<compile_context>
chip_gen: v7x
topology: tpu7x:2x2x1
jax: 0.10.0
libtpu: 0.0.40
codegen_flags: <defaults>
</compile_context>

<pallas_src>
import functools

import jax
import jax.numpy as jnp
from jax import lax
from jax.experimental import pallas as pl
from jax.experimental.pallas import tpu as pltpu


# --------------------------------------------------------------------------------------
# Fused decoder kernel (transposed activation layout: (hidden, tile_t))
# --------------------------------------------------------------------------------------
def _decoder_kernel(pT_ref, zcp_ref, wpT_ref,
                    w0T_ref, b0_ref, w1T_ref, b1_ref, wo_ref, bo_ref,
                    o_ref, *, n_blocks, leaky):
    if leaky:
        act = lambda x: jnp.where(x > 0.0, x, 0.2 * x)
    else:
        act = lambda x: jnp.maximum(x, 0.0)

    pT = pT_ref[0]                                            # (3, Tt) f32

    # fc_p (K = 3): three rank-1 outer products on the VPU (f32; avoids a tiny-K matmul).
    net = (wpT_ref[:, 0:1] * pT[0:1, :]
           + wpT_ref[:, 1:2] * pT[1:2, :]
           + wpT_ref[:, 2:3] * pT[2:3, :])                    # (H, Tt) f32

    # + fc_z(z) + fc_c(c) + (bp + bz + bc): point-invariant, hoisted to the wrapper,
    # arrives here as a per-batch (H, 1) column and broadcasts over the lane axis.
    net = net + zcp_ref[0]

    # ResnetBlockFC x n_blocks:  x + fc_1(act(fc_0(act(x))))
    # bf16 MXU operands (cast fused into the activation pass), f32 accumulation,
    # f32 residual accumulator and biases.
    for i in range(n_blocks):
        a = act(net).astype(jnp.bfloat16)                     # (H, Tt) bf16
        h = jnp.dot(w0T_ref[i], a, preferred_element_type=jnp.float32) + b0_ref[i]
        h = act(h).astype(jnp.bfloat16)
        net = net + jnp.dot(w1T_ref[i], h, preferred_element_type=jnp.float32) + b1_ref[i]

    # fc_out(act(net)): (1, H) @ (H, Tt) -> lane-dense (1, Tt) output row.
    a = act(net).astype(jnp.bfloat16)
    o_ref[0] = jnp.dot(wo_ref[...], a, preferred_element_type=jnp.float32) + bo_ref[...]


def _pick_tile_t(B, T):
    # Big MXU N amortizes per-grid-step overhead and fill/drain; but keep >= 4 grid
    # steps total so both v7x TensorCores stay fed (v5e/v6e have one TC).
    for cand in (1024, 512, 256):
        if B * pl.cdiv(T, cand) >= 4:
            return cand
    return 256


def decoder_forward(p, z, c, params, *, tile_t=None, leaky=False):
    """p: (B, T, 3), z: (B, z_dim) or None, c: (B, c_dim) or None -> (B, T)."""
    B, T, D = p.shape
    assert D == 3
    H = params["wp"].shape[1]
    nb = params["w0"].shape[0]

    if tile_t is None:
        tile_t = _pick_tile_t(B, T)

    # ----- point-invariant projection, hoisted out of the kernel (one tiny XLA GEMM) -----
    zc_proj = jnp.broadcast_to(params["bp"], (B, H))
    if z is not None and "wz" in params:
        zc_proj = zc_proj + jnp.einsum("bz,zh->bh", z, params["wz"],
                                       precision=lax.Precision.HIGHEST) + params["bz"]
    if c is not None and "wc" in params:
        zc_proj = zc_proj + jnp.einsum("bk,kh->bh", c, params["wc"],
                                       precision=lax.Precision.HIGHEST) + params["bc"]
    zc_proj = zc_proj.reshape(B, H, 1).astype(jnp.float32)                 # (B, H, 1)

    # ----- layout plumbing (trace-time only) -----
    T_pad = pl.cdiv(T, tile_t) * tile_t
    p_pad = jnp.pad(p, ((0, 0), (0, T_pad - T), (0, 0)))
    pT = jnp.transpose(p_pad, (0, 2, 1))                                   # (B, 3, T_pad)

    wpT = params["wp"].T.astype(jnp.float32)                               # (H, 3)   f32 (VPU path)
    w0T = jnp.transpose(params["w0"], (0, 2, 1)).astype(jnp.bfloat16)      # (nb, H, H) bf16
    w1T = jnp.transpose(params["w1"], (0, 2, 1)).astype(jnp.bfloat16)      # (nb, H, H) bf16
    b0c = params["b0"].reshape(nb, H, 1).astype(jnp.float32)
    b1c = params["b1"].reshape(nb, H, 1).astype(jnp.float32)
    wo_row = params["wo"].reshape(1, H).astype(jnp.bfloat16)               # (1, H)   bf16
    bo = params["bo"].reshape(1, 1).astype(jnp.float32)

    # Constant-index weight/bias blocks: single-buffered (index map never changes).
    def wspec(shape):
        return pl.BlockSpec(shape, lambda b, t, _n=len(shape): (0,) * _n,
                            pipeline_mode=pl.Buffered(1))

    kernel = functools.partial(_decoder_kernel, n_blocks=nb, leaky=leaky)
    out = pl.pallas_call(
        kernel,
        out_shape=jax.ShapeDtypeStruct((B, 1, T_pad), jnp.float32),
        grid_spec=pltpu.PrefetchScalarGridSpec(
            num_scalar_prefetch=0,
            grid=(B, T_pad // tile_t),
            in_specs=[
                pl.BlockSpec((1, 3, tile_t), lambda b, t: (b, 0, t)),      # pT tile
                pl.BlockSpec((1, H, 1), lambda b, t: (b, 0, 0)),           # hoisted zc projection
                wspec((H, 3)),                                             # fc_p weight^T (f32)
                wspec((nb, H, H)),                                         # fc_0 weights^T (bf16)
                wspec((nb, H, 1)),                                         # fc_0 biases (f32)
                wspec((nb, H, H)),                                         # fc_1 weights^T (bf16)
                wspec((nb, H, 1)),                                         # fc_1 biases (f32)
                wspec((1, H)),                                             # fc_out weight row (bf16)
                wspec((1, 1)),                                             # fc_out bias (f32)
            ],
            out_specs=pl.BlockSpec((1, 1, tile_t), lambda b, t: (b, 0, t)),
        ),
        compiler_params=pltpu.CompilerParams(
            dimension_semantics=("parallel", "parallel"),
        ),
    )(pT, zc_proj, wpT, w0T, b0c, w1T, b1c, wo_row, bo)

    return out.reshape(B, T_pad)[:, :T]


# --------------------------------------------------------------------------------------
# Plain-JAX reference (different code path, f32 HIGHEST precision) for a sanity check
# --------------------------------------------------------------------------------------
_PREC = lax.Precision.HIGHEST


def reference_forward(p, z, c, params, *, leaky=False):
    act = (lambda x: jnp.where(x > 0, x, 0.2 * x)) if leaky else (lambda x: jnp.maximum(x, 0.0))
    nb = params["w0"].shape[0]
    net = jnp.einsum("btd,dh->bth", p, params["wp"], precision=_PREC) + params["bp"]
    net = net + (jnp.einsum("bz,zh->bh", z, params["wz"], precision=_PREC) + params["bz"])[:, None, :]
    net = net + (jnp.einsum("bk,kh->bh", c, params["wc"], precision=_PREC) + params["bc"])[:, None, :]
    for i in range(nb):
        h = act(net)
        h = jnp.einsum("bth,hk->btk", h, params["w0"][i], precision=_PREC) + params["b0"][i]
        h = act(h)
        net = net + jnp.einsum("bth,hk->btk", h, params["w1"][i], precision=_PREC) + params["b1"][i]
    h = act(net)
    out = jnp.einsum("bth,h->bt", h, params["wo"].reshape(-1), precision=_PREC)
    return out + params["bo"].reshape(())


# --------------------------------------------------------------------------------------
# Deterministic parameter init (shapes from Decoder.__init__; math convention (in, out))
# --------------------------------------------------------------------------------------
def init_params(key, *, dim=3, z_dim=128, c_dim=128, hidden=128, n_blocks=5):
    cnt = [0]

    def nk():
        cnt[0] += 1
        return jax.random.fold_in(key, cnt[0])

    def lin_w(fan_in, fan_out, scale=1.0):
        return scale * jax.random.normal(nk(), (fan_in, fan_out), jnp.float32) / jnp.sqrt(float(fan_in))

    def bias(n):
        return jax.random.normal(nk(), (n,), jnp.float32) * 0.1

    return dict(
        wp=lin_w(dim, hidden), bp=bias(hidden),
        wz=lin_w(z_dim, hidden), bz=bias(hidden),
        wc=lin_w(c_dim, hidden), bc=bias(hidden),
        w0=jnp.stack([lin_w(hidden, hidden) for _ in range(n_blocks)]),
        b0=jnp.stack([bias(hidden) for _ in range(n_blocks)]),
        # NOTE: PyTorch ResnetBlockFC zero-inits fc_1.weight; small random weights are used
        # here so the residual path is actually exercised by the correctness check.
        w1=jnp.stack([lin_w(hidden, hidden, scale=0.5) for _ in range(n_blocks)]),
        b1=jnp.stack([bias(hidden) for _ in range(n_blocks)]),
        wo=lin_w(hidden, 1),                       # fc_out weight, (hidden, 1)
        bo=jax.random.normal(nk(), (1,), jnp.float32) * 0.1,
    )


if __name__ == "__main__":
    key = jax.random.PRNGKey(0)
    kp, kz, kc, kparam = jax.random.split(key, 4)

    # Small demo shapes; hidden/z_dim/c_dim use the module defaults (128), MXU-aligned.
    B, T = 2, 1000
    dim, z_dim, c_dim, hidden, n_blocks = 3, 128, 128, 128, 5

    params = init_params(kparam, dim=dim, z_dim=z_dim, c_dim=c_dim,
                         hidden=hidden, n_blocks=n_blocks)

    p = jax.random.uniform(kp, (B, T, dim), jnp.float32, minval=-0.5, maxval=0.5)
    z = jax.random.normal(kz, (B, z_dim), jnp.float32)
    c = jax.random.normal(kc, (B, c_dim), jnp.float32)

    # Jit the whole forward so the small pad/transpose prologue and the hoisted zc
    # projection fuse into the surrounding graph.
    fwd = jax.jit(functools.partial(decoder_forward, leaky=False))
    out = jax.block_until_ready(fwd(p, z, c, params))
    assert out.shape == (B, T)

    ref = jax.block_until_ready(reference_forward(p, z, c, params))
    err = float(jnp.max(jnp.abs(out - ref)))
    scale = float(jnp.max(jnp.abs(ref)))
    # 5e-2 relative tolerance: kernel runs bf16 MXU operands with an f32 residual accumulator.
    if not (err <= 5e-2 * max(1.0, scale)):
        raise AssertionError(f"Pallas output mismatch vs reference: max|diff|={err}, scale={scale}")

    print("KERNEL_OK")
</pallas_src>

<mosaic_0001>
module attributes {stable_mosaic.version = 11 : i64} {
  func.func @_decoder_kernel(%arg0: i32, %arg1: i32, %arg2: memref<1x3x512xf32, #tpu.memory_space<vmem>>, %arg3: memref<1x128x1xf32, #tpu.memory_space<vmem>>, %arg4: memref<128x3xf32, #tpu.memory_space<vmem>>, %arg5: memref<5x128x128xbf16, #tpu.memory_space<vmem>>, %arg6: memref<5x128x1xf32, #tpu.memory_space<vmem>>, %arg7: memref<5x128x128xbf16, #tpu.memory_space<vmem>>, %arg8: memref<5x128x1xf32, #tpu.memory_space<vmem>>, %arg9: memref<1x128xbf16, #tpu.memory_space<vmem>>, %arg10: memref<1x1xf32, #tpu.memory_space<vmem>>, %arg11: memref<1x1x512xf32, #tpu.memory_space<vmem>>) attributes {dimension_semantics = [#tpu.dimension_semantics<parallel>, #tpu.dimension_semantics<parallel>], iteration_bounds = array<i64: 2, 2>, scalar_prefetch = 0 : i64, scratch_operands = 0 : i64, tpu.core_type = #tpu.core_type<tc>, window_params = [{transform_indices = @transform_0, window_bounds = array<i64: 1, 3, 512>}, {transform_indices = @transform_1, window_bounds = array<i64: 1, 128, 1>}, {pipeline_mode = #tpu.pipeline_mode<synchronous>, transform_indices = @transform_2, window_bounds = array<i64: 128, 3>}, {pipeline_mode = #tpu.pipeline_mode<synchronous>, transform_indices = @transform_3, window_bounds = array<i64: 5, 128, 128>}, {pipeline_mode = #tpu.pipeline_mode<synchronous>, transform_indices = @transform_4, window_bounds = array<i64: 5, 128, 1>}, {pipeline_mode = #tpu.pipeline_mode<synchronous>, transform_indices = @transform_5, window_bounds = array<i64: 5, 128, 128>}, {pipeline_mode = #tpu.pipeline_mode<synchronous>, transform_indices = @transform_6, window_bounds = array<i64: 5, 128, 1>}, {pipeline_mode = #tpu.pipeline_mode<synchronous>, transform_indices = @transform_7, window_bounds = array<i64: 1, 128>}, {pipeline_mode = #tpu.pipeline_mode<synchronous>, transform_indices = @transform_8, window_bounds = array<i64: 1, 1>}, {transform_indices = @transform_9, window_bounds = array<i64: 1, 1, 512>}]} {
    %c0 = arith.constant 0 : index
    %c0_0 = arith.constant 0 : index
    %c0_1 = arith.constant 0 : index
    %0 = vector.load %arg2[%c0, %c0_0, %c0_1] : memref<1x3x512xf32, #tpu.memory_space<vmem>>, vector<1x3x512xf32>
    %1 = vector.shape_cast %0 : vector<1x3x512xf32> to vector<3x512xf32>
    %c0_2 = arith.constant 0 : index
    %c0_3 = arith.constant 0 : index
    %2 = vector.load %arg4[%c0_2, %c0_3] : memref<128x3xf32, #tpu.memory_space<vmem>>, vector<128x1xf32>
    %3 = vector.extract_strided_slice %1 {offsets = [0, 0], sizes = [1, 512], strides = [1, 1]} : vector<3x512xf32> to vector<1x512xf32>
    %4 = vector.broadcast %2 : vector<128x1xf32> to vector<128x512xf32>
    %5 = vector.broadcast %3 : vector<1x512xf32> to vector<128x512xf32>
    %6 = arith.mulf %4, %5 : vector<128x512xf32>
    %c0_4 = arith.constant 0 : index
    %c1 = arith.constant 1 : index
    %7 = vector.load %arg4[%c0_4, %c1] : memref<128x3xf32, #tpu.memory_space<vmem>>, vector<128x1xf32>
    %8 = vector.extract_strided_slice %1 {offsets = [1, 0], sizes = [1, 512], strides = [1, 1]} : vector<3x512xf32> to vector<1x512xf32>
    %9 = vector.broadcast %7 : vector<128x1xf32> to vector<128x512xf32>
    %10 = vector.broadcast %8 : vector<1x512xf32> to vector<128x512xf32>
    %11 = arith.mulf %9, %10 : vector<128x512xf32>
    %12 = arith.addf %6, %11 : vector<128x512xf32>
    %c0_5 = arith.constant 0 : index
    %c2 = arith.constant 2 : index
    %13 = vector.load %arg4[%c0_5, %c2] : memref<128x3xf32, #tpu.memory_space<vmem>>, vector<128x1xf32>
    %14 = vector.extract_strided_slice %1 {offsets = [2, 0], sizes = [1, 512], strides = [1, 1]} : vector<3x512xf32> to vector<1x512xf32>
    %15 = vector.broadcast %13 : vector<128x1xf32> to vector<128x512xf32>
    %16 = vector.broadcast %14 : vector<1x512xf32> to vector<128x512xf32>
    %17 = arith.mulf %15, %16 : vector<128x512xf32>
    %18 = arith.addf %12, %17 : vector<128x512xf32>
    %c0_6 = arith.constant 0 : index
    %c0_7 = arith.constant 0 : index
    %c0_8 = arith.constant 0 : index
    %19 = vector.load %arg3[%c0_6, %c0_7, %c0_8] : memref<1x128x1xf32, #tpu.memory_space<vmem>>, vector<1x128x1xf32>
    %20 = vector.shape_cast %19 : vector<1x128x1xf32> to vector<128x1xf32>
    %21 = vector.broadcast %20 : vector<128x1xf32> to vector<128x512xf32>
    %22 = arith.addf %18, %21 : vector<128x512xf32>
    %cst = arith.constant 0.000000e+00 : f32
    %23 = vector.broadcast %cst : f32 to vector<128x512xf32>
    %24 = arith.maximumf %22, %23 : vector<128x512xf32>
    %25 = arith.truncf %24 : vector<128x512xf32> to vector<128x512xbf16>
    %c0_9 = arith.constant 0 : index
    %c0_10 = arith.constant 0 : index
    %c0_11 = arith.constant 0 : index
    %26 = vector.load %arg5[%c0_9, %c0_10, %c0_11] : memref<5x128x128xbf16, #tpu.memory_space<vmem>>, vector<1x128x128xbf16>
    %27 = vector.shape_cast %26 : vector<1x128x128xbf16> to vector<128x128xbf16>
    %cst_12 = arith.constant dense<0.000000e+00> : vector<128x512xf32>
    %28 = tpu.matmul %27, %25, %cst_12 {dimension_numbers = #tpu.dot_dimension_numbers<[1], [0], [0], [1], [0, 0, 1, 1], [], []>} : vector<128x128xbf16>, vector<128x512xbf16>, vector<128x512xf32> -> vector<128x512xf32>
    %c0_13 = arith.constant 0 : index
    %c0_14 = arith.constant 0 : index
    %c0_15 = arith.constant 0 : index
    %29 = vector.load %arg6[%c0_13, %c0_14, %c0_15] : memref<5x128x1xf32, #tpu.memory_space<vmem>>, vector<1x128x1xf32>
    %30 = vector.shape_cast %29 : vector<1x128x1xf32> to vector<128x1xf32>
    %31 = vector.broadcast %30 : vector<128x1xf32> to vector<128x512xf32>
    %32 = arith.addf %28, %31 : vector<128x512xf32>
    %cst_16 = arith.constant 0.000000e+00 : f32
    %33 = vector.broadcast %cst_16 : f32 to vector<128x512xf32>
    %34 = arith.maximumf %32, %33 : vector<128x512xf32>
    %35 = arith.truncf %34 : vector<128x512xf32> to vector<128x512xbf16>
    %c0_17 = arith.constant 0 : index
    %c0_18 = arith.constant 0 : index
    %c0_19 = arith.constant 0 : index
    %36 = vector.load %arg7[%c0_17, %c0_18, %c0_19] : memref<5x128x128xbf16, #tpu.memory_space<vmem>>, vector<1x128x128xbf16>
    %37 = vector.shape_cast %36 : vector<1x128x128xbf16> to vector<128x128xbf16>
    %cst_20 = arith.constant dense<0.000000e+00> : vector<128x512xf32>
    %38 = tpu.matmul %37, %35, %cst_20 {dimension_numbers = #tpu.dot_dimension_numbers<[1], [0], [0], [1], [0, 0, 1, 1], [], []>} : vector<128x128xbf16>, vector<128x512xbf16>, vector<128x512xf32> -> vector<128x512xf32>
    %39 = arith.addf %22, %38 : vector<128x512xf32>
    %c0_21 = arith.constant 0 : index
    %c0_22 = arith.constant 0 : index
    %c0_23 = arith.constant 0 : index
    %40 = vector.load %arg8[%c0_21, %c0_22, %c0_23] : memref<5x128x1xf32, #tpu.memory_space<vmem>>, vector<1x128x1xf32>
    %41 = vector.shape_cast %40 : vector<1x128x1xf32> to vector<128x1xf32>
    %42 = vector.broadcast %41 : vector<128x1xf32> to vector<128x512xf32>
    %43 = arith.addf %39, %42 : vector<128x512xf32>
    %cst_24 = arith.constant 0.000000e+00 : f32
    %44 = vector.broadcast %cst_24 : f32 to vector<128x512xf32>
    %45 = arith.maximumf %43, %44 : vector<128x512xf32>
    %46 = arith.truncf %45 : vector<128x512xf32> to vector<128x512xbf16>
    %c1_25 = arith.constant 1 : index
    %c0_26 = arith.constant 0 : index
    %c0_27 = arith.constant 0 : index
    %47 = vector.load %arg5[%c1_25, %c0_26, %c0_27] : memref<5x128x128xbf16, #tpu.memory_space<vmem>>, vector<1x128x128xbf16>
    %48 = vector.shape_cast %47 : vector<1x128x128xbf16> to vector<128x128xbf16>
    %cst_28 = arith.constant dense<0.000000e+00> : vector<128x512xf32>
    %49 = tpu.matmul %48, %46, %cst_28 {dimension_numbers = #tpu.dot_dimension_numbers<[1], [0], [0], [1], [0, 0, 1, 1], [], []>} : vector<128x128xbf16>, vector<128x512xbf16>, vector<128x512xf32> -> vector<128x512xf32>
    %c1_29 = arith.constant 1 : index
    %c0_30 = arith.constant 0 : index
    %c0_31 = arith.constant 0 : index
    %50 = vector.load %arg6[%c1_29, %c0_30, %c0_31] : memref<5x128x1xf32, #tpu.memory_space<vmem>>, vector<1x128x1xf32>
    %51 = vector.shape_cast %50 : vector<1x128x1xf32> to vector<128x1xf32>
    %52 = vector.broadcast %51 : vector<128x1xf32> to vector<128x512xf32>
    %53 = arith.addf %49, %52 : vector<128x512xf32>
    %cst_32 = arith.constant 0.000000e+00 : f32
    %54 = vector.broadcast %cst_32 : f32 to vector<128x512xf32>
    %55 = arith.maximumf %53, %54 : vector<128x512xf32>
    %56 = arith.truncf %55 : vector<128x512xf32> to vector<128x512xbf16>
    %c1_33 = arith.constant 1 : index
    %c0_34 = arith.constant 0 : index
    %c0_35 = arith.constant 0 : index
    %57 = vector.load %arg7[%c1_33, %c0_34, %c0_35] : memref<5x128x128xbf16, #tpu.memory_space<vmem>>, vector<1x128x128xbf16>
    %58 = vector.shape_cast %57 : vector<1x128x128xbf16> to vector<128x128xbf16>
    %cst_36 = arith.constant dense<0.000000e+00> : vector<128x512xf32>
    %59 = tpu.matmul %58, %56, %cst_36 {dimension_numbers = #tpu.dot_dimension_numbers<[1], [0], [0], [1], [0, 0, 1, 1], [], []>} : vector<128x128xbf16>, vector<128x512xbf16>, vector<128x512xf32> -> vector<128x512xf32>
    %60 = arith.addf %43, %59 : vector<128x512xf32>
    %c1_37 = arith.constant 1 : index
    %c0_38 = arith.constant 0 : index
    %c0_39 = arith.constant 0 : index
    %61 = vector.load %arg8[%c1_37, %c0_38, %c0_39] : memref<5x128x1xf32, #tpu.memory_space<vmem>>, vector<1x128x1xf32>
    %62 = vector.shape_cast %61 : vector<1x128x1xf32> to vector<128x1xf32>
    %63 = vector.broadcast %62 : vector<128x1xf32> to vector<128x512xf32>
    %64 = arith.addf %60, %63 : vector<128x512xf32>
    %cst_40 = arith.constant 0.000000e+00 : f32
    %65 = vector.broadcast %cst_40 : f32 to vector<128x512xf32>
    %66 = arith.maximumf %64, %65 : vector<128x512xf32>
    %67 = arith.truncf %66 : vector<128x512xf32> to vector<128x512xbf16>
    %c2_41 = arith.constant 2 : index
    %c0_42 = arith.constant 0 : index
    %c0_43 = arith.constant 0 : index
    %68 = vector.load %arg5[%c2_41, %c0_42, %c0_43] : memref<5x128x128xbf16, #tpu.memory_space<vmem>>, vector<1x128x128xbf16>
    %69 = vector.shape_cast %68 : vector<1x128x128xbf16> to vector<128x128xbf16>
    %cst_44 = arith.constant dense<0.000000e+00> : vector<128x512xf32>
    %70 = tpu.matmul %69, %67, %cst_44 {dimension_numbers = #tpu.dot_dimension_numbers<[1], [0], [0], [1], [0, 0, 1, 1], [], []>} : vector<128x128xbf16>, vector<128x512xbf16>, vector<128x512xf32> -> vector<128x512xf32>
    %c2_45 = arith.constant 2 : index
    %c0_46 = arith.constant 0 : index
    %c0_47 = arith.constant 0 : index
    %71 = vector.load %arg6[%c2_45, %c0_46, %c0_47] : memref<5x128x1xf32, #tpu.memory_space<vmem>>, vector<1x128x1xf32>
    %72 = vector.shape_cast %71 : vector<1x128x1xf32> to vector<128x1xf32>
    %73 = vector.broadcast %72 : vector<128x1xf32> to vector<128x512xf32>
    %74 = arith.addf %70, %73 : vector<128x512xf32>
    %cst_48 = arith.constant 0.000000e+00 : f32
    %75 = vector.broadcast %cst_48 : f32 to vector<128x512xf32>
    %76 = arith.maximumf %74, %75 : vector<128x512xf32>
    %77 = arith.truncf %76 : vector<128x512xf32> to vector<128x512xbf16>
    %c2_49 = arith.constant 2 : index
    %c0_50 = arith.constant 0 : index
    %c0_51 = arith.constant 0 : index
    %78 = vector.load %arg7[%c2_49, %c0_50, %c0_51] : memref<5x128x128xbf16, #tpu.memory_space<vmem>>, vector<1x128x128xbf16>
    %79 = vector.shape_cast %78 : vector<1x128x128xbf16> to vector<128x128xbf16>
    %cst_52 = arith.constant dense<0.000000e+00> : vector<128x512xf32>
    %80 = tpu.matmul %79, %77, %cst_52 {dimension_numbers = #tpu.dot_dimension_numbers<[1], [0], [0], [1], [0, 0, 1, 1], [], []>} : vector<128x128xbf16>, vector<128x512xbf16>, vector<128x512xf32> -> vector<128x512xf32>
    %81 = arith.addf %64, %80 : vector<128x512xf32>
    %c2_53 = arith.constant 2 : index
    %c0_54 = arith.constant 0 : index
    %c0_55 = arith.constant 0 : index
    %82 = vector.load %arg8[%c2_53, %c0_54, %c0_55] : memref<5x128x1xf32, #tpu.memory_space<vmem>>, vector<1x128x1xf32>
    %83 = vector.shape_cast %82 : vector<1x128x1xf32> to vector<128x1xf32>
    %84 = vector.broadcast %83 : vector<128x1xf32> to vector<128x512xf32>
    %85 = arith.addf %81, %84 : vector<128x512xf32>
    %cst_56 = arith.constant 0.000000e+00 : f32
    %86 = vector.broadcast %cst_56 : f32 to vector<128x512xf32>
    %87 = arith.maximumf %85, %86 : vector<128x512xf32>
    %88 = arith.truncf %87 : vector<128x512xf32> to vector<128x512xbf16>
    %c3 = arith.constant 3 : index
    %c0_57 = arith.constant 0 : index
    %c0_58 = arith.constant 0 : index
    %89 = vector.load %arg5[%c3, %c0_57, %c0_58] : memref<5x128x128xbf16, #tpu.memory_space<vmem>>, vector<1x128x128xbf16>
    %90 = vector.shape_cast %89 : vector<1x128x128xbf16> to vector<128x128xbf16>
    %cst_59 = arith.constant dense<0.000000e+00> : vector<128x512xf32>
    %91 = tpu.matmul %90, %88, %cst_59 {dimension_numbers = #tpu.dot_dimension_numbers<[1], [0], [0], [1], [0, 0, 1, 1], [], []>} : vector<128x128xbf16>, vector<128x512xbf16>, vector<128x512xf32> -> vector<128x512xf32>
    %c3_60 = arith.constant 3 : index
    %c0_61 = arith.constant 0 : index
    %c0_62 = arith.constant 0 : index
    %92 = vector.load %arg6[%c3_60, %c0_61, %c0_62] : memref<5x128x1xf32, #tpu.memory_space<vmem>>, vector<1x128x1xf32>
    %93 = vector.shape_cast %92 : vector<1x128x1xf32> to vector<128x1xf32>
    %94 = vector.broadcast %93 : vector<128x1xf32> to vector<128x512xf32>
    %95 = arith.addf %91, %94 : vector<128x512xf32>
    %cst_63 = arith.constant 0.000000e+00 : f32
    %96 = vector.broadcast %cst_63 : f32 to vector<128x512xf32>
    %97 = arith.maximumf %95, %96 : vector<128x512xf32>
    %98 = arith.truncf %97 : vector<128x512xf32> to vector<128x512xbf16>
    %c3_64 = arith.constant 3 : index
    %c0_65 = arith.constant 0 : index
    %c0_66 = arith.constant 0 : index
    %99 = vector.load %arg7[%c3_64, %c0_65, %c0_66] : memref<5x128x128xbf16, #tpu.memory_space<vmem>>, vector<1x128x128xbf16>
    %100 = vector.shape_cast %99 : vector<1x128x128xbf16> to vector<128x128xbf16>
    %cst_67 = arith.constant dense<0.000000e+00> : vector<128x512xf32>
    %101 = tpu.matmul %100, %98, %cst_67 {dimension_numbers = #tpu.dot_dimension_numbers<[1], [0], [0], [1], [0, 0, 1, 1], [], []>} : vector<128x128xbf16>, vector<128x512xbf16>, vector<128x512xf32> -> vector<128x512xf32>
    %102 = arith.addf %85, %101 : vector<128x512xf32>
    %c3_68 = arith.constant 3 : index
    %c0_69 = arith.constant 0 : index
    %c0_70 = arith.constant 0 : index
    %103 = vector.load %arg8[%c3_68, %c0_69, %c0_70] : memref<5x128x1xf32, #tpu.memory_space<vmem>>, vector<1x128x1xf32>
    %104 = vector.shape_cast %103 : vector<1x128x1xf32> to vector<128x1xf32>
    %105 = vector.broadcast %104 : vector<128x1xf32> to vector<128x512xf32>
    %106 = arith.addf %102, %105 : vector<128x512xf32>
    %cst_71 = arith.constant 0.000000e+00 : f32
    %107 = vector.broadcast %cst_71 : f32 to vector<128x512xf32>
    %108 = arith.maximumf %106, %107 : vector<128x512xf32>
    %109 = arith.truncf %108 : vector<128x512xf32> to vector<128x512xbf16>
    %c4 = arith.constant 4 : index
    %c0_72 = arith.constant 0 : index
    %c0_73 = arith.constant 0 : index
    %110 = vector.load %arg5[%c4, %c0_72, %c0_73] : memref<5x128x128xbf16, #tpu.memory_space<vmem>>, vector<1x128x128xbf16>
    %111 = vector.shape_cast %110 : vector<1x128x128xbf16> to vector<128x128xbf16>
    %cst_74 = arith.constant dense<0.000000e+00> : vector<128x512xf32>
    %112 = tpu.matmul %111, %109, %cst_74 {dimension_numbers = #tpu.dot_dimension_numbers<[1], [0], [0], [1], [0, 0, 1, 1], [], []>} : vector<128x128xbf16>, vector<128x512xbf16>, vector<128x512xf32> -> vector<128x512xf32>
    %c4_75 = arith.constant 4 : index
    %c0_76 = arith.constant 0 : index
    %c0_77 = arith.constant 0 : index
    %113 = vector.load %arg6[%c4_75, %c0_76, %c0_77] : memref<5x128x1xf32, #tpu.memory_space<vmem>>, vector<1x128x1xf32>
    %114 = vector.shape_cast %113 : vector<1x128x1xf32> to vector<128x1xf32>
    %115 = vector.broadcast %114 : vector<128x1xf32> to vector<128x512xf32>
    %116 = arith.addf %112, %115 : vector<128x512xf32>
    %cst_78 = arith.constant 0.000000e+00 : f32
    %117 = vector.broadcast %cst_78 : f32 to vector<128x512xf32>
    %118 = arith.maximumf %116, %117 : vector<128x512xf32>
    %119 = arith.truncf %118 : vector<128x512xf32> to vector<128x512xbf16>
    %c4_79 = arith.constant 4 : index
    %c0_80 = arith.constant 0 : index
    %c0_81 = arith.constant 0 : index
    %120 = vector.load %arg7[%c4_79, %c0_80, %c0_81] : memref<5x128x128xbf16, #tpu.memory_space<vmem>>, vector<1x128x128xbf16>
    %121 = vector.shape_cast %120 : vector<1x128x128xbf16> to vector<128x128xbf16>
    %cst_82 = arith.constant dense<0.000000e+00> : vector<128x512xf32>
    %122 = tpu.matmul %121, %119, %cst_82 {dimension_numbers = #tpu.dot_dimension_numbers<[1], [0], [0], [1], [0, 0, 1, 1], [], []>} : vector<128x128xbf16>, vector<128x512xbf16>, vector<128x512xf32> -> vector<128x512xf32>
    %123 = arith.addf %106, %122 : vector<128x512xf32>
    %c4_83 = arith.constant 4 : index
    %c0_84 = arith.constant 0 : index
    %c0_85 = arith.constant 0 : index
    %124 = vector.load %arg8[%c4_83, %c0_84, %c0_85] : memref<5x128x1xf32, #tpu.memory_space<vmem>>, vector<1x128x1xf32>
    %125 = vector.shape_cast %124 : vector<1x128x1xf32> to vector<128x1xf32>
    %126 = vector.broadcast %125 : vector<128x1xf32> to vector<128x512xf32>
    %127 = arith.addf %123, %126 : vector<128x512xf32>
    %cst_86 = arith.constant 0.000000e+00 : f32
    %128 = vector.broadcast %cst_86 : f32 to vector<128x512xf32>
    %129 = arith.maximumf %127, %128 : vector<128x512xf32>
    %130 = arith.truncf %129 : vector<128x512xf32> to vector<128x512xbf16>
    %c0_87 = arith.constant 0 : index
    %c0_88 = arith.constant 0 : index
    %131 = vector.load %arg9[%c0_87, %c0_88] : memref<1x128xbf16, #tpu.memory_space<vmem>>, vector<1x128xbf16>
    %cst_89 = arith.constant dense<0.000000e+00> : vector<1x512xf32>
    %132 = tpu.matmul %131, %130, %cst_89 {dimension_numbers = #tpu.dot_dimension_numbers<[1], [0], [0], [1], [0, 0, 1, 1], [], []>} : vector<1x128xbf16>, vector<128x512xbf16>, vector<1x512xf32> -> vector<1x512xf32>
    %c0_90 = arith.constant 0 : index
    %c0_91 = arith.constant 0 : index
    %133 = vector.load %arg10[%c0_90, %c0_91] : memref<1x1xf32, #tpu.memory_space<vmem>>, vector<1x1xf32>
    %134 = vector.broadcast %133 : vector<1x1xf32> to vector<1x512xf32>
    %135 = arith.addf %132, %134 : vector<1x512xf32>
    %c0_92 = arith.constant 0 : index
    %c0_93 = arith.constant 0 : index
    %c0_94 = arith.constant 0 : index
    %136 = vector.load %arg11[%c0_92, %c0_93, %c0_94] : memref<1x1x512xf32, #tpu.memory_space<vmem>>, vector<1x1x512xf32>
    %137 = vector.shape_cast %136 : vector<1x1x512xf32> to vector<1x512xf32>
    %138 = vector.shape_cast %135 : vector<1x512xf32> to vector<1x1x512xf32>
    tpu.vector_store %arg11[%c0_92, %c0_93, %c0_94], %138 {strides = array<i32>} : memref<1x1x512xf32, #tpu.memory_space<vmem>>, vector<1x1x512xf32>,
    return
  }
  func.func @transform_0(%arg0: i32, %arg1: i32) -> (i32, i32, i32) {
    %c0_i32 = arith.constant 0 : i32
    %c0_i32_0 = arith.constant 0 : i32
    return %arg0, %c0_i32, %arg1 : i32, i32, i32
  }
  func.func @transform_1(%arg0: i32, %arg1: i32) -> (i32, i32, i32) {
    %c0_i32 = arith.constant 0 : i32
    %c0_i32_0 = arith.constant 0 : i32
    %c0_i32_1 = arith.constant 0 : i32
    return %arg0, %c0_i32, %c0_i32_0 : i32, i32, i32
  }
  func.func @transform_2(%arg0: i32, %arg1: i32) -> (i32, i32) {
    %c0_i32 = arith.constant 0 : i32
    %c0_i32_0 = arith.constant 0 : i32
    %c0_i32_1 = arith.constant 0 : i32
    return %c0_i32, %c0_i32_0 : i32, i32
  }
  func.func @transform_3(%arg0: i32, %arg1: i32) -> (i32, i32, i32) {
    %c0_i32 = arith.constant 0 : i32
    %c0_i32_0 = arith.constant 0 : i32
    %c0_i32_1 = arith.constant 0 : i32
    %c0_i32_2 = arith.constant 0 : i32
    return %c0_i32, %c0_i32_0, %c0_i32_1 : i32, i32, i32
  }
  func.func @transform_4(%arg0: i32, %arg1: i32) -> (i32, i32, i32) {
    %c0_i32 = arith.constant 0 : i32
    %c0_i32_0 = arith.constant 0 : i32
    %c0_i32_1 = arith.constant 0 : i32
    %c0_i32_2 = arith.constant 0 : i32
    return %c0_i32, %c0_i32_0, %c0_i32_1 : i32, i32, i32
  }
  func.func @transform_5(%arg0: i32, %arg1: i32) -> (i32, i32, i32) {
    %c0_i32 = arith.constant 0 : i32
    %c0_i32_0 = arith.constant 0 : i32
    %c0_i32_1 = arith.constant 0 : i32
    %c0_i32_2 = arith.constant 0 : i32
    return %c0_i32, %c0_i32_0, %c0_i32_1 : i32, i32, i32
  }
  func.func @transform_6(%arg0: i32, %arg1: i32) -> (i32, i32, i32) {
    %c0_i32 = arith.constant 0 : i32
    %c0_i32_0 = arith.constant 0 : i32
    %c0_i32_1 = arith.constant 0 : i32
    %c0_i32_2 = arith.constant 0 : i32
    return %c0_i32, %c0_i32_0, %c0_i32_1 : i32, i32, i32
  }
  func.func @transform_7(%arg0: i32, %arg1: i32) -> (i32, i32) {
    %c0_i32 = arith.constant 0 : i32
    %c0_i32_0 = arith.constant 0 : i32
    %c0_i32_1 = arith.constant 0 : i32
    return %c0_i32, %c0_i32_0 : i32, i32
  }
  func.func @transform_8(%arg0: i32, %arg1: i32) -> (i32, i32) {
    %c0_i32 = arith.constant 0 : i32
    %c0_i32_0 = arith.constant 0 : i32
    %c0_i32_1 = arith.constant 0 : i32
    return %c0_i32, %c0_i32_0 : i32, i32
  }
  func.func @transform_9(%arg0: i32, %arg1: i32) -> (i32, i32, i32) {
    %c0_i32 = arith.constant 0 : i32
    %c0_i32_0 = arith.constant 0 : i32
    return %arg0, %c0_i32, %arg1 : i32, i32, i32
  }
}

</mosaic_0001>

<llo_original>
// kernel: decoder_forward.1
$region0: #{decoder_forward.1}
  #allocation0 [shape = 'u32[]', space=smem, size = 0x4, offset = 0x4, fixed_abs, tag = 'smem constant byte address 0x4 - core index']
  #allocation1 [shape = 'u32[144,128]{1,0:T(1,128)}', space=vmem, size = 0x12000, scoped, tag = 'internal scratch']
  #allocation2 [shape = 'f32[1,1]{1,0:T(1,128)S(1)}', space=vmem, size = 0x200, scoped, tag = 'scoped memory for decoder_forward.1']
  %s0 = inlined_call_operand.vmem [shape: f32[2,3,1024], index: 0, kind: input, shape index: {}]
  %s1 = inlined_call_operand.vmem [shape: f32[2,128,1], index: 1, kind: input, shape index: {}]
  %s2 = inlined_call_operand.vmem [shape: f32[128,3], index: 2, kind: input, shape index: {}]
  %s3 = inlined_call_operand.vmem [shape: bf16[5,128,128], index: 3, kind: input, shape index: {}]
  %s4 = inlined_call_operand.vmem [shape: f32[5,128,1], index: 4, kind: input, shape index: {}]
  %s5 = inlined_call_operand.vmem [shape: bf16[5,128,128], index: 5, kind: input, shape index: {}]
  %s6 = inlined_call_operand.vmem [shape: f32[5,128,1], index: 6, kind: input, shape index: {}]
  %s7 = inlined_call_operand.vmem [shape: bf16[1,128], index: 7, kind: input, shape index: {}]
  %s8 = inlined_call_operand.<no memory space> [shape: f32[1,1], index: 8, kind: input, shape index: {}]
  %s9 = inlined_call_operand.vmem [shape: f32[2,1,1024], index: 9, kind: output, shape index: {}]
  %s10 = sld [smem:[#allocation0]]
  $region69: #{decoder_forward.1} parent=0
    _
  %s12 = ssub.s32 1, %s10
  %s13 = scalar_select 0, %s12, %s10
  %v14 = vstv %s8
  %15 = vst [vmem:[#allocation2] sm:$0x1] %v14
  loop: start=0, step=1, limit=6
  $region2: #{decoder_forward.1} parent=0 // loop_pre_header
    _
  $region3: #{decoder_forward.1} parent=0 // loop_header
    %s17 = sphi 0, %s21
    %p18 = scmp.ge.s32.totalorder %s17, 6
    %s24 = sphi 0, %s36
    %s25 = sphi 0, %s32
    %s26 = sphi 0, %s24
    %s27 = sphi 0, %s25
    %s28 = sphi 0, %s26
    %s29 = sphi 0, %s27
    %s41 = sphi 0, %s43
    %s44 = sphi 0, %s41
    %s45 = sphi 0, %s44
    %s61 = sphi 0, %s45
    %s67 = sphi 0, %s69
    %s70 = sphi 0, %s67
    %s71 = sphi 0, %s70
    %s87 = sphi 0, %s71
    %s91 = sphi 0, %s91
    %s93 = sphi 0, %s91
    %s94 = sphi 0, %s93
    %s108 = sphi 0, %s94
    %s112 = sphi 0, %s112
    %s114 = sphi 0, %s112
    %s115 = sphi 0, %s114
    %s129 = sphi 0, %s115
    %s133 = sphi 0, %s133
    %s135 = sphi 0, %s133
    %s136 = sphi 0, %s135
    %s150 = sphi 0, %s136
    %s154 = sphi 0, %s154
    %s156 = sphi 0, %s154
    %s157 = sphi 0, %s156
    %s171 = sphi 0, %s157
    %s175 = sphi 0, %s175
    %s177 = sphi 0, %s175
    %s178 = sphi 0, %s177
    %s192 = sphi 0, %s178
    %s196 = sphi 0, %s196
    %s198 = sphi 0, %s196
    %s199 = sphi 0, %s198
    %s213 = sphi 0, %s199
    %s217 = sphi 0, %s217
    %s219 = sphi 0, %s217
    %s220 = sphi 0, %s219
    %s234 = sphi 0, %s220
    %s242 = sphi 0, %s244
    %s245 = sphi 0, %s242
    %s246 = sphi 0, %s245
    %s262 = sphi 0, %s246
  $region4: #{decoder_forward.1} parent=0 // loop_header_branch
    %20 = sbr.rel (%p18) target = $region8
  $region5: #{decoder_forward.1} parent=0 // loop_body
    %s22 = ssub.s32 %s17, 1
    %s23 = ssub.s32 %s17, 2
    %s30 = sadd.s32 1, %s25
    %p31 = scmp.ge.s32.totalorder %s30, 2
    %s32 = scalar_select %p31, 0, %s30
    %s33 = sadd.s32 1, %s24
    %s34 = scalar_select %p31, %s33, %s24
    %p35 = scmp.ge.s32.totalorder %s34, 2
    %s36 = scalar_select %p35, 0, %s34
    %s37 = ssub.s32 %s24, %s36
    %s38 = ssub.s32 %s25, %s32
    %s39 = sor.u32 %s37, %s38
    %p40 = scmp.eq.s32.totalorder %s39, 0
    %s42 = sadd.s32 %s41, 1
    %s43 = scalar_select %p40, %s41, %s42
    %p46 = pneg %p40
    %p47 = scmp.eq.s32.totalorder %s17, 3
    %p48 = por %p46, %p47
    %p49 = scmp.ne.s32.totalorder %s41, %s44
    %p50 = scmp.eq.s32.totalorder %s17, 0
    %p51 = por %p49, %p50
    %p52 = scmp.ne.s32.totalorder %s41, %s44
    %p53 = scmp.eq.s32.totalorder %s22, 3
    %p54 = por %p52, %p53
    %p55 = scmp.ne.s32.totalorder %s44, %s45
    %p56 = scmp.eq.s32.totalorder %s22, 0
    %p57 = por %p55, %p56
    %p58 = scmp.ne.s32.totalorder %s44, %s45
    %p59 = scmp.eq.s32.totalorder %s23, 3
    %p60 = por %p58, %p59
    %p62 = scmp.ne.s32.totalorder %s45, %s61
    %p63 = scmp.eq.s32.totalorder %s23, 0
    %p64 = por %p62, %p63
    %s65 = ssub.s32 %s24, %s36
    %p66 = scmp.eq.s32.totalorder %s65, 0
    %s68 = sadd.s32 %s67, 1
    %s69 = scalar_select %p66, %s67, %s68
    %p72 = pneg %p66
    %p73 = scmp.eq.s32.totalorder %s17, 3
    %p74 = por %p72, %p73
    %p75 = scmp.ne.s32.totalorder %s67, %s70
    %p76 = scmp.eq.s32.totalorder %s17, 0
    %p77 = por %p75, %p76
    %p78 = scmp.ne.s32.totalorder %s67, %s70
    %p79 = scmp.eq.s32.totalorder %s22, 3
    %p80 = por %p78, %p79
    %p81 = scmp.ne.s32.totalorder %s70, %s71
    %p82 = scmp.eq.s32.totalorder %s22, 0
    %p83 = por %p81, %p82
    %p84 = scmp.ne.s32.totalorder %s70, %s71
    %p85 = scmp.eq.s32.totalorder %s23, 3
    %p86 = por %p84, %p85
    %p88 = scmp.ne.s32.totalorder %s71, %s87
    %p89 = scmp.eq.s32.totalorder %s23, 0
    %p90 = por %p88, %p89
    %s92 = sadd.s32 %s91, 1
    %p95 = scmp.eq.s32.totalorder %s17, 3
    %p96 = scmp.ne.s32.totalorder %s91, %s93
    %p97 = scmp.eq.s32.totalorder %s17, 0
    %p98 = por %p96, %p97
    %p99 = scmp.ne.s32.totalorder %s91, %s93
    %p100 = scmp.eq.s32.totalorder %s22, 3
    %p101 = por %p99, %p100
    %p102 = scmp.ne.s32.totalorder %s93, %s94
    %p103 = scmp.eq.s32.totalorder %s22, 0
    %p104 = por %p102, %p103
    %p105 = scmp.ne.s32.totalorder %s93, %s94
    %p106 = scmp.eq.s32.totalorder %s23, 3
    %p107 = por %p105, %p106
    %p109 = scmp.ne.s32.totalorder %s94, %s108
    %p110 = scmp.eq.s32.totalorder %s23, 0
    %p111 = por %p109, %p110
    %s113 = sadd.s32 %s112, 1
    %p116 = scmp.eq.s32.totalorder %s17, 3
    %p117 = scmp.ne.s32.totalorder %s112, %s114
    %p118 = scmp.eq.s32.totalorder %s17, 0
    %p119 = por %p117, %p118
    %p120 = scmp.ne.s32.totalorder %s112, %s114
    %p121 = scmp.eq.s32.totalorder %s22, 3
    %p122 = por %p120, %p121
    %p123 = scmp.ne.s32.totalorder %s114, %s115
    %p124 = scmp.eq.s32.totalorder %s22, 0
    %p125 = por %p123, %p124
    %p126 = scmp.ne.s32.totalorder %s114, %s115
    %p127 = scmp.eq.s32.totalorder %s23, 3
    %p128 = por %p126, %p127
    %p130 = scmp.ne.s32.totalorder %s115, %s129
    %p131 = scmp.eq.s32.totalorder %s23, 0
    %p132 = por %p130, %p131
    %s134 = sadd.s32 %s133, 1
    %p137 = scmp.eq.s32.totalorder %s17, 3
    %p138 = scmp.ne.s32.totalorder %s133, %s135
    %p139 = scmp.eq.s32.totalorder %s17, 0
    %p140 = por %p138, %p139
    %p141 = scmp.ne.s32.totalorder %s133, %s135
    %p142 = scmp.eq.s32.totalorder %s22, 3
    %p143 = por %p141, %p142
    %p144 = scmp.ne.s32.totalorder %s135, %s136
    %p145 = scmp.eq.s32.totalorder %s22, 0
    %p146 = por %p144, %p145
    %p147 = scmp.ne.s32.totalorder %s135, %s136
    %p148 = scmp.eq.s32.totalorder %s23, 3
    %p149 = por %p147, %p148
    %p151 = scmp.ne.s32.totalorder %s136, %s150
    %p152 = scmp.eq.s32.totalorder %s23, 0
    %p153 = por %p151, %p152
    %s155 = sadd.s32 %s154, 1
    %p158 = scmp.eq.s32.totalorder %s17, 3
    %p159 = scmp.ne.s32.totalorder %s154, %s156
    %p160 = scmp.eq.s32.totalorder %s17, 0
    %p161 = por %p159, %p160
    %p162 = scmp.ne.s32.totalorder %s154, %s156
    %p163 = scmp.eq.s32.totalorder %s22, 3
    %p164 = por %p162, %p163
    %p165 = scmp.ne.s32.totalorder %s156, %s157
    %p166 = scmp.eq.s32.totalorder %s22, 0
    %p167 = por %p165, %p166
    %p168 = scmp.ne.s32.totalorder %s156, %s157
    %p169 = scmp.eq.s32.totalorder %s23, 3
    %p170 = por %p168, %p169
    %p172 = scmp.ne.s32.totalorder %s157, %s171
    %p173 = scmp.eq.s32.totalorder %s23, 0
    %p174 = por %p172, %p173
    %s176 = sadd.s32 %s175, 1
    %p179 = scmp.eq.s32.totalorder %s17, 3
    %p180 = scmp.ne.s32.totalorder %s175, %s177
    %p181 = scmp.eq.s32.totalorder %s17, 0
    %p182 = por %p180, %p181
    %p183 = scmp.ne.s32.totalorder %s175, %s177
    %p184 = scmp.eq.s32.totalorder %s22, 3
    %p185 = por %p183, %p184
    %p186 = scmp.ne.s32.totalorder %s177, %s178
    %p187 = scmp.eq.s32.totalorder %s22, 0
    %p188 = por %p186, %p187
    %p189 = scmp.ne.s32.totalorder %s177, %s178
    %p190 = scmp.eq.s32.totalorder %s23, 3
    %p191 = por %p189, %p190
    %p193 = scmp.ne.s32.totalorder %s178, %s192
    %p194 = scmp.eq.s32.totalorder %s23, 0
    %p195 = por %p193, %p194
    %s197 = sadd.s32 %s196, 1
    %p200 = scmp.eq.s32.totalorder %s17, 3
    %p201 = scmp.ne.s32.totalorder %s196, %s198
    %p202 = scmp.eq.s32.totalorder %s17, 0
    %p203 = por %p201, %p202
    %p204 = scmp.ne.s32.totalorder %s196, %s198
    %p205 = scmp.eq.s32.totalorder %s22, 3
    %p206 = por %p204, %p205
    %p207 = scmp.ne.s32.totalorder %s198, %s199
    %p208 = scmp.eq.s32.totalorder %s22, 0
    %p209 = por %p207, %p208
    %p210 = scmp.ne.s32.totalorder %s198, %s199
    %p211 = scmp.eq.s32.totalorder %s23, 3
    %p212 = por %p210, %p211
    %p214 = scmp.ne.s32.totalorder %s199, %s213
    %p215 = scmp.eq.s32.totalorder %s23, 0
    %p216 = por %p214, %p215
    %s218 = sadd.s32 %s217, 1
    %p221 = scmp.eq.s32.totalorder %s17, 3
    %p222 = scmp.ne.s32.totalorder %s217, %s219
    %p223 = scmp.eq.s32.totalorder %s17, 0
    %p224 = por %p222, %p223
    %p225 = scmp.ne.s32.totalorder %s217, %s219
    %p226 = scmp.eq.s32.totalorder %s22, 3
    %p227 = por %p225, %p226
    %p228 = scmp.ne.s32.totalorder %s219, %s220
    %p229 = scmp.eq.s32.totalorder %s22, 0
    %p230 = por %p228, %p229
    %p231 = scmp.ne.s32.totalorder %s219, %s220
    %p232 = scmp.eq.s32.totalorder %s23, 3
    %p233 = por %p231, %p232
    %p235 = scmp.ne.s32.totalorder %s220, %s234
    %p236 = scmp.eq.s32.totalorder %s23, 0
    %p237 = por %p235, %p236
    %s238 = ssub.s32 %s24, %s36
    %s239 = ssub.s32 %s25, %s32
    %s240 = sor.u32 %s238, %s239
    %p241 = scmp.eq.s32.totalorder %s240, 0
    %s243 = sadd.s32 %s242, 1
    %s244 = scalar_select %p241, %s242, %s243
    %p247 = pneg %p241
    %p248 = scmp.eq.s32.totalorder %s17, 3
    %p249 = por %p247, %p248
    %p250 = scmp.ne.s32.totalorder %s242, %s245
    %p251 = scmp.eq.s32.totalorder %s17, 0
    %p252 = por %p250, %p251
    %p253 = scmp.ne.s32.totalorder %s242, %s245
    %p254 = scmp.eq.s32.totalorder %s22, 3
    %p255 = por %p253, %p254
    %p256 = scmp.ne.s32.totalorder %s245, %s246
    %p257 = scmp.eq.s32.totalorder %s22, 0
    %p258 = por %p256, %p257
    %p259 = scmp.ne.s32.totalorder %s245, %s246
    %p260 = scmp.eq.s32.totalorder %s23, 3
    %p261 = por %p259, %p260
    %p263 = scmp.ne.s32.totalorder %s246, %s262
    %p264 = scmp.eq.s32.totalorder %s23, 0
    %p265 = por %p263, %p264
    %p266 = scmp.le.s32.totalorder 1, %s17
    %p267 = scmp.lt.s32.totalorder %s17, 5
    %p268 = pnand %p266, %p267
    %p269 = pneg %p268
    // Predicated region
    $region9: #{decoder_forward.1} parent=5 // pred_check
      _
    $region10: #{decoder_forward.1} parent=5 // pred_check_branch
      %271 = sbr.rel (%p268) target = $region12
    $region11: #{decoder_forward.1} parent=5 // pred_region
      %s272 = ssub.s32 %s17, 1
      // Predicated region
      $region13: #{decoder_forward.1} parent=11 // pred_check
        %p273 = pneg %p104
      $region14: #{decoder_forward.1} parent=11 // pred_check_branch
        %275 = sbr.rel (%p273) target = $region16
      $region15: #{decoder_forward.1} parent=11 // pred_region
        _
      $region16: #{decoder_forward.1} parent=11 // pred_fallthru
        _
      // Predicated region
      $region17: #{decoder_forward.1} parent=11 // pred_check
        %p276 = pneg %p125
      $region18: #{decoder_forward.1} parent=11 // pred_check_branch
        %278 = sbr.rel (%p276) target = $region20
      $region19: #{decoder_forward.1} parent=11 // pred_region
        _
      $region20: #{decoder_forward.1} parent=11 // pred_fallthru
        _
      // Predicated region
      $region21: #{decoder_forward.1} parent=11 // pred_check
        %p279 = pneg %p146
      $region22: #{decoder_forward.1} parent=11 // pred_check_branch
        %281 = sbr.rel (%p279) target = $region24
      $region23: #{decoder_forward.1} parent=11 // pred_region
        _
      $region24: #{decoder_forward.1} parent=11 // pred_fallthru
        _
      // Predicated region
      $region25: #{decoder_forward.1} parent=11 // pred_check
        %p282 = pneg %p167
      $region26: #{decoder_forward.1} parent=11 // pred_check_branch
        %284 = sbr.rel (%p282) target = $region28
      $region27: #{decoder_forward.1} parent=11 // pred_region
        _
      $region28: #{decoder_forward.1} parent=11 // pred_fallthru
        _
      // Predicated region
      $region29: #{decoder_forward.1} parent=11 // pred_check
        %p285 = pneg %p188
      $region30: #{decoder_forward.1} parent=11 // pred_check_branch
        %287 = sbr.rel (%p285) target = $region32
      $region31: #{decoder_forward.1} parent=11 // pred_region
        _
      $region32: #{decoder_forward.1} parent=11 // pred_fallthru
        _
      // Predicated region
      $region33: #{decoder_forward.1} parent=11 // pred_check
        %p288 = pneg %p209
      $region34: #{decoder_forward.1} parent=11 // pred_check_branch
        %290 = sbr.rel (%p288) target = $region36
      $region35: #{decoder_forward.1} parent=11 // pred_region
        _
      $region36: #{decoder_forward.1} parent=11 // pred_fallthru
        _
      // Predicated region
      $region37: #{decoder_forward.1} parent=11 // pred_check
        %p291 = pneg %p230
      $region38: #{decoder_forward.1} parent=11 // pred_check_branch
        %293 = sbr.rel (%p291) target = $region40
      $region39: #{decoder_forward.1} parent=11 // pred_region
        _
      $region40: #{decoder_forward.1} parent=11 // pred_fallthru
        _
    $region12: #{decoder_forward.1} parent=5 // pred_fallthru
      _
    %p294 = scmp.lt.s32.totalorder %s17, 4
    // Predicated region
    $region41: #{decoder_forward.1} parent=5 // pred_check
      %p295 = pneg %p294
    $region42: #{decoder_forward.1} parent=5 // pred_check_branch
      %297 = sbr.rel (%p295) target = $region44
    $region43: #{decoder_forward.1} parent=5 // pred_region
      // Predicated region
      $region45: #{decoder_forward.1} parent=43 // pred_check
        %p298 = pneg %p51
      $region46: #{decoder_forward.1} parent=43 // pred_check_branch
        %300 = sbr.rel (%p298) target = $region48
      $region47: #{decoder_forward.1} parent=43 // pred_region
        %s301 = smul.u32 4, %s25
        %p302 = scmp.lt.s32.totalorder %s24, 1
        %s303 = scalar_select %p302, %s24, 1
        %p304 = scmp.lt.s32.totalorder %s301, 7
        %s305 = scalar_select %p304, %s301, 7
        %s306 = smul.addr %s303, 8
        %s307 = sadd.s32 %s305, %s306
        %s308 = smul.addr %s307, 4
        %s309 = scalar_lea.vmem %s0, %s308
        %s310 = smul.u32 4, %s25
      $region48: #{decoder_forward.1} parent=43 // pred_fallthru
        _
      // Predicated region
      $region49: #{decoder_forward.1} parent=43 // pred_check
        %p311 = pneg %p77
      $region50: #{decoder_forward.1} parent=43 // pred_check_branch
        %313 = sbr.rel (%p311) target = $region52
      $region51: #{decoder_forward.1} parent=43 // pred_region
        %p314 = scmp.lt.s32.totalorder %s24, 1
        %s315 = scalar_select %p314, %s24, 1
        %s316 = smul.addr %s315, 16
        %s317 = smul.addr %s316, 8
        %s318 = scalar_lea.vmem %s1, %s317
      $region52: #{decoder_forward.1} parent=43 // pred_fallthru
        _
    $region44: #{decoder_forward.1} parent=5 // pred_fallthru
      _
    %p319 = scmp.le.s32.totalorder 1, %s17
    %p320 = scmp.lt.s32.totalorder %s17, 5
    %p321 = pnand %p319, %p320
    %p322 = pneg %p321
    // Predicated region
    $region53: #{decoder_forward.1} parent=5 // pred_check
      _
    $region54: #{decoder_forward.1} parent=5 // pred_check_branch
      %324 = sbr.rel (%p321) target = $region56
    $region55: #{decoder_forward.1} parent=5 // pred_region
      %s325 = ssub.s32 %s17, 1
      %s326 = smul.u32 4, %s27
      %p327 = scmp.lt.s32.totalorder %s26, 1
      %s328 = scalar_select %p327, %s26, 1
      %p329 = scmp.lt.s32.totalorder %s326, 7
      %s330 = scalar_select %p329, %s326, 7
      %s331 = smul.addr %s328, 8
      %s332 = sadd.s32 %s330, %s331
      %s333 = smul.addr %s332, 4
      %s334 = scalar_lea.vmem %s0, %s333
      %p335 = pneg %p57
      %p336 = pneg %p54
      %p337 = scmp.lt.s32.totalorder %s26, 1
      %s338 = scalar_select %p337, %s26, 1
      %s339 = smul.addr %s338, 16
      %s340 = smul.addr %s339, 8
      %s341 = scalar_lea.vmem %s1, %s340
      %p342 = pneg %p83
      %p343 = pneg %p80
      %p344 = pneg %p104
      %p345 = pneg %p101
      %p346 = pneg %p125
      %p347 = pneg %p122
      %p348 = pneg %p146
      %p349 = pneg %p143
      %p350 = pneg %p167
      %p351 = pneg %p164
      %p352 = pneg %p188
      %p353 = pneg %p185
      %p354 = pneg %p209
      %p355 = pneg %p206
      %p356 = pneg %p230
      %p357 = pneg %p227
      %p358 = pneg %p258
      %p359 = pneg %p255
      %s360 = smul.u32 4, %s27
      %p361 = scmp.lt.s32.totalorder %s26, 1
      %s362 = scalar_select %p361, %s26, 1
      %p363 = scmp.lt.s32.totalorder %s360, 7
      %s364 = scalar_select %p363, %s360, 7
      %s365 = smul.addr %s362, 8
      %s366 = sadd.s32 %s364, %s365
      %s367 = scalar_lea.vmem %s9, %s366
      %s368 = smul.u32 4, %s27
      %p369 = scmp.lt.s32.totalorder %s26, 1
      %s370 = scalar_select %p369, %s26, 1
      %p371 = scmp.lt.s32.totalorder %s368, 7
      %s372 = scalar_select %p371, %s368, 7
      %s373 = smul.addr %s370, 8
      %s374 = sadd.s32 %s372, %s373
      %s375 = smul.addr %s374, 4
      %s376 = scalar_lea.vmem %s0, %s375
      %s377 = smul.u32 4, %s27
      %p378 = scmp.lt.s32.totalorder %s26, 1
      %s379 = scalar_select %p378, %s26, 1
      %s380 = smul.addr %s379, 16
      %s381 = smul.addr %s380, 8
      %s382 = scalar_lea.vmem %s1, %s381
      %s383 = smul.u32 4, %s27
      %p384 = scmp.lt.s32.totalorder %s26, 1
      %s385 = scalar_select %p384, %s26, 1
      %p386 = scmp.lt.s32.totalorder %s383, 7
      %s387 = scalar_select %p386, %s383, 7
      %s388 = smul.addr %s385, 8
      %s389 = sadd.s32 %s387, %s388
      %s390 = scalar_lea.vmem %s9, %s389
      %s391 = smul.u32 4, %s27
      %v393 = vld [vmem:[%s376] sm:$0x77]
      %v394 = vld [vmem:[%s376 + $0x8] sm:$0x77]
      %v395 = vld [vmem:[%s2] sm:$0xff]
      %v396 = vld [vmem:[%s2 + $0x8] sm:$0xff]
      %v397 = vld [vmem:[%s2 + $0x10] sm:$0xff]
      %v398 = vld [vmem:[%s2 + $0x18] sm:$0xff]
      %v399 = vld [vmem:[%s2 + $0x20] sm:$0xff]
      %v400 = vld [vmem:[%s2 + $0x28] sm:$0xff]
      %v401 = vld [vmem:[%s2 + $0x30] sm:$0xff]
      %v402 = vld [vmem:[%s2 + $0x38] sm:$0xff]
      %v403 = vld [vmem:[%s2 + $0x40] sm:$0xff]
      %v404 = vld [vmem:[%s2 + $0x48] sm:$0xff]
      %v405 = vld [vmem:[%s2 + $0x50] sm:$0xff]
      %v406 = vld [vmem:[%s2 + $0x58] sm:$0xff]
      %v407 = vld [vmem:[%s2 + $0x60] sm:$0xff]
      %v408 = vld [vmem:[%s2 + $0x68] sm:$0xff]
      %v409 = vld [vmem:[%s2 + $0x70] sm:$0xff]
      %v410 = vld [vmem:[%s2 + $0x78] sm:$0xff]
      %412 = vset.pattern.permute.xlu0 0
      %413 = vperm.xlu0 %412, %v395
      %v414 = vpop.permute.xlu0 %413
      %417 = vset.pattern.permute.xlu0 0
      %418 = vperm.xlu0 %417, %v396
      %v419 = vpop.permute.xlu0 %418
      %422 = vset.pattern.permute.xlu0 0
      %423 = vperm.xlu0 %422, %v397
      %v424 = vpop.permute.xlu0 %423
      %427 = vset.pattern.permute.xlu0 0
      %428 = vperm.xlu0 %427, %v398
      %v429 = vpop.permute.xlu0 %428
      %432 = vset.pattern.permute.xlu0 0
      %433 = vperm.xlu0 %432, %v399
      %v434 = vpop.permute.xlu0 %433
      %437 = vset.pattern.permute.xlu0 0
      %438 = vperm.xlu0 %437, %v400
      %v439 = vpop.permute.xlu0 %438
      %442 = vset.pattern.permute.xlu0 0
      %443 = vperm.xlu0 %442, %v401
      %v444 = vpop.permute.xlu0 %443
      %447 = vset.pattern.permute.xlu0 0
      %448 = vperm.xlu0 %447, %v402
      %v449 = vpop.permute.xlu0 %448
      %452 = vset.pattern.permute.xlu0 0
      %453 = vperm.xlu0 %452, %v403
      %v454 = vpop.permute.xlu0 %453
      %457 = vset.pattern.permute.xlu0 0
      %458 = vperm.xlu0 %457, %v404
      %v459 = vpop.permute.xlu0 %458
      %462 = vset.pattern.permute.xlu0 0
      %463 = vperm.xlu0 %462, %v405
      %v464 = vpop.permute.xlu0 %463
      %467 = vset.pattern.permute.xlu0 0
      %468 = vperm.xlu0 %467, %v406
      %v469 = vpop.permute.xlu0 %468
      %472 = vset.pattern.permute.xlu0 0
      %473 = vperm.xlu0 %472, %v407
      %v474 = vpop.permute.xlu0 %473
      %477 = vset.pattern.permute.xlu0 0
      %478 = vperm.xlu0 %477, %v408
      %v479 = vpop.permute.xlu0 %478
      %482 = vset.pattern.permute.xlu0 0
      %483 = vperm.xlu0 %482, %v409
      %v484 = vpop.permute.xlu0 %483
      %487 = vset.pattern.permute.xlu0 0
      %488 = vperm.xlu0 %487, %v410
      %v489 = vpop.permute.xlu0 %488
      %v493 = vlaneseq
      %v494 = vshrl.u32 %v493, 7
      %v495 = vsub.s32 0, %v494
      %v496 = vrot.slane %v393, %v495
      %v497 = vlaneseq
      %v498 = vshrl.u32 %v497, 7
      %v499 = vsub.s32 4, %v498
      %v500 = vrot.slane %v393, %v499
      %v501 = vlaneseq
      %v502 = vshrl.u32 %v501, 7
      %v503 = vsub.s32 0, %v502
      %v504 = vrot.slane %v394, %v503
      %v505 = vlaneseq
      %v506 = vshrl.u32 %v505, 7
      %v507 = vsub.s32 4, %v506
      %v508 = vrot.slane %v394, %v507
      %v513 = vlaneseq
      %v514 = vshrl.u32 %v513, 7
      %v515 = vsub.s32 0, %v514
      %v516 = vrot.slane %v496, %v515
      %v517 = vlaneseq
      %v518 = vshrl.u32 %v517, 7
      %v519 = vsub.s32 0, %v518
      %v520 = vrot.slane %v500, %v519
      %v521 = vlaneseq
      %v522 = vshrl.u32 %v521, 7
      %v523 = vsub.s32 0, %v522
      %v524 = vrot.slane %v504, %v523
      %v525 = vlaneseq
      %v526 = vshrl.u32 %v525, 7
      %v527 = vsub.s32 0, %v526
      %v528 = vrot.slane %v508, %v527
      %v529 = vmul.f32 %v414, %v516
      %v530 = vmul.f32 %v414, %v520
      %v531 = vmul.f32 %v414, %v524
      %v532 = vmul.f32 %v414, %v528
      %v533 = vmul.f32 %v419, %v516
      %v534 = vmul.f32 %v419, %v520
      %v535 = vmul.f32 %v419, %v524
      %v536 = vmul.f32 %v419, %v528
      %v537 = vmul.f32 %v424, %v516
      %v538 = vmul.f32 %v424, %v520
      %v539 = vmul.f32 %v424, %v524
      %v540 = vmul.f32 %v424, %v528
      %v541 = vmul.f32 %v429, %v516
      %v542 = vmul.f32 %v429, %v520
      %v543 = vmul.f32 %v429, %v524
      %v544 = vmul.f32 %v429, %v528
      %v545 = vmul.f32 %v434, %v516
      %v546 = vmul.f32 %v434, %v520
      %v547 = vmul.f32 %v434, %v524
      %v548 = vmul.f32 %v434, %v528
      %v549 = vmul.f32 %v439, %v516
      %v550 = vmul.f32 %v439, %v520
      %v551 = vmul.f32 %v439, %v524
      %v552 = vmul.f32 %v439, %v528
      %v553 = vmul.f32 %v444, %v516
      %v554 = vmul.f32 %v444, %v520
      %v555 = vmul.f32 %v444, %v524
      %v556 = vmul.f32 %v444, %v528
      %v557 = vmul.f32 %v449, %v516
      %v558 = vmul.f32 %v449, %v520
      %v559 = vmul.f32 %v449, %v524
      %v560 = vmul.f32 %v449, %v528
      %v561 = vmul.f32 %v454, %v516
      %v562 = vmul.f32 %v454, %v520
      %v563 = vmul.f32 %v454, %v524
      %v564 = vmul.f32 %v454, %v528
      %v565 = vmul.f32 %v459, %v516
      %v566 = vmul.f32 %v459, %v520
      %v567 = vmul.f32 %v459, %v524
      %v568 = vmul.f32 %v459, %v528
      %v569 = vmul.f32 %v464, %v516
      %v570 = vmul.f32 %v464, %v520
      %v571 = vmul.f32 %v464, %v524
      %v572 = vmul.f32 %v464, %v528
      %v573 = vmul.f32 %v469, %v516
      %v574 = vmul.f32 %v469, %v520
      %v575 = vmul.f32 %v469, %v524
      %v576 = vmul.f32 %v469, %v528
      %v577 = vmul.f32 %v474, %v516
      %v578 = vmul.f32 %v474, %v520
      %v579 = vmul.f32 %v474, %v524
      %v580 = vmul.f32 %v474, %v528
      %v581 = vmul.f32 %v479, %v516
      %v582 = vmul.f32 %v479, %v520
      %v583 = vmul.f32 %v479, %v524
      %v584 = vmul.f32 %v479, %v528
      %v585 = vmul.f32 %v484, %v516
      %v586 = vmul.f32 %v484, %v520
      %v587 = vmul.f32 %v484, %v524
      %v588 = vmul.f32 %v484, %v528
      %v589 = vmul.f32 %v489, %v516
      %v590 = vmul.f32 %v489, %v520
      %v591 = vmul.f32 %v489, %v524
      %v592 = vmul.f32 %v489, %v528
      %593 = vset.pattern.permute.xlu0 1
      %594 = vperm.xlu0 %593, %v395
      %v595 = vpop.permute.xlu0 %594
      %597 = vset.pattern.permute.xlu0 1
      %598 = vperm.xlu0 %597, %v396
      %v599 = vpop.permute.xlu0 %598
      %601 = vset.pattern.permute.xlu0 1
      %602 = vperm.xlu0 %601, %v397
      %v603 = vpop.permute.xlu0 %602
      %605 = vset.pattern.permute.xlu0 1
      %606 = vperm.xlu0 %605, %v398
      %v607 = vpop.permute.xlu0 %606
      %609 = vset.pattern.permute.xlu0 1
      %610 = vperm.xlu0 %609, %v399
      %v611 = vpop.permute.xlu0 %610
      %613 = vset.pattern.permute.xlu0 1
      %614 = vperm.xlu0 %613, %v400
      %v615 = vpop.permute.xlu0 %614
      %617 = vset.pattern.permute.xlu0 1
      %618 = vperm.xlu0 %617, %v401
      %v619 = vpop.permute.xlu0 %618
      %621 = vset.pattern.permute.xlu0 1
      %622 = vperm.xlu0 %621, %v402
      %v623 = vpop.permute.xlu0 %622
      %625 = vset.pattern.permute.xlu0 1
      %626 = vperm.xlu0 %625, %v403
      %v627 = vpop.permute.xlu0 %626
      %629 = vset.pattern.permute.xlu0 1
      %630 = vperm.xlu0 %629, %v404
      %v631 = vpop.permute.xlu0 %630
      %633 = vset.pattern.permute.xlu0 1
      %634 = vperm.xlu0 %633, %v405
      %v635 = vpop.permute.xlu0 %634
      %637 = vset.pattern.permute.xlu0 1
      %638 = vperm.xlu0 %637, %v406
      %v639 = vpop.permute.xlu0 %638
      %641 = vset.pattern.permute.xlu0 1
      %642 = vperm.xlu0 %641, %v407
      %v643 = vpop.permute.xlu0 %642
      %645 = vset.pattern.permute.xlu0 1
      %646 = vperm.xlu0 %645, %v408
      %v647 = vpop.permute.xlu0 %646
      %649 = vset.pattern.permute.xlu0 1
      %650 = vperm.xlu0 %649, %v409
      %v651 = vpop.permute.xlu0 %650
      %653 = vset.pattern.permute.xlu0 1
      %654 = vperm.xlu0 %653, %v410
      %v655 = vpop.permute.xlu0 %654
      %v657 = vlaneseq
      %v658 = vshrl.u32 %v657, 7
      %v659 = vsub.s32 1, %v658
      %v660 = vrot.slane %v393, %v659
      %v661 = vlaneseq
      %v662 = vshrl.u32 %v661, 7
      %v663 = vsub.s32 5, %v662
      %v664 = vrot.slane %v393, %v663
      %v665 = vlaneseq
      %v666 = vshrl.u32 %v665, 7
      %v667 = vsub.s32 1, %v666
      %v668 = vrot.slane %v394, %v667
      %v669 = vlaneseq
      %v670 = vshrl.u32 %v669, 7
      %v671 = vsub.s32 5, %v670
      %v672 = vrot.slane %v394, %v671
      %v677 = vlaneseq
      %v678 = vshrl.u32 %v677, 7
      %v679 = vsub.s32 1, %v678
      %v680 = vrot.slane %v660, %v679
      %v681 = vlaneseq
      %v682 = vshrl.u32 %v681, 7
      %v683 = vsub.s32 1, %v682
      %v684 = vrot.slane %v664, %v683
      %v685 = vlaneseq
      %v686 = vshrl.u32 %v685, 7
      %v687 = vsub.s32 1, %v686
      %v688 = vrot.slane %v668, %v687
      %v689 = vlaneseq
      %v690 = vshrl.u32 %v689, 7
      %v691 = vsub.s32 1, %v690
      %v692 = vrot.slane %v672, %v691
      %v693 = vmul.f32 %v595, %v680
      %v694 = vmul.f32 %v595, %v684
      %v695 = vmul.f32 %v595, %v688
      %v696 = vmul.f32 %v595, %v692
      %v697 = vmul.f32 %v599, %v680
      %v698 = vmul.f32 %v599, %v684
      %v699 = vmul.f32 %v599, %v688
      %v700 = vmul.f32 %v599, %v692
      %v701 = vmul.f32 %v603, %v680
      %v702 = vmul.f32 %v603, %v684
      %v703 = vmul.f32 %v603, %v688
      %v704 = vmul.f32 %v603, %v692
      %v705 = vmul.f32 %v607, %v680
      %v706 = vmul.f32 %v607, %v684
      %v707 = vmul.f32 %v607, %v688
      %v708 = vmul.f32 %v607, %v692
      %v709 = vmul.f32 %v611, %v680
      %v710 = vmul.f32 %v611, %v684
      %v711 = vmul.f32 %v611, %v688
      %v712 = vmul.f32 %v611, %v692
      %v713 = vmul.f32 %v615, %v680
      %v714 = vmul.f32 %v615, %v684
      %v715 = vmul.f32 %v615, %v688
      %v716 = vmul.f32 %v615, %v692
      %v717 = vmul.f32 %v619, %v680
      %v718 = vmul.f32 %v619, %v684
      %v719 = vmul.f32 %v619, %v688
      %v720 = vmul.f32 %v619, %v692
      %v721 = vmul.f32 %v623, %v680
      %v722 = vmul.f32 %v623, %v684
      %v723 = vmul.f32 %v623, %v688
      %v724 = vmul.f32 %v623, %v692
      %v725 = vmul.f32 %v627, %v680
      %v726 = vmul.f32 %v627, %v684
      %v727 = vmul.f32 %v627, %v688
      %v728 = vmul.f32 %v627, %v692
      %v729 = vmul.f32 %v631, %v680
      %v730 = vmul.f32 %v631, %v684
      %v731 = vmul.f32 %v631, %v688
      %v732 = vmul.f32 %v631, %v692
      %v733 = vmul.f32 %v635, %v680
      %v734 = vmul.f32 %v635, %v684
      %v735 = vmul.f32 %v635, %v688
      %v736 = vmul.f32 %v635, %v692
      %v737 = vmul.f32 %v639, %v680
      %v738 = vmul.f32 %v639, %v684
      %v739 = vmul.f32 %v639, %v688
      %v740 = vmul.f32 %v639, %v692
      %v741 = vmul.f32 %v643, %v680
      %v742 = vmul.f32 %v643, %v684
      %v743 = vmul.f32 %v643, %v688
      %v744 = vmul.f32 %v643, %v692
      %v745 = vmul.f32 %v647, %v680
      %v746 = vmul.f32 %v647, %v684
      %v747 = vmul.f32 %v647, %v688
      %v748 = vmul.f32 %v647, %v692
      %v749 = vmul.f32 %v651, %v680
      %v750 = vmul.f32 %v651, %v684
      %v751 = vmul.f32 %v651, %v688
      %v752 = vmul.f32 %v651, %v692
      %v753 = vmul.f32 %v655, %v680
      %v754 = vmul.f32 %v655, %v684
      %v755 = vmul.f32 %v655, %v688
      %v756 = vmul.f32 %v655, %v692
      %v757 = vadd.f32 %v529, %v693
      %v758 = vadd.f32 %v530, %v694
      %v759 = vadd.f32 %v531, %v695
      %v760 = vadd.f32 %v532, %v696
      %v761 = vadd.f32 %v533, %v697
      %v762 = vadd.f32 %v534, %v698
      %v763 = vadd.f32 %v535, %v699
      %v764 = vadd.f32 %v536, %v700
      %v765 = vadd.f32 %v537, %v701
      %v766 = vadd.f32 %v538, %v702
      %v767 = vadd.f32 %v539, %v703
      %v768 = vadd.f32 %v540, %v704
      %v769 = vadd.f32 %v541, %v705
      %v770 = vadd.f32 %v542, %v706
      %v771 = vadd.f32 %v543, %v707
      %v772 = vadd.f32 %v544, %v708
      %v773 = vadd.f32 %v545, %v709
      %v774 = vadd.f32 %v546, %v710
      %v775 = vadd.f32 %v547, %v711
      %v776 = vadd.f32 %v548, %v712
      %v777 = vadd.f32 %v549, %v713
      %v778 = vadd.f32 %v550, %v714
      %v779 = vadd.f32 %v551, %v715
      %v780 = vadd.f32 %v552, %v716
      %v781 = vadd.f32 %v553, %v717
      %v782 = vadd.f32 %v554, %v718
      %v783 = vadd.f32 %v555, %v719
      %v784 = vadd.f32 %v556, %v720
      %v785 = vadd.f32 %v557, %v721
      %v786 = vadd.f32 %v558, %v722
      %v787 = vadd.f32 %v559, %v723
      %v788 = vadd.f32 %v560, %v724
      %v789 = vadd.f32 %v561, %v725
      %v790 = vadd.f32 %v562, %v726
      %v791 = vadd.f32 %v563, %v727
      %v792 = vadd.f32 %v564, %v728
      %v793 = vadd.f32 %v565, %v729
      %v794 = vadd.f32 %v566, %v730
      %v795 = vadd.f32 %v567, %v731
      %v796 = vadd.f32 %v568, %v732
      %v797 = vadd.f32 %v569, %v733
      %v798 = vadd.f32 %v570, %v734
      %v799 = vadd.f32 %v571, %v735
      %v800 = vadd.f32 %v572, %v736
      %v801 = vadd.f32 %v573, %v737
      %v802 = vadd.f32 %v574, %v738
      %v803 = vadd.f32 %v575, %v739
      %v804 = vadd.f32 %v576, %v740
      %v805 = vadd.f32 %v577, %v741
      %v806 = vadd.f32 %v578, %v742
      %v807 = vadd.f32 %v579, %v743
      %v808 = vadd.f32 %v580, %v744
      %v809 = vadd.f32 %v581, %v745
      %v810 = vadd.f32 %v582, %v746
      %v811 = vadd.f32 %v583, %v747
      %v812 = vadd.f32 %v584, %v748
      %v813 = vadd.f32 %v585, %v749
      %v814 = vadd.f32 %v586, %v750
      %v815 = vadd.f32 %v587, %v751
      %v816 = vadd.f32 %v588, %v752
      %v817 = vadd.f32 %v589, %v753
      %v818 = vadd.f32 %v590, %v754
      %v819 = vadd.f32 %v591, %v755
      %v820 = vadd.f32 %v592, %v756
      %821 = vset.pattern.permute.xlu0 2
      %822 = vperm.xlu0 %821, %v395
      %v823 = vpop.permute.xlu0 %822
      %825 = vset.pattern.permute.xlu0 2
      %826 = vperm.xlu0 %825, %v396
      %v827 = vpop.permute.xlu0 %826
      %829 = vset.pattern.permute.xlu0 2
      %830 = vperm.xlu0 %829, %v397
      %v831 = vpop.permute.xlu0 %830
      %833 = vset.pattern.permute.xlu0 2
      %834 = vperm.xlu0 %833, %v398
      %v835 = vpop.permute.xlu0 %834
      %837 = vset.pattern.permute.xlu0 2
      %838 = vperm.xlu0 %837, %v399
      %v839 = vpop.permute.xlu0 %838
      %841 = vset.pattern.permute.xlu0 2
      %842 = vperm.xlu0 %841, %v400
      %v843 = vpop.permute.xlu0 %842
      %845 = vset.pattern.permute.xlu0 2
      %846 = vperm.xlu0 %845, %v401
      %v847 = vpop.permute.xlu0 %846
      %849 = vset.pattern.permute.xlu0 2
      %850 = vperm.xlu0 %849, %v402
      %v851 = vpop.permute.xlu0 %850
      %853 = vset.pattern.permute.xlu0 2
      %854 = vperm.xlu0 %853, %v403
      %v855 = vpop.permute.xlu0 %854
      %857 = vset.pattern.permute.xlu0 2
      %858 = vperm.xlu0 %857, %v404
      %v859 = vpop.permute.xlu0 %858
      %861 = vset.pattern.permute.xlu0 2
      %862 = vperm.xlu0 %861, %v405
      %v863 = vpop.permute.xlu0 %862
      %865 = vset.pattern.permute.xlu0 2
      %866 = vperm.xlu0 %865, %v406
      %v867 = vpop.permute.xlu0 %866
      %869 = vset.pattern.permute.xlu0 2
      %870 = vperm.xlu0 %869, %v407
      %v871 = vpop.permute.xlu0 %870
      %873 = vset.pattern.permute.xlu0 2
      %874 = vperm.xlu0 %873, %v408
      %v875 = vpop.permute.xlu0 %874
      %877 = vset.pattern.permute.xlu0 2
      %878 = vperm.xlu0 %877, %v409
      %v879 = vpop.permute.xlu0 %878
      %881 = vset.pattern.permute.xlu0 2
      %882 = vperm.xlu0 %881, %v410
      %v883 = vpop.permute.xlu0 %882
      %v885 = vlaneseq
      %v886 = vshrl.u32 %v885, 7
      %v887 = vsub.s32 2, %v886
      %v888 = vrot.slane %v393, %v887
      %v889 = vlaneseq
      %v890 = vshrl.u32 %v889, 7
      %v891 = vsub.s32 6, %v890
      %v892 = vrot.slane %v393, %v891
      %v893 = vlaneseq
      %v894 = vshrl.u32 %v893, 7
      %v895 = vsub.s32 2, %v894
      %v896 = vrot.slane %v394, %v895
      %v897 = vlaneseq
      %v898 = vshrl.u32 %v897, 7
      %v899 = vsub.s32 6, %v898
      %v900 = vrot.slane %v394, %v899
      %v905 = vlaneseq
      %v906 = vshrl.u32 %v905, 7
      %v907 = vsub.s32 2, %v906
      %v908 = vrot.slane %v888, %v907
      %v909 = vlaneseq
      %v910 = vshrl.u32 %v909, 7
      %v911 = vsub.s32 2, %v910
      %v912 = vrot.slane %v892, %v911
      %v913 = vlaneseq
      %v914 = vshrl.u32 %v913, 7
      %v915 = vsub.s32 2, %v914
      %v916 = vrot.slane %v896, %v915
      %v917 = vlaneseq
      %v918 = vshrl.u32 %v917, 7
      %v919 = vsub.s32 2, %v918
      %v920 = vrot.slane %v900, %v919
      %v921 = vmul.f32 %v823, %v908
      %v922 = vmul.f32 %v823, %v912
      %v923 = vmul.f32 %v823, %v916
      %v924 = vmul.f32 %v823, %v920
      %v925 = vmul.f32 %v827, %v908
      %v926 = vmul.f32 %v827, %v912
      %v927 = vmul.f32 %v827, %v916
      %v928 = vmul.f32 %v827, %v920
      %v929 = vmul.f32 %v831, %v908
      %v930 = vmul.f32 %v831, %v912
      %v931 = vmul.f32 %v831, %v916
      %v932 = vmul.f32 %v831, %v920
      %v933 = vmul.f32 %v835, %v908
      %v934 = vmul.f32 %v835, %v912
      %v935 = vmul.f32 %v835, %v916
      %v936 = vmul.f32 %v835, %v920
      %v937 = vmul.f32 %v839, %v908
      %v938 = vmul.f32 %v839, %v912
      %v939 = vmul.f32 %v839, %v916
      %v940 = vmul.f32 %v839, %v920
      %v941 = vmul.f32 %v843, %v908
      %v942 = vmul.f32 %v843, %v912
      %v943 = vmul.f32 %v843, %v916
      %v944 = vmul.f32 %v843, %v920
      %v945 = vmul.f32 %v847, %v908
      %v946 = vmul.f32 %v847, %v912
      %v947 = vmul.f32 %v847, %v916
      %v948 = vmul.f32 %v847, %v920
      %v949 = vmul.f32 %v851, %v908
      %v950 = vmul.f32 %v851, %v912
      %v951 = vmul.f32 %v851, %v916
      %v952 = vmul.f32 %v851, %v920
      %v953 = vmul.f32 %v855, %v908
      %v954 = vmul.f32 %v855, %v912
      %v955 = vmul.f32 %v855, %v916
      %v956 = vmul.f32 %v855, %v920
      %v957 = vmul.f32 %v859, %v908
      %v958 = vmul.f32 %v859, %v912
      %v959 = vmul.f32 %v859, %v916
      %v960 = vmul.f32 %v859, %v920
      %v961 = vmul.f32 %v863, %v908
      %v962 = vmul.f32 %v863, %v912
      %v963 = vmul.f32 %v863, %v916
      %v964 = vmul.f32 %v863, %v920
      %v965 = vmul.f32 %v867, %v908
      %v966 = vmul.f32 %v867, %v912
      %v967 = vmul.f32 %v867, %v916
      %v968 = vmul.f32 %v867, %v920
      %v969 = vmul.f32 %v871, %v908
      %v970 = vmul.f32 %v871, %v912
      %v971 = vmul.f32 %v871, %v916
      %v972 = vmul.f32 %v871, %v920
      %v973 = vmul.f32 %v875, %v908
      %v974 = vmul.f32 %v875, %v912
      %v975 = vmul.f32 %v875, %v916
      %v976 = vmul.f32 %v875, %v920
      %v977 = vmul.f32 %v879, %v908
      %v978 = vmul.f32 %v879, %v912
      %v979 = vmul.f32 %v879, %v916
      %v980 = vmul.f32 %v879, %v920
      %v981 = vmul.f32 %v883, %v908
      %v982 = vmul.f32 %v883, %v912
      %v983 = vmul.f32 %v883, %v916
      %v984 = vmul.f32 %v883, %v920
      %v985 = vadd.f32 %v757, %v921
      %v986 = vadd.f32 %v758, %v922
      %v987 = vadd.f32 %v759, %v923
      %v988 = vadd.f32 %v760, %v924
      %v989 = vadd.f32 %v761, %v925
      %v990 = vadd.f32 %v762, %v926
      %v991 = vadd.f32 %v763, %v927
      %v992 = vadd.f32 %v764, %v928
      %v993 = vadd.f32 %v765, %v929
      %v994 = vadd.f32 %v766, %v930
      %v995 = vadd.f32 %v767, %v931
      %v996 = vadd.f32 %v768, %v932
      %v997 = vadd.f32 %v769, %v933
      %v998 = vadd.f32 %v770, %v934
      %v999 = vadd.f32 %v771, %v935
      %v1000 = vadd.f32 %v772, %v936
      %v1001 = vadd.f32 %v773, %v937
      %v1002 = vadd.f32 %v774, %v938
      %v1003 = vadd.f32 %v775, %v939
      %v1004 = vadd.f32 %v776, %v940
      %v1005 = vadd.f32 %v777, %v941
      %v1006 = vadd.f32 %v778, %v942
      %v1007 = vadd.f32 %v779, %v943
      %v1008 = vadd.f32 %v780, %v944
      %v1009 = vadd.f32 %v781, %v945
      %v1010 = vadd.f32 %v782, %v946
      %v1011 = vadd.f32 %v783, %v947
      %v1012 = vadd.f32 %v784, %v948
      %v1013 = vadd.f32 %v785, %v949
      %v1014 = vadd.f32 %v786, %v950
      %v1015 = vadd.f32 %v787, %v951
      %v1016 = vadd.f32 %v788, %v952
      %v1017 = vadd.f32 %v789, %v953
      %v1018 = vadd.f32 %v790, %v954
      %v1019 = vadd.f32 %v791, %v955
      %v1020 = vadd.f32 %v792, %v956
      %v1021 = vadd.f32 %v793, %v957
      %v1022 = vadd.f32 %v794, %v958
      %v1023 = vadd.f32 %v795, %v959
      %v1024 = vadd.f32 %v796, %v960
      %v1025 = vadd.f32 %v797, %v961
      %v1026 = vadd.f32 %v798, %v962
      %v1027 = vadd.f32 %v799, %v963
      %v1028 = vadd.f32 %v800, %v964
      %v1029 = vadd.f32 %v801, %v965
      %v1030 = vadd.f32 %v802, %v966
      %v1031 = vadd.f32 %v803, %v967
      %v1032 = vadd.f32 %v804, %v968
      %v1033 = vadd.f32 %v805, %v969
      %v1034 = vadd.f32 %v806, %v970
      %v1035 = vadd.f32 %v807, %v971
      %v1036 = vadd.f32 %v808, %v972
      %v1037 = vadd.f32 %v809, %v973
      %v1038 = vadd.f32 %v810, %v974
      %v1039 = vadd.f32 %v811, %v975
      %v1040 = vadd.f32 %v812, %v976
      %v1041 = vadd.f32 %v813, %v977
      %v1042 = vadd.f32 %v814, %v978
      %v1043 = vadd.f32 %v815, %v979
      %v1044 = vadd.f32 %v816, %v980
      %v1045 = vadd.f32 %v817, %v981
      %v1046 = vadd.f32 %v818, %v982
      %v1047 = vadd.f32 %v819, %v983
      %v1048 = vadd.f32 %v820, %v984
      %v1049 = vld [vmem:[%s382] sm:$0xff]
      %v1050 = vld [vmem:[%s382 + $0x8] sm:$0xff]
      %v1051 = vld [vmem:[%s382 + $0x10] sm:$0xff]
      %v1052 = vld [vmem:[%s382 + $0x18] sm:$0xff]
      %v1053 = vld [vmem:[%s382 + $0x20] sm:$0xff]
      %v1054 = vld [vmem:[%s382 + $0x28] sm:$0xff]
      %v1055 = vld [vmem:[%s382 + $0x30] sm:$0xff]
      %v1056 = vld [vmem:[%s382 + $0x38] sm:$0xff]
      %v1057 = vld [vmem:[%s382 + $0x40] sm:$0xff]
      %v1058 = vld [vmem:[%s382 + $0x48] sm:$0xff]
      %v1059 = vld [vmem:[%s382 + $0x50] sm:$0xff]
      %v1060 = vld [vmem:[%s382 + $0x58] sm:$0xff]
      %v1061 = vld [vmem:[%s382 + $0x60] sm:$0xff]
      %v1062 = vld [vmem:[%s382 + $0x68] sm:$0xff]
      %v1063 = vld [vmem:[%s382 + $0x70] sm:$0xff]
      %v1064 = vld [vmem:[%s382 + $0x78] sm:$0xff]
      %1066 = vset.pattern.permute.xlu0 0
      %1067 = vperm.xlu0 %1066, %v1049
      %v1068 = vpop.permute.xlu0 %1067
      %1071 = vset.pattern.permute.xlu0 0
      %1072 = vperm.xlu0 %1071, %v1050
      %v1073 = vpop.permute.xlu0 %1072
      %1076 = vset.pattern.permute.xlu0 0
      %1077 = vperm.xlu0 %1076, %v1051
      %v1078 = vpop.permute.xlu0 %1077
      %1081 = vset.pattern.permute.xlu0 0
      %1082 = vperm.xlu0 %1081, %v1052
      %v1083 = vpop.permute.xlu0 %1082
      %1086 = vset.pattern.permute.xlu0 0
      %1087 = vperm.xlu0 %1086, %v1053
      %v1088 = vpop.permute.xlu0 %1087
      %1091 = vset.pattern.permute.xlu0 0
      %1092 = vperm.xlu0 %1091, %v1054
      %v1093 = vpop.permute.xlu0 %1092
      %1096 = vset.pattern.permute.xlu0 0
      %1097 = vperm.xlu0 %1096, %v1055
      %v1098 = vpop.permute.xlu0 %1097
      %1101 = vset.pattern.permute.xlu0 0
      %1102 = vperm.xlu0 %1101, %v1056
      %v1103 = vpop.permute.xlu0 %1102
      %1106 = vset.pattern.permute.xlu0 0
      %1107 = vperm.xlu0 %1106, %v1057
      %v1108 = vpop.permute.xlu0 %1107
      %1111 = vset.pattern.permute.xlu0 0
      %1112 = vperm.xlu0 %1111, %v1058
      %v1113 = vpop.permute.xlu0 %1112
      %1116 = vset.pattern.permute.xlu0 0
      %1117 = vperm.xlu0 %1116, %v1059
      %v1118 = vpop.permute.xlu0 %1117
      %1121 = vset.pattern.permute.xlu0 0
      %1122 = vperm.xlu0 %1121, %v1060
      %v1123 = vpop.permute.xlu0 %1122
      %1126 = vset.pattern.permute.xlu0 0
      %1127 = vperm.xlu0 %1126, %v1061
      %v1128 = vpop.permute.xlu0 %1127
      %1131 = vset.pattern.permute.xlu0 0
      %1132 = vperm.xlu0 %1131, %v1062
      %v1133 = vpop.permute.xlu0 %1132
      %1136 = vset.pattern.permute.xlu0 0
      %1137 = vperm.xlu0 %1136, %v1063
      %v1138 = vpop.permute.xlu0 %1137
      %1141 = vset.pattern.permute.xlu0 0
      %1142 = vperm.xlu0 %1141, %v1064
      %v1143 = vpop.permute.xlu0 %1142
      %v1145 = vadd.f32 %v985, %v1068
      %v1146 = vadd.f32 %v986, %v1068
      %v1147 = vadd.f32 %v987, %v1068
      %v1148 = vadd.f32 %v988, %v1068
      %v1149 = vadd.f32 %v989, %v1073
      %v1150 = vadd.f32 %v990, %v1073
      %v1151 = vadd.f32 %v991, %v1073
      %v1152 = vadd.f32 %v992, %v1073
      %v1153 = vadd.f32 %v993, %v1078
      %v1154 = vadd.f32 %v994, %v1078
      %v1155 = vadd.f32 %v995, %v1078
      %v1156 = vadd.f32 %v996, %v1078
      %v1157 = vadd.f32 %v997, %v1083
      %v1158 = vadd.f32 %v998, %v1083
      %v1159 = vadd.f32 %v999, %v1083
      %v1160 = vadd.f32 %v1000, %v1083
      %v1161 = vadd.f32 %v1001, %v1088
      %v1162 = vadd.f32 %v1002, %v1088
      %v1163 = vadd.f32 %v1003, %v1088
      %v1164 = vadd.f32 %v1004, %v1088
      %v1165 = vadd.f32 %v1005, %v1093
      %v1166 = vadd.f32 %v1006, %v1093
      %v1167 = vadd.f32 %v1007, %v1093
      %v1168 = vadd.f32 %v1008, %v1093
      %v1169 = vadd.f32 %v1009, %v1098
      %v1170 = vadd.f32 %v1010, %v1098
      %v1171 = vadd.f32 %v1011, %v1098
      %v1172 = vadd.f32 %v1012, %v1098
      %v1173 = vadd.f32 %v1013, %v1103
      %v1174 = vadd.f32 %v1014, %v1103
      %v1175 = vadd.f32 %v1015, %v1103
      %v1176 = vadd.f32 %v1016, %v1103
      %v1177 = vadd.f32 %v1017, %v1108
      %v1178 = vadd.f32 %v1018, %v1108
      %v1179 = vadd.f32 %v1019, %v1108
      %v1180 = vadd.f32 %v1020, %v1108
      %v1181 = vadd.f32 %v1021, %v1113
      %v1182 = vadd.f32 %v1022, %v1113
      %v1183 = vadd.f32 %v1023, %v1113
      %v1184 = vadd.f32 %v1024, %v1113
      %v1185 = vadd.f32 %v1025, %v1118
      %v1186 = vadd.f32 %v1026, %v1118
      %v1187 = vadd.f32 %v1027, %v1118
      %v1188 = vadd.f32 %v1028, %v1118
      %v1189 = vadd.f32 %v1029, %v1123
      %v1190 = vadd.f32 %v1030, %v1123
      %v1191 = vadd.f32 %v1031, %v1123
      %v1192 = vadd.f32 %v1032, %v1123
      %v1193 = vadd.f32 %v1033, %v1128
      %v1194 = vadd.f32 %v1034, %v1128
      %v1195 = vadd.f32 %v1035, %v1128
      %v1196 = vadd.f32 %v1036, %v1128
      %v1197 = vadd.f32 %v1037, %v1133
      %v1198 = vadd.f32 %v1038, %v1133
      %v1199 = vadd.f32 %v1039, %v1133
      %v1200 = vadd.f32 %v1040, %v1133
      %v1201 = vadd.f32 %v1041, %v1138
      %v1202 = vadd.f32 %v1042, %v1138
      %v1203 = vadd.f32 %v1043, %v1138
      %v1204 = vadd.f32 %v1044, %v1138
      %v1205 = vadd.f32 %v1045, %v1143
      %v1206 = vadd.f32 %v1046, %v1143
      %v1207 = vadd.f32 %v1047, %v1143
      %v1208 = vadd.f32 %v1048, %v1143
      %v1209 = vmax.f32 %v1145, 0.0
      %v1210 = vmax.f32 %v1146, 0.0
      %v1211 = vmax.f32 %v1147, 0.0
      %v1212 = vmax.f32 %v1148, 0.0
      %v1213 = vmax.f32 %v1149, 0.0
      %v1214 = vmax.f32 %v1150, 0.0
      %v1215 = vmax.f32 %v1151, 0.0
      %v1216 = vmax.f32 %v1152, 0.0
      %v1217 = vmax.f32 %v1153, 0.0
      %v1218 = vmax.f32 %v1154, 0.0
      %v1219 = vmax.f32 %v1155, 0.0
      %v1220 = vmax.f32 %v1156, 0.0
      %v1221 = vmax.f32 %v1157, 0.0
      %v1222 = vmax.f32 %v1158, 0.0
      %v1223 = vmax.f32 %v1159, 0.0
      %v1224 = vmax.f32 %v1160, 0.0
      %v1225 = vmax.f32 %v1161, 0.0
      %v1226 = vmax.f32 %v1162, 0.0
      %v1227 = vmax.f32 %v1163, 0.0
      %v1228 = vmax.f32 %v1164, 0.0
      %v1229 = vmax.f32 %v1165, 0.0
      %v1230 = vmax.f32 %v1166, 0.0
      %v1231 = vmax.f32 %v1167, 0.0
      %v1232 = vmax.f32 %v1168, 0.0
      %v1233 = vmax.f32 %v1169, 0.0
      %v1234 = vmax.f32 %v1170, 0.0
      %v1235 = vmax.f32 %v1171, 0.0
      %v1236 = vmax.f32 %v1172, 0.0
      %v1237 = vmax.f32 %v1173, 0.0
      %v1238 = vmax.f32 %v1174, 0.0
      %v1239 = vmax.f32 %v1175, 0.0
      %v1240 = vmax.f32 %v1176, 0.0
      %v1241 = vmax.f32 %v1177, 0.0
      %v1242 = vmax.f32 %v1178, 0.0
      %v1243 = vmax.f32 %v1179, 0.0
      %v1244 = vmax.f32 %v1180, 0.0
      %v1245 = vmax.f32 %v1181, 0.0
      %v1246 = vmax.f32 %v1182, 0.0
      %v1247 = vmax.f32 %v1183, 0.0
      %v1248 = vmax.f32 %v1184, 0.0
      %v1249 = vmax.f32 %v1185, 0.0
      %v1250 = vmax.f32 %v1186, 0.0
      %v1251 = vmax.f32 %v1187, 0.0
      %v1252 = vmax.f32 %v1188, 0.0
      %v1253 = vmax.f32 %v1189, 0.0
      %v1254 = vmax.f32 %v1190, 0.0
      %v1255 = vmax.f32 %v1191, 0.0
      %v1256 = vmax.f32 %v1192, 0.0
      %v1257 = vmax.f32 %v1193, 0.0
      %v1258 = vmax.f32 %v1194, 0.0
      %v1259 = vmax.f32 %v1195, 0.0
      %v1260 = vmax.f32 %v1196, 0.0
      %v1261 = vmax.f32 %v1197, 0.0
      %v1262 = vmax.f32 %v1198, 0.0
      %v1263 = vmax.f32 %v1199, 0.0
      %v1264 = vmax.f32 %v1200, 0.0
      %v1265 = vmax.f32 %v1201, 0.0
      %v1266 = vmax.f32 %v1202, 0.0
      %v1267 = vmax.f32 %v1203, 0.0
      %v1268 = vmax.f32 %v1204, 0.0
      %v1269 = vmax.f32 %v1205, 0.0
      %v1270 = vmax.f32 %v1206, 0.0
      %v1271 = vmax.f32 %v1207, 0.0
      %v1272 = vmax.f32 %v1208, 0.0
      %v1273 = vpack.c.bf16 %v1213, %v1209
      %v1274 = vpack.c.bf16 %v1214, %v1210
      %v1275 = vpack.c.bf16 %v1215, %v1211
      %v1276 = vpack.c.bf16 %v1216, %v1212
      %v1277 = vpack.c.bf16 %v1221, %v1217
      %v1278 = vpack.c.bf16 %v1222, %v1218
      %v1279 = vpack.c.bf16 %v1223, %v1219
      %v1280 = vpack.c.bf16 %v1224, %v1220
      %v1281 = vpack.c.bf16 %v1229, %v1225
      %v1282 = vpack.c.bf16 %v1230, %v1226
      %v1283 = vpack.c.bf16 %v1231, %v1227
      %v1284 = vpack.c.bf16 %v1232, %v1228
      %v1285 = vpack.c.bf16 %v1237, %v1233
      %v1286 = vpack.c.bf16 %v1238, %v1234
      %v1287 = vpack.c.bf16 %v1239, %v1235
      %v1288 = vpack.c.bf16 %v1240, %v1236
      %v1289 = vpack.c.bf16 %v1245, %v1241
      %v1290 = vpack.c.bf16 %v1246, %v1242
      %v1291 = vpack.c.bf16 %v1247, %v1243
      %v1292 = vpack.c.bf16 %v1248, %v1244
      %v1293 = vpack.c.bf16 %v1253, %v1249
      %v1294 = vpack.c.bf16 %v1254, %v1250
      %v1295 = vpack.c.bf16 %v1255, %v1251
      %v1296 = vpack.c.bf16 %v1256, %v1252
      %v1297 = vpack.c.bf16 %v1261, %v1257
      %v1298 = vpack.c.bf16 %v1262, %v1258
      %v1299 = vpack.c.bf16 %v1263, %v1259
      %v1300 = vpack.c.bf16 %v1264, %v1260
      %v1301 = vpack.c.bf16 %v1269, %v1265
      %v1302 = vpack.c.bf16 %v1270, %v1266
      %v1303 = vpack.c.bf16 %v1271, %v1267
      %v1304 = vpack.c.bf16 %v1272, %v1268
      %v1305 = vld [vmem:[%s3] sm:$0xf]
      %v1306 = vld [vmem:[%s3 + $0x4] sm:$0xf]
      %v1307 = vld [vmem:[%s3 + $0x8] sm:$0xf]
      %v1308 = vld [vmem:[%s3 + $0xc] sm:$0xf]
      %v1309 = vld [vmem:[%s3 + $0x10] sm:$0xf]
      %v1310 = vld [vmem:[%s3 + $0x14] sm:$0xf]
      %v1311 = vld [vmem:[%s3 + $0x18] sm:$0xf]
      %v1312 = vld [vmem:[%s3 + $0x1c] sm:$0xf]
      %v1313 = vld [vmem:[%s3 + $0x20] sm:$0xf]
      %v1314 = vld [vmem:[%s3 + $0x24] sm:$0xf]
      %v1315 = vld [vmem:[%s3 + $0x28] sm:$0xf]
      %v1316 = vld [vmem:[%s3 + $0x2c] sm:$0xf]
      %v1317 = vld [vmem:[%s3 + $0x30] sm:$0xf]
      %v1318 = vld [vmem:[%s3 + $0x34] sm:$0xf]
      %v1319 = vld [vmem:[%s3 + $0x38] sm:$0xf]
      %v1320 = vld [vmem:[%s3 + $0x3c] sm:$0xf]
      %v1321 = vld [vmem:[%s4] sm:$0xff]
      %v1322 = vld [vmem:[%s4 + $0x8] sm:$0xff]
      %v1323 = vld [vmem:[%s4 + $0x10] sm:$0xff]
      %v1324 = vld [vmem:[%s4 + $0x18] sm:$0xff]
      %v1325 = vld [vmem:[%s4 + $0x20] sm:$0xff]
      %v1326 = vld [vmem:[%s4 + $0x28] sm:$0xff]
      %v1327 = vld [vmem:[%s4 + $0x30] sm:$0xff]
      %v1328 = vld [vmem:[%s4 + $0x38] sm:$0xff]
      %v1329 = vld [vmem:[%s4 + $0x40] sm:$0xff]
      %v1330 = vld [vmem:[%s4 + $0x48] sm:$0xff]
      %v1331 = vld [vmem:[%s4 + $0x50] sm:$0xff]
      %v1332 = vld [vmem:[%s4 + $0x58] sm:$0xff]
      %v1333 = vld [vmem:[%s4 + $0x60] sm:$0xff]
      %v1334 = vld [vmem:[%s4 + $0x68] sm:$0xff]
      %v1335 = vld [vmem:[%s4 + $0x70] sm:$0xff]
      %v1336 = vld [vmem:[%s4 + $0x78] sm:$0xff]
      %1338 = vset.pattern.permute.xlu0 0
      %1339 = vperm.xlu0 %1338, %v1321
      %v1340 = vpop.permute.xlu0 %1339
      %1343 = vset.pattern.permute.xlu0 0
      %1344 = vperm.xlu0 %1343, %v1322
      %v1345 = vpop.permute.xlu0 %1344
      %1348 = vset.pattern.permute.xlu0 0
      %1349 = vperm.xlu0 %1348, %v1323
      %v1350 = vpop.permute.xlu0 %1349
      %1353 = vset.pattern.permute.xlu0 0
      %1354 = vperm.xlu0 %1353, %v1324
      %v1355 = vpop.permute.xlu0 %1354
      %1358 = vset.pattern.permute.xlu0 0
      %1359 = vperm.xlu0 %1358, %v1325
      %v1360 = vpop.permute.xlu0 %1359
      %1363 = vset.pattern.permute.xlu0 0
      %1364 = vperm.xlu0 %1363, %v1326
      %v1365 = vpop.permute.xlu0 %1364
      %1368 = vset.pattern.permute.xlu0 0
      %1369 = vperm.xlu0 %1368, %v1327
      %v1370 = vpop.permute.xlu0 %1369
      %1373 = vset.pattern.permute.xlu0 0
      %1374 = vperm.xlu0 %1373, %v1328
      %v1375 = vpop.permute.xlu0 %1374
      %1378 = vset.pattern.permute.xlu0 0
      %1379 = vperm.xlu0 %1378, %v1329
      %v1380 = vpop.permute.xlu0 %1379
      %1383 = vset.pattern.permute.xlu0 0
      %1384 = vperm.xlu0 %1383, %v1330
      %v1385 = vpop.permute.xlu0 %1384
      %1388 = vset.pattern.permute.xlu0 0
      %1389 = vperm.xlu0 %1388, %v1331
      %v1390 = vpop.permute.xlu0 %1389
      %1393 = vset.pattern.permute.xlu0 0
      %1394 = vperm.xlu0 %1393, %v1332
      %v1395 = vpop.permute.xlu0 %1394
      %1398 = vset.pattern.permute.xlu0 0
      %1399 = vperm.xlu0 %1398, %v1333
      %v1400 = vpop.permute.xlu0 %1399
      %1403 = vset.pattern.permute.xlu0 0
      %1404 = vperm.xlu0 %1403, %v1334
      %v1405 = vpop.permute.xlu0 %1404
      %1408 = vset.pattern.permute.xlu0 0
      %1409 = vperm.xlu0 %1408, %v1335
      %v1410 = vpop.permute.xlu0 %1409
      %1413 = vset.pattern.permute.xlu0 0
      %1414 = vperm.xlu0 %1413, %v1336
      %v1415 = vpop.permute.xlu0 %1414
      %v1433 = vunpack.c.l.b16 %v1305
      %v1434 = vunpack.c.l.b16 %v1306
      %v1435 = vunpack.c.l.b16 %v1307
      %v1436 = vunpack.c.l.b16 %v1308
      %v1437 = vunpack.c.l.b16 %v1309
      %v1438 = vunpack.c.l.b16 %v1310
      %v1439 = vunpack.c.l.b16 %v1311
      %v1440 = vunpack.c.l.b16 %v1312
      %v1441 = vunpack.c.l.b16 %v1313
      %v1442 = vunpack.c.l.b16 %v1314
      %v1443 = vunpack.c.l.b16 %v1315
      %v1444 = vunpack.c.l.b16 %v1316
      %v1445 = vunpack.c.l.b16 %v1317
      %v1446 = vunpack.c.l.b16 %v1318
      %v1447 = vunpack.c.l.b16 %v1319
      %v1448 = vunpack.c.l.b16 %v1320
      %v1449 = vpack.c.b16 %v1434, %v1433
      %v1450 = vpack.c.b16 %v1436, %v1435
      %v1451 = vpack.c.b16 %v1438, %v1437
      %v1452 = vpack.c.b16 %v1440, %v1439
      %v1453 = vpack.c.b16 %v1442, %v1441
      %v1454 = vpack.c.b16 %v1444, %v1443
      %v1455 = vpack.c.b16 %v1446, %v1445
      %v1456 = vpack.c.b16 %v1448, %v1447
      %1465 = vmatprep.subr.bf16.mxu0 %v1274
      %1466 = vmatpush1.bf16.msra.mxu0 %v1273
      %1467 = vmatprep.subr.bf16.mxu0 %v1278
      %1468 = vmatpush1.bf16.msra.mxu0 %v1277
      %1469 = vmatprep.subr.bf16.mxu0 %v1282
      %1470 = vmatpush1.bf16.msra.mxu0 %v1281
      %1471 = vmatprep.subr.bf16.mxu0 %v1286
      %1472 = vmatpush1.bf16.msra.mxu0 %v1285
      %1473 = vmatprep.subr.bf16.mxu0 %v1290
      %1474 = vmatpush1.bf16.msra.mxu0 %v1289
      %1475 = vmatprep.subr.bf16.mxu0 %v1294
      %1476 = vmatpush1.bf16.msra.mxu0 %v1293
      %1477 = vmatprep.subr.bf16.mxu0 %v1298
      %1478 = vmatpush1.bf16.msra.mxu0 %v1297
      %1479 = vmatprep.subr.bf16.mxu0 %v1302
      %1480 = vmatpush1.bf16.msra.mxu0 %v1301
      %1481 = vmatprep.subr.bf16.mxu0 0
      %1482 = vmatpush1.bf16.msra.mxu0 0
      %1483 = vmatprep.subr.bf16.mxu0 0
      %1484 = vmatpush1.bf16.msra.mxu0 0
      %1485 = vmatprep.subr.bf16.mxu0 0
      %1486 = vmatpush1.bf16.msra.mxu0 0
      %1487 = vmatprep.subr.bf16.mxu0 0
      %1488 = vmatpush1.bf16.msra.mxu0 0
      %1489 = vmatprep.subr.bf16.mxu0 0
      %1490 = vmatpush1.bf16.msra.mxu0 0
      %1491 = vmatprep.subr.bf16.mxu0 0
      %1492 = vmatpush1.bf16.msra.mxu0 0
      %1493 = vmatprep.subr.bf16.mxu0 0
      %1494 = vmatpush1.bf16.msra.mxu0 0
      %1495 = vmatprep.subr.bf16.mxu0 0
      %1496 = vmatpush1.bf16.msra.mxu0 0
      %1497 = vmatprep.mubr.bf16.mxu0 0
      %1498 = vmatmul.mubr.bf16.gmra.mrb[0].mxu0 %v1449
      %v1499 = vpop.f32.mrb[0].mxu0
      %v1500 = vadd.f32 %v1340, %v1499
      %v1501 = vpop.f32.mrb[0].mxu0
      %v1502 = vadd.f32 %v1340, %v1501
      %v1503 = vpop.f32.mrb[0].mxu0
      %v1504 = vadd.f32 %v1345, %v1503
      %v1505 = vpop.f32.mrb[0].mxu0
      %v1506 = vadd.f32 %v1345, %v1505
      %1507 = vmatprep.mubr.bf16.mxu0 0
      %1508 = vmatmul.mubr.bf16.gmra.mrb[0].mxu0 %v1450
      %v1509 = vpop.f32.mrb[0].mxu0
      %v1510 = vadd.f32 %v1350, %v1509
      %v1511 = vpop.f32.mrb[0].mxu0
      %v1512 = vadd.f32 %v1350, %v1511
      %v1513 = vpop.f32.mrb[0].mxu0
      %v1514 = vadd.f32 %v1355, %v1513
      %v1515 = vpop.f32.mrb[0].mxu0
      %v1516 = vadd.f32 %v1355, %v1515
      %1517 = vmatprep.mubr.bf16.mxu0 0
      %1518 = vmatmul.mubr.bf16.gmra.mrb[0].mxu0 %v1451
      %v1519 = vpop.f32.mrb[0].mxu0
      %v1520 = vadd.f32 %v1360, %v1519
      %v1521 = vpop.f32.mrb[0].mxu0
      %v1522 = vadd.f32 %v1360, %v1521
      %v1523 = vpop.f32.mrb[0].mxu0
      %v1524 = vadd.f32 %v1365, %v1523
      %v1525 = vpop.f32.mrb[0].mxu0
      %v1526 = vadd.f32 %v1365, %v1525
      %1527 = vmatprep.mubr.bf16.mxu0 0
      %1528 = vmatmul.mubr.bf16.gmra.mrb[0].mxu0 %v1452
      %v1529 = vpop.f32.mrb[0].mxu0
      %v1530 = vadd.f32 %v1370, %v1529
      %v1531 = vpop.f32.mrb[0].mxu0
      %v1532 = vadd.f32 %v1370, %v1531
      %v1533 = vpop.f32.mrb[0].mxu0
      %v1534 = vadd.f32 %v1375, %v1533
      %v1535 = vpop.f32.mrb[0].mxu0
      %v1536 = vadd.f32 %v1375, %v1535
      %1537 = vmatprep.mubr.bf16.mxu0 0
      %1538 = vmatmul.mubr.bf16.gmra.mrb[0].mxu0 %v1453
      %v1539 = vpop.f32.mrb[0].mxu0
      %v1540 = vadd.f32 %v1380, %v1539
      %v1541 = vpop.f32.mrb[0].mxu0
      %v1542 = vadd.f32 %v1380, %v1541
      %v1543 = vpop.f32.mrb[0].mxu0
      %v1544 = vadd.f32 %v1385, %v1543
      %v1545 = vpop.f32.mrb[0].mxu0
      %v1546 = vadd.f32 %v1385, %v1545
      %1547 = vmatprep.mubr.bf16.mxu0 0
      %1548 = vmatmul.mubr.bf16.gmra.mrb[0].mxu0 %v1454
      %v1549 = vpop.f32.mrb[0].mxu0
      %v1550 = vadd.f32 %v1390, %v1549
      %v1551 = vpop.f32.mrb[0].mxu0
      %v1552 = vadd.f32 %v1390, %v1551
      %v1553 = vpop.f32.mrb[0].mxu0
      %v1554 = vadd.f32 %v1395, %v1553
      %v1555 = vpop.f32.mrb[0].mxu0
      %v1556 = vadd.f32 %v1395, %v1555
      %1557 = vmatprep.mubr.bf16.mxu0 0
      %1558 = vmatmul.mubr.bf16.gmra.mrb[0].mxu0 %v1455
      %v1559 = vpop.f32.mrb[0].mxu0
      %v1560 = vadd.f32 %v1400, %v1559
      %v1561 = vpop.f32.mrb[0].mxu0
      %v1562 = vadd.f32 %v1400, %v1561
      %v1563 = vpop.f32.mrb[0].mxu0
      %v1564 = vadd.f32 %v1405, %v1563
      %v1565 = vpop.f32.mrb[0].mxu0
      %v1566 = vadd.f32 %v1405, %v1565
      %1567 = vmatprep.mubr.bf16.mxu0 0
      %1568 = vmatmul.mubr.bf16.gmra.mrb[0].mxu0 %v1456
      %v1569 = vpop.f32.mrb[0].mxu0
      %v1570 = vadd.f32 %v1410, %v1569
      %v1571 = vpop.f32.mrb[0].mxu0
      %v1572 = vadd.f32 %v1410, %v1571
      %v1573 = vpop.f32.mrb[0].mxu0
      %v1574 = vadd.f32 %v1415, %v1573
      %v1575 = vpop.f32.mrb[0].mxu0
      %v1576 = vadd.f32 %v1415, %v1575
      %1577 = vdwg.mxu0
      %1578 = vmatprep.subr.bf16.mxu0 %v1276
      %1579 = vmatpush1.bf16.msra.mxu0 %v1275
      %1580 = vmatprep.subr.bf16.mxu0 %v1280
      %1581 = vmatpush1.bf16.msra.mxu0 %v1279
      %1582 = vmatprep.subr.bf16.mxu0 %v1284
      %1583 = vmatpush1.bf16.msra.mxu0 %v1283
      %1584 = vmatprep.subr.bf16.mxu0 %v1288
      %1585 = vmatpush1.bf16.msra.mxu0 %v1287
      %1586 = vmatprep.subr.bf16.mxu0 %v1292
      %1587 = vmatpush1.bf16.msra.mxu0 %v1291
      %1588 = vmatprep.subr.bf16.mxu0 %v1296
      %1589 = vmatpush1.bf16.msra.mxu0 %v1295
      %1590 = vmatprep.subr.bf16.mxu0 %v1300
      %1591 = vmatpush1.bf16.msra.mxu0 %v1299
      %1592 = vmatprep.subr.bf16.mxu0 %v1304
      %1593 = vmatpush1.bf16.msra.mxu0 %v1303
      %1594 = vmatprep.subr.bf16.mxu0 0
      %1595 = vmatpush1.bf16.msra.mxu0 0
      %1596 = vmatprep.subr.bf16.mxu0 0
      %1597 = vmatpush1.bf16.msra.mxu0 0
      %1598 = vmatprep.subr.bf16.mxu0 0
      %1599 = vmatpush1.bf16.msra.mxu0 0
      %1600 = vmatprep.subr.bf16.mxu0 0
      %1601 = vmatpush1.bf16.msra.mxu0 0
      %1602 = vmatprep.subr.bf16.mxu0 0
      %1603 = vmatpush1.bf16.msra.mxu0 0
      %1604 = vmatprep.subr.bf16.mxu0 0
      %1605 = vmatpush1.bf16.msra.mxu0 0
      %1606 = vmatprep.subr.bf16.mxu0 0
      %1607 = vmatpush1.bf16.msra.mxu0 0
      %1608 = vmatprep.subr.bf16.mxu0 0
      %1609 = vmatpush1.bf16.msra.mxu0 0
      %1610 = vmatprep.mubr.bf16.mxu0 0
      %1611 = vmatmul.mubr.bf16.gmra.mrb[0].mxu0 %v1449
      %v1612 = vpop.f32.mrb[0].mxu0
      %v1613 = vadd.f32 %v1340, %v1612
      %v1614 = vpop.f32.mrb[0].mxu0
      %v1615 = vadd.f32 %v1340, %v1614
      %v1616 = vpop.f32.mrb[0].mxu0
      %v1617 = vadd.f32 %v1345, %v1616
      %v1618 = vpop.f32.mrb[0].mxu0
      %v1619 = vadd.f32 %v1345, %v1618
      %1620 = vmatprep.mubr.bf16.mxu0 0
      %1621 = vmatmul.mubr.bf16.gmra.mrb[0].mxu0 %v1450
      %v1622 = vpop.f32.mrb[0].mxu0
      %v1623 = vadd.f32 %v1350, %v1622
      %v1624 = vpop.f32.mrb[0].mxu0
      %v1625 = vadd.f32 %v1350, %v1624
      %v1626 = vpop.f32.mrb[0].mxu0
      %v1627 = vadd.f32 %v1355, %v1626
      %v1628 = vpop.f32.mrb[0].mxu0
      %v1629 = vadd.f32 %v1355, %v1628
      %1630 = vmatprep.mubr.bf16.mxu0 0
      %1631 = vmatmul.mubr.bf16.gmra.mrb[0].mxu0 %v1451
      %v1632 = vpop.f32.mrb[0].mxu0
      %v1633 = vadd.f32 %v1360, %v1632
      %v1634 = vpop.f32.mrb[0].mxu0
      %v1635 = vadd.f32 %v1360, %v1634
      %v1636 = vpop.f32.mrb[0].mxu0
      %v1637 = vadd.f32 %v1365, %v1636
      %v1638 = vpop.f32.mrb[0].mxu0
      %v1639 = vadd.f32 %v1365, %v1638
      %1640 = vmatprep.mubr.bf16.mxu0 0
      %1641 = vmatmul.mubr.bf16.gmra.mrb[0].mxu0 %v1452
      %v1642 = vpop.f32.mrb[0].mxu0
      %v1643 = vadd.f32 %v1370, %v1642
      %v1644 = vpop.f32.mrb[0].mxu0
      %v1645 = vadd.f32 %v1370, %v1644
      %v1646 = vpop.f32.mrb[0].mxu0
      %v1647 = vadd.f32 %v1375, %v1646
      %v1648 = vpop.f32.mrb[0].mxu0
      %v1649 = vadd.f32 %v1375, %v1648
      %1650 = vmatprep.mubr.bf16.mxu0 0
      %1651 = vmatmul.mubr.bf16.gmra.mrb[0].mxu0 %v1453
      %v1652 = vpop.f32.mrb[0].mxu0
      %v1653 = vadd.f32 %v1380, %v1652
      %v1654 = vpop.f32.mrb[0].mxu0
      %v1655 = vadd.f32 %v1380, %v1654
      %v1656 = vpop.f32.mrb[0].mxu0
      %v1657 = vadd.f32 %v1385, %v1656
      %v1658 = vpop.f32.mrb[0].mxu0
      %v1659 = vadd.f32 %v1385, %v1658
      %1660 = vmatprep.mubr.bf16.mxu0 0
      %1661 = vmatmul.mubr.bf16.gmra.mrb[0].mxu0 %v1454
      %v1662 = vpop.f32.mrb[0].mxu0
      %v1663 = vadd.f32 %v1390, %v1662
      %v1664 = vpop.f32.mrb[0].mxu0
      %v1665 = vadd.f32 %v1390, %v1664
      %v1666 = vpop.f32.mrb[0].mxu0
      %v1667 = vadd.f32 %v1395, %v1666
      %v1668 = vpop.f32.mrb[0].mxu0
      %v1669 = vadd.f32 %v1395, %v1668
      %1670 = vmatprep.mubr.bf16.mxu0 0
      %1671 = vmatmul.mubr.bf16.gmra.mrb[0].mxu0 %v1455
      %v1672 = vpop.f32.mrb[0].mxu0
      %v1673 = vadd.f32 %v1400, %v1672
      %v1674 = vpop.f32.mrb[0].mxu0
      %v1675 = vadd.f32 %v1400, %v1674
      %v1676 = vpop.f32.mrb[0].mxu0
      %v1677 = vadd.f32 %v1405, %v1676
      %v1678 = vpop.f32.mrb[0].mxu0
      %v1679 = vadd.f32 %v1405, %v1678
      %1680 = vmatprep.mubr.bf16.mxu0 0
      %1681 = vmatmul.mubr.bf16.gmra.mrb[0].mxu0 %v1456
      %v1682 = vpop.f32.mrb[0].mxu0
      %v1683 = vadd.f32 %v1410, %v1682
      %v1684 = vpop.f32.mrb[0].mxu0
      %v1685 = vadd.f32 %v1410, %v1684
      %v1686 = vpop.f32.mrb[0].mxu0
      %v1687 = vadd.f32 %v1415, %v1686
      %v1688 = vpop.f32.mrb[0].mxu0
      %v1689 = vadd.f32 %v1415, %v1688
      %1690 = vdwg.mxu0
      %v1691 = vmax.f32 %v1500, 0.0
      %v1692 = vmax.f32 %v1502, 0.0
      %v1693 = vmax.f32 %v1613, 0.0
      %v1694 = vmax.f32 %v1615, 0.0
      %v1695 = vmax.f32 %v1504, 0.0
      %v1696 = vmax.f32 %v1506, 0.0
      %v1697 = vmax.f32 %v1617, 0.0
      %v1698 = vmax.f32 %v1619, 0.0
      %v1699 = vmax.f32 %v1510, 0.0
      %v1700 = vmax.f32 %v1512, 0.0
      %v1701 = vmax.f32 %v1623, 0.0
      %v1702 = vmax.f32 %v1625, 0.0
      %v1703 = vmax.f32 %v1514, 0.0
      %v1704 = vmax.f32 %v1516, 0.0
      %v1705 = vmax.f32 %v1627, 0.0
      %v1706 = vmax.f32 %v1629, 0.0
      %v1707 = vmax.f32 %v1520, 0.0
      %v1708 = vmax.f32 %v1522, 0.0
      %v1709 = vmax.f32 %v1633, 0.0
      %v1710 = vmax.f32 %v1635, 0.0
      %v1711 = vmax.f32 %v1524, 0.0
      %v1712 = vmax.f32 %v1526, 0.0
      %v1713 = vmax.f32 %v1637, 0.0
      %v1714 = vmax.f32 %v1639, 0.0
      %v1715 = vmax.f32 %v1530, 0.0
      %v1716 = vmax.f32 %v1532, 0.0
      %v1717 = vmax.f32 %v1643, 0.0
      %v1718 = vmax.f32 %v1645, 0.0
      %v1719 = vmax.f32 %v1534, 0.0
      %v1720 = vmax.f32 %v1536, 0.0
      %v1721 = vmax.f32 %v1647, 0.0
      %v1722 = vmax.f32 %v1649, 0.0
      %v1723 = vmax.f32 %v1540, 0.0
      %v1724 = vmax.f32 %v1542, 0.0
      %v1725 = vmax.f32 %v1653, 0.0
      %v1726 = vmax.f32 %v1655, 0.0
      %v1727 = vmax.f32 %v1544, 0.0
      %v1728 = vmax.f32 %v1546, 0.0
      %v1729 = vmax.f32 %v1657, 0.0
      %v1730 = vmax.f32 %v1659, 0.0
      %v1731 = vmax.f32 %v1550, 0.0
      %v1732 = vmax.f32 %v1552, 0.0
      %v1733 = vmax.f32 %v1663, 0.0
      %v1734 = vmax.f32 %v1665, 0.0
      %v1735 = vmax.f32 %v1554, 0.0
      %v1736 = vmax.f32 %v1556, 0.0
      %v1737 = vmax.f32 %v1667, 0.0
      %v1738 = vmax.f32 %v1669, 0.0
      %v1739 = vmax.f32 %v1560, 0.0
      %v1740 = vmax.f32 %v1562, 0.0
      %v1741 = vmax.f32 %v1673, 0.0
      %v1742 = vmax.f32 %v1675, 0.0
      %v1743 = vmax.f32 %v1564, 0.0
      %v1744 = vmax.f32 %v1566, 0.0
      %v1745 = vmax.f32 %v1677, 0.0
      %v1746 = vmax.f32 %v1679, 0.0
      %v1747 = vmax.f32 %v1570, 0.0
      %v1748 = vmax.f32 %v1572, 0.0
      %v1749 = vmax.f32 %v1683, 0.0
      %v1750 = vmax.f32 %v1685, 0.0
      %v1751 = vmax.f32 %v1574, 0.0
      %v1752 = vmax.f32 %v1576, 0.0
      %v1753 = vmax.f32 %v1687, 0.0
      %v1754 = vmax.f32 %v1689, 0.0
      %v1755 = vpack.c.bf16 %v1695, %v1691
      %v1756 = vpack.c.bf16 %v1696, %v1692
      %v1757 = vpack.c.bf16 %v1697, %v1693
      %v1758 = vpack.c.bf16 %v1698, %v1694
      %v1759 = vpack.c.bf16 %v1703, %v1699
      %v1760 = vpack.c.bf16 %v1704, %v1700
      %v1761 = vpack.c.bf16 %v1705, %v1701
      %v1762 = vpack.c.bf16 %v1706, %v1702
      %v1763 = vpack.c.bf16 %v1711, %v1707
      %v1764 = vpack.c.bf16 %v1712, %v1708
      %v1765 = vpack.c.bf16 %v1713, %v1709
      %v1766 = vpack.c.bf16 %v1714, %v1710
      %v1767 = vpack.c.bf16 %v1719, %v1715
      %v1768 = vpack.c.bf16 %v1720, %v1716
      %v1769 = vpack.c.bf16 %v1721, %v1717
      %v1770 = vpack.c.bf16 %v1722, %v1718
      %v1771 = vpack.c.bf16 %v1727, %v1723
      %v1772 = vpack.c.bf16 %v1728, %v1724
      %v1773 = vpack.c.bf16 %v1729, %v1725
      %v1774 = vpack.c.bf16 %v1730, %v1726
      %v1775 = vpack.c.bf16 %v1735, %v1731
      %v1776 = vpack.c.bf16 %v1736, %v1732
      %v1777 = vpack.c.bf16 %v1737, %v1733
      %v1778 = vpack.c.bf16 %v1738, %v1734
      %v1779 = vpack.c.bf16 %v1743, %v1739
      %v1780 = vpack.c.bf16 %v1744, %v1740
      %v1781 = vpack.c.bf16 %v1745, %v1741
      %v1782 = vpack.c.bf16 %v1746, %v1742
      %v1783 = vpack.c.bf16 %v1751, %v1747
      %v1784 = vpack.c.bf16 %v1752, %v1748
      %v1785 = vpack.c.bf16 %v1753, %v1749
      %v1786 = vpack.c.bf16 %v1754, %v1750
      %v1787 = vld [vmem:[%s5] sm:$0xf]
      %v1788 = vld [vmem:[%s5 + $0x4] sm:$0xf]
      %v1789 = vld [vmem:[%s5 + $0x8] sm:$0xf]
      %v1790 = vld [vmem:[%s5 + $0xc] sm:$0xf]
      %v1791 = vld [vmem:[%s5 + $0x10] sm:$0xf]
      %v1792 = vld [vmem:[%s5 + $0x14] sm:$0xf]
      %v1793 = vld [vmem:[%s5 + $0x18] sm:$0xf]
      %v1794 = vld [vmem:[%s5 + $0x1c] sm:$0xf]
      %v1795 = vld [vmem:[%s5 + $0x20] sm:$0xf]
      %v1796 = vld [vmem:[%s5 + $0x24] sm:$0xf]
      %v1797 = vld [vmem:[%s5 + $0x28] sm:$0xf]
      %v1798 = vld [vmem:[%s5 + $0x2c] sm:$0xf]
      %v1799 = vld [vmem:[%s5 + $0x30] sm:$0xf]
      %v1800 = vld [vmem:[%s5 + $0x34] sm:$0xf]
      %v1801 = vld [vmem:[%s5 + $0x38] sm:$0xf]
      %v1802 = vld [vmem:[%s5 + $0x3c] sm:$0xf]
      %v1819 = vunpack.c.l.b16 %v1787
      %v1820 = vunpack.c.l.b16 %v1788
      %v1821 = vunpack.c.l.b16 %v1789
      %v1822 = vunpack.c.l.b16 %v1790
      %v1823 = vunpack.c.l.b16 %v1791
      %v1824 = vunpack.c.l.b16 %v1792
      %v1825 = vunpack.c.l.b16 %v1793
      %v1826 = vunpack.c.l.b16 %v1794
      %v1827 = vunpack.c.l.b16 %v1795
      %v1828 = vunpack.c.l.b16 %v1796
      %v1829 = vunpack.c.l.b16 %v1797
      %v1830 = vunpack.c.l.b16 %v1798
      %v1831 = vunpack.c.l.b16 %v1799
      %v1832 = vunpack.c.l.b16 %v1800
      %v1833 = vunpack.c.l.b16 %v1801
      %v1834 = vunpack.c.l.b16 %v1802
      %v1835 = vpack.c.b16 %v1820, %v1819
      %v1836 = vpack.c.b16 %v1822, %v1821
      %v1837 = vpack.c.b16 %v1824, %v1823
      %v1838 = vpack.c.b16 %v1826, %v1825
      %v1839 = vpack.c.b16 %v1828, %v1827
      %v1840 = vpack.c.b16 %v1830, %v1829
      %v1841 = vpack.c.b16 %v1832, %v1831
      %v1842 = vpack.c.b16 %v1834, %v1833
      %1851 = vmatprep.subr.bf16.mxu0 %v1756
      %1852 = vmatpush1.bf16.msra.mxu0 %v1755
      %1853 = vmatprep.subr.bf16.mxu0 %v1760
      %1854 = vmatpush1.bf16.msra.mxu0 %v1759
      %1855 = vmatprep.subr.bf16.mxu0 %v1764
      %1856 = vmatpush1.bf16.msra.mxu0 %v1763
      %1857 = vmatprep.subr.bf16.mxu0 %v1768
      %1858 = vmatpush1.bf16.msra.mxu0 %v1767
      %1859 = vmatprep.subr.bf16.mxu0 %v1772
      %1860 = vmatpush1.bf16.msra.mxu0 %v1771
      %1861 = vmatprep.subr.bf16.mxu0 %v1776
      %1862 = vmatpush1.bf16.msra.mxu0 %v1775
      %1863 = vmatprep.subr.bf16.mxu0 %v1780
      %1864 = vmatpush1.bf16.msra.mxu0 %v1779
      %1865 = vmatprep.subr.bf16.mxu0 %v1784
      %1866 = vmatpush1.bf16.msra.mxu0 %v1783
      %1867 = vmatprep.subr.bf16.mxu0 0
      %1868 = vmatpush1.bf16.msra.mxu0 0
      %1869 = vmatprep.subr.bf16.mxu0 0
      %1870 = vmatpush1.bf16.msra.mxu0 0
      %1871 = vmatprep.subr.bf16.mxu0 0
      %1872 = vmatpush1.bf16.msra.mxu0 0
      %1873 = vmatprep.subr.bf16.mxu0 0
      %1874 = vmatpush1.bf16.msra.mxu0 0
      %1875 = vmatprep.subr.bf16.mxu0 0
      %1876 = vmatpush1.bf16.msra.mxu0 0
      %1877 = vmatprep.subr.bf16.mxu0 0
      %1878 = vmatpush1.bf16.msra.mxu0 0
      %1879 = vmatprep.subr.bf16.mxu0 0
      %1880 = vmatpush1.bf16.msra.mxu0 0
      %1881 = vmatprep.subr.bf16.mxu0 0
      %1882 = vmatpush1.bf16.msra.mxu0 0
      %1883 = vmatprep.mubr.bf16.mxu0 0
      %1884 = vmatmul.mubr.bf16.gmra.mrb[0].mxu0 %v1835
      %v1885 = vpop.f32.mrb[0].mxu0
      %v1886 = vadd.f32 0.0, %v1885
      %v1887 = vpop.f32.mrb[0].mxu0
      %v1888 = vadd.f32 0.0, %v1887
      %v1889 = vpop.f32.mrb[0].mxu0
      %v1890 = vadd.f32 0.0, %v1889
      %v1891 = vpop.f32.mrb[0].mxu0
      %v1892 = vadd.f32 0.0, %v1891
      %1893 = vmatprep.mubr.bf16.mxu0 0
      %1894 = vmatmul.mubr.bf16.gmra.mrb[0].mxu0 %v1836
      %v1895 = vpop.f32.mrb[0].mxu0
      %v1896 = vadd.f32 0.0, %v1895
      %v1897 = vpop.f32.mrb[0].mxu0
      %v1898 = vadd.f32 0.0, %v1897
      %v1899 = vpop.f32.mrb[0].mxu0
      %v1900 = vadd.f32 0.0, %v1899
      %v1901 = vpop.f32.mrb[0].mxu0
      %v1902 = vadd.f32 0.0, %v1901
      %1903 = vmatprep.mubr.bf16.mxu0 0
      %1904 = vmatmul.mubr.bf16.gmra.mrb[0].mxu0 %v1837
      %v1905 = vpop.f32.mrb[0].mxu0
      %v1906 = vadd.f32 0.0, %v1905
      %v1907 = vpop.f32.mrb[0].mxu0
      %v1908 = vadd.f32 0.0, %v1907
      %v1909 = vpop.f32.mrb[0].mxu0
      %v1910 = vadd.f32 0.0, %v1909
      %v1911 = vpop.f32.mrb[0].mxu0
      %v1912 = vadd.f32 0.0, %v1911
      %1913 = vmatprep.mubr.bf16.mxu0 0
      %1914 = vmatmul.mubr.bf16.gmra.mrb[0].mxu0 %v1838
      %v1915 = vpop.f32.mrb[0].mxu0
      %v1916 = vadd.f32 0.0, %v1915
      %v1917 = vpop.f32.mrb[0].mxu0
      %v1918 = vadd.f32 0.0, %v1917
      %v1919 = vpop.f32.mrb[0].mxu0
      %v1920 = vadd.f32 0.0, %v1919
      %v1921 = vpop.f32.mrb[0].mxu0
      %v1922 = vadd.f32 0.0, %v1921
      %1923 = vmatprep.mubr.bf16.mxu0 0
      %1924 = vmatmul.mubr.bf16.gmra.mrb[0].mxu0 %v1839
      %v1925 = vpop.f32.mrb[0].mxu0
      %v1926 = vadd.f32 0.0, %v1925
      %v1927 = vpop.f32.mrb[0].mxu0
      %v1928 = vadd.f32 0.0, %v1927
      %v1929 = vpop.f32.mrb[0].mxu0
      %v1930 = vadd.f32 0.0, %v1929
      %v1931 = vpop.f32.mrb[0].mxu0
      %v1932 = vadd.f32 0.0, %v1931
      %1933 = vmatprep.mubr.bf16.mxu0 0
      %1934 = vmatmul.mubr.bf16.gmra.mrb[0].mxu0 %v1840
      %v1935 = vpop.f32.mrb[0].mxu0
      %v1936 = vadd.f32 0.0, %v1935
      %v1937 = vpop.f32.mrb[0].mxu0
      %v1938 = vadd.f32 0.0, %v1937
      %v1939 = vpop.f32.mrb[0].mxu0
      %v1940 = vadd.f32 0.0, %v1939
      %v1941 = vpop.f32.mrb[0].mxu0
      %v1942 = vadd.f32 0.0, %v1941
      %1943 = vmatprep.mubr.bf16.mxu0 0
      %1944 = vmatmul.mubr.bf16.gmra.mrb[0].mxu0 %v1841
      %v1945 = vpop.f32.mrb[0].mxu0
      %v1946 = vadd.f32 0.0, %v1945
      %v1947 = vpop.f32.mrb[0].mxu0
      %v1948 = vadd.f32 0.0, %v1947
      %v1949 = vpop.f32.mrb[0].mxu0
      %v1950 = vadd.f32 0.0, %v1949
      %v1951 = vpop.f32.mrb[0].mxu0
      %v1952 = vadd.f32 0.0, %v1951
      %1953 = vmatprep.mubr.bf16.mxu0 0
      %1954 = vmatmul.mubr.bf16.gmra.mrb[0].mxu0 %v1842
      %v1955 = vpop.f32.mrb[0].mxu0
      %v1956 = vadd.f32 0.0, %v1955
      %v1957 = vpop.f32.mrb[0].mxu0
      %v1958 = vadd.f32 0.0, %v1957
      %v1959 = vpop.f32.mrb[0].mxu0
      %v1960 = vadd.f32 0.0, %v1959
      %v1961 = vpop.f32.mrb[0].mxu0
      %v1962 = vadd.f32 0.0, %v1961
      %1963 = vdwg.mxu0
      %1964 = vmatprep.subr.bf16.mxu0 %v1758
      %1965 = vmatpush1.bf16.msra.mxu0 %v1757
      %1966 = vmatprep.subr.bf16.mxu0 %v1762
      %1967 = vmatpush1.bf16.msra.mxu0 %v1761
      %1968 = vmatprep.subr.bf16.mxu0 %v1766
      %1969 = vmatpush1.bf16.msra.mxu0 %v1765
      %1970 = vmatprep.subr.bf16.mxu0 %v1770
      %1971 = vmatpush1.bf16.msra.mxu0 %v1769
      %1972 = vmatprep.subr.bf16.mxu0 %v1774
      %1973 = vmatpush1.bf16.msra.mxu0 %v1773
      %1974 = vmatprep.subr.bf16.mxu0 %v1778
      %1975 = vmatpush1.bf16.msra.mxu0 %v1777
      %1976 = vmatprep.subr.bf16.mxu0 %v1782
      %1977 = vmatpush1.bf16.msra.mxu0 %v1781
      %1978 = vmatprep.subr.bf16.mxu0 %v1786
      %1979 = vmatpush1.bf16.msra.mxu0 %v1785
      %1980 = vmatprep.subr.bf16.mxu0 0
      %1981 = vmatpush1.bf16.msra.mxu0 0
      %1982 = vmatprep.subr.bf16.mxu0 0
      %1983 = vmatpush1.bf16.msra.mxu0 0
      %1984 = vmatprep.subr.bf16.mxu0 0
      %1985 = vmatpush1.bf16.msra.mxu0 0
      %1986 = vmatprep.subr.bf16.mxu0 0
      %1987 = vmatpush1.bf16.msra.mxu0 0
      %1988 = vmatprep.subr.bf16.mxu0 0
      %1989 = vmatpush1.bf16.msra.mxu0 0
      %1990 = vmatprep.subr.bf16.mxu0 0
      %1991 = vmatpush1.bf16.msra.mxu0 0
      %1992 = vmatprep.subr.bf16.mxu0 0
      %1993 = vmatpush1.bf16.msra.mxu0 0
      %1994 = vmatprep.subr.bf16.mxu0 0
      %1995 = vmatpush1.bf16.msra.mxu0 0
      %1996 = vmatprep.mubr.bf16.mxu0 0
      %1997 = vmatmul.mubr.bf16.gmra.mrb[0].mxu0 %v1835
      %v1998 = vpop.f32.mrb[0].mxu0
      %v1999 = vadd.f32 0.0, %v1998
      %v2000 = vpop.f32.mrb[0].mxu0
      %v2001 = vadd.f32 0.0, %v2000
      %v2002 = vpop.f32.mrb[0].mxu0
      %v2003 = vadd.f32 0.0, %v2002
      %v2004 = vpop.f32.mrb[0].mxu0
      %v2005 = vadd.f32 0.0, %v2004
      %2006 = vmatprep.mubr.bf16.mxu0 0
      %2007 = vmatmul.mubr.bf16.gmra.mrb[0].mxu0 %v1836
      %v2008 = vpop.f32.mrb[0].mxu0
      %v2009 = vadd.f32 0.0, %v2008
      %v2010 = vpop.f32.mrb[0].mxu0
      %v2011 = vadd.f32 0.0, %v2010
      %v2012 = vpop.f32.mrb[0].mxu0
      %v2013 = vadd.f32 0.0, %v2012
      %v2014 = vpop.f32.mrb[0].mxu0
      %v2015 = vadd.f32 0.0, %v2014
      %2016 = vmatprep.mubr.bf16.mxu0 0
      %2017 = vmatmul.mubr.bf16.gmra.mrb[0].mxu0 %v1837
      %v2018 = vpop.f32.mrb[0].mxu0
      %v2019 = vadd.f32 0.0, %v2018
      %v2020 = vpop.f32.mrb[0].mxu0
      %v2021 = vadd.f32 0.0, %v2020
      %v2022 = vpop.f32.mrb[0].mxu0
      %v2023 = vadd.f32 0.0, %v2022
      %v2024 = vpop.f32.mrb[0].mxu0
      %v2025 = vadd.f32 0.0, %v2024
      %2026 = vmatprep.mubr.bf16.mxu0 0
      %2027 = vmatmul.mubr.bf16.gmra.mrb[0].mxu0 %v1838
      %v2028 = vpop.f32.mrb[0].mxu0
      %v2029 = vadd.f32 0.0, %v2028
      %v2030 = vpop.f32.mrb[0].mxu0
      %v2031 = vadd.f32 0.0, %v2030
      %v2032 = vpop.f32.mrb[0].mxu0
      %v2033 = vadd.f32 0.0, %v2032
      %v2034 = vpop.f32.mrb[0].mxu0
      %v2035 = vadd.f32 0.0, %v2034
      %2036 = vmatprep.mubr.bf16.mxu0 0
      %2037 = vmatmul.mubr.bf16.gmra.mrb[0].mxu0 %v1839
      %v2038 = vpop.f32.mrb[0].mxu0
      %v2039 = vadd.f32 0.0, %v2038
      %v2040 = vpop.f32.mrb[0].mxu0
      %v2041 = vadd.f32 0.0, %v2040
      %v2042 = vpop.f32.mrb[0].mxu0
      %v2043 = vadd.f32 0.0, %v2042
      %v2044 = vpop.f32.mrb[0].mxu0
      %v2045 = vadd.f32 0.0, %v2044
      %2046 = vmatprep.mubr.bf16.mxu0 0
      %2047 = vmatmul.mubr.bf16.gmra.mrb[0].mxu0 %v1840
      %v2048 = vpop.f32.mrb[0].mxu0
      %v2049 = vadd.f32 0.0, %v2048
      %v2050 = vpop.f32.mrb[0].mxu0
      %v2051 = vadd.f32 0.0, %v2050
      %v2052 = vpop.f32.mrb[0].mxu0
      %v2053 = vadd.f32 0.0, %v2052
      %v2054 = vpop.f32.mrb[0].mxu0
      %v2055 = vadd.f32 0.0, %v2054
      %2056 = vmatprep.mubr.bf16.mxu0 0
      %2057 = vmatmul.mubr.bf16.gmra.mrb[0].mxu0 %v1841
      %v2058 = vpop.f32.mrb[0].mxu0
      %v2059 = vadd.f32 0.0, %v2058
      %v2060 = vpop.f32.mrb[0].mxu0
      %v2061 = vadd.f32 0.0, %v2060
      %v2062 = vpop.f32.mrb[0].mxu0
      %v2063 = vadd.f32 0.0, %v2062
      %v2064 = vpop.f32.mrb[0].mxu0
      %v2065 = vadd.f32 0.0, %v2064
      %2066 = vmatprep.mubr.bf16.mxu0 0
      %2067 = vmatmul.mubr.bf16.gmra.mrb[0].mxu0 %v1842
      %v2068 = vpop.f32.mrb[0].mxu0
      %v2069 = vadd.f32 0.0, %v2068
      %v2070 = vpop.f32.mrb[0].mxu0
      %v2071 = vadd.f32 0.0, %v2070
      %v2072 = vpop.f32.mrb[0].mxu0
      %v2073 = vadd.f32 0.0, %v2072
      %v2074 = vpop.f32.mrb[0].mxu0
      %v2075 = vadd.f32 0.0, %v2074
      %2076 = vdwg.mxu0
      %v2077 = vadd.f32 %v1145, %v1886
      %v2078 = vadd.f32 %v1146, %v1888
      %v2079 = vadd.f32 %v1147, %v1999
      %v2080 = vadd.f32 %v1148, %v2001
      %v2081 = vadd.f32 %v1149, %v1890
      %v2082 = vadd.f32 %v1150, %v1892
      %v2083 = vadd.f32 %v1151, %v2003
      %v2084 = vadd.f32 %v1152, %v2005
      %v2085 = vadd.f32 %v1153, %v1896
      %v2086 = vadd.f32 %v1154, %v1898
      %v2087 = vadd.f32 %v1155, %v2009
      %v2088 = vadd.f32 %v1156, %v2011
      %v2089 = vadd.f32 %v1157, %v1900
      %v2090 = vadd.f32 %v1158, %v1902
      %v2091 = vadd.f32 %v1159, %v2013
      %v2092 = vadd.f32 %v1160, %v2015
      %v2093 = vadd.f32 %v1161, %v1906
      %v2094 = vadd.f32 %v1162, %v1908
      %v2095 = vadd.f32 %v1163, %v2019
      %v2096 = vadd.f32 %v1164, %v2021
      %v2097 = vadd.f32 %v1165, %v1910
      %v2098 = vadd.f32 %v1166, %v1912
      %v2099 = vadd.f32 %v1167, %v2023
      %v2100 = vadd.f32 %v1168, %v2025
      %v2101 = vadd.f32 %v1169, %v1916
      %v2102 = vadd.f32 %v1170, %v1918
      %v2103 = vadd.f32 %v1171, %v2029
      %v2104 = vadd.f32 %v1172, %v2031
      %v2105 = vadd.f32 %v1173, %v1920
      %v2106 = vadd.f32 %v1174, %v1922
      %v2107 = vadd.f32 %v1175, %v2033
      %v2108 = vadd.f32 %v1176, %v2035
      %v2109 = vadd.f32 %v1177, %v1926
      %v2110 = vadd.f32 %v1178, %v1928
      %v2111 = vadd.f32 %v1179, %v2039
      %v2112 = vadd.f32 %v1180, %v2041
      %v2113 = vadd.f32 %v1181, %v1930
      %v2114 = vadd.f32 %v1182, %v1932
      %v2115 = vadd.f32 %v1183, %v2043
      %v2116 = vadd.f32 %v1184, %v2045
      %v2117 = vadd.f32 %v1185, %v1936
      %v2118 = vadd.f32 %v1186, %v1938
      %v2119 = vadd.f32 %v1187, %v2049
      %v2120 = vadd.f32 %v1188, %v2051
      %v2121 = vadd.f32 %v1189, %v1940
      %v2122 = vadd.f32 %v1190, %v1942
      %v2123 = vadd.f32 %v1191, %v2053
      %v2124 = vadd.f32 %v1192, %v2055
      %v2125 = vadd.f32 %v1193, %v1946
      %v2126 = vadd.f32 %v1194, %v1948
      %v2127 = vadd.f32 %v1195, %v2059
      %v2128 = vadd.f32 %v1196, %v2061
      %v2129 = vadd.f32 %v1197, %v1950
      %v2130 = vadd.f32 %v1198, %v1952
      %v2131 = vadd.f32 %v1199, %v2063
      %v2132 = vadd.f32 %v1200, %v2065
      %v2133 = vadd.f32 %v1201, %v1956
      %v2134 = vadd.f32 %v1202, %v1958
      %v2135 = vadd.f32 %v1203, %v2069
      %v2136 = vadd.f32 %v1204, %v2071
      %v2137 = vadd.f32 %v1205, %v1960
      %v2138 = vadd.f32 %v1206, %v1962
      %v2139 = vadd.f32 %v1207, %v2073
      %v2140 = vadd.f32 %v1208, %v2075
      %v2141 = vld [vmem:[%s6] sm:$0xff]
      %v2142 = vld [vmem:[%s6 + $0x8] sm:$0xff]
      %v2143 = vld [vmem:[%s6 + $0x10] sm:$0xff]
      %v2144 = vld [vmem:[%s6 + $0x18] sm:$0xff]
      %v2145 = vld [vmem:[%s6 + $0x20] sm:$0xff]
      %v2146 = vld [vmem:[%s6 + $0x28] sm:$0xff]
      %v2147 = vld [vmem:[%s6 + $0x30] sm:$0xff]
      %v2148 = vld [vmem:[%s6 + $0x38] sm:$0xff]
      %v2149 = vld [vmem:[%s6 + $0x40] sm:$0xff]
      %v2150 = vld [vmem:[%s6 + $0x48] sm:$0xff]
      %v2151 = vld [vmem:[%s6 + $0x50] sm:$0xff]
      %v2152 = vld [vmem:[%s6 + $0x58] sm:$0xff]
      %v2153 = vld [vmem:[%s6 + $0x60] sm:$0xff]
      %v2154 = vld [vmem:[%s6 + $0x68] sm:$0xff]
      %v2155 = vld [vmem:[%s6 + $0x70] sm:$0xff]
      %v2156 = vld [vmem:[%s6 + $0x78] sm:$0xff]
      %2158 = vset.pattern.permute.xlu0 0
      %2159 = vperm.xlu0 %2158, %v2141
      %v2160 = vpop.permute.xlu0 %2159
      %2163 = vset.pattern.permute.xlu0 0
      %2164 = vperm.xlu0 %2163, %v2142
      %v2165 = vpop.permute.xlu0 %2164
      %2168 = vset.pattern.permute.xlu0 0
      %2169 = vperm.xlu0 %2168, %v2143
      %v2170 = vpop.permute.xlu0 %2169
      %2173 = vset.pattern.permute.xlu0 0
      %2174 = vperm.xlu0 %2173, %v2144
      %v2175 = vpop.permute.xlu0 %2174
      %2178 = vset.pattern.permute.xlu0 0
      %2179 = vperm.xlu0 %2178, %v2145
      %v2180 = vpop.permute.xlu0 %2179
      %2183 = vset.pattern.permute.xlu0 0
      %2184 = vperm.xlu0 %2183, %v2146
      %v2185 = vpop.permute.xlu0 %2184
      %2188 = vset.pattern.permute.xlu0 0
      %2189 = vperm.xlu0 %2188, %v2147
      %v2190 = vpop.permute.xlu0 %2189
      %2193 = vset.pattern.permute.xlu0 0
      %2194 = vperm.xlu0 %2193, %v2148
      %v2195 = vpop.permute.xlu0 %2194
      %2198 = vset.pattern.permute.xlu0 0
      %2199 = vperm.xlu0 %2198, %v2149
      %v2200 = vpop.permute.xlu0 %2199
      %2203 = vset.pattern.permute.xlu0 0
      %2204 = vperm.xlu0 %2203, %v2150
      %v2205 = vpop.permute.xlu0 %2204
      %2208 = vset.pattern.permute.xlu0 0
      %2209 = vperm.xlu0 %2208, %v2151
      %v2210 = vpop.permute.xlu0 %2209
      %2213 = vset.pattern.permute.xlu0 0
      %2214 = vperm.xlu0 %2213, %v2152
      %v2215 = vpop.permute.xlu0 %2214
      %2218 = vset.pattern.permute.xlu0 0
      %2219 = vperm.xlu0 %2218, %v2153
      %v2220 = vpop.permute.xlu0 %2219
      %2223 = vset.pattern.permute.xlu0 0
      %2224 = vperm.xlu0 %2223, %v2154
      %v2225 = vpop.permute.xlu0 %2224
      %2228 = vset.pattern.permute.xlu0 0
      %2229 = vperm.xlu0 %2228, %v2155
      %v2230 = vpop.permute.xlu0 %2229
      %2233 = vset.pattern.permute.xlu0 0
      %2234 = vperm.xlu0 %2233, %v2156
      %v2235 = vpop.permute.xlu0 %2234
      %v2237 = vadd.f32 %v2077, %v2160
      %v2238 = vadd.f32 %v2078, %v2160
      %v2239 = vadd.f32 %v2079, %v2160
      %v2240 = vadd.f32 %v2080, %v2160
      %v2241 = vadd.f32 %v2081, %v2165
      %v2242 = vadd.f32 %v2082, %v2165
      %v2243 = vadd.f32 %v2083, %v2165
      %v2244 = vadd.f32 %v2084, %v2165
      %v2245 = vadd.f32 %v2085, %v2170
      %v2246 = vadd.f32 %v2086, %v2170
      %v2247 = vadd.f32 %v2087, %v2170
      %v2248 = vadd.f32 %v2088, %v2170
      %v2249 = vadd.f32 %v2089, %v2175
      %v2250 = vadd.f32 %v2090, %v2175
      %v2251 = vadd.f32 %v2091, %v2175
      %v2252 = vadd.f32 %v2092, %v2175
      %v2253 = vadd.f32 %v2093, %v2180
      %v2254 = vadd.f32 %v2094, %v2180
      %v2255 = vadd.f32 %v2095, %v2180
      %v2256 = vadd.f32 %v2096, %v2180
      %v2257 = vadd.f32 %v2097, %v2185
      %v2258 = vadd.f32 %v2098, %v2185
      %v2259 = vadd.f32 %v2099, %v2185
      %v2260 = vadd.f32 %v2100, %v2185
      %v2261 = vadd.f32 %v2101, %v2190
      %v2262 = vadd.f32 %v2102, %v2190
      %v2263 = vadd.f32 %v2103, %v2190
      %v2264 = vadd.f32 %v2104, %v2190
      %v2265 = vadd.f32 %v2105, %v2195
      %v2266 = vadd.f32 %v2106, %v2195
      %v2267 = vadd.f32 %v2107, %v2195
      %v2268 = vadd.f32 %v2108, %v2195
      %v2269 = vadd.f32 %v2109, %v2200
      %v2270 = vadd.f32 %v2110, %v2200
      %v2271 = vadd.f32 %v2111, %v2200
      %v2272 = vadd.f32 %v2112, %v2200
      %v2273 = vadd.f32 %v2113, %v2205
      %v2274 = vadd.f32 %v2114, %v2205
      %v2275 = vadd.f32 %v2115, %v2205
      %v2276 = vadd.f32 %v2116, %v2205
      %v2277 = vadd.f32 %v2117, %v2210
      %v2278 = vadd.f32 %v2118, %v2210
      %v2279 = vadd.f32 %v2119, %v2210
      %v2280 = vadd.f32 %v2120, %v2210
      %v2281 = vadd.f32 %v2121, %v2215
      %v2282 = vadd.f32 %v2122, %v2215
      %v2283 = vadd.f32 %v2123, %v2215
      %v2284 = vadd.f32 %v2124, %v2215
      %v2285 = vadd.f32 %v2125, %v2220
      %v2286 = vadd.f32 %v2126, %v2220
      %v2287 = vadd.f32 %v2127, %v2220
      %v2288 = vadd.f32 %v2128, %v2220
      %v2289 = vadd.f32 %v2129, %v2225
      %v2290 = vadd.f32 %v2130, %v2225
      %v2291 = vadd.f32 %v2131, %v2225
      %v2292 = vadd.f32 %v2132, %v2225
      %v2293 = vadd.f32 %v2133, %v2230
      %v2294 = vadd.f32 %v2134, %v2230
      %v2295 = vadd.f32 %v2135, %v2230
      %v2296 = vadd.f32 %v2136, %v2230
      %v2297 = vadd.f32 %v2137, %v2235
      %v2298 = vadd.f32 %v2138, %v2235
      %v2299 = vadd.f32 %v2139, %v2235
      %v2300 = vadd.f32 %v2140, %v2235
      %v2301 = vmax.f32 %v2237, 0.0
      %v2302 = vmax.f32 %v2238, 0.0
      %v2303 = vmax.f32 %v2239, 0.0
      %v2304 = vmax.f32 %v2240, 0.0
      %v2305 = vmax.f32 %v2241, 0.0
      %v2306 = vmax.f32 %v2242, 0.0
      %v2307 = vmax.f32 %v2243, 0.0
      %v2308 = vmax.f32 %v2244, 0.0
      %v2309 = vmax.f32 %v2245, 0.0
      %v2310 = vmax.f32 %v2246, 0.0
      %v2311 = vmax.f32 %v2247, 0.0
      %v2312 = vmax.f32 %v2248, 0.0
      %v2313 = vmax.f32 %v2249, 0.0
      %v2314 = vmax.f32 %v2250, 0.0
      %v2315 = vmax.f32 %v2251, 0.0
      %v2316 = vmax.f32 %v2252, 0.0
      %v2317 = vmax.f32 %v2253, 0.0
      %v2318 = vmax.f32 %v2254, 0.0
      %v2319 = vmax.f32 %v2255, 0.0
      %v2320 = vmax.f32 %v2256, 0.0
      %v2321 = vmax.f32 %v2257, 0.0
      %v2322 = vmax.f32 %v2258, 0.0
      %v2323 = vmax.f32 %v2259, 0.0
      %v2324 = vmax.f32 %v2260, 0.0
      %v2325 = vmax.f32 %v2261, 0.0
      %v2326 = vmax.f32 %v2262, 0.0
      %v2327 = vmax.f32 %v2263, 0.0
      %v2328 = vmax.f32 %v2264, 0.0
      %v2329 = vmax.f32 %v2265, 0.0
      %v2330 = vmax.f32 %v2266, 0.0
      %v2331 = vmax.f32 %v2267, 0.0
      %v2332 = vmax.f32 %v2268, 0.0
      %v2333 = vmax.f32 %v2269, 0.0
      %v2334 = vmax.f32 %v2270, 0.0
      %v2335 = vmax.f32 %v2271, 0.0
      %v2336 = vmax.f32 %v2272, 0.0
      %v2337 = vmax.f32 %v2273, 0.0
      %v2338 = vmax.f32 %v2274, 0.0
      %v2339 = vmax.f32 %v2275, 0.0
      %v2340 = vmax.f32 %v2276, 0.0
      %v2341 = vmax.f32 %v2277, 0.0
      %v2342 = vmax.f32 %v2278, 0.0
      %v2343 = vmax.f32 %v2279, 0.0
      %v2344 = vmax.f32 %v2280, 0.0
      %v2345 = vmax.f32 %v2281, 0.0
      %v2346 = vmax.f32 %v2282, 0.0
      %v2347 = vmax.f32 %v2283, 0.0
      %v2348 = vmax.f32 %v2284, 0.0
      %v2349 = vmax.f32 %v2285, 0.0
      %v2350 = vmax.f32 %v2286, 0.0
      %v2351 = vmax.f32 %v2287, 0.0
      %v2352 = vmax.f32 %v2288, 0.0
      %v2353 = vmax.f32 %v2289, 0.0
      %v2354 = vmax.f32 %v2290, 0.0
      %v2355 = vmax.f32 %v2291, 0.0
      %v2356 = vmax.f32 %v2292, 0.0
      %v2357 = vmax.f32 %v2293, 0.0
      %v2358 = vmax.f32 %v2294, 0.0
      %v2359 = vmax.f32 %v2295, 0.0
      %v2360 = vmax.f32 %v2296, 0.0
      %v2361 = vmax.f32 %v2297, 0.0
      %v2362 = vmax.f32 %v2298, 0.0
      %v2363 = vmax.f32 %v2299, 0.0
      %v2364 = vmax.f32 %v2300, 0.0
      %v2365 = vpack.c.bf16 %v2305, %v2301
      %v2366 = vpack.c.bf16 %v2306, %v2302
      %v2367 = vpack.c.bf16 %v2307, %v2303
      %v2368 = vpack.c.bf16 %v2308, %v2304
      %v2369 = vpack.c.bf16 %v2313, %v2309
      %v2370 = vpack.c.bf16 %v2314, %v2310
      %v2371 = vpack.c.bf16 %v2315, %v2311
      %v2372 = vpack.c.bf16 %v2316, %v2312
      %v2373 = vpack.c.bf16 %v2321, %v2317
      %v2374 = vpack.c.bf16 %v2322, %v2318
      %v2375 = vpack.c.bf16 %v2323, %v2319
      %v2376 = vpack.c.bf16 %v2324, %v2320
      %v2377 = vpack.c.bf16 %v2329, %v2325
      %v2378 = vpack.c.bf16 %v2330, %v2326
      %v2379 = vpack.c.bf16 %v2331, %v2327
      %v2380 = vpack.c.bf16 %v2332, %v2328
      %v2381 = vpack.c.bf16 %v2337, %v2333
      %v2382 = vpack.c.bf16 %v2338, %v2334
      %v2383 = vpack.c.bf16 %v2339, %v2335
      %v2384 = vpack.c.bf16 %v2340, %v2336
      %v2385 = vpack.c.bf16 %v2345, %v2341
      %v2386 = vpack.c.bf16 %v2346, %v2342
      %v2387 = vpack.c.bf16 %v2347, %v2343
      %v2388 = vpack.c.bf16 %v2348, %v2344
      %v2389 = vpack.c.bf16 %v2353, %v2349
      %v2390 = vpack.c.bf16 %v2354, %v2350
      %v2391 = vpack.c.bf16 %v2355, %v2351
      %v2392 = vpack.c.bf16 %v2356, %v2352
      %v2393 = vpack.c.bf16 %v2361, %v2357
      %v2394 = vpack.c.bf16 %v2362, %v2358
      %v2395 = vpack.c.bf16 %v2363, %v2359
      %v2396 = vpack.c.bf16 %v2364, %v2360
      %s2397 = scalar_lea.vmem %s3, 64
      %v2398 = vld [vmem:[%s2397] sm:$0xf]
      %v2399 = vld [vmem:[%s2397 + $0x4] sm:$0xf]
      %v2400 = vld [vmem:[%s2397 + $0x8] sm:$0xf]
      %v2401 = vld [vmem:[%s2397 + $0xc] sm:$0xf]
      %v2402 = vld [vmem:[%s2397 + $0x10] sm:$0xf]
      %v2403 = vld [vmem:[%s2397 + $0x14] sm:$0xf]
      %v2404 = vld [vmem:[%s2397 + $0x18] sm:$0xf]
      %v2405 = vld [vmem:[%s2397 + $0x1c] sm:$0xf]
      %v2406 = vld [vmem:[%s2397 + $0x20] sm:$0xf]
      %v2407 = vld [vmem:[%s2397 + $0x24] sm:$0xf]
      %v2408 = vld [vmem:[%s2397 + $0x28] sm:$0xf]
      %v2409 = vld [vmem:[%s2397 + $0x2c] sm:$0xf]
      %v2410 = vld [vmem:[%s2397 + $0x30] sm:$0xf]
      %v2411 = vld [vmem:[%s2397 + $0x34] sm:$0xf]
      %v2412 = vld [vmem:[%s2397 + $0x38] sm:$0xf]
      %v2413 = vld [vmem:[%s2397 + $0x3c] sm:$0xf]
      %s2414 = scalar_lea.vmem %s4, 128
      %v2415 = vld [vmem:[%s2414] sm:$0xff]
      %v2416 = vld [vmem:[%s2414 + $0x8] sm:$0xff]
      %v2417 = vld [vmem:[%s2414 + $0x10] sm:$0xff]
      %v2418 = vld [vmem:[%s2414 + $0x18] sm:$0xff]
      %v2419 = vld [vmem:[%s2414 + $0x20] sm:$0xff]
      %v2420 = vld [vmem:[%s2414 + $0x28] sm:$0xff]
      %v2421 = vld [vmem:[%s2414 + $0x30] sm:$0xff]
      %v2422 = vld [vmem:[%s2414 + $0x38] sm:$0xff]
      %v2423 = vld [vmem:[%s2414 + $0x40] sm:$0xff]
      %v2424 = vld [vmem:[%s2414 + $0x48] sm:$0xff]
      %v2425 = vld [vmem:[%s2414 + $0x50] sm:$0xff]
      %v2426 = vld [vmem:[%s2414 + $0x58] sm:$0xff]
      %v2427 = vld [vmem:[%s2414 + $0x60] sm:$0xff]
      %v2428 = vld [vmem:[%s2414 + $0x68] sm:$0xff]
      %v2429 = vld [vmem:[%s2414 + $0x70] sm:$0xff]
      %v2430 = vld [vmem:[%s2414 + $0x78] sm:$0xff]
      %2432 = vset.pattern.permute.xlu0 0
      %2433 = vperm.xlu0 %2432, %v2415
      %v2434 = vpop.permute.xlu0 %2433
      %2437 = vset.pattern.permute.xlu0 0
      %2438 = vperm.xlu0 %2437, %v2416
      %v2439 = vpop.permute.xlu0 %2438
      %2442 = vset.pattern.permute.xlu0 0
      %2443 = vperm.xlu0 %2442, %v2417
      %v2444 = vpop.permute.xlu0 %2443
      %2447 = vset.pattern.permute.xlu0 0
      %2448 = vperm.xlu0 %2447, %v2418
      %v2449 = vpop.permute.xlu0 %2448
      %2452 = vset.pattern.permute.xlu0 0
      %2453 = vperm.xlu0 %2452, %v2419
      %v2454 = vpop.permute.xlu0 %2453
      %2457 = vset.pattern.permute.xlu0 0
      %2458 = vperm.xlu0 %2457, %v2420
      %v2459 = vpop.permute.xlu0 %2458
      %2462 = vset.pattern.permute.xlu0 0
      %2463 = vperm.xlu0 %2462, %v2421
      %v2464 = vpop.permute.xlu0 %2463
      %2467 = vset.pattern.permute.xlu0 0
      %2468 = vperm.xlu0 %2467, %v2422
      %v2469 = vpop.permute.xlu0 %2468
      %2472 = vset.pattern.permute.xlu0 0
      %2473 = vperm.xlu0 %2472, %v2423
      %v2474 = vpop.permute.xlu0 %2473
      %2477 = vset.pattern.permute.xlu0 0
      %2478 = vperm.xlu0 %2477, %v2424
      %v2479 = vpop.permute.xlu0 %2478
      %2482 = vset.pattern.permute.xlu0 0
      %2483 = vperm.xlu0 %2482, %v2425
      %v2484 = vpop.permute.xlu0 %2483
      %2487 = vset.pattern.permute.xlu0 0
      %2488 = vperm.xlu0 %2487, %v2426
      %v2489 = vpop.permute.xlu0 %2488
      %2492 = vset.pattern.permute.xlu0 0
      %2493 = vperm.xlu0 %2492, %v2427
      %v2494 = vpop.permute.xlu0 %2493
      %2497 = vset.pattern.permute.xlu0 0
      %2498 = vperm.xlu0 %2497, %v2428
      %v2499 = vpop.permute.xlu0 %2498
      %2502 = vset.pattern.permute.xlu0 0
      %2503 = vperm.xlu0 %2502, %v2429
      %v2504 = vpop.permute.xlu0 %2503
      %2507 = vset.pattern.permute.xlu0 0
      %2508 = vperm.xlu0 %2507, %v2430
      %v2509 = vpop.permute.xlu0 %2508
      %v2527 = vunpack.c.l.b16 %v2398
      %v2528 = vunpack.c.l.b16 %v2399
      %v2529 = vunpack.c.l.b16 %v2400
      %v2530 = vunpack.c.l.b16 %v2401
      %v2531 = vunpack.c.l.b16 %v2402
      %v2532 = vunpack.c.l.b16 %v2403
      %v2533 = vunpack.c.l.b16 %v2404
      %v2534 = vunpack.c.l.b16 %v2405
      %v2535 = vunpack.c.l.b16 %v2406
      %v2536 = vunpack.c.l.b16 %v2407
      %v2537 = vunpack.c.l.b16 %v2408
      %v2538 = vunpack.c.l.b16 %v2409
      %v2539 = vunpack.c.l.b16 %v2410
      %v2540 = vunpack.c.l.b16 %v2411
      %v2541 = vunpack.c.l.b16 %v2412
      %v2542 = vunpack.c.l.b16 %v2413
      %v2543 = vpack.c.b16 %v2528, %v2527
      %v2544 = vpack.c.b16 %v2530, %v2529
      %v2545 = vpack.c.b16 %v2532, %v2531
      %v2546 = vpack.c.b16 %v2534, %v2533
      %v2547 = vpack.c.b16 %v2536, %v2535
      %v2548 = vpack.c.b16 %v2538, %v2537
      %v2549 = vpack.c.b16 %v2540, %v2539
      %v2550 = vpack.c.b16 %v2542, %v2541
      %2559 = vmatprep.subr.bf16.mxu0 %v2366
      %2560 = vmatpush1.bf16.msra.mxu0 %v2365
      %2561 = vmatprep.subr.bf16.mxu0 %v2370
      %2562 = vmatpush1.bf16.msra.mxu0 %v2369
      %2563 = vmatprep.subr.bf16.mxu0 %v2374
      %2564 = vmatpush1.bf16.msra.mxu0 %v2373
      %2565 = vmatprep.subr.bf16.mxu0 %v2378
      %2566 = vmatpush1.bf16.msra.mxu0 %v2377
      %2567 = vmatprep.subr.bf16.mxu0 %v2382
      %2568 = vmatpush1.bf16.msra.mxu0 %v2381
      %2569 = vmatprep.subr.bf16.mxu0 %v2386
      %2570 = vmatpush1.bf16.msra.mxu0 %v2385
      %2571 = vmatprep.subr.bf16.mxu0 %v2390
      %2572 = vmatpush1.bf16.msra.mxu0 %v2389
      %2573 = vmatprep.subr.bf16.mxu0 %v2394
      %2574 = vmatpush1.bf16.msra.mxu0 %v2393
      %2575 = vmatprep.subr.bf16.mxu0 0
      %2576 = vmatpush1.bf16.msra.mxu0 0
      %2577 = vmatprep.subr.bf16.mxu0 0
      %2578 = vmatpush1.bf16.msra.mxu0 0
      %2579 = vmatprep.subr.bf16.mxu0 0
      %2580 = vmatpush1.bf16.msra.mxu0 0
      %2581 = vmatprep.subr.bf16.mxu0 0
      %2582 = vmatpush1.bf16.msra.mxu0 0
      %2583 = vmatprep.subr.bf16.mxu0 0
      %2584 = vmatpush1.bf16.msra.mxu0 0
      %2585 = vmatprep.subr.bf16.mxu0 0
      %2586 = vmatpush1.bf16.msra.mxu0 0
      %2587 = vmatprep.subr.bf16.mxu0 0
      %2588 = vmatpush1.bf16.msra.mxu0 0
      %2589 = vmatprep.subr.bf16.mxu0 0
      %2590 = vmatpush1.bf16.msra.mxu0 0
      %2591 = vmatprep.mubr.bf16.mxu0 0
      %2592 = vmatmul.mubr.bf16.gmra.mrb[0].mxu0 %v2543
      %v2593 = vpop.f32.mrb[0].mxu0
      %v2594 = vadd.f32 %v2434, %v2593
      %v2595 = vpop.f32.mrb[0].mxu0
      %v2596 = vadd.f32 %v2434, %v2595
      %v2597 = vpop.f32.mrb[0].mxu0
      %v2598 = vadd.f32 %v2439, %v2597
      %v2599 = vpop.f32.mrb[0].mxu0
      %v2600 = vadd.f32 %v2439, %v2599
      %2601 = vmatprep.mubr.bf16.mxu0 0
      %2602 = vmatmul.mubr.bf16.gmra.mrb[0].mxu0 %v2544
      %v2603 = vpop.f32.mrb[0].mxu0
      %v2604 = vadd.f32 %v2444, %v2603
      %v2605 = vpop.f32.mrb[0].mxu0
      %v2606 = vadd.f32 %v2444, %v2605
      %v2607 = vpop.f32.mrb[0].mxu0
      %v2608 = vadd.f32 %v2449, %v2607
      %v2609 = vpop.f32.mrb[0].mxu0
      %v2610 = vadd.f32 %v2449, %v2609
      %2611 = vmatprep.mubr.bf16.mxu0 0
      %2612 = vmatmul.mubr.bf16.gmra.mrb[0].mxu0 %v2545
      %v2613 = vpop.f32.mrb[0].mxu0
      %v2614 = vadd.f32 %v2454, %v2613
      %v2615 = vpop.f32.mrb[0].mxu0
      %v2616 = vadd.f32 %v2454, %v2615
      %v2617 = vpop.f32.mrb[0].mxu0
      %v2618 = vadd.f32 %v2459, %v2617
      %v2619 = vpop.f32.mrb[0].mxu0
      %v2620 = vadd.f32 %v2459, %v2619
      %2621 = vmatprep.mubr.bf16.mxu0 0
      %2622 = vmatmul.mubr.bf16.gmra.mrb[0].mxu0 %v2546
      %v2623 = vpop.f32.mrb[0].mxu0
      %v2624 = vadd.f32 %v2464, %v2623
      %v2625 = vpop.f32.mrb[0].mxu0
      %v2626 = vadd.f32 %v2464, %v2625
      %v2627 = vpop.f32.mrb[0].mxu0
      %v2628 = vadd.f32 %v2469, %v2627
      %v2629 = vpop.f32.mrb[0].mxu0
      %v2630 = vadd.f32 %v2469, %v2629
      %2631 = vmatprep.mubr.bf16.mxu0 0
      %2632 = vmatmul.mubr.bf16.gmra.mrb[0].mxu0 %v2547
      %v2633 = vpop.f32.mrb[0].mxu0
      %v2634 = vadd.f32 %v2474, %v2633
      %v2635 = vpop.f32.mrb[0].mxu0
      %v2636 = vadd.f32 %v2474, %v2635
      %v2637 = vpop.f32.mrb[0].mxu0
      %v2638 = vadd.f32 %v2479, %v2637
      %v2639 = vpop.f32.mrb[0].mxu0
      %v2640 = vadd.f32 %v2479, %v2639
      %2641 = vmatprep.mubr.bf16.mxu0 0
      %2642 = vmatmul.mubr.bf16.gmra.mrb[0].mxu0 %v2548
      %v2643 = vpop.f32.mrb[0].mxu0
      %v2644 = vadd.f32 %v2484, %v2643
      %v2645 = vpop.f32.mrb[0].mxu0
      %v2646 = vadd.f32 %v2484, %v2645
      %v2647 = vpop.f32.mrb[0].mxu0
      %v2648 = vadd.f32 %v2489, %v2647
      %v2649 = vpop.f32.mrb[0].mxu0
      %v2650 = vadd.f32 %v2489, %v2649
      %2651 = vmatprep.mubr.bf16.mxu0 0
      %2652 = vmatmul.mubr.bf16.gmra.mrb[0].mxu0 %v2549
      %v2653 = vpop.f32.mrb[0].mxu0
      %v2654 = vadd.f32 %v2494, %v2653
      %v2655 = vpop.f32.mrb[0].mxu0
      %v2656 = vadd.f32 %v2494, %v2655
      %v2657 = vpop.f32.mrb[0].mxu0
      %v2658 = vadd.f32 %v2499, %v2657
      %v2659 = vpop.f32.mrb[0].mxu0
      %v2660 = vadd.f32 %v2499, %v2659
      %2661 = vmatprep.mubr.bf16.mxu0 0
      %2662 = vmatmul.mubr.bf16.gmra.mrb[0].mxu0 %v2550
      %v2663 = vpop.f32.mrb[0].mxu0
      %v2664 = vadd.f32 %v2504, %v2663
      %v2665 = vpop.f32.mrb[0].mxu0
      %v2666 = vadd.f32 %v2504, %v2665
      %v2667 = vpop.f32.mrb[0].mxu0
      %v2668 = vadd.f32 %v2509, %v2667
      %v2669 = vpop.f32.mrb[0].mxu0
      %v2670 = vadd.f32 %v2509, %v2669
      %2671 = vdwg.mxu0
      %2672 = vmatprep.subr.bf16.mxu0 %v2368
      %2673 = vmatpush1.bf16.msra.mxu0 %v2367
      %2674 = vmatprep.subr.bf16.mxu0 %v2372
      %2675 = vmatpush1.bf16.msra.mxu0 %v2371
      %2676 = vmatprep.subr.bf16.mxu0 %v2376
      %2677 = vmatpush1.bf16.msra.mxu0 %v2375
      %2678 = vmatprep.subr.bf16.mxu0 %v2380
      %2679 = vmatpush1.bf16.msra.mxu0 %v2379
      %2680 = vmatprep.subr.bf16.mxu0 %v2384
      %2681 = vmatpush1.bf16.msra.mxu0 %v2383
      %2682 = vmatprep.subr.bf16.mxu0 %v2388
      %2683 = vmatpush1.bf16.msra.mxu0 %v2387
      %2684 = vmatprep.subr.bf16.mxu0 %v2392
      %2685 = vmatpush1.bf16.msra.mxu0 %v2391
      %2686 = vmatprep.subr.bf16.mxu0 %v2396
      %2687 = vmatpush1.bf16.msra.mxu0 %v2395
      %2688 = vmatprep.subr.bf16.mxu0 0
      %2689 = vmatpush1.bf16.msra.mxu0 0
      %2690 = vmatprep.subr.bf16.mxu0 0
      %2691 = vmatpush1.bf16.msra.mxu0 0
      %2692 = vmatprep.subr.bf16.mxu0 0
      %2693 = vmatpush1.bf16.msra.mxu0 0
      %2694 = vmatprep.subr.bf16.mxu0 0
      %2695 = vmatpush1.bf16.msra.mxu0 0
      %2696 = vmatprep.subr.bf16.mxu0 0
      %2697 = vmatpush1.bf16.msra.mxu0 0
      %2698 = vmatprep.subr.bf16.mxu0 0
      %2699 = vmatpush1.bf16.msra.mxu0 0
      %2700 = vmatprep.subr.bf16.mxu0 0
      %2701 = vmatpush1.bf16.msra.mxu0 0
      %2702 = vmatprep.subr.bf16.mxu0 0
      %2703 = vmatpush1.bf16.msra.mxu0 0
      %2704 = vmatprep.mubr.bf16.mxu0 0
      %2705 = vmatmul.mubr.bf16.gmra.mrb[0].mxu0 %v2543
      %v2706 = vpop.f32.mrb[0].mxu0
      %v2707 = vadd.f32 %v2434, %v2706
      %v2708 = vpop.f32.mrb[0].mxu0
      %v2709 = vadd.f32 %v2434, %v2708
      %v2710 = vpop.f32.mrb[0].mxu0
      %v2711 = vadd.f32 %v2439, %v2710
      %v2712 = vpop.f32.mrb[0].mxu0
      %v2713 = vadd.f32 %v2439, %v2712
      %2714 = vmatprep.mubr.bf16.mxu0 0
      %2715 = vmatmul.mubr.bf16.gmra.mrb[0].mxu0 %v2544
      %v2716 = vpop.f32.mrb[0].mxu0
      %v2717 = vadd.f32 %v2444, %v2716
      %v2718 = vpop.f32.mrb[0].mxu0
      %v2719 = vadd.f32 %v2444, %v2718
      %v2720 = vpop.f32.mrb[0].mxu0
      %v2721 = vadd.f32 %v2449, %v2720
      %v2722 = vpop.f32.mrb[0].mxu0
      %v2723 = vadd.f32 %v2449, %v2722
      %2724 = vmatprep.mubr.bf16.mxu0 0
      %2725 = vmatmul.mubr.bf16.gmra.mrb[0].mxu0 %v2545
      %v2726 = vpop.f32.mrb[0].mxu0
      %v2727 = vadd.f32 %v2454, %v2726
      %v2728 = vpop.f32.mrb[0].mxu0
      %v2729 = vadd.f32 %v2454, %v2728
      %v2730 = vpop.f32.mrb[0].mxu0
      %v2731 = vadd.f32 %v2459, %v2730
      %v2732 = vpop.f32.mrb[0].mxu0
      %v2733 = vadd.f32 %v2459, %v2732
      %2734 = vmatprep.mubr.bf16.mxu0 0
      %2735 = vmatmul.mubr.bf16.gmra.mrb[0].mxu0 %v2546
      %v2736 = vpop.f32.mrb[0].mxu0
      %v2737 = vadd.f32 %v2464, %v2736
      %v2738 = vpop.f32.mrb[0].mxu0
      %v2739 = vadd.f32 %v2464, %v2738
      %v2740 = vpop.f32.mrb[0].mxu0
      %v2741 = vadd.f32 %v2469, %v2740
      %v2742 = vpop.f32.mrb[0].mxu0
      %v2743 = vadd.f32 %v2469, %v2742
      %2744 = vmatprep.mubr.bf16.mxu0 0
      %2745 = vmatmul.mubr.bf16.gmra.mrb[0].mxu0 %v2547
      %v2746 = vpop.f32.mrb[0].mxu0
      %v2747 = vadd.f32 %v2474, %v2746
      %v2748 = vpop.f32.mrb[0].mxu0
      %v2749 = vadd.f32 %v2474, %v2748
      %v2750 = vpop.f32.mrb[0].mxu0
      %v2751 = vadd.f32 %v2479, %v2750
      %v2752 = vpop.f32.mrb[0].mxu0
      %v2753 = vadd.f32 %v2479, %v2752
      %2754 = vmatprep.mubr.bf16.mxu0 0
      %2755 = vmatmul.mubr.bf16.gmra.mrb[0].mxu0 %v2548
      %v2756 = vpop.f32.mrb[0].mxu0
      %v2757 = vadd.f32 %v2484, %v2756
      %v2758 = vpop.f32.mrb[0].mxu0
      %v2759 = vadd.f32 %v2484, %v2758
      %v2760 = vpop.f32.mrb[0].mxu0
      %v2761 = vadd.f32 %v2489, %v2760
      %v2762 = vpop.f32.mrb[0].mxu0
      %v2763 = vadd.f32 %v2489, %v2762
      %2764 = vmatprep.mubr.bf16.mxu0 0
      %2765 = vmatmul.mubr.bf16.gmra.mrb[0].mxu0 %v2549
      %v2766 = vpop.f32.mrb[0].mxu0
      %v2767 = vadd.f32 %v2494, %v2766
      %v2768 = vpop.f32.mrb[0].mxu0
      %v2769 = vadd.f32 %v2494, %v2768
      %v2770 = vpop.f32.mrb[0].mxu0
      %v2771 = vadd.f32 %v2499, %v2770
      %v2772 = vpop.f32.mrb[0].mxu0
      %v2773 = vadd.f32 %v2499, %v2772
      %2774 = vmatprep.mubr.bf16.mxu0 0
      %2775 = vmatmul.mubr.bf16.gmra.mrb[0].mxu0 %v2550
      %v2776 = vpop.f32.mrb[0].mxu0
      %v2777 = vadd.f32 %v2504, %v2776
      %v2778 = vpop.f32.mrb[0].mxu0
      %v2779 = vadd.f32 %v2504, %v2778
      %v2780 = vpop.f32.mrb[0].mxu0
      %v2781 = vadd.f32 %v2509, %v2780
      %v2782 = vpop.f32.mrb[0].mxu0
      %v2783 = vadd.f32 %v2509, %v2782
      %2784 = vdwg.mxu0
      %v2785 = vmax.f32 %v2594, 0.0
      %v2786 = vmax.f32 %v2596, 0.0
      %v2787 = vmax.f32 %v2707, 0.0
      %v2788 = vmax.f32 %v2709, 0.0
      %v2789 = vmax.f32 %v2598, 0.0
      %v2790 = vmax.f32 %v2600, 0.0
      %v2791 = vmax.f32 %v2711, 0.0
      %v2792 = vmax.f32 %v2713, 0.0
      %v2793 = vmax.f32 %v2604, 0.0
      %v2794 = vmax.f32 %v2606, 0.0
      %v2795 = vmax.f32 %v2717, 0.0
      %v2796 = vmax.f32 %v2719, 0.0
      %v2797 = vmax.f32 %v2608, 0.0
      %v2798 = vmax.f32 %v2610, 0.0
      %v2799 = vmax.f32 %v2721, 0.0
      %v2800 = vmax.f32 %v2723, 0.0
      %v2801 = vmax.f32 %v2614, 0.0
      %v2802 = vmax.f32 %v2616, 0.0
      %v2803 = vmax.f32 %v2727, 0.0
      %v2804 = vmax.f32 %v2729, 0.0
      %v2805 = vmax.f32 %v2618, 0.0
      %v2806 = vmax.f32 %v2620, 0.0
      %v2807 = vmax.f32 %v2731, 0.0
      %v2808 = vmax.f32 %v2733, 0.0
      %v2809 = vmax.f32 %v2624, 0.0
      %v2810 = vmax.f32 %v2626, 0.0
      %v2811 = vmax.f32 %v2737, 0.0
      %v2812 = vmax.f32 %v2739, 0.0
      %v2813 = vmax.f32 %v2628, 0.0
      %v2814 = vmax.f32 %v2630, 0.0
      %v2815 = vmax.f32 %v2741, 0.0
      %v2816 = vmax.f32 %v2743, 0.0
      %v2817 = vmax.f32 %v2634, 0.0
      %v2818 = vmax.f32 %v2636, 0.0
      %v2819 = vmax.f32 %v2747, 0.0
      %v2820 = vmax.f32 %v2749, 0.0
      %v2821 = vmax.f32 %v2638, 0.0
      %v2822 = vmax.f32 %v2640, 0.0
      %v2823 = vmax.f32 %v2751, 0.0
      %v2824 = vmax.f32 %v2753, 0.0
      %v2825 = vmax.f32 %v2644, 0.0
      %v2826 = vmax.f32 %v2646, 0.0
      %v2827 = vmax.f32 %v2757, 0.0
      %v2828 = vmax.f32 %v2759, 0.0
      %v2829 = vmax.f32 %v2648, 0.0
      %v2830 = vmax.f32 %v2650, 0.0
      %v2831 = vmax.f32 %v2761, 0.0
      %v2832 = vmax.f32 %v2763, 0.0
      %v2833 = vmax.f32 %v2654, 0.0
      %v2834 = vmax.f32 %v2656, 0.0
      %v2835 = vmax.f32 %v2767, 0.0
      %v2836 = vmax.f32 %v2769, 0.0
      %v2837 = vmax.f32 %v2658, 0.0
      %v2838 = vmax.f32 %v2660, 0.0
      %v2839 = vmax.f32 %v2771, 0.0
      %v2840 = vmax.f32 %v2773, 0.0
      %v2841 = vmax.f32 %v2664, 0.0
      %v2842 = vmax.f32 %v2666, 0.0
      %v2843 = vmax.f32 %v2777, 0.0
      %v2844 = vmax.f32 %v2779, 0.0
      %v2845 = vmax.f32 %v2668, 0.0
      %v2846 = vmax.f32 %v2670, 0.0
      %v2847 = vmax.f32 %v2781, 0.0
      %v2848 = vmax.f32 %v2783, 0.0
      %v2849 = vpack.c.bf16 %v2789, %v2785
      %v2850 = vpack.c.bf16 %v2790, %v2786
      %v2851 = vpack.c.bf16 %v2791, %v2787
      %v2852 = vpack.c.bf16 %v2792, %v2788
      %v2853 = vpack.c.bf16 %v2797, %v2793
      %v2854 = vpack.c.bf16 %v2798, %v2794
      %v2855 = vpack.c.bf16 %v2799, %v2795
      %v2856 = vpack.c.bf16 %v2800, %v2796
      %v2857 = vpack.c.bf16 %v2805, %v2801
      %v2858 = vpack.c.bf16 %v2806, %v2802
      %v2859 = vpack.c.bf16 %v2807, %v2803
      %v2860 = vpack.c.bf16 %v2808, %v2804
      %v2861 = vpack.c.bf16 %v2813, %v2809
      %v2862 = vpack.c.bf16 %v2814, %v2810
      %v2863 = vpack.c.bf16 %v2815, %v2811
      %v2864 = vpack.c.bf16 %v2816, %v2812
      %v2865 = vpack.c.bf16 %v2821, %v2817
      %v2866 = vpack.c.bf16 %v2822, %v2818
      %v2867 = vpack.c.bf16 %v2823, %v2819
      %v2868 = vpack.c.bf16 %v2824, %v2820
      %v2869 = vpack.c.bf16 %v2829, %v2825
      %v2870 = vpack.c.bf16 %v2830, %v2826
      %v2871 = vpack.c.bf16 %v2831, %v2827
      %v2872 = vpack.c.bf16 %v2832, %v2828
      %v2873 = vpack.c.bf16 %v2837, %v2833
      %v2874 = vpack.c.bf16 %v2838, %v2834
      %v2875 = vpack.c.bf16 %v2839, %v2835
      %v2876 = vpack.c.bf16 %v2840, %v2836
      %v2877 = vpack.c.bf16 %v2845, %v2841
      %v2878 = vpack.c.bf16 %v2846, %v2842
      %v2879 = vpack.c.bf16 %v2847, %v2843
      %v2880 = vpack.c.bf16 %v2848, %v2844
      %s2881 = scalar_lea.vmem %s5, 64
      %v2882 = vld [vmem:[%s2881] sm:$0xf]
      %v2883 = vld [vmem:[%s2881 + $0x4] sm:$0xf]
      %v2884 = vld [vmem:[%s2881 + $0x8] sm:$0xf]
      %v2885 = vld [vmem:[%s2881 + $0xc] sm:$0xf]
      %v2886 = vld [vmem:[%s2881 + $0x10] sm:$0xf]
      %v2887 = vld [vmem:[%s2881 + $0x14] sm:$0xf]
      %v2888 = vld [vmem:[%s2881 + $0x18] sm:$0xf]
      %v2889 = vld [vmem:[%s2881 + $0x1c] sm:$0xf]
      %v2890 = vld [vmem:[%s2881 + $0x20] sm:$0xf]
      %v2891 = vld [vmem:[%s2881 + $0x24] sm:$0xf]
      %v2892 = vld [vmem:[%s2881 + $0x28] sm:$0xf]
      %v2893 = vld [vmem:[%s2881 + $0x2c] sm:$0xf]
      %v2894 = vld [vmem:[%s2881 + $0x30] sm:$0xf]
      %v2895 = vld [vmem:[%s2881 + $0x34] sm:$0xf]
      %v2896 = vld [vmem:[%s2881 + $0x38] sm:$0xf]
      %v2897 = vld [vmem:[%s2881 + $0x3c] sm:$0xf]
      %v2914 = vunpack.c.l.b16 %v2882
      %v2915 = vunpack.c.l.b16 %v2883
      %v2916 = vunpack.c.l.b16 %v2884
      %v2917 = vunpack.c.l.b16 %v2885
      %v2918 = vunpack.c.l.b16 %v2886
      %v2919 = vunpack.c.l.b16 %v2887
      %v2920 = vunpack.c.l.b16 %v2888
      %v2921 = vunpack.c.l.b16 %v2889
      %v2922 = vunpack.c.l.b16 %v2890
      %v2923 = vunpack.c.l.b16 %v2891
      %v2924 = vunpack.c.l.b16 %v2892
      %v2925 = vunpack.c.l.b16 %v2893
      %v2926 = vunpack.c.l.b16 %v2894
      %v2927 = vunpack.c.l.b16 %v2895
      %v2928 = vunpack.c.l.b16 %v2896
      %v2929 = vunpack.c.l.b16 %v2897
      %v2930 = vpack.c.b16 %v2915, %v2914
      %v2931 = vpack.c.b16 %v2917, %v2916
      %v2932 = vpack.c.b16 %v2919, %v2918
      %v2933 = vpack.c.b16 %v2921, %v2920
      %v2934 = vpack.c.b16 %v2923, %v2922
      %v2935 = vpack.c.b16 %v2925, %v2924
      %v2936 = vpack.c.b16 %v2927, %v2926
      %v2937 = vpack.c.b16 %v2929, %v2928
      %2946 = vmatprep.subr.bf16.mxu0 %v2850
      %2947 = vmatpush1.bf16.msra.mxu0 %v2849
      %2948 = vmatprep.subr.bf16.mxu0 %v2854
      %2949 = vmatpush1.bf16.msra.mxu0 %v2853
      %2950 = vmatprep.subr.bf16.mxu0 %v2858
      %2951 = vmatpush1.bf16.msra.mxu0 %v2857
      %2952 = vmatprep.subr.bf16.mxu0 %v2862
      %2953 = vmatpush1.bf16.msra.mxu0 %v2861
      %2954 = vmatprep.subr.bf16.mxu0 %v2866
      %2955 = vmatpush1.bf16.msra.mxu0 %v2865
      %2956 = vmatprep.subr.bf16.mxu0 %v2870
      %2957 = vmatpush1.bf16.msra.mxu0 %v2869
      %2958 = vmatprep.subr.bf16.mxu0 %v2874
      %2959 = vmatpush1.bf16.msra.mxu0 %v2873
      %2960 = vmatprep.subr.bf16.mxu0 %v2878
      %2961 = vmatpush1.bf16.msra.mxu0 %v2877
      %2962 = vmatprep.subr.bf16.mxu0 0
      %2963 = vmatpush1.bf16.msra.mxu0 0
      %2964 = vmatprep.subr.bf16.mxu0 0
      %2965 = vmatpush1.bf16.msra.mxu0 0
      %2966 = vmatprep.subr.bf16.mxu0 0
      %2967 = vmatpush1.bf16.msra.mxu0 0
      %2968 = vmatprep.subr.bf16.mxu0 0
      %2969 = vmatpush1.bf16.msra.mxu0 0
      %2970 = vmatprep.subr.bf16.mxu0 0
      %2971 = vmatpush1.bf16.msra.mxu0 0
      %2972 = vmatprep.subr.bf16.mxu0 0
      %2973 = vmatpush1.bf16.msra.mxu0 0
      %2974 = vmatprep.subr.bf16.mxu0 0
      %2975 = vmatpush1.bf16.msra.mxu0 0
      %2976 = vmatprep.subr.bf16.mxu0 0
      %2977 = vmatpush1.bf16.msra.mxu0 0
      %2978 = vmatprep.mubr.bf16.mxu0 0
      %2979 = vmatmul.mubr.bf16.gmra.mrb[0].mxu0 %v2930
      %v2980 = vpop.f32.mrb[0].mxu0
      %v2981 = vadd.f32 0.0, %v2980
      %v2982 = vpop.f32.mrb[0].mxu0
      %v2983 = vadd.f32 0.0, %v2982
      %v2984 = vpop.f32.mrb[0].mxu0
      %v2985 = vadd.f32 0.0, %v2984
      %v2986 = vpop.f32.mrb[0].mxu0
      %v2987 = vadd.f32 0.0, %v2986
      %2988 = vmatprep.mubr.bf16.mxu0 0
      %2989 = vmatmul.mubr.bf16.gmra.mrb[0].mxu0 %v2931
      %v2990 = vpop.f32.mrb[0].mxu0
      %v2991 = vadd.f32 0.0, %v2990
      %v2992 = vpop.f32.mrb[0].mxu0
      %v2993 = vadd.f32 0.0, %v2992
      %v2994 = vpop.f32.mrb[0].mxu0
      %v2995 = vadd.f32 0.0, %v2994
      %v2996 = vpop.f32.mrb[0].mxu0
      %v2997 = vadd.f32 0.0, %v2996
      %2998 = vmatprep.mubr.bf16.mxu0 0
      %2999 = vmatmul.mubr.bf16.gmra.mrb[0].mxu0 %v2932
      %v3000 = vpop.f32.mrb[0].mxu0
      %v3001 = vadd.f32 0.0, %v3000
      %v3002 = vpop.f32.mrb[0].mxu0
      %v3003 = vadd.f32 0.0, %v3002
      %v3004 = vpop.f32.mrb[0].mxu0
      %v3005 = vadd.f32 0.0, %v3004
      %v3006 = vpop.f32.mrb[0].mxu0
      %v3007 = vadd.f32 0.0, %v3006
      %3008 = vmatprep.mubr.bf16.mxu0 0
      %3009 = vmatmul.mubr.bf16.gmra.mrb[0].mxu0 %v2933
      %v3010 = vpop.f32.mrb[0].mxu0
      %v3011 = vadd.f32 0.0, %v3010
      %v3012 = vpop.f32.mrb[0].mxu0
      %v3013 = vadd.f32 0.0, %v3012
      %v3014 = vpop.f32.mrb[0].mxu0
      %v3015 = vadd.f32 0.0, %v3014
      %v3016 = vpop.f32.mrb[0].mxu0
      %v3017 = vadd.f32 0.0, %v3016
      %3018 = vmatprep.mubr.bf16.mxu0 0
      %3019 = vmatmul.mubr.bf16.gmra.mrb[0].mxu0 %v2934
      %v3020 = vpop.f32.mrb[0].mxu0
      %v3021 = vadd.f32 0.0, %v3020
      %v3022 = vpop.f32.mrb[0].mxu0
      %v3023 = vadd.f32 0.0, %v3022
      %v3024 = vpop.f32.mrb[0].mxu0
      %v3025 = vadd.f32 0.0, %v3024
      %v3026 = vpop.f32.mrb[0].mxu0
      %v3027 = vadd.f32 0.0, %v3026
      %3028 = vmatprep.mubr.bf16.mxu0 0
      %3029 = vmatmul.mubr.bf16.gmra.mrb[0].mxu0 %v2935
      %v3030 = vpop.f32.mrb[0].mxu0
      %v3031 = vadd.f32 0.0, %v3030
      %v3032 = vpop.f32.mrb[0].mxu0
      %v3033 = vadd.f32 0.0, %v3032
      %v3034 = vpop.f32.mrb[0].mxu0
      %v3035 = vadd.f32 0.0, %v3034
      %v3036 = vpop.f32.mrb[0].mxu0
      %v3037 = vadd.f32 0.0, %v3036
      %3038 = vmatprep.mubr.bf16.mxu0 0
      %3039 = vmatmul.mubr.bf16.gmra.mrb[0].mxu0 %v2936
      %v3040 = vpop.f32.mrb[0].mxu0
      %v3041 = vadd.f32 0.0, %v3040
      %v3042 = vpop.f32.mrb[0].mxu0
      %v3043 = vadd.f32 0.0, %v3042
      %v3044 = vpop.f32.mrb[0].mxu0
      %v3045 = vadd.f32 0.0, %v3044
      %v3046 = vpop.f32.mrb[0].mxu0
      %v3047 = vadd.f32 0.0, %v3046
      %3048 = vmatprep.mubr.bf16.mxu0 0
      %3049 = vmatmul.mubr.bf16.gmra.mrb[0].mxu0 %v2937
      %v3050 = vpop.f32.mrb[0].mxu0
      %v3051 = vadd.f32 0.0, %v3050
      %v3052 = vpop.f32.mrb[0].mxu0
      %v3053 = vadd.f32 0.0, %v3052
      %v3054 = vpop.f32.mrb[0].mxu0
      %v3055 = vadd.f32 0.0, %v3054
      %v3056 = vpop.f32.mrb[0].mxu0
      %v3057 = vadd.f32 0.0, %v3056
      %3058 = vdwg.mxu0
      %3059 = vmatprep.subr.bf16.mxu0 %v2852
      %3060 = vmatpush1.bf16.msra.mxu0 %v2851
      %3061 = vmatprep.subr.bf16.mxu0 %v2856
      %3062 = vmatpush1.bf16.msra.mxu0 %v2855
      %3063 = vmatprep.subr.bf16.mxu0 %v2860
      %3064 = vmatpush1.bf16.msra.mxu0 %v2859
      %3065 = vmatprep.subr.bf16.mxu0 %v2864
      %3066 = vmatpush1.bf16.msra.mxu0 %v2863
      %3067 = vmatprep.subr.bf16.mxu0 %v2868
      %3068 = vmatpush1.bf16.msra.mxu0 %v2867
      %3069 = vmatprep.subr.bf16.mxu0 %v2872
      %3070 = vmatpush1.bf16.msra.mxu0 %v2871
      %3071 = vmatprep.subr.bf16.mxu0 %v2876
      %3072 = vmatpush1.bf16.msra.mxu0 %v2875
      %3073 = vmatprep.subr.bf16.mxu0 %v2880
      %3074 = vmatpush1.bf16.msra.mxu0 %v2879
      %3075 = vmatprep.subr.bf16.mxu0 0
      %3076 = vmatpush1.bf16.msra.mxu0 0
      %3077 = vmatprep.subr.bf16.mxu0 0
      %3078 = vmatpush1.bf16.msra.mxu0 0
      %3079 = vmatprep.subr.bf16.mxu0 0
      %3080 = vmatpush1.bf16.msra.mxu0 0
      %3081 = vmatprep.subr.bf16.mxu0 0
      %3082 = vmatpush1.bf16.msra.mxu0 0
      %3083 = vmatprep.subr.bf16.mxu0 0
      %3084 = vmatpush1.bf16.msra.mxu0 0
      %3085 = vmatprep.subr.bf16.mxu0 0
      %3086 = vmatpush1.bf16.msra.mxu0 0
      %3087 = vmatprep.subr.bf16.mxu0 0
      %3088 = vmatpush1.bf16.msra.mxu0 0
      %3089 = vmatprep.subr.bf16.mxu0 0
      %3090 = vmatpush1.bf16.msra.mxu0 0
      %3091 = vmatprep.mubr.bf16.mxu0 0
      %3092 = vmatmul.mubr.bf16.gmra.mrb[0].mxu0 %v2930
      %v3093 = vpop.f32.mrb[0].mxu0
      %v3094 = vadd.f32 0.0, %v3093
      %v3095 = vpop.f32.mrb[0].mxu0
      %v3096 = vadd.f32 0.0, %v3095
      %v3097 = vpop.f32.mrb[0].mxu0
      %v3098 = vadd.f32 0.0, %v3097
      %v3099 = vpop.f32.mrb[0].mxu0
      %v3100 = vadd.f32 0.0, %v3099
      %3101 = vmatprep.mubr.bf16.mxu0 0
      %3102 = vmatmul.mubr.bf16.gmra.mrb[0].mxu0 %v2931
      %v3103 = vpop.f32.mrb[0].mxu0
      %v3104 = vadd.f32 0.0, %v3103
      %v3105 = vpop.f32.mrb[0].mxu0
      %v3106 = vadd.f32 0.0, %v3105
      %v3107 = vpop.f32.mrb[0].mxu0
      %v3108 = vadd.f32 0.0, %v3107
      %v3109 = vpop.f32.mrb[0].mxu0
      %v3110 = vadd.f32 0.0, %v3109
      %3111 = vmatprep.mubr.bf16.mxu0 0
      %3112 = vmatmul.mubr.bf16.gmra.mrb[0].mxu0 %v2932
      %v3113 = vpop.f32.mrb[0].mxu0
      %v3114 = vadd.f32 0.0, %v3113
      %v3115 = vpop.f32.mrb[0].mxu0
      %v3116 = vadd.f32 0.0, %v3115
      %v3117 = vpop.f32.mrb[0].mxu0
      %v3118 = vadd.f32 0.0, %v3117
      %v3119 = vpop.f32.mrb[0].mxu0
      %v3120 = vadd.f32 0.0, %v3119
      %3121 = vmatprep.mubr.bf16.mxu0 0
      %3122 = vmatmul.mubr.bf16.gmra.mrb[0].mxu0 %v2933
      %v3123 = vpop.f32.mrb[0].mxu0
      %v3124 = vadd.f32 0.0, %v3123
      %v3125 = vpop.f32.mrb[0].mxu0
      %v3126 = vadd.f32 0.0, %v3125
      %v3127 = vpop.f32.mrb[0].mxu0
      %v3128 = vadd.f32 0.0, %v3127
      %v3129 = vpop.f32.mrb[0].mxu0
      %v3130 = vadd.f32 0.0, %v3129
      %3131 = vmatprep.mubr.bf16.mxu0 0
      %3132 = vmatmul.mubr.bf16.gmra.mrb[0].mxu0 %v2934
      %v3133 = vpop.f32.mrb[0].mxu0
      %v3134 = vadd.f32 0.0, %v3133
      %v3135 = vpop.f32.mrb[0].mxu0
      %v3136 = vadd.f32 0.0, %v3135
      %v3137 = vpop.f32.mrb[0].mxu0
      %v3138 = vadd.f32 0.0, %v3137
      %v3139 = vpop.f32.mrb[0].mxu0
      %v3140 = vadd.f32 0.0, %v3139
      %3141 = vmatprep.mubr.bf16.mxu0 0
      %3142 = vmatmul.mubr.bf16.gmra.mrb[0].mxu0 %v2935
      %v3143 = vpop.f32.mrb[0].mxu0
      %v3144 = vadd.f32 0.0, %v3143
      %v3145 = vpop.f32.mrb[0].mxu0
      %v3146 = vadd.f32 0.0, %v3145
      %v3147 = vpop.f32.mrb[0].mxu0
      %v3148 = vadd.f32 0.0, %v3147
      %v3149 = vpop.f32.mrb[0].mxu0
      %v3150 = vadd.f32 0.0, %v3149
      %3151 = vmatprep.mubr.bf16.mxu0 0
      %3152 = vmatmul.mubr.bf16.gmra.mrb[0].mxu0 %v2936
      %v3153 = vpop.f32.mrb[0].mxu0
      %v3154 = vadd.f32 0.0, %v3153
      %v3155 = vpop.f32.mrb[0].mxu0
      %v3156 = vadd.f32 0.0, %v3155
      %v3157 = vpop.f32.mrb[0].mxu0
      %v3158 = vadd.f32 0.0, %v3157
      %v3159 = vpop.f32.mrb[0].mxu0
      %v3160 = vadd.f32 0.0, %v3159
      %3161 = vmatprep.mubr.bf16.mxu0 0
      %3162 = vmatmul.mubr.bf16.gmra.mrb[0].mxu0 %v2937
      %v3163 = vpop.f32.mrb[0].mxu0
      %v3164 = vadd.f32 0.0, %v3163
      %v3165 = vpop.f32.mrb[0].mxu0
      %v3166 = vadd.f32 0.0, %v3165
      %v3167 = vpop.f32.mrb[0].mxu0
      %v3168 = vadd.f32 0.0, %v3167
      %v3169 = vpop.f32.mrb[0].mxu0
      %v3170 = vadd.f32 0.0, %v3169
      %3171 = vdwg.mxu0
      %v3172 = vadd.f32 %v2237, %v2981
      %v3173 = vadd.f32 %v2238, %v2983
      %v3174 = vadd.f32 %v2239, %v3094
      %v3175 = vadd.f32 %v2240, %v3096
      %v3176 = vadd.f32 %v2241, %v2985
      %v3177 = vadd.f32 %v2242, %v2987
      %v3178 = vadd.f32 %v2243, %v3098
      %v3179 = vadd.f32 %v2244, %v3100
      %v3180 = vadd.f32 %v2245, %v2991
      %v3181 = vadd.f32 %v2246, %v2993
      %v3182 = vadd.f32 %v2247, %v3104
      %v3183 = vadd.f32 %v2248, %v3106
      %v3184 = vadd.f32 %v2249, %v2995
      %v3185 = vadd.f32 %v2250, %v2997
      %v3186 = vadd.f32 %v2251, %v3108
      %v3187 = vadd.f32 %v2252, %v3110
      %v3188 = vadd.f32 %v2253, %v3001
      %v3189 = vadd.f32 %v2254, %v3003
      %v3190 = vadd.f32 %v2255, %v3114
      %v3191 = vadd.f32 %v2256, %v3116
      %v3192 = vadd.f32 %v2257, %v3005
      %v3193 = vadd.f32 %v2258, %v3007
      %v3194 = vadd.f32 %v2259, %v3118
      %v3195 = vadd.f32 %v2260, %v3120
      %v3196 = vadd.f32 %v2261, %v3011
      %v3197 = vadd.f32 %v2262, %v3013
      %v3198 = vadd.f32 %v2263, %v3124
      %v3199 = vadd.f32 %v2264, %v3126
      %v3200 = vadd.f32 %v2265, %v3015
      %v3201 = vadd.f32 %v2266, %v3017
      %v3202 = vadd.f32 %v2267, %v3128
      %v3203 = vadd.f32 %v2268, %v3130
      %v3204 = vadd.f32 %v2269, %v3021
      %v3205 = vadd.f32 %v2270, %v3023
      %v3206 = vadd.f32 %v2271, %v3134
      %v3207 = vadd.f32 %v2272, %v3136
      %v3208 = vadd.f32 %v2273, %v3025
      %v3209 = vadd.f32 %v2274, %v3027
      %v3210 = vadd.f32 %v2275, %v3138
      %v3211 = vadd.f32 %v2276, %v3140
      %v3212 = vadd.f32 %v2277, %v3031
      %v3213 = vadd.f32 %v2278, %v3033
      %v3214 = vadd.f32 %v2279, %v3144
      %v3215 = vadd.f32 %v2280, %v3146
      %v3216 = vadd.f32 %v2281, %v3035
      %v3217 = vadd.f32 %v2282, %v3037
      %v3218 = vadd.f32 %v2283, %v3148
      %v3219 = vadd.f32 %v2284, %v3150
      %v3220 = vadd.f32 %v2285, %v3041
      %v3221 = vadd.f32 %v2286, %v3043
      %v3222 = vadd.f32 %v2287, %v3154
      %v3223 = vadd.f32 %v2288, %v3156
      %v3224 = vadd.f32 %v2289, %v3045
      %v3225 = vadd.f32 %v2290, %v3047
      %v3226 = vadd.f32 %v2291, %v3158
      %v3227 = vadd.f32 %v2292, %v3160
      %v3228 = vadd.f32 %v2293, %v3051
      %v3229 = vadd.f32 %v2294, %v3053
      %v3230 = vadd.f32 %v2295, %v3164
      %v3231 = vadd.f32 %v2296, %v3166
      %v3232 = vadd.f32 %v2297, %v3055
      %v3233 = vadd.f32 %v2298, %v3057
      %v3234 = vadd.f32 %v2299, %v3168
      %v3235 = vadd.f32 %v2300, %v3170
      %s3236 = scalar_lea.vmem %s6, 128
      %v3237 = vld [vmem:[%s3236] sm:$0xff]
      %v3238 = vld [vmem:[%s3236 + $0x8] sm:$0xff]
      %v3239 = vld [vmem:[%s3236 + $0x10] sm:$0xff]
      %v3240 = vld [vmem:[%s3236 + $0x18] sm:$0xff]
      %v3241 = vld [vmem:[%s3236 + $0x20] sm:$0xff]
      %v3242 = vld [vmem:[%s3236 + $0x28] sm:$0xff]
      %v3243 = vld [vmem:[%s3236 + $0x30] sm:$0xff]
      %v3244 = vld [vmem:[%s3236 + $0x38] sm:$0xff]
      %v3245 = vld [vmem:[%s3236 + $0x40] sm:$0xff]
      %v3246 = vld [vmem:[%s3236 + $0x48] sm:$0xff]
      %v3247 = vld [vmem:[%s3236 + $0x50] sm:$0xff]
      %v3248 = vld [vmem:[%s3236 + $0x58] sm:$0xff]
      %v3249 = vld [vmem:[%s3236 + $0x60] sm:$0xff]
      %v3250 = vld [vmem:[%s3236 + $0x68] sm:$0xff]
      %v3251 = vld [vmem:[%s3236 + $0x70] sm:$0xff]
      %v3252 = vld [vmem:[%s3236 + $0x78] sm:$0xff]
      %3254 = vset.pattern.permute.xlu0 0
      %3255 = vperm.xlu0 %3254, %v3237
      %v3256 = vpop.permute.xlu0 %3255
      %3259 = vset.pattern.permute.xlu0 0
      %3260 = vperm.xlu0 %3259, %v3238
      %v3261 = vpop.permute.xlu0 %3260
      %3264 = vset.pattern.permute.xlu0 0
      %3265 = vperm.xlu0 %3264, %v3239
      %v3266 = vpop.permute.xlu0 %3265
      %3269 = vset.pattern.permute.xlu0 0
      %3270 = vperm.xlu0 %3269, %v3240
      %v3271 = vpop.permute.xlu0 %3270
      %3274 = vset.pattern.permute.xlu0 0
      %3275 = vperm.xlu0 %3274, %v3241
      %v3276 = vpop.permute.xlu0 %3275
      %3279 = vset.pattern.permute.xlu0 0
      %3280 = vperm.xlu0 %3279, %v3242
      %v3281 = vpop.permute.xlu0 %3280
      %3284 = vset.pattern.permute.xlu0 0
      %3285 = vperm.xlu0 %3284, %v3243
      %v3286 = vpop.permute.xlu0 %3285
      %3289 = vset.pattern.permute.xlu0 0
      %3290 = vperm.xlu0 %3289, %v3244
      %v3291 = vpop.permute.xlu0 %3290
      %3294 = vset.pattern.permute.xlu0 0
      %3295 = vperm.xlu0 %3294, %v3245
      %v3296 = vpop.permute.xlu0 %3295
      %3299 = vset.pattern.permute.xlu0 0
      %3300 = vperm.xlu0 %3299, %v3246
      %v3301 = vpop.permute.xlu0 %3300
      %3304 = vset.pattern.permute.xlu0 0
      %3305 = vperm.xlu0 %3304, %v3247
      %v3306 = vpop.permute.xlu0 %3305
      %3309 = vset.pattern.permute.xlu0 0
      %3310 = vperm.xlu0 %3309, %v3248
      %v3311 = vpop.permute.xlu0 %3310
      %3314 = vset.pattern.permute.xlu0 0
      %3315 = vperm.xlu0 %3314, %v3249
      %v3316 = vpop.permute.xlu0 %3315
      %3319 = vset.pattern.permute.xlu0 0
      %3320 = vperm.xlu0 %3319, %v3250
      %v3321 = vpop.permute.xlu0 %3320
      %3324 = vset.pattern.permute.xlu0 0
      %3325 = vperm.xlu0 %3324, %v3251
      %v3326 = vpop.permute.xlu0 %3325
      %3329 = vset.pattern.permute.xlu0 0
      %3330 = vperm.xlu0 %3329, %v3252
      %v3331 = vpop.permute.xlu0 %3330
      %v3333 = vadd.f32 %v3172, %v3256
      %v3334 = vadd.f32 %v3173, %v3256
      %v3335 = vadd.f32 %v3174, %v3256
      %v3336 = vadd.f32 %v3175, %v3256
      %v3337 = vadd.f32 %v3176, %v3261
      %v3338 = vadd.f32 %v3177, %v3261
      %v3339 = vadd.f32 %v3178, %v3261
      %v3340 = vadd.f32 %v3179, %v3261
      %v3341 = vadd.f32 %v3180, %v3266
      %v3342 = vadd.f32 %v3181, %v3266
      %v3343 = vadd.f32 %v3182, %v3266
      %v3344 = vadd.f32 %v3183, %v3266
      %v3345 = vadd.f32 %v3184, %v3271
      %v3346 = vadd.f32 %v3185, %v3271
      %v3347 = vadd.f32 %v3186, %v3271
      %v3348 = vadd.f32 %v3187, %v3271
      %v3349 = vadd.f32 %v3188, %v3276
      %v3350 = vadd.f32 %v3189, %v3276
      %v3351 = vadd.f32 %v3190, %v3276
      %v3352 = vadd.f32 %v3191, %v3276
      %v3353 = vadd.f32 %v3192, %v3281
      %v3354 = vadd.f32 %v3193, %v3281
      %v3355 = vadd.f32 %v3194, %v3281
      %v3356 = vadd.f32 %v3195, %v3281
      %v3357 = vadd.f32 %v3196, %v3286
      %v3358 = vadd.f32 %v3197, %v3286
      %v3359 = vadd.f32 %v3198, %v3286
      %v3360 = vadd.f32 %v3199, %v3286
      %v3361 = vadd.f32 %v3200, %v3291
      %v3362 = vadd.f32 %v3201, %v3291
      %v3363 = vadd.f32 %v3202, %v3291
      %v3364 = vadd.f32 %v3203, %v3291
      %v3365 = vadd.f32 %v3204, %v3296
      %v3366 = vadd.f32 %v3205, %v3296
      %v3367 = vadd.f32 %v3206, %v3296
      %v3368 = vadd.f32 %v3207, %v3296
      %v3369 = vadd.f32 %v3208, %v3301
      %v3370 = vadd.f32 %v3209, %v3301
      %v3371 = vadd.f32 %v3210, %v3301
      %v3372 = vadd.f32 %v3211, %v3301
      %v3373 = vadd.f32 %v3212, %v3306
      %v3374 = vadd.f32 %v3213, %v3306
      %v3375 = vadd.f32 %v3214, %v3306
      %v3376 = vadd.f32 %v3215, %v3306
      %v3377 = vadd.f32 %v3216, %v3311
      %v3378 = vadd.f32 %v3217, %v3311
      %v3379 = vadd.f32 %v3218, %v3311
      %v3380 = vadd.f32 %v3219, %v3311
      %v3381 = vadd.f32 %v3220, %v3316
      %v3382 = vadd.f32 %v3221, %v3316
      %v3383 = vadd.f32 %v3222, %v3316
      %v3384 = vadd.f32 %v3223, %v3316
      %v3385 = vadd.f32 %v3224, %v3321
      %v3386 = vadd.f32 %v3225, %v3321
      %v3387 = vadd.f32 %v3226, %v3321
      %v3388 = vadd.f32 %v3227, %v3321
      %v3389 = vadd.f32 %v3228, %v3326
      %v3390 = vadd.f32 %v3229, %v3326
      %v3391 = vadd.f32 %v3230, %v3326
      %v3392 = vadd.f32 %v3231, %v3326
      %v3393 = vadd.f32 %v3232, %v3331
      %v3394 = vadd.f32 %v3233, %v3331
      %v3395 = vadd.f32 %v3234, %v3331
      %v3396 = vadd.f32 %v3235, %v3331
      %v3397 = vmax.f32 %v3333, 0.0
      %v3398 = vmax.f32 %v3334, 0.0
      %v3399 = vmax.f32 %v3335, 0.0
      %v3400 = vmax.f32 %v3336, 0.0
      %v3401 = vmax.f32 %v3337, 0.0
      %v3402 = vmax.f32 %v3338, 0.0
      %v3403 = vmax.f32 %v3339, 0.0
      %v3404 = vmax.f32 %v3340, 0.0
      %v3405 = vmax.f32 %v3341, 0.0
      %v3406 = vmax.f32 %v3342, 0.0
      %v3407 = vmax.f32 %v3343, 0.0
      %v3408 = vmax.f32 %v3344, 0.0
      %v3409 = vmax.f32 %v3345, 0.0
      %v3410 = vmax.f32 %v3346, 0.0
      %v3411 = vmax.f32 %v3347, 0.0
      %v3412 = vmax.f32 %v3348, 0.0
      %v3413 = vmax.f32 %v3349, 0.0
      %v3414 = vmax.f32 %v3350, 0.0
      %v3415 = vmax.f32 %v3351, 0.0
      %v3416 = vmax.f32 %v3352, 0.0
      %v3417 = vmax.f32 %v3353, 0.0
      %v3418 = vmax.f32 %v3354, 0.0
      %v3419 = vmax.f32 %v3355, 0.0
      %v3420 = vmax.f32 %v3356, 0.0
      %v3421 = vmax.f32 %v3357, 0.0
      %v3422 = vmax.f32 %v3358, 0.0
      %v3423 = vmax.f32 %v3359, 0.0
      %v3424 = vmax.f32 %v3360, 0.0
      %v3425 = vmax.f32 %v3361, 0.0
      %v3426 = vmax.f32 %v3362, 0.0
      %v3427 = vmax.f32 %v3363, 0.0
      %v3428 = vmax.f32 %v3364, 0.0
      %v3429 = vmax.f32 %v3365, 0.0
      %v3430 = vmax.f32 %v3366, 0.0
      %v3431 = vmax.f32 %v3367, 0.0
      %v3432 = vmax.f32 %v3368, 0.0
      %v3433 = vmax.f32 %v3369, 0.0
      %v3434 = vmax.f32 %v3370, 0.0
      %v3435 = vmax.f32 %v3371, 0.0
      %v3436 = vmax.f32 %v3372, 0.0
      %v3437 = vmax.f32 %v3373, 0.0
      %v3438 = vmax.f32 %v3374, 0.0
      %v3439 = vmax.f32 %v3375, 0.0
      %v3440 = vmax.f32 %v3376, 0.0
      %v3441 = vmax.f32 %v3377, 0.0
      %v3442 = vmax.f32 %v3378, 0.0
      %v3443 = vmax.f32 %v3379, 0.0
      %v3444 = vmax.f32 %v3380, 0.0
      %v3445 = vmax.f32 %v3381, 0.0
      %v3446 = vmax.f32 %v3382, 0.0
      %v3447 = vmax.f32 %v3383, 0.0
      %v3448 = vmax.f32 %v3384, 0.0
      %v3449 = vmax.f32 %v3385, 0.0
      %v3450 = vmax.f32 %v3386, 0.0
      %v3451 = vmax.f32 %v3387, 0.0
      %v3452 = vmax.f32 %v3388, 0.0
      %v3453 = vmax.f32 %v3389, 0.0
      %v3454 = vmax.f32 %v3390, 0.0
      %v3455 = vmax.f32 %v3391, 0.0
      %v3456 = vmax.f32 %v3392, 0.0
      %v3457 = vmax.f32 %v3393, 0.0
      %v3458 = vmax.f32 %v3394, 0.0
      %v3459 = vmax.f32 %v3395, 0.0
      %v3460 = vmax.f32 %v3396, 0.0
      %v3461 = vpack.c.bf16 %v3401, %v3397
      %v3462 = vpack.c.bf16 %v3402, %v3398
      %v3463 = vpack.c.bf16 %v3403, %v3399
      %v3464 = vpack.c.bf16 %v3404, %v3400
      %v3465 = vpack.c.bf16 %v3409, %v3405
      %v3466 = vpack.c.bf16 %v3410, %v3406
      %v3467 = vpack.c.bf16 %v3411, %v3407
      %v3468 = vpack.c.bf16 %v3412, %v3408
      %v3469 = vpack.c.bf16 %v3417, %v3413
      %v3470 = vpack.c.bf16 %v3418, %v3414
      %v3471 = vpack.c.bf16 %v3419, %v3415
      %v3472 = vpack.c.bf16 %v3420, %v3416
      %v3473 = vpack.c.bf16 %v3425, %v3421
      %v3474 = vpack.c.bf16 %v3426, %v3422
      %v3475 = vpack.c.bf16 %v3427, %v3423
      %v3476 = vpack.c.bf16 %v3428, %v3424
      %v3477 = vpack.c.bf16 %v3433, %v3429
      %v3478 = vpack.c.bf16 %v3434, %v3430
      %v3479 = vpack.c.bf16 %v3435, %v3431
      %v3480 = vpack.c.bf16 %v3436, %v3432
      %v3481 = vpack.c.bf16 %v3441, %v3437
      %v3482 = vpack.c.bf16 %v3442, %v3438
      %v3483 = vpack.c.bf16 %v3443, %v3439
      %v3484 = vpack.c.bf16 %v3444, %v3440
      %v3485 = vpack.c.bf16 %v3449, %v3445
      %v3486 = vpack.c.bf16 %v3450, %v3446
      %v3487 = vpack.c.bf16 %v3451, %v3447
      %v3488 = vpack.c.bf16 %v3452, %v3448
      %v3489 = vpack.c.bf16 %v3457, %v3453
      %v3490 = vpack.c.bf16 %v3458, %v3454
      %v3491 = vpack.c.bf16 %v3459, %v3455
      %v3492 = vpack.c.bf16 %v3460, %v3456
      %s3493 = scalar_lea.vmem %s3, 128
      %v3494 = vld [vmem:[%s3493] sm:$0xf]
      %v3495 = vld [vmem:[%s3493 + $0x4] sm:$0xf]
      %v3496 = vld [vmem:[%s3493 + $0x8] sm:$0xf]
      %v3497 = vld [vmem:[%s3493 + $0xc] sm:$0xf]
      %v3498 = vld [vmem:[%s3493 + $0x10] sm:$0xf]
      %v3499 = vld [vmem:[%s3493 + $0x14] sm:$0xf]
      %v3500 = vld [vmem:[%s3493 + $0x18] sm:$0xf]
      %v3501 = vld [vmem:[%s3493 + $0x1c] sm:$0xf]
      %v3502 = vld [vmem:[%s3493 + $0x20] sm:$0xf]
      %v3503 = vld [vmem:[%s3493 + $0x24] sm:$0xf]
      %v3504 = vld [vmem:[%s3493 + $0x28] sm:$0xf]
      %v3505 = vld [vmem:[%s3493 + $0x2c] sm:$0xf]
      %v3506 = vld [vmem:[%s3493 + $0x30] sm:$0xf]
      %v3507 = vld [vmem:[%s3493 + $0x34] sm:$0xf]
      %v3508 = vld [vmem:[%s3493 + $0x38] sm:$0xf]
      %v3509 = vld [vmem:[%s3493 + $0x3c] sm:$0xf]
      %s3510 = scalar_lea.vmem %s4, 256
      %v3511 = vld [vmem:[%s3510] sm:$0xff]
      %v3512 = vld [vmem:[%s3510 + $0x8] sm:$0xff]
      %v3513 = vld [vmem:[%s3510 + $0x10] sm:$0xff]
      %v3514 = vld [vmem:[%s3510 + $0x18] sm:$0xff]
      %v3515 = vld [vmem:[%s3510 + $0x20] sm:$0xff]
      %v3516 = vld [vmem:[%s3510 + $0x28] sm:$0xff]
      %v3517 = vld [vmem:[%s3510 + $0x30] sm:$0xff]
      %v3518 = vld [vmem:[%s3510 + $0x38] sm:$0xff]
      %v3519 = vld [vmem:[%s3510 + $0x40] sm:$0xff]
      %v3520 = vld [vmem:[%s3510 + $0x48] sm:$0xff]
      %v3521 = vld [vmem:[%s3510 + $0x50] sm:$0xff]
      %v3522 = vld [vmem:[%s3510 + $0x58] sm:$0xff]
      %v3523 = vld [vmem:[%s3510 + $0x60] sm:$0xff]
      %v3524 = vld [vmem:[%s3510 + $0x68] sm:$0xff]
      %v3525 = vld [vmem:[%s3510 + $0x70] sm:$0xff]
      %v3526 = vld [vmem:[%s3510 + $0x78] sm:$0xff]
      %3528 = vset.pattern.permute.xlu0 0
      %3529 = vperm.xlu0 %3528, %v3511
      %v3530 = vpop.permute.xlu0 %3529
      %3533 = vset.pattern.permute.xlu0 0
      %3534 = vperm.xlu0 %3533, %v3512
      %v3535 = vpop.permute.xlu0 %3534
      %3538 = vset.pattern.permute.xlu0 0
      %3539 = vperm.xlu0 %3538, %v3513
      %v3540 = vpop.permute.xlu0 %3539
      %3543 = vset.pattern.permute.xlu0 0
      %3544 = vperm.xlu0 %3543, %v3514
      %v3545 = vpop.permute.xlu0 %3544
      %3548 = vset.pattern.permute.xlu0 0
      %3549 = vperm.xlu0 %3548, %v3515
      %v3550 = vpop.permute.xlu0 %3549
      %3553 = vset.pattern.permute.xlu0 0
      %3554 = vperm.xlu0 %3553, %v3516
      %v3555 = vpop.permute.xlu0 %3554
      %3558 = vset.pattern.permute.xlu0 0
      %3559 = vperm.xlu0 %3558, %v3517
      %v3560 = vpop.permute.xlu0 %3559
      %3563 = vset.pattern.permute.xlu0 0
      %3564 = vperm.xlu0 %3563, %v3518
      %v3565 = vpop.permute.xlu0 %3564
      %3568 = vset.pattern.permute.xlu0 0
      %3569 = vperm.xlu0 %3568, %v3519
      %v3570 = vpop.permute.xlu0 %3569
      %3573 = vset.pattern.permute.xlu0 0
      %3574 = vperm.xlu0 %3573, %v3520
      %v3575 = vpop.permute.xlu0 %3574
      %3578 = vset.pattern.permute.xlu0 0
      %3579 = vperm.xlu0 %3578, %v3521
      %v3580 = vpop.permute.xlu0 %3579
      %3583 = vset.pattern.permute.xlu0 0
      %3584 = vperm.xlu0 %3583, %v3522
      %v3585 = vpop.permute.xlu0 %3584
      %3588 = vset.pattern.permute.xlu0 0
      %3589 = vperm.xlu0 %3588, %v3523
      %v3590 = vpop.permute.xlu0 %3589
      %3593 = vset.pattern.permute.xlu0 0
      %3594 = vperm.xlu0 %3593, %v3524
      %v3595 = vpop.permute.xlu0 %3594
      %3598 = vset.pattern.permute.xlu0 0
      %3599 = vperm.xlu0 %3598, %v3525
      %v3600 = vpop.permute.xlu0 %3599
      %3603 = vset.pattern.permute.xlu0 0
      %3604 = vperm.xlu0 %3603, %v3526
      %v3605 = vpop.permute.xlu0 %3604
      %v3623 = vunpack.c.l.b16 %v3494
      %v3624 = vunpack.c.l.b16 %v3495
      %v3625 = vunpack.c.l.b16 %v3496
      %v3626 = vunpack.c.l.b16 %v3497
      %v3627 = vunpack.c.l.b16 %v3498
      %v3628 = vunpack.c.l.b16 %v3499
      %v3629 = vunpack.c.l.b16 %v3500
      %v3630 = vunpack.c.l.b16 %v3501
      %v3631 = vunpack.c.l.b16 %v3502
      %v3632 = vunpack.c.l.b16 %v3503
      %v3633 = vunpack.c.l.b16 %v3504
      %v3634 = vunpack.c.l.b16 %v3505
      %v3635 = vunpack.c.l.b16 %v3506
      %v3636 = vunpack.c.l.b16 %v3507
      %v3637 = vunpack.c.l.b16 %v3508
      %v3638 = vunpack.c.l.b16 %v3509
      %v3639 = vpack.c.b16 %v3624, %v3623
      %v3640 = vpack.c.b16 %v3626, %v3625
      %v3641 = vpack.c.b16 %v3628, %v3627
      %v3642 = vpack.c.b16 %v3630, %v3629
      %v3643 = vpack.c.b16 %v3632, %v3631
      %v3644 = vpack.c.b16 %v3634, %v3633
      %v3645 = vpack.c.b16 %v3636, %v3635
      %v3646 = vpack.c.b16 %v3638, %v3637
      %3655 = vmatprep.subr.bf16.mxu0 %v3462
      %3656 = vmatpush1.bf16.msra.mxu0 %v3461
      %3657 = vmatprep.subr.bf16.mxu0 %v3466
      %3658 = vmatpush1.bf16.msra.mxu0 %v3465
      %3659 = vmatprep.subr.bf16.mxu0 %v3470
      %3660 = vmatpush1.bf16.msra.mxu0 %v3469
      %3661 = vmatprep.subr.bf16.mxu0 %v3474
      %3662 = vmatpush1.bf16.msra.mxu0 %v3473
      %3663 = vmatprep.subr.bf16.mxu0 %v3478
      %3664 = vmatpush1.bf16.msra.mxu0 %v3477
      %3665 = vmatprep.subr.bf16.mxu0 %v3482
      %3666 = vmatpush1.bf16.msra.mxu0 %v3481
      %3667 = vmatprep.subr.bf16.mxu0 %v3486
      %3668 = vmatpush1.bf16.msra.mxu0 %v3485
      %3669 = vmatprep.subr.bf16.mxu0 %v3490
      %3670 = vmatpush1.bf16.msra.mxu0 %v3489
      %3671 = vmatprep.subr.bf16.mxu0 0
      %3672 = vmatpush1.bf16.msra.mxu0 0
      %3673 = vmatprep.subr.bf16.mxu0 0
      %3674 = vmatpush1.bf16.msra.mxu0 0
      %3675 = vmatprep.subr.bf16.mxu0 0
      %3676 = vmatpush1.bf16.msra.mxu0 0
      %3677 = vmatprep.subr.bf16.mxu0 0
      %3678 = vmatpush1.bf16.msra.mxu0 0
      %3679 = vmatprep.subr.bf16.mxu0 0
      %3680 = vmatpush1.bf16.msra.mxu0 0
      %3681 = vmatprep.subr.bf16.mxu0 0
      %3682 = vmatpush1.bf16.msra.mxu0 0
      %3683 = vmatprep.subr.bf16.mxu0 0
      %3684 = vmatpush1.bf16.msra.mxu0 0
      %3685 = vmatprep.subr.bf16.mxu0 0
      %3686 = vmatpush1.bf16.msra.mxu0 0
      %3687 = vmatprep.mubr.bf16.mxu0 0
      %3688 = vmatmul.mubr.bf16.gmra.mrb[0].mxu0 %v3639
      %v3689 = vpop.f32.mrb[0].mxu0
      %v3690 = vadd.f32 %v3530, %v3689
      %v3691 = vpop.f32.mrb[0].mxu0
      %v3692 = vadd.f32 %v3530, %v3691
      %v3693 = vpop.f32.mrb[0].mxu0
      %v3694 = vadd.f32 %v3535, %v3693
      %v3695 = vpop.f32.mrb[0].mxu0
      %v3696 = vadd.f32 %v3535, %v3695
      %3697 = vmatprep.mubr.bf16.mxu0 0
      %3698 = vmatmul.mubr.bf16.gmra.mrb[0].mxu0 %v3640
      %v3699 = vpop.f32.mrb[0].mxu0
      %v3700 = vadd.f32 %v3540, %v3699
      %v3701 = vpop.f32.mrb[0].mxu0
      %v3702 = vadd.f32 %v3540, %v3701
      %v3703 = vpop.f32.mrb[0].mxu0
      %v3704 = vadd.f32 %v3545, %v3703
      %v3705 = vpop.f32.mrb[0].mxu0
      %v3706 = vadd.f32 %v3545, %v3705
      %3707 = vmatprep.mubr.bf16.mxu0 0
      %3708 = vmatmul.mubr.bf16.gmra.mrb[0].mxu0 %v3641
      %v3709 = vpop.f32.mrb[0].mxu0
      %v3710 = vadd.f32 %v3550, %v3709
      %v3711 = vpop.f32.mrb[0].mxu0
      %v3712 = vadd.f32 %v3550, %v3711
      %v3713 = vpop.f32.mrb[0].mxu0
      %v3714 = vadd.f32 %v3555, %v3713
      %v3715 = vpop.f32.mrb[0].mxu0
      %v3716 = vadd.f32 %v3555, %v3715
      %3717 = vmatprep.mubr.bf16.mxu0 0
      %3718 = vmatmul.mubr.bf16.gmra.mrb[0].mxu0 %v3642
      %v3719 = vpop.f32.mrb[0].mxu0
      %v3720 = vadd.f32 %v3560, %v3719
      %v3721 = vpop.f32.mrb[0].mxu0
      %v3722 = vadd.f32 %v3560, %v3721
      %v3723 = vpop.f32.mrb[0].mxu0
      %v3724 = vadd.f32 %v3565, %v3723
      %v3725 = vpop.f32.mrb[0].mxu0
      %v3726 = vadd.f32 %v3565, %v3725
      %3727 = vmatprep.mubr.bf16.mxu0 0
      %3728 = vmatmul.mubr.bf16.gmra.mrb[0].mxu0 %v3643
      %v3729 = vpop.f32.mrb[0].mxu0
      %v3730 = vadd.f32 %v3570, %v3729
      %v3731 = vpop.f32.mrb[0].mxu0
      %v3732 = vadd.f32 %v3570, %v3731
      %v3733 = vpop.f32.mrb[0].mxu0
      %v3734 = vadd.f32 %v3575, %v3733
      %v3735 = vpop.f32.mrb[0].mxu0
      %v3736 = vadd.f32 %v3575, %v3735
      %3737 = vmatprep.mubr.bf16.mxu0 0
      %3738 = vmatmul.mubr.bf16.gmra.mrb[0].mxu0 %v3644
      %v3739 = vpop.f32.mrb[0].mxu0
      %v3740 = vadd.f32 %v3580, %v3739
      %v3741 = vpop.f32.mrb[0].mxu0
      %v3742 = vadd.f32 %v3580, %v3741
      %v3743 = vpop.f32.mrb[0].mxu0
      %v3744 = vadd.f32 %v3585, %v3743
      %v3745 = vpop.f32.mrb[0].mxu0
      %v3746 = vadd.f32 %v3585, %v3745
      %3747 = vmatprep.mubr.bf16.mxu0 0
      %3748 = vmatmul.mubr.bf16.gmra.mrb[0].mxu0 %v3645
      %v3749 = vpop.f32.mrb[0].mxu0
      %v3750 = vadd.f32 %v3590, %v3749
      %v3751 = vpop.f32.mrb[0].mxu0
      %v3752 = vadd.f32 %v3590, %v3751
      %v3753 = vpop.f32.mrb[0].mxu0
      %v3754 = vadd.f32 %v3595, %v3753
      %v3755 = vpop.f32.mrb[0].mxu0
      %v3756 = vadd.f32 %v3595, %v3755
      %3757 = vmatprep.mubr.bf16.mxu0 0
      %3758 = vmatmul.mubr.bf16.gmra.mrb[0].mxu0 %v3646
      %v3759 = vpop.f32.mrb[0].mxu0
      %v3760 = vadd.f32 %v3600, %v3759
      %v3761 = vpop.f32.mrb[0].mxu0
      %v3762 = vadd.f32 %v3600, %v3761
      %v3763 = vpop.f32.mrb[0].mxu0
      %v3764 = vadd.f32 %v3605, %v3763
      %v3765 = vpop.f32.mrb[0].mxu0
      %v3766 = vadd.f32 %v3605, %v3765
      %3767 = vdwg.mxu0
      %3768 = vmatprep.subr.bf16.mxu0 %v3464
      %3769 = vmatpush1.bf16.msra.mxu0 %v3463
      %3770 = vmatprep.subr.bf16.mxu0 %v3468
      %3771 = vmatpush1.bf16.msra.mxu0 %v3467
      %3772 = vmatprep.subr.bf16.mxu0 %v3472
      %3773 = vmatpush1.bf16.msra.mxu0 %v3471
      %3774 = vmatprep.subr.bf16.mxu0 %v3476
      %3775 = vmatpush1.bf16.msra.mxu0 %v3475
      %3776 = vmatprep.subr.bf16.mxu0 %v3480
      %3777 = vmatpush1.bf16.msra.mxu0 %v3479
      %3778 = vmatprep.subr.bf16.mxu0 %v3484
      %3779 = vmatpush1.bf16.msra.mxu0 %v3483
      %3780 = vmatprep.subr.bf16.mxu0 %v3488
      %3781 = vmatpush1.bf16.msra.mxu0 %v3487
      %3782 = vmatprep.subr.bf16.mxu0 %v3492
      %3783 = vmatpush1.bf16.msra.mxu0 %v3491
      %3784 = vmatprep.subr.bf16.mxu0 0
      %3785 = vmatpush1.bf16.msra.mxu0 0
      %3786 = vmatprep.subr.bf16.mxu0 0
      %3787 = vmatpush1.bf16.msra.mxu0 0
      %3788 = vmatprep.subr.bf16.mxu0 0
      %3789 = vmatpush1.bf16.msra.mxu0 0
      %3790 = vmatprep.subr.bf16.mxu0 0
      %3791 = vmatpush1.bf16.msra.mxu0 0
      %3792 = vmatprep.subr.bf16.mxu0 0
      %3793 = vmatpush1.bf16.msra.mxu0 0
      %3794 = vmatprep.subr.bf16.mxu0 0
      %3795 = vmatpush1.bf16.msra.mxu0 0
      %3796 = vmatprep.subr.bf16.mxu0 0
      %3797 = vmatpush1.bf16.msra.mxu0 0
      %3798 = vmatprep.subr.bf16.mxu0 0
      %3799 = vmatpush1.bf16.msra.mxu0 0
      %3800 = vmatprep.mubr.bf16.mxu0 0
      %3801 = vmatmul.mubr.bf16.gmra.mrb[0].mxu0 %v3639
      %v3802 = vpop.f32.mrb[0].mxu0
      %v3803 = vadd.f32 %v3530, %v3802
      %v3804 = vpop.f32.mrb[0].mxu0
      %v3805 = vadd.f32 %v3530, %v3804
      %v3806 = vpop.f32.mrb[0].mxu0
      %v3807 = vadd.f32 %v3535, %v3806
      %v3808 = vpop.f32.mrb[0].mxu0
      %v3809 = vadd.f32 %v3535, %v3808
      %3810 = vmatprep.mubr.bf16.mxu0 0
      %3811 = vmatmul.mubr.bf16.gmra.mrb[0].mxu0 %v3640
      %v3812 = vpop.f32.mrb[0].mxu0
      %v3813 = vadd.f32 %v3540, %v3812
      %v3814 = vpop.f32.mrb[0].mxu0
      %v3815 = vadd.f32 %v3540, %v3814
      %v3816 = vpop.f32.mrb[0].mxu0
      %v3817 = vadd.f32 %v3545, %v3816
      %v3818 = vpop.f32.mrb[0].mxu0
      %v3819 = vadd.f32 %v3545, %v3818
      %3820 = vmatprep.mubr.bf16.mxu0 0
      %3821 = vmatmul.mubr.bf16.gmra.mrb[0].mxu0 %v3641
      %v3822 = vpop.f32.mrb[0].mxu0
      %v3823 = vadd.f32 %v3550, %v3822
      %v3824 = vpop.f32.mrb[0].mxu0
      %v3825 = vadd.f32 %v3550, %v3824
      %v3826 = vpop.f32.mrb[0].mxu0
      %v3827 = vadd.f32 %v3555, %v3826
      %v3828 = vpop.f32.mrb[0].mxu0
      %v3829 = vadd.f32 %v3555, %v3828
      %3830 = vmatprep.mubr.bf16.mxu0 0
      %3831 = vmatmul.mubr.bf16.gmra.mrb[0].mxu0 %v3642
      %v3832 = vpop.f32.mrb[0].mxu0
      %v3833 = vadd.f32 %v3560, %v3832
      %v3834 = vpop.f32.mrb[0].mxu0
      %v3835 = vadd.f32 %v3560, %v3834
      %v3836 = vpop.f32.mrb[0].mxu0
      %v3837 = vadd.f32 %v3565, %v3836
      %v3838 = vpop.f32.mrb[0].mxu0
      %v3839 = vadd.f32 %v3565, %v3838
      %3840 = vmatprep.mubr.bf16.mxu0 0
      %3841 = vmatmul.mubr.bf16.gmra.mrb[0].mxu0 %v3643
      %v3842 = vpop.f32.mrb[0].mxu0
      %v3843 = vadd.f32 %v3570, %v3842
      %v3844 = vpop.f32.mrb[0].mxu0
      %v3845 = vadd.f32 %v3570, %v3844
      %v3846 = vpop.f32.mrb[0].mxu0
      %v3847 = vadd.f32 %v3575, %v3846
      %v3848 = vpop.f32.mrb[0].mxu0
      %v3849 = vadd.f32 %v3575, %v3848
      %3850 = vmatprep.mubr.bf16.mxu0 0
      %3851 = vmatmul.mubr.bf16.gmra.mrb[0].mxu0 %v3644
      %v3852 = vpop.f32.mrb[0].mxu0
      %v3853 = vadd.f32 %v3580, %v3852
      %v3854 = vpop.f32.mrb[0].mxu0
      %v3855 = vadd.f32 %v3580, %v3854
      %v3856 = vpop.f32.mrb[0].mxu0
      %v3857 = vadd.f32 %v3585, %v3856
      %v3858 = vpop.f32.mrb[0].mxu0
      %v3859 = vadd.f32 %v3585, %v3858
      %3860 = vmatprep.mubr.bf16.mxu0 0
      %3861 = vmatmul.mubr.bf16.gmra.mrb[0].mxu0 %v3645
      %v3862 = vpop.f32.mrb[0].mxu0
      %v3863 = vadd.f32 %v3590, %v3862
      %v3864 = vpop.f32.mrb[0].mxu0
      %v3865 = vadd.f32 %v3590, %v3864
      %v3866 = vpop.f32.mrb[0].mxu0
      %v3867 = vadd.f32 %v3595, %v3866
      %v3868 = vpop.f32.mrb[0].mxu0
      %v3869 = vadd.f32 %v3595, %v3868
      %3870 = vmatprep.mubr.bf16.mxu0 0
      %3871 = vmatmul.mubr.bf16.gmra.mrb[0].mxu0 %v3646
      %v3872 = vpop.f32.mrb[0].mxu0
      %v3873 = vadd.f32 %v3600, %v3872
      %v3874 = vpop.f32.mrb[0].mxu0
      %v3875 = vadd.f32 %v3600, %v3874
      %v3876 = vpop.f32.mrb[0].mxu0
      %v3877 = vadd.f32 %v3605, %v3876
      %v3878 = vpop.f32.mrb[0].mxu0
      %v3879 = vadd.f32 %v3605, %v3878
      %3880 = vdwg.mxu0
      %v3881 = vmax.f32 %v3690, 0.0
      %v3882 = vmax.f32 %v3692, 0.0
      %v3883 = vmax.f32 %v3803, 0.0
      %v3884 = vmax.f32 %v3805, 0.0
      %v3885 = vmax.f32 %v3694, 0.0
      %v3886 = vmax.f32 %v3696, 0.0
      %v3887 = vmax.f32 %v3807, 0.0
      %v3888 = vmax.f32 %v3809, 0.0
      %v3889 = vmax.f32 %v3700, 0.0
      %v3890 = vmax.f32 %v3702, 0.0
      %v3891 = vmax.f32 %v3813, 0.0
      %v3892 = vmax.f32 %v3815, 0.0
      %v3893 = vmax.f32 %v3704, 0.0
      %v3894 = vmax.f32 %v3706, 0.0
      %v3895 = vmax.f32 %v3817, 0.0
      %v3896 = vmax.f32 %v3819, 0.0
      %v3897 = vmax.f32 %v3710, 0.0
      %v3898 = vmax.f32 %v3712, 0.0
      %v3899 = vmax.f32 %v3823, 0.0
      %v3900 = vmax.f32 %v3825, 0.0
      %v3901 = vmax.f32 %v3714, 0.0
      %v3902 = vmax.f32 %v3716, 0.0
      %v3903 = vmax.f32 %v3827, 0.0
      %v3904 = vmax.f32 %v3829, 0.0
      %v3905 = vmax.f32 %v3720, 0.0
      %v3906 = vmax.f32 %v3722, 0.0
      %v3907 = vmax.f32 %v3833, 0.0
      %v3908 = vmax.f32 %v3835, 0.0
      %v3909 = vmax.f32 %v3724, 0.0
      %v3910 = vmax.f32 %v3726, 0.0
      %v3911 = vmax.f32 %v3837, 0.0
      %v3912 = vmax.f32 %v3839, 0.0
      %v3913 = vmax.f32 %v3730, 0.0
      %v3914 = vmax.f32 %v3732, 0.0
      %v3915 = vmax.f32 %v3843, 0.0
      %v3916 = vmax.f32 %v3845, 0.0
      %v3917 = vmax.f32 %v3734, 0.0
      %v3918 = vmax.f32 %v3736, 0.0
      %v3919 = vmax.f32 %v3847, 0.0
      %v3920 = vmax.f32 %v3849, 0.0
      %v3921 = vmax.f32 %v3740, 0.0
      %v3922 = vmax.f32 %v3742, 0.0
      %v3923 = vmax.f32 %v3853, 0.0
      %v3924 = vmax.f32 %v3855, 0.0
      %v3925 = vmax.f32 %v3744, 0.0
      %v3926 = vmax.f32 %v3746, 0.0
      %v3927 = vmax.f32 %v3857, 0.0
      %v3928 = vmax.f32 %v3859, 0.0
      %v3929 = vmax.f32 %v3750, 0.0
      %v3930 = vmax.f32 %v3752, 0.0
      %v3931 = vmax.f32 %v3863, 0.0
      %v3932 = vmax.f32 %v3865, 0.0
      %v3933 = vmax.f32 %v3754, 0.0
      %v3934 = vmax.f32 %v3756, 0.0
      %v3935 = vmax.f32 %v3867, 0.0
      %v3936 = vmax.f32 %v3869, 0.0
      %v3937 = vmax.f32 %v3760, 0.0
      %v3938 = vmax.f32 %v3762, 0.0
      %v3939 = vmax.f32 %v3873, 0.0
      %v3940 = vmax.f32 %v3875, 0.0
      %v3941 = vmax.f32 %v3764, 0.0
      %v3942 = vmax.f32 %v3766, 0.0
      %v3943 = vmax.f32 %v3877, 0.0
      %v3944 = vmax.f32 %v3879, 0.0
      %v3945 = vpack.c.bf16 %v3885, %v3881
      %v3946 = vpack.c.bf16 %v3886, %v3882
      %v3947 = vpack.c.bf16 %v3887, %v3883
      %v3948 = vpack.c.bf16 %v3888, %v3884
      %v3949 = vpack.c.bf16 %v3893, %v3889
      %v3950 = vpack.c.bf16 %v3894, %v3890
      %v3951 = vpack.c.bf16 %v3895, %v3891
      %v3952 = vpack.c.bf16 %v3896, %v3892
      %v3953 = vpack.c.bf16 %v3901, %v3897
      %v3954 = vpack.c.bf16 %v3902, %v3898
      %v3955 = vpack.c.bf16 %v3903, %v3899
      %v3956 = vpack.c.bf16 %v3904, %v3900
      %v3957 = vpack.c.bf16 %v3909, %v3905
      %v3958 = vpack.c.bf16 %v3910, %v3906
      %v3959 = vpack.c.bf16 %v3911, %v3907
      %v3960 = vpack.c.bf16 %v3912, %v3908
      %v3961 = vpack.c.bf16 %v3917, %v3913
      %v3962 = vpack.c.bf16 %v3918, %v3914
      %v3963 = vpack.c.bf16 %v3919, %v3915
      %v3964 = vpack.c.bf16 %v3920, %v3916
      %v3965 = vpack.c.bf16 %v3925, %v3921
      %v3966 = vpack.c.bf16 %v3926, %v3922
      %v3967 = vpack.c.bf16 %v3927, %v3923
      %v3968 = vpack.c.bf16 %v3928, %v3924
      %v3969 = vpack.c.bf16 %v3933, %v3929
      %v3970 = vpack.c.bf16 %v3934, %v3930
      %v3971 = vpack.c.bf16 %v3935, %v3931
      %v3972 = vpack.c.bf16 %v3936, %v3932
      %v3973 = vpack.c.bf16 %v3941, %v3937
      %v3974 = vpack.c.bf16 %v3942, %v3938
      %v3975 = vpack.c.bf16 %v3943, %v3939
      %v3976 = vpack.c.bf16 %v3944, %v3940
      %s3977 = scalar_lea.vmem %s5, 128
      %v3978 = vld [vmem:[%s3977] sm:$0xf]
      %v3979 = vld [vmem:[%s3977 + $0x4] sm:$0xf]
      %v3980 = vld [vmem:[%s3977 + $0x8] sm:$0xf]
      %v3981 = vld [vmem:[%s3977 + $0xc] sm:$0xf]
      %v3982 = vld [vmem:[%s3977 + $0x10] sm:$0xf]
      %v3983 = vld [vmem:[%s3977 + $0x14] sm:$0xf]
      %v3984 = vld [vmem:[%s3977 + $0x18] sm:$0xf]
      %v3985 = vld [vmem:[%s3977 + $0x1c] sm:$0xf]
      %v3986 = vld [vmem:[%s3977 + $0x20] sm:$0xf]
      %v3987 = vld [vmem:[%s3977 + $0x24] sm:$0xf]
      %v3988 = vld [vmem:[%s3977 + $0x28] sm:$0xf]
      %v3989 = vld [vmem:[%s3977 + $0x2c] sm:$0xf]
      %v3990 = vld [vmem:[%s3977 + $0x30] sm:$0xf]
      %v3991 = vld [vmem:[%s3977 + $0x34] sm:$0xf]
      %v3992 = vld [vmem:[%s3977 + $0x38] sm:$0xf]
      %v3993 = vld [vmem:[%s3977 + $0x3c] sm:$0xf]
      %v4010 = vunpack.c.l.b16 %v3978
      %v4011 = vunpack.c.l.b16 %v3979
      %v4012 = vunpack.c.l.b16 %v3980
      %v4013 = vunpack.c.l.b16 %v3981
      %v4014 = vunpack.c.l.b16 %v3982
      %v4015 = vunpack.c.l.b16 %v3983
      %v4016 = vunpack.c.l.b16 %v3984
      %v4017 = vunpack.c.l.b16 %v3985
      %v4018 = vunpack.c.l.b16 %v3986
      %v4019 = vunpack.c.l.b16 %v3987
      %v4020 = vunpack.c.l.b16 %v3988
      %v4021 = vunpack.c.l.b16 %v3989
      %v4022 = vunpack.c.l.b16 %v3990
      %v4023 = vunpack.c.l.b16 %v3991
      %v4024 = vunpack.c.l.b16 %v3992
      %v4025 = vunpack.c.l.b16 %v3993
      %v4026 = vpack.c.b16 %v4011, %v4010
      %v4027 = vpack.c.b16 %v4013, %v4012
      %v4028 = vpack.c.b16 %v4015, %v4014
      %v4029 = vpack.c.b16 %v4017, %v4016
      %v4030 = vpack.c.b16 %v4019, %v4018
      %v4031 = vpack.c.b16 %v4021, %v4020
      %v4032 = vpack.c.b16 %v4023, %v4022
      %v4033 = vpack.c.b16 %v4025, %v4024
      %4042 = vmatprep.subr.bf16.mxu0 %v3946
      %4043 = vmatpush1.bf16.msra.mxu0 %v3945
      %4044 = vmatprep.subr.bf16.mxu0 %v3950
      %4045 = vmatpush1.bf16.msra.mxu0 %v3949
      %4046 = vmatprep.subr.bf16.mxu0 %v3954
      %4047 = vmatpush1.bf16.msra.mxu0 %v3953
      %4048 = vmatprep.subr.bf16.mxu0 %v3958
      %4049 = vmatpush1.bf16.msra.mxu0 %v3957
      %4050 = vmatprep.subr.bf16.mxu0 %v3962
      %4051 = vmatpush1.bf16.msra.mxu0 %v3961
      %4052 = vmatprep.subr.bf16.mxu0 %v3966
      %4053 = vmatpush1.bf16.msra.mxu0 %v3965
      %4054 = vmatprep.subr.bf16.mxu0 %v3970
      %4055 = vmatpush1.bf16.msra.mxu0 %v3969
      %4056 = vmatprep.subr.bf16.mxu0 %v3974
      %4057 = vmatpush1.bf16.msra.mxu0 %v3973
      %4058 = vmatprep.subr.bf16.mxu0 0
      %4059 = vmatpush1.bf16.msra.mxu0 0
      %4060 = vmatprep.subr.bf16.mxu0 0
      %4061 = vmatpush1.bf16.msra.mxu0 0
      %4062 = vmatprep.subr.bf16.mxu0 0
      %4063 = vmatpush1.bf16.msra.mxu0 0
      %4064 = vmatprep.subr.bf16.mxu0 0
      %4065 = vmatpush1.bf16.msra.mxu0 0
      %4066 = vmatprep.subr.bf16.mxu0 0
      %4067 = vmatpush1.bf16.msra.mxu0 0
      %4068 = vmatprep.subr.bf16.mxu0 0
      %4069 = vmatpush1.bf16.msra.mxu0 0
      %4070 = vmatprep.subr.bf16.mxu0 0
      %4071 = vmatpush1.bf16.msra.mxu0 0
      %4072 = vmatprep.subr.bf16.mxu0 0
      %4073 = vmatpush1.bf16.msra.mxu0 0
      %4074 = vmatprep.mubr.bf16.mxu0 0
      %4075 = vmatmul.mubr.bf16.gmra.mrb[0].mxu0 %v4026
      %v4076 = vpop.f32.mrb[0].mxu0
      %v4077 = vadd.f32 0.0, %v4076
      %v4078 = vpop.f32.mrb[0].mxu0
      %v4079 = vadd.f32 0.0, %v4078
      %v4080 = vpop.f32.mrb[0].mxu0
      %v4081 = vadd.f32 0.0, %v4080
      %v4082 = vpop.f32.mrb[0].mxu0
      %v4083 = vadd.f32 0.0, %v4082
      %4084 = vmatprep.mubr.bf16.mxu0 0
      %4085 = vmatmul.mubr.bf16.gmra.mrb[0].mxu0 %v4027
      %v4086 = vpop.f32.mrb[0].mxu0
      %v4087 = vadd.f32 0.0, %v4086
      %v4088 = vpop.f32.mrb[0].mxu0
      %v4089 = vadd.f32 0.0, %v4088
      %v4090 = vpop.f32.mrb[0].mxu0
      %v4091 = vadd.f32 0.0, %v4090
      %v4092 = vpop.f32.mrb[0].mxu0
      %v4093 = vadd.f32 0.0, %v4092
      %4094 = vmatprep.mubr.bf16.mxu0 0
      %4095 = vmatmul.mubr.bf16.gmra.mrb[0].mxu0 %v4028
      %v4096 = vpop.f32.mrb[0].mxu0
      %v4097 = vadd.f32 0.0, %v4096
      %v4098 = vpop.f32.mrb[0].mxu0
      %v4099 = vadd.f32 0.0, %v4098
      %v4100 = vpop.f32.mrb[0].mxu0
      %v4101 = vadd.f32 0.0, %v4100
      %v4102 = vpop.f32.mrb[0].mxu0
      %v4103 = vadd.f32 0.0, %v4102
      %4104 = vmatprep.mubr.bf16.mxu0 0
      %4105 = vmatmul.mubr.bf16.gmra.mrb[0].mxu0 %v4029
      %v4106 = vpop.f32.mrb[0].mxu0
      %v4107 = vadd.f32 0.0, %v4106
      %v4108 = vpop.f32.mrb[0].mxu0
      %v4109 = vadd.f32 0.0, %v4108
      %v4110 = vpop.f32.mrb[0].mxu0
      %v4111 = vadd.f32 0.0, %v4110
      %v4112 = vpop.f32.mrb[0].mxu0
      %v4113 = vadd.f32 0.0, %v4112
      %4114 = vmatprep.mubr.bf16.mxu0 0
      %4115 = vmatmul.mubr.bf16.gmra.mrb[0].mxu0 %v4030
      %v4116 = vpop.f32.mrb[0].mxu0
      %v4117 = vadd.f32 0.0, %v4116
      %v4118 = vpop.f32.mrb[0].mxu0
      %v4119 = vadd.f32 0.0, %v4118
      %v4120 = vpop.f32.mrb[0].mxu0
      %v4121 = vadd.f32 0.0, %v4120
      %v4122 = vpop.f32.mrb[0].mxu0
      %v4123 = vadd.f32 0.0, %v4122
      %4124 = vmatprep.mubr.bf16.mxu0 0
      %4125 = vmatmul.mubr.bf16.gmra.mrb[0].mxu0 %v4031
      %v4126 = vpop.f32.mrb[0].mxu0
      %v4127 = vadd.f32 0.0, %v4126
      %v4128 = vpop.f32.mrb[0].mxu0
      %v4129 = vadd.f32 0.0, %v4128
      %v4130 = vpop.f32.mrb[0].mxu0
      %v4131 = vadd.f32 0.0, %v4130
      %v4132 = vpop.f32.mrb[0].mxu0
      %v4133 = vadd.f32 0.0, %v4132
      %4134 = vmatprep.mubr.bf16.mxu0 0
      %4135 = vmatmul.mubr.bf16.gmra.mrb[0].mxu0 %v4032
      %v4136 = vpop.f32.mrb[0].mxu0
      %v4137 = vadd.f32 0.0, %v4136
      %v4138 = vpop.f32.mrb[0].mxu0
      %v4139 = vadd.f32 0.0, %v4138
      %v4140 = vpop.f32.mrb[0].mxu0
      %v4141 = vadd.f32 0.0, %v4140
      %v4142 = vpop.f32.mrb[0].mxu0
      %v4143 = vadd.f32 0.0, %v4142
      %4144 = vmatprep.mubr.bf16.mxu0 0
      %4145 = vmatmul.mubr.bf16.gmra.mrb[0].mxu0 %v4033
      %v4146 = vpop.f32.mrb[0].mxu0
      %v4147 = vadd.f32 0.0, %v4146
      %v4148 = vpop.f32.mrb[0].mxu0
      %v4149 = vadd.f32 0.0, %v4148
      %v4150 = vpop.f32.mrb[0].mxu0
      %v4151 = vadd.f32 0.0, %v4150
      %v4152 = vpop.f32.mrb[0].mxu0
      %v4153 = vadd.f32 0.0, %v4152
      %4154 = vdwg.mxu0
      %4155 = vmatprep.subr.bf16.mxu0 %v3948
      %4156 = vmatpush1.bf16.msra.mxu0 %v3947
      %4157 = vmatprep.subr.bf16.mxu0 %v3952
      %4158 = vmatpush1.bf16.msra.mxu0 %v3951
      %4159 = vmatprep.subr.bf16.mxu0 %v3956
      %4160 = vmatpush1.bf16.msra.mxu0 %v3955
      %4161 = vmatprep.subr.bf16.mxu0 %v3960
      %4162 = vmatpush1.bf16.msra.mxu0 %v3959
      %4163 = vmatprep.subr.bf16.mxu0 %v3964
      %4164 = vmatpush1.bf16.msra.mxu0 %v3963
      %4165 = vmatprep.subr.bf16.mxu0 %v3968
      %4166 = vmatpush1.bf16.msra.mxu0 %v3967
      %4167 = vmatprep.subr.bf16.mxu0 %v3972
      %4168 = vmatpush1.bf16.msra.mxu0 %v3971
      %4169 = vmatprep.subr.bf16.mxu0 %v3976
      %4170 = vmatpush1.bf16.msra.mxu0 %v3975
      %4171 = vmatprep.subr.bf16.mxu0 0
      %4172 = vmatpush1.bf16.msra.mxu0 0
      %4173 = vmatprep.subr.bf16.mxu0 0
      %4174 = vmatpush1.bf16.msra.mxu0 0
      %4175 = vmatprep.subr.bf16.mxu0 0
      %4176 = vmatpush1.bf16.msra.mxu0 0
      %4177 = vmatprep.subr.bf16.mxu0 0
      %4178 = vmatpush1.bf16.msra.mxu0 0
      %4179 = vmatprep.subr.bf16.mxu0 0
      %4180 = vmatpush1.bf16.msra.mxu0 0
      %4181 = vmatprep.subr.bf16.mxu0 0
      %4182 = vmatpush1.bf16.msra.mxu0 0
      %4183 = vmatprep.subr.bf16.mxu0 0
      %4184 = vmatpush1.bf16.msra.mxu0 0
      %4185 = vmatprep.subr.bf16.mxu0 0
      %4186 = vmatpush1.bf16.msra.mxu0 0
      %4187 = vmatprep.mubr.bf16.mxu0 0
      %4188 = vmatmul.mubr.bf16.gmra.mrb[0].mxu0 %v4026
      %v4189 = vpop.f32.mrb[0].mxu0
      %v4190 = vadd.f32 0.0, %v4189
      %v4191 = vpop.f32.mrb[0].mxu0
      %v4192 = vadd.f32 0.0, %v4191
      %v4193 = vpop.f32.mrb[0].mxu0
      %v4194 = vadd.f32 0.0, %v4193
      %v4195 = vpop.f32.mrb[0].mxu0
      %v4196 = vadd.f32 0.0, %v4195
      %4197 = vmatprep.mubr.bf16.mxu0 0
      %4198 = vmatmul.mubr.bf16.gmra.mrb[0].mxu0 %v4027
      %v4199 = vpop.f32.mrb[0].mxu0
      %v4200 = vadd.f32 0.0, %v4199
      %v4201 = vpop.f32.mrb[0].mxu0
      %v4202 = vadd.f32 0.0, %v4201
      %v4203 = vpop.f32.mrb[0].mxu0
      %v4204 = vadd.f32 0.0, %v4203
      %v4205 = vpop.f32.mrb[0].mxu0
      %v4206 = vadd.f32 0.0, %v4205
      %4207 = vmatprep.mubr.bf16.mxu0 0
      %4208 = vmatmul.mubr.bf16.gmra.mrb[0].mxu0 %v4028
      %v4209 = vpop.f32.mrb[0].mxu0
      %v4210 = vadd.f32 0.0, %v4209
      %v4211 = vpop.f32.mrb[0].mxu0
      %v4212 = vadd.f32 0.0, %v4211
      %v4213 = vpop.f32.mrb[0].mxu0
      %v4214 = vadd.f32 0.0, %v4213
      %v4215 = vpop.f32.mrb[0].mxu0
      %v4216 = vadd.f32 0.0, %v4215
      %4217 = vmatprep.mubr.bf16.mxu0 0
      %4218 = vmatmul.mubr.bf16.gmra.mrb[0].mxu0 %v4029
      %v4219 = vpop.f32.mrb[0].mxu0
      %v4220 = vadd.f32 0.0, %v4219
      %v4221 = vpop.f32.mrb[0].mxu0
      %v4222 = vadd.f32 0.0, %v4221
      %v4223 = vpop.f32.mrb[0].mxu0
      %v4224 = vadd.f32 0.0, %v4223
      %v4225 = vpop.f32.mrb[0].mxu0
      %v4226 = vadd.f32 0.0, %v4225
      %4227 = vmatprep.mubr.bf16.mxu0 0
      %4228 = vmatmul.mubr.bf16.gmra.mrb[0].mxu0 %v4030
      %v4229 = vpop.f32.mrb[0].mxu0
      %v4230 = vadd.f32 0.0, %v4229
      %v4231 = vpop.f32.mrb[0].mxu0
      %v4232 = vadd.f32 0.0, %v4231
      %v4233 = vpop.f32.mrb[0].mxu0
      %v4234 = vadd.f32 0.0, %v4233
      %v4235 = vpop.f32.mrb[0].mxu0
      %v4236 = vadd.f32 0.0, %v4235
      %4237 = vmatprep.mubr.bf16.mxu0 0
      %4238 = vmatmul.mubr.bf16.gmra.mrb[0].mxu0 %v4031
      %v4239 = vpop.f32.mrb[0].mxu0
      %v4240 = vadd.f32 0.0, %v4239
      %v4241 = vpop.f32.mrb[0].mxu0
      %v4242 = vadd.f32 0.0, %v4241
      %v4243 = vpop.f32.mrb[0].mxu0
      %v4244 = vadd.f32 0.0, %v4243
      %v4245 = vpop.f32.mrb[0].mxu0
      %v4246 = vadd.f32 0.0, %v4245
      %4247 = vmatprep.mubr.bf16.mxu0 0
      %4248 = vmatmul.mubr.bf16.gmra.mrb[0].mxu0 %v4032
      %v4249 = vpop.f32.mrb[0].mxu0
      %v4250 = vadd.f32 0.0, %v4249
      %v4251 = vpop.f32.mrb[0].mxu0
      %v4252 = vadd.f32 0.0, %v4251
      %v4253 = vpop.f32.mrb[0].mxu0
      %v4254 = vadd.f32 0.0, %v4253
      %v4255 = vpop.f32.mrb[0].mxu0
      %v4256 = vadd.f32 0.0, %v4255
      %4257 = vmatprep.mubr.bf16.mxu0 0
      %4258 = vmatmul.mubr.bf16.gmra.mrb[0].mxu0 %v4033
      %v4259 = vpop.f32.mrb[0].mxu0
      %v4260 = vadd.f32 0.0, %v4259
      %v4261 = vpop.f32.mrb[0].mxu0
      %v4262 = vadd.f32 0.0, %v4261
      %v4263 = vpop.f32.mrb[0].mxu0
      %v4264 = vadd.f32 0.0, %v4263
      %v4265 = vpop.f32.mrb[0].mxu0
      %v4266 = vadd.f32 0.0, %v4265
      %4267 = vdwg.mxu0
      %v4268 = vadd.f32 %v3333, %v4077
      %v4269 = vadd.f32 %v3334, %v4079
      %v4270 = vadd.f32 %v3335, %v4190
      %v4271 = vadd.f32 %v3336, %v4192
      %v4272 = vadd.f32 %v3337, %v4081
      %v4273 = vadd.f32 %v3338, %v4083
      %v4274 = vadd.f32 %v3339, %v4194
      %v4275 = vadd.f32 %v3340, %v4196
      %v4276 = vadd.f32 %v3341, %v4087
      %v4277 = vadd.f32 %v3342, %v4089
      %v4278 = vadd.f32 %v3343, %v4200
      %v4279 = vadd.f32 %v3344, %v4202
      %v4280 = vadd.f32 %v3345, %v4091
      %v4281 = vadd.f32 %v3346, %v4093
      %v4282 = vadd.f32 %v3347, %v4204
      %v4283 = vadd.f32 %v3348, %v4206
      %v4284 = vadd.f32 %v3349, %v4097
      %v4285 = vadd.f32 %v3350, %v4099
      %v4286 = vadd.f32 %v3351, %v4210
      %v4287 = vadd.f32 %v3352, %v4212
      %v4288 = vadd.f32 %v3353, %v4101
      %v4289 = vadd.f32 %v3354, %v4103
      %v4290 = vadd.f32 %v3355, %v4214
      %v4291 = vadd.f32 %v3356, %v4216
      %v4292 = vadd.f32 %v3357, %v4107
      %v4293 = vadd.f32 %v3358, %v4109
      %v4294 = vadd.f32 %v3359, %v4220
      %v4295 = vadd.f32 %v3360, %v4222
      %v4296 = vadd.f32 %v3361, %v4111
      %v4297 = vadd.f32 %v3362, %v4113
      %v4298 = vadd.f32 %v3363, %v4224
      %v4299 = vadd.f32 %v3364, %v4226
      %v4300 = vadd.f32 %v3365, %v4117
      %v4301 = vadd.f32 %v3366, %v4119
      %v4302 = vadd.f32 %v3367, %v4230
      %v4303 = vadd.f32 %v3368, %v4232
      %v4304 = vadd.f32 %v3369, %v4121
      %v4305 = vadd.f32 %v3370, %v4123
      %v4306 = vadd.f32 %v3371, %v4234
      %v4307 = vadd.f32 %v3372, %v4236
      %v4308 = vadd.f32 %v3373, %v4127
      %v4309 = vadd.f32 %v3374, %v4129
      %v4310 = vadd.f32 %v3375, %v4240
      %v4311 = vadd.f32 %v3376, %v4242
      %v4312 = vadd.f32 %v3377, %v4131
      %v4313 = vadd.f32 %v3378, %v4133
      %v4314 = vadd.f32 %v3379, %v4244
      %v4315 = vadd.f32 %v3380, %v4246
      %v4316 = vadd.f32 %v3381, %v4137
      %v4317 = vadd.f32 %v3382, %v4139
      %v4318 = vadd.f32 %v3383, %v4250
      %v4319 = vadd.f32 %v3384, %v4252
      %v4320 = vadd.f32 %v3385, %v4141
      %v4321 = vadd.f32 %v3386, %v4143
      %v4322 = vadd.f32 %v3387, %v4254
      %v4323 = vadd.f32 %v3388, %v4256
      %v4324 = vadd.f32 %v3389, %v4147
      %v4325 = vadd.f32 %v3390, %v4149
      %v4326 = vadd.f32 %v3391, %v4260
      %v4327 = vadd.f32 %v3392, %v4262
      %v4328 = vadd.f32 %v3393, %v4151
      %v4329 = vadd.f32 %v3394, %v4153
      %v4330 = vadd.f32 %v3395, %v4264
      %v4331 = vadd.f32 %v3396, %v4266
      %s4332 = scalar_lea.vmem %s6, 256
      %v4333 = vld [vmem:[%s4332] sm:$0xff]
      %v4334 = vld [vmem:[%s4332 + $0x8] sm:$0xff]
      %v4335 = vld [vmem:[%s4332 + $0x10] sm:$0xff]
      %v4336 = vld [vmem:[%s4332 + $0x18] sm:$0xff]
      %v4337 = vld [vmem:[%s4332 + $0x20] sm:$0xff]
      %v4338 = vld [vmem:[%s4332 + $0x28] sm:$0xff]
      %v4339 = vld [vmem:[%s4332 + $0x30] sm:$0xff]
      %v4340 = vld [vmem:[%s4332 + $0x38] sm:$0xff]
      %v4341 = vld [vmem:[%s4332 + $0x40] sm:$0xff]
      %v4342 = vld [vmem:[%s4332 + $0x48] sm:$0xff]
      %v4343 = vld [vmem:[%s4332 + $0x50] sm:$0xff]
      %v4344 = vld [vmem:[%s4332 + $0x58] sm:$0xff]
      %v4345 = vld [vmem:[%s4332 + $0x60] sm:$0xff]
      %v4346 = vld [vmem:[%s4332 + $0x68] sm:$0xff]
      %v4347 = vld [vmem:[%s4332 + $0x70] sm:$0xff]
      %v4348 = vld [vmem:[%s4332 + $0x78] sm:$0xff]
      %4350 = vset.pattern.permute.xlu0 0
      %4351 = vperm.xlu0 %4350, %v4333
      %v4352 = vpop.permute.xlu0 %4351
      %4355 = vset.pattern.permute.xlu0 0
      %4356 = vperm.xlu0 %4355, %v4334
      %v4357 = vpop.permute.xlu0 %4356
      %4360 = vset.pattern.permute.xlu0 0
      %4361 = vperm.xlu0 %4360, %v4335
      %v4362 = vpop.permute.xlu0 %4361
      %4365 = vset.pattern.permute.xlu0 0
      %4366 = vperm.xlu0 %4365, %v4336
      %v4367 = vpop.permute.xlu0 %4366
      %4370 = vset.pattern.permute.xlu0 0
      %4371 = vperm.xlu0 %4370, %v4337
      %v4372 = vpop.permute.xlu0 %4371
      %4375 = vset.pattern.permute.xlu0 0
      %4376 = vperm.xlu0 %4375, %v4338
      %v4377 = vpop.permute.xlu0 %4376
      %4380 = vset.pattern.permute.xlu0 0
      %4381 = vperm.xlu0 %4380, %v4339
      %v4382 = vpop.permute.xlu0 %4381
      %4385 = vset.pattern.permute.xlu0 0
      %4386 = vperm.xlu0 %4385, %v4340
      %v4387 = vpop.permute.xlu0 %4386
      %4390 = vset.pattern.permute.xlu0 0
      %4391 = vperm.xlu0 %4390, %v4341
      %v4392 = vpop.permute.xlu0 %4391
      %4395 = vset.pattern.permute.xlu0 0
      %4396 = vperm.xlu0 %4395, %v4342
      %v4397 = vpop.permute.xlu0 %4396
      %4400 = vset.pattern.permute.xlu0 0
      %4401 = vperm.xlu0 %4400, %v4343
      %v4402 = vpop.permute.xlu0 %4401
      %4405 = vset.pattern.permute.xlu0 0
      %4406 = vperm.xlu0 %4405, %v4344
      %v4407 = vpop.permute.xlu0 %4406
      %4410 = vset.pattern.permute.xlu0 0
      %4411 = vperm.xlu0 %4410, %v4345
      %v4412 = vpop.permute.xlu0 %4411
      %4415 = vset.pattern.permute.xlu0 0
      %4416 = vperm.xlu0 %4415, %v4346
      %v4417 = vpop.permute.xlu0 %4416
      %4420 = vset.pattern.permute.xlu0 0
      %4421 = vperm.xlu0 %4420, %v4347
      %v4422 = vpop.permute.xlu0 %4421
      %4425 = vset.pattern.permute.xlu0 0
      %4426 = vperm.xlu0 %4425, %v4348
      %v4427 = vpop.permute.xlu0 %4426
      %v4429 = vadd.f32 %v4268, %v4352
      %v4430 = vadd.f32 %v4269, %v4352
      %v4431 = vadd.f32 %v4270, %v4352
      %v4432 = vadd.f32 %v4271, %v4352
      %v4433 = vadd.f32 %v4272, %v4357
      %v4434 = vadd.f32 %v4273, %v4357
      %v4435 = vadd.f32 %v4274, %v4357
      %v4436 = vadd.f32 %v4275, %v4357
      %v4437 = vadd.f32 %v4276, %v4362
      %v4438 = vadd.f32 %v4277, %v4362
      %v4439 = vadd.f32 %v4278, %v4362
      %v4440 = vadd.f32 %v4279, %v4362
      %v4441 = vadd.f32 %v4280, %v4367
      %v4442 = vadd.f32 %v4281, %v4367
      %v4443 = vadd.f32 %v4282, %v4367
      %v4444 = vadd.f32 %v4283, %v4367
      %v4445 = vadd.f32 %v4284, %v4372
      %v4446 = vadd.f32 %v4285, %v4372
      %v4447 = vadd.f32 %v4286, %v4372
      %v4448 = vadd.f32 %v4287, %v4372
      %v4449 = vadd.f32 %v4288, %v4377
      %v4450 = vadd.f32 %v4289, %v4377
      %v4451 = vadd.f32 %v4290, %v4377
      %v4452 = vadd.f32 %v4291, %v4377
      %v4453 = vadd.f32 %v4292, %v4382
      %v4454 = vadd.f32 %v4293, %v4382
      %v4455 = vadd.f32 %v4294, %v4382
      %v4456 = vadd.f32 %v4295, %v4382
      %v4457 = vadd.f32 %v4296, %v4387
      %v4458 = vadd.f32 %v4297, %v4387
      %v4459 = vadd.f32 %v4298, %v4387
      %v4460 = vadd.f32 %v4299, %v4387
      %v4461 = vadd.f32 %v4300, %v4392
      %v4462 = vadd.f32 %v4301, %v4392
      %v4463 = vadd.f32 %v4302, %v4392
      %v4464 = vadd.f32 %v4303, %v4392
      %v4465 = vadd.f32 %v4304, %v4397
      %v4466 = vadd.f32 %v4305, %v4397
      %v4467 = vadd.f32 %v4306, %v4397
      %v4468 = vadd.f32 %v4307, %v4397
      %v4469 = vadd.f32 %v4308, %v4402
      %v4470 = vadd.f32 %v4309, %v4402
      %v4471 = vadd.f32 %v4310, %v4402
      %v4472 = vadd.f32 %v4311, %v4402
      %v4473 = vadd.f32 %v4312, %v4407
      %v4474 = vadd.f32 %v4313, %v4407
      %v4475 = vadd.f32 %v4314, %v4407
      %v4476 = vadd.f32 %v4315, %v4407
      %v4477 = vadd.f32 %v4316, %v4412
      %v4478 = vadd.f32 %v4317, %v4412
      %v4479 = vadd.f32 %v4318, %v4412
      %v4480 = vadd.f32 %v4319, %v4412
      %v4481 = vadd.f32 %v4320, %v4417
      %v4482 = vadd.f32 %v4321, %v4417
      %v4483 = vadd.f32 %v4322, %v4417
      %v4484 = vadd.f32 %v4323, %v4417
      %v4485 = vadd.f32 %v4324, %v4422
      %v4486 = vadd.f32 %v4325, %v4422
      %v4487 = vadd.f32 %v4326, %v4422
      %v4488 = vadd.f32 %v4327, %v4422
      %v4489 = vadd.f32 %v4328, %v4427
      %v4490 = vadd.f32 %v4329, %v4427
      %v4491 = vadd.f32 %v4330, %v4427
      %v4492 = vadd.f32 %v4331, %v4427
      %v4493 = vmax.f32 %v4429, 0.0
      %v4494 = vmax.f32 %v4430, 0.0
      %v4495 = vmax.f32 %v4431, 0.0
      %v4496 = vmax.f32 %v4432, 0.0
      %v4497 = vmax.f32 %v4433, 0.0
      %v4498 = vmax.f32 %v4434, 0.0
      %v4499 = vmax.f32 %v4435, 0.0
      %v4500 = vmax.f32 %v4436, 0.0
      %v4501 = vmax.f32 %v4437, 0.0
      %v4502 = vmax.f32 %v4438, 0.0
      %v4503 = vmax.f32 %v4439, 0.0
      %v4504 = vmax.f32 %v4440, 0.0
      %v4505 = vmax.f32 %v4441, 0.0
      %v4506 = vmax.f32 %v4442, 0.0
      %v4507 = vmax.f32 %v4443, 0.0
      %v4508 = vmax.f32 %v4444, 0.0
      %v4509 = vmax.f32 %v4445, 0.0
      %v4510 = vmax.f32 %v4446, 0.0
      %v4511 = vmax.f32 %v4447, 0.0
      %v4512 = vmax.f32 %v4448, 0.0
      %v4513 = vmax.f32 %v4449, 0.0
      %v4514 = vmax.f32 %v4450, 0.0
      %v4515 = vmax.f32 %v4451, 0.0
      %v4516 = vmax.f32 %v4452, 0.0
      %v4517 = vmax.f32 %v4453, 0.0
      %v4518 = vmax.f32 %v4454, 0.0
      %v4519 = vmax.f32 %v4455, 0.0
      %v4520 = vmax.f32 %v4456, 0.0
      %v4521 = vmax.f32 %v4457, 0.0
      %v4522 = vmax.f32 %v4458, 0.0
      %v4523 = vmax.f32 %v4459, 0.0
      %v4524 = vmax.f32 %v4460, 0.0
      %v4525 = vmax.f32 %v4461, 0.0
      %v4526 = vmax.f32 %v4462, 0.0
      %v4527 = vmax.f32 %v4463, 0.0
      %v4528 = vmax.f32 %v4464, 0.0
      %v4529 = vmax.f32 %v4465, 0.0
      %v4530 = vmax.f32 %v4466, 0.0
      %v4531 = vmax.f32 %v4467, 0.0
      %v4532 = vmax.f32 %v4468, 0.0
      %v4533 = vmax.f32 %v4469, 0.0
      %v4534 = vmax.f32 %v4470, 0.0
      %v4535 = vmax.f32 %v4471, 0.0
      %v4536 = vmax.f32 %v4472, 0.0
      %v4537 = vmax.f32 %v4473, 0.0
      %v4538 = vmax.f32 %v4474, 0.0
      %v4539 = vmax.f32 %v4475, 0.0
      %v4540 = vmax.f32 %v4476, 0.0
      %v4541 = vmax.f32 %v4477, 0.0
      %v4542 = vmax.f32 %v4478, 0.0
      %v4543 = vmax.f32 %v4479, 0.0
      %v4544 = vmax.f32 %v4480, 0.0
      %v4545 = vmax.f32 %v4481, 0.0
      %v4546 = vmax.f32 %v4482, 0.0
      %v4547 = vmax.f32 %v4483, 0.0
      %v4548 = vmax.f32 %v4484, 0.0
      %v4549 = vmax.f32 %v4485, 0.0
      %v4550 = vmax.f32 %v4486, 0.0
      %v4551 = vmax.f32 %v4487, 0.0
      %v4552 = vmax.f32 %v4488, 0.0
      %v4553 = vmax.f32 %v4489, 0.0
      %v4554 = vmax.f32 %v4490, 0.0
      %v4555 = vmax.f32 %v4491, 0.0
      %v4556 = vmax.f32 %v4492, 0.0
      %v4557 = vpack.c.bf16 %v4497, %v4493
      %v4558 = vpack.c.bf16 %v4498, %v4494
      %v4559 = vpack.c.bf16 %v4499, %v4495
      %v4560 = vpack.c.bf16 %v4500, %v4496
      %v4561 = vpack.c.bf16 %v4505, %v4501
      %v4562 = vpack.c.bf16 %v4506, %v4502
      %v4563 = vpack.c.bf16 %v4507, %v4503
      %v4564 = vpack.c.bf16 %v4508, %v4504
      %v4565 = vpack.c.bf16 %v4513, %v4509
      %v4566 = vpack.c.bf16 %v4514, %v4510
      %v4567 = vpack.c.bf16 %v4515, %v4511
      %v4568 = vpack.c.bf16 %v4516, %v4512
      %v4569 = vpack.c.bf16 %v4521, %v4517
      %v4570 = vpack.c.bf16 %v4522, %v4518
      %v4571 = vpack.c.bf16 %v4523, %v4519
      %v4572 = vpack.c.bf16 %v4524, %v4520
      %v4573 = vpack.c.bf16 %v4529, %v4525
      %v4574 = vpack.c.bf16 %v4530, %v4526
      %v4575 = vpack.c.bf16 %v4531, %v4527
      %v4576 = vpack.c.bf16 %v4532, %v4528
      %v4577 = vpack.c.bf16 %v4537, %v4533
      %v4578 = vpack.c.bf16 %v4538, %v4534
      %v4579 = vpack.c.bf16 %v4539, %v4535
      %v4580 = vpack.c.bf16 %v4540, %v4536
      %v4581 = vpack.c.bf16 %v4545, %v4541
      %v4582 = vpack.c.bf16 %v4546, %v4542
      %v4583 = vpack.c.bf16 %v4547, %v4543
      %v4584 = vpack.c.bf16 %v4548, %v4544
      %v4585 = vpack.c.bf16 %v4553, %v4549
      %v4586 = vpack.c.bf16 %v4554, %v4550
      %v4587 = vpack.c.bf16 %v4555, %v4551
      %v4588 = vpack.c.bf16 %v4556, %v4552
      %s4589 = scalar_lea.vmem %s3, 192
      %v4590 = vld [vmem:[%s4589] sm:$0xf]
      %v4591 = vld [vmem:[%s4589 + $0x4] sm:$0xf]
      %v4592 = vld [vmem:[%s4589 + $0x8] sm:$0xf]
      %v4593 = vld [vmem:[%s4589 + $0xc] sm:$0xf]
      %v4594 = vld [vmem:[%s4589 + $0x10] sm:$0xf]
      %v4595 = vld [vmem:[%s4589 + $0x14] sm:$0xf]
      %v4596 = vld [vmem:[%s4589 + $0x18] sm:$0xf]
      %v4597 = vld [vmem:[%s4589 + $0x1c] sm:$0xf]
      %v4598 = vld [vmem:[%s4589 + $0x20] sm:$0xf]
      %v4599 = vld [vmem:[%s4589 + $0x24] sm:$0xf]
      %v4600 = vld [vmem:[%s4589 + $0x28] sm:$0xf]
      %v4601 = vld [vmem:[%s4589 + $0x2c] sm:$0xf]
      %v4602 = vld [vmem:[%s4589 + $0x30] sm:$0xf]
      %v4603 = vld [vmem:[%s4589 + $0x34] sm:$0xf]
      %v4604 = vld [vmem:[%s4589 + $0x38] sm:$0xf]
      %v4605 = vld [vmem:[%s4589 + $0x3c] sm:$0xf]
      %s4606 = scalar_lea.vmem %s4, 384
      %v4607 = vld [vmem:[%s4606] sm:$0xff]
      %v4608 = vld [vmem:[%s4606 + $0x8] sm:$0xff]
      %v4609 = vld [vmem:[%s4606 + $0x10] sm:$0xff]
      %v4610 = vld [vmem:[%s4606 + $0x18] sm:$0xff]
      %v4611 = vld [vmem:[%s4606 + $0x20] sm:$0xff]
      %v4612 = vld [vmem:[%s4606 + $0x28] sm:$0xff]
      %v4613 = vld [vmem:[%s4606 + $0x30] sm:$0xff]
      %v4614 = vld [vmem:[%s4606 + $0x38] sm:$0xff]
      %v4615 = vld [vmem:[%s4606 + $0x40] sm:$0xff]
      %v4616 = vld [vmem:[%s4606 + $0x48] sm:$0xff]
      %v4617 = vld [vmem:[%s4606 + $0x50] sm:$0xff]
      %v4618 = vld [vmem:[%s4606 + $0x58] sm:$0xff]
      %v4619 = vld [vmem:[%s4606 + $0x60] sm:$0xff]
      %v4620 = vld [vmem:[%s4606 + $0x68] sm:$0xff]
      %v4621 = vld [vmem:[%s4606 + $0x70] sm:$0xff]
      %v4622 = vld [vmem:[%s4606 + $0x78] sm:$0xff]
      %4624 = vset.pattern.permute.xlu0 0
      %4625 = vperm.xlu0 %4624, %v4607
      %v4626 = vpop.permute.xlu0 %4625
      %4629 = vset.pattern.permute.xlu0 0
      %4630 = vperm.xlu0 %4629, %v4608
      %v4631 = vpop.permute.xlu0 %4630
      %4634 = vset.pattern.permute.xlu0 0
      %4635 = vperm.xlu0 %4634, %v4609
      %v4636 = vpop.permute.xlu0 %4635
      %4639 = vset.pattern.permute.xlu0 0
      %4640 = vperm.xlu0 %4639, %v4610
      %v4641 = vpop.permute.xlu0 %4640
      %4644 = vset.pattern.permute.xlu0 0
      %4645 = vperm.xlu0 %4644, %v4611
      %v4646 = vpop.permute.xlu0 %4645
      %4649 = vset.pattern.permute.xlu0 0
      %4650 = vperm.xlu0 %4649, %v4612
      %v4651 = vpop.permute.xlu0 %4650
      %4654 = vset.pattern.permute.xlu0 0
      %4655 = vperm.xlu0 %4654, %v4613
      %v4656 = vpop.permute.xlu0 %4655
      %4659 = vset.pattern.permute.xlu0 0
      %4660 = vperm.xlu0 %4659, %v4614
      %v4661 = vpop.permute.xlu0 %4660
      %4664 = vset.pattern.permute.xlu0 0
      %4665 = vperm.xlu0 %4664, %v4615
      %v4666 = vpop.permute.xlu0 %4665
      %4669 = vset.pattern.permute.xlu0 0
      %4670 = vperm.xlu0 %4669, %v4616
      %v4671 = vpop.permute.xlu0 %4670
      %4674 = vset.pattern.permute.xlu0 0
      %4675 = vperm.xlu0 %4674, %v4617
      %v4676 = vpop.permute.xlu0 %4675
      %4679 = vset.pattern.permute.xlu0 0
      %4680 = vperm.xlu0 %4679, %v4618
      %v4681 = vpop.permute.xlu0 %4680
      %4684 = vset.pattern.permute.xlu0 0
      %4685 = vperm.xlu0 %4684, %v4619
      %v4686 = vpop.permute.xlu0 %4685
      %4689 = vset.pattern.permute.xlu0 0
      %4690 = vperm.xlu0 %4689, %v4620
      %v4691 = vpop.permute.xlu0 %4690
      %4694 = vset.pattern.permute.xlu0 0
      %4695 = vperm.xlu0 %4694, %v4621
      %v4696 = vpop.permute.xlu0 %4695
      %4699 = vset.pattern.permute.xlu0 0
      %4700 = vperm.xlu0 %4699, %v4622
      %v4701 = vpop.permute.xlu0 %4700
      %v4719 = vunpack.c.l.b16 %v4590
      %v4720 = vunpack.c.l.b16 %v4591
      %v4721 = vunpack.c.l.b16 %v4592
      %v4722 = vunpack.c.l.b16 %v4593
      %v4723 = vunpack.c.l.b16 %v4594
      %v4724 = vunpack.c.l.b16 %v4595
      %v4725 = vunpack.c.l.b16 %v4596
      %v4726 = vunpack.c.l.b16 %v4597
      %v4727 = vunpack.c.l.b16 %v4598
      %v4728 = vunpack.c.l.b16 %v4599
      %v4729 = vunpack.c.l.b16 %v4600
      %v4730 = vunpack.c.l.b16 %v4601
      %v4731 = vunpack.c.l.b16 %v4602
      %v4732 = vunpack.c.l.b16 %v4603
      %v4733 = vunpack.c.l.b16 %v4604
      %v4734 = vunpack.c.l.b16 %v4605
      %v4735 = vpack.c.b16 %v4720, %v4719
      %v4736 = vpack.c.b16 %v4722, %v4721
      %v4737 = vpack.c.b16 %v4724, %v4723
      %v4738 = vpack.c.b16 %v4726, %v4725
      %v4739 = vpack.c.b16 %v4728, %v4727
      %v4740 = vpack.c.b16 %v4730, %v4729
      %v4741 = vpack.c.b16 %v4732, %v4731
      %v4742 = vpack.c.b16 %v4734, %v4733
      %4751 = vmatprep.subr.bf16.mxu0 %v4558
      %4752 = vmatpush1.bf16.msra.mxu0 %v4557
      %4753 = vmatprep.subr.bf16.mxu0 %v4562
      %4754 = vmatpush1.bf16.msra.mxu0 %v4561
      %4755 = vmatprep.subr.bf16.mxu0 %v4566
      %4756 = vmatpush1.bf16.msra.mxu0 %v4565
      %4757 = vmatprep.subr.bf16.mxu0 %v4570
      %4758 = vmatpush1.bf16.msra.mxu0 %v4569
      %4759 = vmatprep.subr.bf16.mxu0 %v4574
      %4760 = vmatpush1.bf16.msra.mxu0 %v4573
      %4761 = vmatprep.subr.bf16.mxu0 %v4578
      %4762 = vmatpush1.bf16.msra.mxu0 %v4577
      %4763 = vmatprep.subr.bf16.mxu0 %v4582
      %4764 = vmatpush1.bf16.msra.mxu0 %v4581
      %4765 = vmatprep.subr.bf16.mxu0 %v4586
      %4766 = vmatpush1.bf16.msra.mxu0 %v4585
      %4767 = vmatprep.subr.bf16.mxu0 0
      %4768 = vmatpush1.bf16.msra.mxu0 0
      %4769 = vmatprep.subr.bf16.mxu0 0
      %4770 = vmatpush1.bf16.msra.mxu0 0
      %4771 = vmatprep.subr.bf16.mxu0 0
      %4772 = vmatpush1.bf16.msra.mxu0 0
      %4773 = vmatprep.subr.bf16.mxu0 0
      %4774 = vmatpush1.bf16.msra.mxu0 0
      %4775 = vmatprep.subr.bf16.mxu0 0
      %4776 = vmatpush1.bf16.msra.mxu0 0
      %4777 = vmatprep.subr.bf16.mxu0 0
      %4778 = vmatpush1.bf16.msra.mxu0 0
      %4779 = vmatprep.subr.bf16.mxu0 0
      %4780 = vmatpush1.bf16.msra.mxu0 0
      %4781 = vmatprep.subr.bf16.mxu0 0
      %4782 = vmatpush1.bf16.msra.mxu0 0
      %4783 = vmatprep.mubr.bf16.mxu0 0
      %4784 = vmatmul.mubr.bf16.gmra.mrb[0].mxu0 %v4735
      %v4785 = vpop.f32.mrb[0].mxu0
      %v4786 = vadd.f32 %v4626, %v4785
      %v4787 = vpop.f32.mrb[0].mxu0
      %v4788 = vadd.f32 %v4626, %v4787
      %v4789 = vpop.f32.mrb[0].mxu0
      %v4790 = vadd.f32 %v4631, %v4789
      %v4791 = vpop.f32.mrb[0].mxu0
      %v4792 = vadd.f32 %v4631, %v4791
      %4793 = vmatprep.mubr.bf16.mxu0 0
      %4794 = vmatmul.mubr.bf16.gmra.mrb[0].mxu0 %v4736
      %v4795 = vpop.f32.mrb[0].mxu0
      %v4796 = vadd.f32 %v4636, %v4795
      %v4797 = vpop.f32.mrb[0].mxu0
      %v4798 = vadd.f32 %v4636, %v4797
      %v4799 = vpop.f32.mrb[0].mxu0
      %v4800 = vadd.f32 %v4641, %v4799
      %v4801 = vpop.f32.mrb[0].mxu0
      %v4802 = vadd.f32 %v4641, %v4801
      %4803 = vmatprep.mubr.bf16.mxu0 0
      %4804 = vmatmul.mubr.bf16.gmra.mrb[0].mxu0 %v4737
      %v4805 = vpop.f32.mrb[0].mxu0
      %v4806 = vadd.f32 %v4646, %v4805
      %v4807 = vpop.f32.mrb[0].mxu0
      %v4808 = vadd.f32 %v4646, %v4807
      %v4809 = vpop.f32.mrb[0].mxu0
      %v4810 = vadd.f32 %v4651, %v4809
      %v4811 = vpop.f32.mrb[0].mxu0
      %v4812 = vadd.f32 %v4651, %v4811
      %4813 = vmatprep.mubr.bf16.mxu0 0
      %4814 = vmatmul.mubr.bf16.gmra.mrb[0].mxu0 %v4738
      %v4815 = vpop.f32.mrb[0].mxu0
      %v4816 = vadd.f32 %v4656, %v4815
      %v4817 = vpop.f32.mrb[0].mxu0
      %v4818 = vadd.f32 %v4656, %v4817
      %v4819 = vpop.f32.mrb[0].mxu0
      %v4820 = vadd.f32 %v4661, %v4819
      %v4821 = vpop.f32.mrb[0].mxu0
      %v4822 = vadd.f32 %v4661, %v4821
      %4823 = vmatprep.mubr.bf16.mxu0 0
      %4824 = vmatmul.mubr.bf16.gmra.mrb[0].mxu0 %v4739
      %v4825 = vpop.f32.mrb[0].mxu0
      %v4826 = vadd.f32 %v4666, %v4825
      %v4827 = vpop.f32.mrb[0].mxu0
      %v4828 = vadd.f32 %v4666, %v4827
      %v4829 = vpop.f32.mrb[0].mxu0
      %v4830 = vadd.f32 %v4671, %v4829
      %v4831 = vpop.f32.mrb[0].mxu0
      %v4832 = vadd.f32 %v4671, %v4831
      %4833 = vmatprep.mubr.bf16.mxu0 0
      %4834 = vmatmul.mubr.bf16.gmra.mrb[0].mxu0 %v4740
      %v4835 = vpop.f32.mrb[0].mxu0
      %v4836 = vadd.f32 %v4676, %v4835
      %v4837 = vpop.f32.mrb[0].mxu0
      %v4838 = vadd.f32 %v4676, %v4837
      %v4839 = vpop.f32.mrb[0].mxu0
      %v4840 = vadd.f32 %v4681, %v4839
      %v4841 = vpop.f32.mrb[0].mxu0
      %v4842 = vadd.f32 %v4681, %v4841
      %4843 = vmatprep.mubr.bf16.mxu0 0
      %4844 = vmatmul.mubr.bf16.gmra.mrb[0].mxu0 %v4741
      %v4845 = vpop.f32.mrb[0].mxu0
      %v4846 = vadd.f32 %v4686, %v4845
      %v4847 = vpop.f32.mrb[0].mxu0
      %v4848 = vadd.f32 %v4686, %v4847
      %v4849 = vpop.f32.mrb[0].mxu0
      %v4850 = vadd.f32 %v4691, %v4849
      %v4851 = vpop.f32.mrb[0].mxu0
      %v4852 = vadd.f32 %v4691, %v4851
      %4853 = vmatprep.mubr.bf16.mxu0 0
      %4854 = vmatmul.mubr.bf16.gmra.mrb[0].mxu0 %v4742
      %v4855 = vpop.f32.mrb[0].mxu0
      %v4856 = vadd.f32 %v4696, %v4855
      %v4857 = vpop.f32.mrb[0].mxu0
      %v4858 = vadd.f32 %v4696, %v4857
      %v4859 = vpop.f32.mrb[0].mxu0
      %v4860 = vadd.f32 %v4701, %v4859
      %v4861 = vpop.f32.mrb[0].mxu0
      %v4862 = vadd.f32 %v4701, %v4861
      %4863 = vdwg.mxu0
      %4864 = vmatprep.subr.bf16.mxu0 %v4560
      %4865 = vmatpush1.bf16.msra.mxu0 %v4559
      %4866 = vmatprep.subr.bf16.mxu0 %v4564
      %4867 = vmatpush1.bf16.msra.mxu0 %v4563
      %4868 = vmatprep.subr.bf16.mxu0 %v4568
      %4869 = vmatpush1.bf16.msra.mxu0 %v4567
      %4870 = vmatprep.subr.bf16.mxu0 %v4572
      %4871 = vmatpush1.bf16.msra.mxu0 %v4571
      %4872 = vmatprep.subr.bf16.mxu0 %v4576
      %4873 = vmatpush1.bf16.msra.mxu0 %v4575
      %4874 = vmatprep.subr.bf16.mxu0 %v4580
      %4875 = vmatpush1.bf16.msra.mxu0 %v4579
      %4876 = vmatprep.subr.bf16.mxu0 %v4584
      %4877 = vmatpush1.bf16.msra.mxu0 %v4583
      %4878 = vmatprep.subr.bf16.mxu0 %v4588
      %4879 = vmatpush1.bf16.msra.mxu0 %v4587
      %4880 = vmatprep.subr.bf16.mxu0 0
      %4881 = vmatpush1.bf16.msra.mxu0 0
      %4882 = vmatprep.subr.bf16.mxu0 0
      %4883 = vmatpush1.bf16.msra.mxu0 0
      %4884 = vmatprep.subr.bf16.mxu0 0
      %4885 = vmatpush1.bf16.msra.mxu0 0
      %4886 = vmatprep.subr.bf16.mxu0 0
      %4887 = vmatpush1.bf16.msra.mxu0 0
      %4888 = vmatprep.subr.bf16.mxu0 0
      %4889 = vmatpush1.bf16.msra.mxu0 0
      %4890 = vmatprep.subr.bf16.mxu0 0
      %4891 = vmatpush1.bf16.msra.mxu0 0
      %4892 = vmatprep.subr.bf16.mxu0 0
      %4893 = vmatpush1.bf16.msra.mxu0 0
      %4894 = vmatprep.subr.bf16.mxu0 0
      %4895 = vmatpush1.bf16.msra.mxu0 0
      %4896 = vmatprep.mubr.bf16.mxu0 0
      %4897 = vmatmul.mubr.bf16.gmra.mrb[0].mxu0 %v4735
      %v4898 = vpop.f32.mrb[0].mxu0
      %v4899 = vadd.f32 %v4626, %v4898
      %v4900 = vpop.f32.mrb[0].mxu0
      %v4901 = vadd.f32 %v4626, %v4900
      %v4902 = vpop.f32.mrb[0].mxu0
      %v4903 = vadd.f32 %v4631, %v4902
      %v4904 = vpop.f32.mrb[0].mxu0
      %v4905 = vadd.f32 %v4631, %v4904
      %4906 = vmatprep.mubr.bf16.mxu0 0
      %4907 = vmatmul.mubr.bf16.gmra.mrb[0].mxu0 %v4736
      %v4908 = vpop.f32.mrb[0].mxu0
      %v4909 = vadd.f32 %v4636, %v4908
      %v4910 = vpop.f32.mrb[0].mxu0
      %v4911 = vadd.f32 %v4636, %v4910
      %v4912 = vpop.f32.mrb[0].mxu0
      %v4913 = vadd.f32 %v4641, %v4912
      %v4914 = vpop.f32.mrb[0].mxu0
      %v4915 = vadd.f32 %v4641, %v4914
      %4916 = vmatprep.mubr.bf16.mxu0 0
      %4917 = vmatmul.mubr.bf16.gmra.mrb[0].mxu0 %v4737
      %v4918 = vpop.f32.mrb[0].mxu0
      %v4919 = vadd.f32 %v4646, %v4918
      %v4920 = vpop.f32.mrb[0].mxu0
      %v4921 = vadd.f32 %v4646, %v4920
      %v4922 = vpop.f32.mrb[0].mxu0
      %v4923 = vadd.f32 %v4651, %v4922
      %v4924 = vpop.f32.mrb[0].mxu0
      %v4925 = vadd.f32 %v4651, %v4924
      %4926 = vmatprep.mubr.bf16.mxu0 0
      %4927 = vmatmul.mubr.bf16.gmra.mrb[0].mxu0 %v4738
      %v4928 = vpop.f32.mrb[0].mxu0
      %v4929 = vadd.f32 %v4656, %v4928
      %v4930 = vpop.f32.mrb[0].mxu0
      %v4931 = vadd.f32 %v4656, %v4930
      %v4932 = vpop.f32.mrb[0].mxu0
      %v4933 = vadd.f32 %v4661, %v4932
      %v4934 = vpop.f32.mrb[0].mxu0
      %v4935 = vadd.f32 %v4661, %v4934
      %4936 = vmatprep.mubr.bf16.mxu0 0
      %4937 = vmatmul.mubr.bf16.gmra.mrb[0].mxu0 %v4739
      %v4938 = vpop.f32.mrb[0].mxu0
      %v4939 = vadd.f32 %v4666, %v4938
      %v4940 = vpop.f32.mrb[0].mxu0
      %v4941 = vadd.f32 %v4666, %v4940
      %v4942 = vpop.f32.mrb[0].mxu0
      %v4943 = vadd.f32 %v4671, %v4942
      %v4944 = vpop.f32.mrb[0].mxu0
      %v4945 = vadd.f32 %v4671, %v4944
      %4946 = vmatprep.mubr.bf16.mxu0 0
      %4947 = vmatmul.mubr.bf16.gmra.mrb[0].mxu0 %v4740
      %v4948 = vpop.f32.mrb[0].mxu0
      %v4949 = vadd.f32 %v4676, %v4948
      %v4950 = vpop.f32.mrb[0].mxu0
      %v4951 = vadd.f32 %v4676, %v4950
      %v4952 = vpop.f32.mrb[0].mxu0
      %v4953 = vadd.f32 %v4681, %v4952
      %v4954 = vpop.f32.mrb[0].mxu0
      %v4955 = vadd.f32 %v4681, %v4954
      %4956 = vmatprep.mubr.bf16.mxu0 0
      %4957 = vmatmul.mubr.bf16.gmra.mrb[0].mxu0 %v4741
      %v4958 = vpop.f32.mrb[0].mxu0
      %v4959 = vadd.f32 %v4686, %v4958
      %v4960 = vpop.f32.mrb[0].mxu0
      %v4961 = vadd.f32 %v4686, %v4960
      %v4962 = vpop.f32.mrb[0].mxu0
      %v4963 = vadd.f32 %v4691, %v4962
      %v4964 = vpop.f32.mrb[0].mxu0
      %v4965 = vadd.f32 %v4691, %v4964
      %4966 = vmatprep.mubr.bf16.mxu0 0
      %4967 = vmatmul.mubr.bf16.gmra.mrb[0].mxu0 %v4742
      %v4968 = vpop.f32.mrb[0].mxu0
      %v4969 = vadd.f32 %v4696, %v4968
      %v4970 = vpop.f32.mrb[0].mxu0
      %v4971 = vadd.f32 %v4696, %v4970
      %v4972 = vpop.f32.mrb[0].mxu0
      %v4973 = vadd.f32 %v4701, %v4972
      %v4974 = vpop.f32.mrb[0].mxu0
      %v4975 = vadd.f32 %v4701, %v4974
      %4976 = vdwg.mxu0
      %v4977 = vmax.f32 %v4786, 0.0
      %v4978 = vmax.f32 %v4788, 0.0
      %v4979 = vmax.f32 %v4899, 0.0
      %v4980 = vmax.f32 %v4901, 0.0
      %v4981 = vmax.f32 %v4790, 0.0
      %v4982 = vmax.f32 %v4792, 0.0
      %v4983 = vmax.f32 %v4903, 0.0
      %v4984 = vmax.f32 %v4905, 0.0
      %v4985 = vmax.f32 %v4796, 0.0
      %v4986 = vmax.f32 %v4798, 0.0
      %v4987 = vmax.f32 %v4909, 0.0
      %v4988 = vmax.f32 %v4911, 0.0
      %v4989 = vmax.f32 %v4800, 0.0
      %v4990 = vmax.f32 %v4802, 0.0
      %v4991 = vmax.f32 %v4913, 0.0
      %v4992 = vmax.f32 %v4915, 0.0
      %v4993 = vmax.f32 %v4806, 0.0
      %v4994 = vmax.f32 %v4808, 0.0
      %v4995 = vmax.f32 %v4919, 0.0
      %v4996 = vmax.f32 %v4921, 0.0
      %v4997 = vmax.f32 %v4810, 0.0
      %v4998 = vmax.f32 %v4812, 0.0
      %v4999 = vmax.f32 %v4923, 0.0
      %v5000 = vmax.f32 %v4925, 0.0
      %v5001 = vmax.f32 %v4816, 0.0
      %v5002 = vmax.f32 %v4818, 0.0
      %v5003 = vmax.f32 %v4929, 0.0
      %v5004 = vmax.f32 %v4931, 0.0
      %v5005 = vmax.f32 %v4820, 0.0
      %v5006 = vmax.f32 %v4822, 0.0
      %v5007 = vmax.f32 %v4933, 0.0
      %v5008 = vmax.f32 %v4935, 0.0
      %v5009 = vmax.f32 %v4826, 0.0
      %v5010 = vmax.f32 %v4828, 0.0
      %v5011 = vmax.f32 %v4939, 0.0
      %v5012 = vmax.f32 %v4941, 0.0
      %v5013 = vmax.f32 %v4830, 0.0
      %v5014 = vmax.f32 %v4832, 0.0
      %v5015 = vmax.f32 %v4943, 0.0
      %v5016 = vmax.f32 %v4945, 0.0
      %v5017 = vmax.f32 %v4836, 0.0
      %v5018 = vmax.f32 %v4838, 0.0
      %v5019 = vmax.f32 %v4949, 0.0
      %v5020 = vmax.f32 %v4951, 0.0
      %v5021 = vmax.f32 %v4840, 0.0
      %v5022 = vmax.f32 %v4842, 0.0
      %v5023 = vmax.f32 %v4953, 0.0
      %v5024 = vmax.f32 %v4955, 0.0
      %v5025 = vmax.f32 %v4846, 0.0
      %v5026 = vmax.f32 %v4848, 0.0
      %v5027 = vmax.f32 %v4959, 0.0
      %v5028 = vmax.f32 %v4961, 0.0
      %v5029 = vmax.f32 %v4850, 0.0
      %v5030 = vmax.f32 %v4852, 0.0
      %v5031 = vmax.f32 %v4963, 0.0
      %v5032 = vmax.f32 %v4965, 0.0
      %v5033 = vmax.f32 %v4856, 0.0
      %v5034 = vmax.f32 %v4858, 0.0
      %v5035 = vmax.f32 %v4969, 0.0
      %v5036 = vmax.f32 %v4971, 0.0
      %v5037 = vmax.f32 %v4860, 0.0
      %v5038 = vmax.f32 %v4862, 0.0
      %v5039 = vmax.f32 %v4973, 0.0
      %v5040 = vmax.f32 %v4975, 0.0
      %v5041 = vpack.c.bf16 %v4981, %v4977
      %v5042 = vpack.c.bf16 %v4982, %v4978
      %v5043 = vpack.c.bf16 %v4983, %v4979
      %v5044 = vpack.c.bf16 %v4984, %v4980
      %v5045 = vpack.c.bf16 %v4989, %v4985
      %v5046 = vpack.c.bf16 %v4990, %v4986
      %v5047 = vpack.c.bf16 %v4991, %v4987
      %v5048 = vpack.c.bf16 %v4992, %v4988
      %v5049 = vpack.c.bf16 %v4997, %v4993
      %v5050 = vpack.c.bf16 %v4998, %v4994
      %v5051 = vpack.c.bf16 %v4999, %v4995
      %v5052 = vpack.c.bf16 %v5000, %v4996
      %v5053 = vpack.c.bf16 %v5005, %v5001
      %v5054 = vpack.c.bf16 %v5006, %v5002
      %v5055 = vpack.c.bf16 %v5007, %v5003
      %v5056 = vpack.c.bf16 %v5008, %v5004
      %v5057 = vpack.c.bf16 %v5013, %v5009
      %v5058 = vpack.c.bf16 %v5014, %v5010
      %v5059 = vpack.c.bf16 %v5015, %v5011
      %v5060 = vpack.c.bf16 %v5016, %v5012
      %v5061 = vpack.c.bf16 %v5021, %v5017
      %v5062 = vpack.c.bf16 %v5022, %v5018
      %v5063 = vpack.c.bf16 %v5023, %v5019
      %v5064 = vpack.c.bf16 %v5024, %v5020
      %v5065 = vpack.c.bf16 %v5029, %v5025
      %v5066 = vpack.c.bf16 %v5030, %v5026
      %v5067 = vpack.c.bf16 %v5031, %v5027
      %v5068 = vpack.c.bf16 %v5032, %v5028
      %v5069 = vpack.c.bf16 %v5037, %v5033
      %v5070 = vpack.c.bf16 %v5038, %v5034
      %v5071 = vpack.c.bf16 %v5039, %v5035
      %v5072 = vpack.c.bf16 %v5040, %v5036
      %s5073 = scalar_lea.vmem %s5, 192
      %v5074 = vld [vmem:[%s5073] sm:$0xf]
      %v5075 = vld [vmem:[%s5073 + $0x4] sm:$0xf]
      %v5076 = vld [vmem:[%s5073 + $0x8] sm:$0xf]
      %v5077 = vld [vmem:[%s5073 + $0xc] sm:$0xf]
      %v5078 = vld [vmem:[%s5073 + $0x10] sm:$0xf]
      %v5079 = vld [vmem:[%s5073 + $0x14] sm:$0xf]
      %v5080 = vld [vmem:[%s5073 + $0x18] sm:$0xf]
      %v5081 = vld [vmem:[%s5073 + $0x1c] sm:$0xf]
      %v5082 = vld [vmem:[%s5073 + $0x20] sm:$0xf]
      %v5083 = vld [vmem:[%s5073 + $0x24] sm:$0xf]
      %v5084 = vld [vmem:[%s5073 + $0x28] sm:$0xf]
      %v5085 = vld [vmem:[%s5073 + $0x2c] sm:$0xf]
      %v5086 = vld [vmem:[%s5073 + $0x30] sm:$0xf]
      %v5087 = vld [vmem:[%s5073 + $0x34] sm:$0xf]
      %v5088 = vld [vmem:[%s5073 + $0x38] sm:$0xf]
      %v5089 = vld [vmem:[%s5073 + $0x3c] sm:$0xf]
      %v5106 = vunpack.c.l.b16 %v5074
      %v5107 = vunpack.c.l.b16 %v5075
      %v5108 = vunpack.c.l.b16 %v5076
      %v5109 = vunpack.c.l.b16 %v5077
      %v5110 = vunpack.c.l.b16 %v5078
      %v5111 = vunpack.c.l.b16 %v5079
      %v5112 = vunpack.c.l.b16 %v5080
      %v5113 = vunpack.c.l.b16 %v5081
      %v5114 = vunpack.c.l.b16 %v5082
      %v5115 = vunpack.c.l.b16 %v5083
      %v5116 = vunpack.c.l.b16 %v5084
      %v5117 = vunpack.c.l.b16 %v5085
      %v5118 = vunpack.c.l.b16 %v5086
      %v5119 = vunpack.c.l.b16 %v5087
      %v5120 = vunpack.c.l.b16 %v5088
      %v5121 = vunpack.c.l.b16 %v5089
      %v5122 = vpack.c.b16 %v5107, %v5106
      %v5123 = vpack.c.b16 %v5109, %v5108
      %v5124 = vpack.c.b16 %v5111, %v5110
      %v5125 = vpack.c.b16 %v5113, %v5112
      %v5126 = vpack.c.b16 %v5115, %v5114
      %v5127 = vpack.c.b16 %v5117, %v5116
      %v5128 = vpack.c.b16 %v5119, %v5118
      %v5129 = vpack.c.b16 %v5121, %v5120
      %5138 = vmatprep.subr.bf16.mxu0 %v5042
      %5139 = vmatpush1.bf16.msra.mxu0 %v5041
      %5140 = vmatprep.subr.bf16.mxu0 %v5046
      %5141 = vmatpush1.bf16.msra.mxu0 %v5045
      %5142 = vmatprep.subr.bf16.mxu0 %v5050
      %5143 = vmatpush1.bf16.msra.mxu0 %v5049
      %5144 = vmatprep.subr.bf16.mxu0 %v5054
      %5145 = vmatpush1.bf16.msra.mxu0 %v5053
      %5146 = vmatprep.subr.bf16.mxu0 %v5058
      %5147 = vmatpush1.bf16.msra.mxu0 %v5057
      %5148 = vmatprep.subr.bf16.mxu0 %v5062
      %5149 = vmatpush1.bf16.msra.mxu0 %v5061
      %5150 = vmatprep.subr.bf16.mxu0 %v5066
      %5151 = vmatpush1.bf16.msra.mxu0 %v5065
      %5152 = vmatprep.subr.bf16.mxu0 %v5070
      %5153 = vmatpush1.bf16.msra.mxu0 %v5069
      %5154 = vmatprep.subr.bf16.mxu0 0
      %5155 = vmatpush1.bf16.msra.mxu0 0
      %5156 = vmatprep.subr.bf16.mxu0 0
      %5157 = vmatpush1.bf16.msra.mxu0 0
      %5158 = vmatprep.subr.bf16.mxu0 0
      %5159 = vmatpush1.bf16.msra.mxu0 0
      %5160 = vmatprep.subr.bf16.mxu0 0
      %5161 = vmatpush1.bf16.msra.mxu0 0
      %5162 = vmatprep.subr.bf16.mxu0 0
      %5163 = vmatpush1.bf16.msra.mxu0 0
      %5164 = vmatprep.subr.bf16.mxu0 0
      %5165 = vmatpush1.bf16.msra.mxu0 0
      %5166 = vmatprep.subr.bf16.mxu0 0
      %5167 = vmatpush1.bf16.msra.mxu0 0
      %5168 = vmatprep.subr.bf16.mxu0 0
      %5169 = vmatpush1.bf16.msra.mxu0 0
      %5170 = vmatprep.mubr.bf16.mxu0 0
      %5171 = vmatmul.mubr.bf16.gmra.mrb[0].mxu0 %v5122
      %v5172 = vpop.f32.mrb[0].mxu0
      %v5173 = vadd.f32 0.0, %v5172
      %v5174 = vpop.f32.mrb[0].mxu0
      %v5175 = vadd.f32 0.0, %v5174
      %v5176 = vpop.f32.mrb[0].mxu0
      %v5177 = vadd.f32 0.0, %v5176
      %v5178 = vpop.f32.mrb[0].mxu0
      %v5179 = vadd.f32 0.0, %v5178
      %5180 = vmatprep.mubr.bf16.mxu0 0
      %5181 = vmatmul.mubr.bf16.gmra.mrb[0].mxu0 %v5123
      %v5182 = vpop.f32.mrb[0].mxu0
      %v5183 = vadd.f32 0.0, %v5182
      %v5184 = vpop.f32.mrb[0].mxu0
      %v5185 = vadd.f32 0.0, %v5184
      %v5186 = vpop.f32.mrb[0].mxu0
      %v5187 = vadd.f32 0.0, %v5186
      %v5188 = vpop.f32.mrb[0].mxu0
      %v5189 = vadd.f32 0.0, %v5188
      %5190 = vmatprep.mubr.bf16.mxu0 0
      %5191 = vmatmul.mubr.bf16.gmra.mrb[0].mxu0 %v5124
      %v5192 = vpop.f32.mrb[0].mxu0
      %v5193 = vadd.f32 0.0, %v5192
      %v5194 = vpop.f32.mrb[0].mxu0
      %v5195 = vadd.f32 0.0, %v5194
      %v5196 = vpop.f32.mrb[0].mxu0
      %v5197 = vadd.f32 0.0, %v5196
      %v5198 = vpop.f32.mrb[0].mxu0
      %v5199 = vadd.f32 0.0, %v5198
      %5200 = vmatprep.mubr.bf16.mxu0 0
      %5201 = vmatmul.mubr.bf16.gmra.mrb[0].mxu0 %v5125
      %v5202 = vpop.f32.mrb[0].mxu0
      %v5203 = vadd.f32 0.0, %v5202
      %v5204 = vpop.f32.mrb[0].mxu0
      %v5205 = vadd.f32 0.0, %v5204
      %v5206 = vpop.f32.mrb[0].mxu0
      %v5207 = vadd.f32 0.0, %v5206
      %v5208 = vpop.f32.mrb[0].mxu0
      %v5209 = vadd.f32 0.0, %v5208
      %5210 = vmatprep.mubr.bf16.mxu0 0
      %5211 = vmatmul.mubr.bf16.gmra.mrb[0].mxu0 %v5126
      %v5212 = vpop.f32.mrb[0].mxu0
      %v5213 = vadd.f32 0.0, %v5212
      %v5214 = vpop.f32.mrb[0].mxu0
      %v5215 = vadd.f32 0.0, %v5214
      %v5216 = vpop.f32.mrb[0].mxu0
      %v5217 = vadd.f32 0.0, %v5216
      %v5218 = vpop.f32.mrb[0].mxu0
      %v5219 = vadd.f32 0.0, %v5218
      %5220 = vmatprep.mubr.bf16.mxu0 0
      %5221 = vmatmul.mubr.bf16.gmra.mrb[0].mxu0 %v5127
      %v5222 = vpop.f32.mrb[0].mxu0
      %v5223 = vadd.f32 0.0, %v5222
      %v5224 = vpop.f32.mrb[0].mxu0
      %v5225 = vadd.f32 0.0, %v5224
      %v5226 = vpop.f32.mrb[0].mxu0
      %v5227 = vadd.f32 0.0, %v5226
      %v5228 = vpop.f32.mrb[0].mxu0
      %v5229 = vadd.f32 0.0, %v5228
      %5230 = vmatprep.mubr.bf16.mxu0 0
      %5231 = vmatmul.mubr.bf16.gmra.mrb[0].mxu0 %v5128
      %v5232 = vpop.f32.mrb[0].mxu0
      %v5233 = vadd.f32 0.0, %v5232
      %v5234 = vpop.f32.mrb[0].mxu0
      %v5235 = vadd.f32 0.0, %v5234
      %v5236 = vpop.f32.mrb[0].mxu0
      %v5237 = vadd.f32 0.0, %v5236
      %v5238 = vpop.f32.mrb[0].mxu0
      %v5239 = vadd.f32 0.0, %v5238
      %5240 = vmatprep.mubr.bf16.mxu0 0
      %5241 = vmatmul.mubr.bf16.gmra.mrb[0].mxu0 %v5129
      %v5242 = vpop.f32.mrb[0].mxu0
      %v5243 = vadd.f32 0.0, %v5242
      %v5244 = vpop.f32.mrb[0].mxu0
      %v5245 = vadd.f32 0.0, %v5244
      %v5246 = vpop.f32.mrb[0].mxu0
      %v5247 = vadd.f32 0.0, %v5246
      %v5248 = vpop.f32.mrb[0].mxu0
      %v5249 = vadd.f32 0.0, %v5248
      %5250 = vdwg.mxu0
      %5251 = vmatprep.subr.bf16.mxu0 %v5044
      %5252 = vmatpush1.bf16.msra.mxu0 %v5043
      %5253 = vmatprep.subr.bf16.mxu0 %v5048
      %5254 = vmatpush1.bf16.msra.mxu0 %v5047
      %5255 = vmatprep.subr.bf16.mxu0 %v5052
      %5256 = vmatpush1.bf16.msra.mxu0 %v5051
      %5257 = vmatprep.subr.bf16.mxu0 %v5056
      %5258 = vmatpush1.bf16.msra.mxu0 %v5055
      %5259 = vmatprep.subr.bf16.mxu0 %v5060
      %5260 = vmatpush1.bf16.msra.mxu0 %v5059
      %5261 = vmatprep.subr.bf16.mxu0 %v5064
      %5262 = vmatpush1.bf16.msra.mxu0 %v5063
      %5263 = vmatprep.subr.bf16.mxu0 %v5068
      %5264 = vmatpush1.bf16.msra.mxu0 %v5067
      %5265 = vmatprep.subr.bf16.mxu0 %v5072
      %5266 = vmatpush1.bf16.msra.mxu0 %v5071
      %5267 = vmatprep.subr.bf16.mxu0 0
      %5268 = vmatpush1.bf16.msra.mxu0 0
      %5269 = vmatprep.subr.bf16.mxu0 0
      %5270 = vmatpush1.bf16.msra.mxu0 0
      %5271 = vmatprep.subr.bf16.mxu0 0
      %5272 = vmatpush1.bf16.msra.mxu0 0
      %5273 = vmatprep.subr.bf16.mxu0 0
      %5274 = vmatpush1.bf16.msra.mxu0 0
      %5275 = vmatprep.subr.bf16.mxu0 0
      %5276 = vmatpush1.bf16.msra.mxu0 0
      %5277 = vmatprep.subr.bf16.mxu0 0
      %5278 = vmatpush1.bf16.msra.mxu0 0
      %5279 = vmatprep.subr.bf16.mxu0 0
      %5280 = vmatpush1.bf16.msra.mxu0 0
      %5281 = vmatprep.subr.bf16.mxu0 0
      %5282 = vmatpush1.bf16.msra.mxu0 0
      %5283 = vmatprep.mubr.bf16.mxu0 0
      %5284 = vmatmul.mubr.bf16.gmra.mrb[0].mxu0 %v5122
      %v5285 = vpop.f32.mrb[0].mxu0
      %v5286 = vadd.f32 0.0, %v5285
      %v5287 = vpop.f32.mrb[0].mxu0
      %v5288 = vadd.f32 0.0, %v5287
      %v5289 = vpop.f32.mrb[0].mxu0
      %v5290 = vadd.f32 0.0, %v5289
      %v5291 = vpop.f32.mrb[0].mxu0
      %v5292 = vadd.f32 0.0, %v5291
      %5293 = vmatprep.mubr.bf16.mxu0 0
      %5294 = vmatmul.mubr.bf16.gmra.mrb[0].mxu0 %v5123
      %v5295 = vpop.f32.mrb[0].mxu0
      %v5296 = vadd.f32 0.0, %v5295
      %v5297 = vpop.f32.mrb[0].mxu0
      %v5298 = vadd.f32 0.0, %v5297
      %v5299 = vpop.f32.mrb[0].mxu0
      %v5300 = vadd.f32 0.0, %v5299
      %v5301 = vpop.f32.mrb[0].mxu0
      %v5302 = vadd.f32 0.0, %v5301
      %5303 = vmatprep.mubr.bf16.mxu0 0
      %5304 = vmatmul.mubr.bf16.gmra.mrb[0].mxu0 %v5124
      %v5305 = vpop.f32.mrb[0].mxu0
      %v5306 = vadd.f32 0.0, %v5305
      %v5307 = vpop.f32.mrb[0].mxu0
      %v5308 = vadd.f32 0.0, %v5307
      %v5309 = vpop.f32.mrb[0].mxu0
      %v5310 = vadd.f32 0.0, %v5309
      %v5311 = vpop.f32.mrb[0].mxu0
      %v5312 = vadd.f32 0.0, %v5311
      %5313 = vmatprep.mubr.bf16.mxu0 0
      %5314 = vmatmul.mubr.bf16.gmra.mrb[0].mxu0 %v5125
      %v5315 = vpop.f32.mrb[0].mxu0
      %v5316 = vadd.f32 0.0, %v5315
      %v5317 = vpop.f32.mrb[0].mxu0
      %v5318 = vadd.f32 0.0, %v5317
      %v5319 = vpop.f32.mrb[0].mxu0
      %v5320 = vadd.f32 0.0, %v5319
      %v5321 = vpop.f32.mrb[0].mxu0
      %v5322 = vadd.f32 0.0, %v5321
      %5323 = vmatprep.mubr.bf16.mxu0 0
      %5324 = vmatmul.mubr.bf16.gmra.mrb[0].mxu0 %v5126
      %v5325 = vpop.f32.mrb[0].mxu0
      %v5326 = vadd.f32 0.0, %v5325
      %v5327 = vpop.f32.mrb[0].mxu0
      %v5328 = vadd.f32 0.0, %v5327
      %v5329 = vpop.f32.mrb[0].mxu0
      %v5330 = vadd.f32 0.0, %v5329
      %v5331 = vpop.f32.mrb[0].mxu0
      %v5332 = vadd.f32 0.0, %v5331
      %5333 = vmatprep.mubr.bf16.mxu0 0
      %5334 = vmatmul.mubr.bf16.gmra.mrb[0].mxu0 %v5127
      %v5335 = vpop.f32.mrb[0].mxu0
      %v5336 = vadd.f32 0.0, %v5335
      %v5337 = vpop.f32.mrb[0].mxu0
      %v5338 = vadd.f32 0.0, %v5337
      %v5339 = vpop.f32.mrb[0].mxu0
      %v5340 = vadd.f32 0.0, %v5339
      %v5341 = vpop.f32.mrb[0].mxu0
      %v5342 = vadd.f32 0.0, %v5341
      %5343 = vmatprep.mubr.bf16.mxu0 0
      %5344 = vmatmul.mubr.bf16.gmra.mrb[0].mxu0 %v5128
      %v5345 = vpop.f32.mrb[0].mxu0
      %v5346 = vadd.f32 0.0, %v5345
      %v5347 = vpop.f32.mrb[0].mxu0
      %v5348 = vadd.f32 0.0, %v5347
      %v5349 = vpop.f32.mrb[0].mxu0
      %v5350 = vadd.f32 0.0, %v5349
      %v5351 = vpop.f32.mrb[0].mxu0
      %v5352 = vadd.f32 0.0, %v5351
      %5353 = vmatprep.mubr.bf16.mxu0 0
      %5354 = vmatmul.mubr.bf16.gmra.mrb[0].mxu0 %v5129
      %v5355 = vpop.f32.mrb[0].mxu0
      %v5356 = vadd.f32 0.0, %v5355
      %v5357 = vpop.f32.mrb[0].mxu0
      %v5358 = vadd.f32 0.0, %v5357
      %v5359 = vpop.f32.mrb[0].mxu0
      %v5360 = vadd.f32 0.0, %v5359
      %v5361 = vpop.f32.mrb[0].mxu0
      %v5362 = vadd.f32 0.0, %v5361
      %5363 = vdwg.mxu0
      %v5364 = vadd.f32 %v4429, %v5173
      %v5365 = vadd.f32 %v4430, %v5175
      %v5366 = vadd.f32 %v4431, %v5286
      %v5367 = vadd.f32 %v4432, %v5288
      %v5368 = vadd.f32 %v4433, %v5177
      %v5369 = vadd.f32 %v4434, %v5179
      %v5370 = vadd.f32 %v4435, %v5290
      %v5371 = vadd.f32 %v4436, %v5292
      %v5372 = vadd.f32 %v4437, %v5183
      %v5373 = vadd.f32 %v4438, %v5185
      %v5374 = vadd.f32 %v4439, %v5296
      %v5375 = vadd.f32 %v4440, %v5298
      %v5376 = vadd.f32 %v4441, %v5187
      %v5377 = vadd.f32 %v4442, %v5189
      %v5378 = vadd.f32 %v4443, %v5300
      %v5379 = vadd.f32 %v4444, %v5302
      %v5380 = vadd.f32 %v4445, %v5193
      %v5381 = vadd.f32 %v4446, %v5195
      %v5382 = vadd.f32 %v4447, %v5306
      %v5383 = vadd.f32 %v4448, %v5308
      %v5384 = vadd.f32 %v4449, %v5197
      %v5385 = vadd.f32 %v4450, %v5199
      %v5386 = vadd.f32 %v4451, %v5310
      %v5387 = vadd.f32 %v4452, %v5312
      %v5388 = vadd.f32 %v4453, %v5203
      %v5389 = vadd.f32 %v4454, %v5205
      %v5390 = vadd.f32 %v4455, %v5316
      %v5391 = vadd.f32 %v4456, %v5318
      %v5392 = vadd.f32 %v4457, %v5207
      %v5393 = vadd.f32 %v4458, %v5209
      %v5394 = vadd.f32 %v4459, %v5320
      %v5395 = vadd.f32 %v4460, %v5322
      %v5396 = vadd.f32 %v4461, %v5213
      %v5397 = vadd.f32 %v4462, %v5215
      %v5398 = vadd.f32 %v4463, %v5326
      %v5399 = vadd.f32 %v4464, %v5328
      %v5400 = vadd.f32 %v4465, %v5217
      %v5401 = vadd.f32 %v4466, %v5219
      %v5402 = vadd.f32 %v4467, %v5330
      %v5403 = vadd.f32 %v4468, %v5332
      %v5404 = vadd.f32 %v4469, %v5223
      %v5405 = vadd.f32 %v4470, %v5225
      %v5406 = vadd.f32 %v4471, %v5336
      %v5407 = vadd.f32 %v4472, %v5338
      %v5408 = vadd.f32 %v4473, %v5227
      %v5409 = vadd.f32 %v4474, %v5229
      %v5410 = vadd.f32 %v4475, %v5340
      %v5411 = vadd.f32 %v4476, %v5342
      %v5412 = vadd.f32 %v4477, %v5233
      %v5413 = vadd.f32 %v4478, %v5235
      %v5414 = vadd.f32 %v4479, %v5346
      %v5415 = vadd.f32 %v4480, %v5348
      %v5416 = vadd.f32 %v4481, %v5237
      %v5417 = vadd.f32 %v4482, %v5239
      %v5418 = vadd.f32 %v4483, %v5350
      %v5419 = vadd.f32 %v4484, %v5352
      %v5420 = vadd.f32 %v4485, %v5243
      %v5421 = vadd.f32 %v4486, %v5245
      %v5422 = vadd.f32 %v4487, %v5356
      %v5423 = vadd.f32 %v4488, %v5358
      %v5424 = vadd.f32 %v4489, %v5247
      %v5425 = vadd.f32 %v4490, %v5249
      %v5426 = vadd.f32 %v4491, %v5360
      %v5427 = vadd.f32 %v4492, %v5362
      %s5428 = scalar_lea.vmem %s6, 384
      %v5429 = vld [vmem:[%s5428] sm:$0xff]
      %v5430 = vld [vmem:[%s5428 + $0x8] sm:$0xff]
      %v5431 = vld [vmem:[%s5428 + $0x10] sm:$0xff]
      %v5432 = vld [vmem:[%s5428 + $0x18] sm:$0xff]
      %v5433 = vld [vmem:[%s5428 + $0x20] sm:$0xff]
      %v5434 = vld [vmem:[%s5428 + $0x28] sm:$0xff]
      %v5435 = vld [vmem:[%s5428 + $0x30] sm:$0xff]
      %v5436 = vld [vmem:[%s5428 + $0x38] sm:$0xff]
      %v5437 = vld [vmem:[%s5428 + $0x40] sm:$0xff]
      %v5438 = vld [vmem:[%s5428 + $0x48] sm:$0xff]
      %v5439 = vld [vmem:[%s5428 + $0x50] sm:$0xff]
      %v5440 = vld [vmem:[%s5428 + $0x58] sm:$0xff]
      %v5441 = vld [vmem:[%s5428 + $0x60] sm:$0xff]
      %v5442 = vld [vmem:[%s5428 + $0x68] sm:$0xff]
      %v5443 = vld [vmem:[%s5428 + $0x70] sm:$0xff]
      %v5444 = vld [vmem:[%s5428 + $0x78] sm:$0xff]
      %5446 = vset.pattern.permute.xlu0 0
      %5447 = vperm.xlu0 %5446, %v5429
      %v5448 = vpop.permute.xlu0 %5447
      %5451 = vset.pattern.permute.xlu0 0
      %5452 = vperm.xlu0 %5451, %v5430
      %v5453 = vpop.permute.xlu0 %5452
      %5456 = vset.pattern.permute.xlu0 0
      %5457 = vperm.xlu0 %5456, %v5431
      %v5458 = vpop.permute.xlu0 %5457
      %5461 = vset.pattern.permute.xlu0 0
      %5462 = vperm.xlu0 %5461, %v5432
      %v5463 = vpop.permute.xlu0 %5462
      %5466 = vset.pattern.permute.xlu0 0
      %5467 = vperm.xlu0 %5466, %v5433
      %v5468 = vpop.permute.xlu0 %5467
      %5471 = vset.pattern.permute.xlu0 0
      %5472 = vperm.xlu0 %5471, %v5434
      %v5473 = vpop.permute.xlu0 %5472
      %5476 = vset.pattern.permute.xlu0 0
      %5477 = vperm.xlu0 %5476, %v5435
      %v5478 = vpop.permute.xlu0 %5477
      %5481 = vset.pattern.permute.xlu0 0
      %5482 = vperm.xlu0 %5481, %v5436
      %v5483 = vpop.permute.xlu0 %5482
      %5486 = vset.pattern.permute.xlu0 0
      %5487 = vperm.xlu0 %5486, %v5437
      %v5488 = vpop.permute.xlu0 %5487
      %5491 = vset.pattern.permute.xlu0 0
      %5492 = vperm.xlu0 %5491, %v5438
      %v5493 = vpop.permute.xlu0 %5492
      %5496 = vset.pattern.permute.xlu0 0
      %5497 = vperm.xlu0 %5496, %v5439
      %v5498 = vpop.permute.xlu0 %5497
      %5501 = vset.pattern.permute.xlu0 0
      %5502 = vperm.xlu0 %5501, %v5440
      %v5503 = vpop.permute.xlu0 %5502
      %5506 = vset.pattern.permute.xlu0 0
      %5507 = vperm.xlu0 %5506, %v5441
      %v5508 = vpop.permute.xlu0 %5507
      %5511 = vset.pattern.permute.xlu0 0
      %5512 = vperm.xlu0 %5511, %v5442
      %v5513 = vpop.permute.xlu0 %5512
      %5516 = vset.pattern.permute.xlu0 0
      %5517 = vperm.xlu0 %5516, %v5443
      %v5518 = vpop.permute.xlu0 %5517
      %5521 = vset.pattern.permute.xlu0 0
      %5522 = vperm.xlu0 %5521, %v5444
      %v5523 = vpop.permute.xlu0 %5522
      %v5525 = vadd.f32 %v5364, %v5448
      %v5526 = vadd.f32 %v5365, %v5448
      %v5527 = vadd.f32 %v5366, %v5448
      %v5528 = vadd.f32 %v5367, %v5448
      %v5529 = vadd.f32 %v5368, %v5453
      %v5530 = vadd.f32 %v5369, %v5453
      %v5531 = vadd.f32 %v5370, %v5453
      %v5532 = vadd.f32 %v5371, %v5453
      %v5533 = vadd.f32 %v5372, %v5458
      %v5534 = vadd.f32 %v5373, %v5458
      %v5535 = vadd.f32 %v5374, %v5458
      %v5536 = vadd.f32 %v5375, %v5458
      %v5537 = vadd.f32 %v5376, %v5463
      %v5538 = vadd.f32 %v5377, %v5463
      %v5539 = vadd.f32 %v5378, %v5463
      %v5540 = vadd.f32 %v5379, %v5463
      %v5541 = vadd.f32 %v5380, %v5468
      %v5542 = vadd.f32 %v5381, %v5468
      %v5543 = vadd.f32 %v5382, %v5468
      %v5544 = vadd.f32 %v5383, %v5468
      %v5545 = vadd.f32 %v5384, %v5473
      %v5546 = vadd.f32 %v5385, %v5473
      %v5547 = vadd.f32 %v5386, %v5473
      %v5548 = vadd.f32 %v5387, %v5473
      %v5549 = vadd.f32 %v5388, %v5478
      %v5550 = vadd.f32 %v5389, %v5478
      %v5551 = vadd.f32 %v5390, %v5478
      %v5552 = vadd.f32 %v5391, %v5478
      %v5553 = vadd.f32 %v5392, %v5483
      %v5554 = vadd.f32 %v5393, %v5483
      %v5555 = vadd.f32 %v5394, %v5483
      %v5556 = vadd.f32 %v5395, %v5483
      %v5557 = vadd.f32 %v5396, %v5488
      %v5558 = vadd.f32 %v5397, %v5488
      %v5559 = vadd.f32 %v5398, %v5488
      %v5560 = vadd.f32 %v5399, %v5488
      %v5561 = vadd.f32 %v5400, %v5493
      %v5562 = vadd.f32 %v5401, %v5493
      %v5563 = vadd.f32 %v5402, %v5493
      %v5564 = vadd.f32 %v5403, %v5493
      %v5565 = vadd.f32 %v5404, %v5498
      %v5566 = vadd.f32 %v5405, %v5498
      %v5567 = vadd.f32 %v5406, %v5498
      %v5568 = vadd.f32 %v5407, %v5498
      %v5569 = vadd.f32 %v5408, %v5503
      %v5570 = vadd.f32 %v5409, %v5503
      %v5571 = vadd.f32 %v5410, %v5503
      %v5572 = vadd.f32 %v5411, %v5503
      %v5573 = vadd.f32 %v5412, %v5508
      %v5574 = vadd.f32 %v5413, %v5508
      %v5575 = vadd.f32 %v5414, %v5508
      %v5576 = vadd.f32 %v5415, %v5508
      %v5577 = vadd.f32 %v5416, %v5513
      %v5578 = vadd.f32 %v5417, %v5513
      %v5579 = vadd.f32 %v5418, %v5513
      %v5580 = vadd.f32 %v5419, %v5513
      %v5581 = vadd.f32 %v5420, %v5518
      %v5582 = vadd.f32 %v5421, %v5518
      %v5583 = vadd.f32 %v5422, %v5518
      %v5584 = vadd.f32 %v5423, %v5518
      %v5585 = vadd.f32 %v5424, %v5523
      %v5586 = vadd.f32 %v5425, %v5523
      %v5587 = vadd.f32 %v5426, %v5523
      %v5588 = vadd.f32 %v5427, %v5523
      %v5589 = vmax.f32 %v5525, 0.0
      %v5590 = vmax.f32 %v5526, 0.0
      %v5591 = vmax.f32 %v5527, 0.0
      %v5592 = vmax.f32 %v5528, 0.0
      %v5593 = vmax.f32 %v5529, 0.0
      %v5594 = vmax.f32 %v5530, 0.0
      %v5595 = vmax.f32 %v5531, 0.0
      %v5596 = vmax.f32 %v5532, 0.0
      %v5597 = vmax.f32 %v5533, 0.0
      %v5598 = vmax.f32 %v5534, 0.0
      %v5599 = vmax.f32 %v5535, 0.0
      %v5600 = vmax.f32 %v5536, 0.0
      %v5601 = vmax.f32 %v5537, 0.0
      %v5602 = vmax.f32 %v5538, 0.0
      %v5603 = vmax.f32 %v5539, 0.0
      %v5604 = vmax.f32 %v5540, 0.0
      %v5605 = vmax.f32 %v5541, 0.0
      %v5606 = vmax.f32 %v5542, 0.0
      %v5607 = vmax.f32 %v5543, 0.0
      %v5608 = vmax.f32 %v5544, 0.0
      %v5609 = vmax.f32 %v5545, 0.0
      %v5610 = vmax.f32 %v5546, 0.0
      %v5611 = vmax.f32 %v5547, 0.0
      %v5612 = vmax.f32 %v5548, 0.0
      %v5613 = vmax.f32 %v5549, 0.0
      %v5614 = vmax.f32 %v5550, 0.0
      %v5615 = vmax.f32 %v5551, 0.0
      %v5616 = vmax.f32 %v5552, 0.0
      %v5617 = vmax.f32 %v5553, 0.0
      %v5618 = vmax.f32 %v5554, 0.0
      %v5619 = vmax.f32 %v5555, 0.0
      %v5620 = vmax.f32 %v5556, 0.0
      %v5621 = vmax.f32 %v5557, 0.0
      %v5622 = vmax.f32 %v5558, 0.0
      %v5623 = vmax.f32 %v5559, 0.0
      %v5624 = vmax.f32 %v5560, 0.0
      %v5625 = vmax.f32 %v5561, 0.0
      %v5626 = vmax.f32 %v5562, 0.0
      %v5627 = vmax.f32 %v5563, 0.0
      %v5628 = vmax.f32 %v5564, 0.0
      %v5629 = vmax.f32 %v5565, 0.0
      %v5630 = vmax.f32 %v5566, 0.0
      %v5631 = vmax.f32 %v5567, 0.0
      %v5632 = vmax.f32 %v5568, 0.0
      %v5633 = vmax.f32 %v5569, 0.0
      %v5634 = vmax.f32 %v5570, 0.0
      %v5635 = vmax.f32 %v5571, 0.0
      %v5636 = vmax.f32 %v5572, 0.0
      %v5637 = vmax.f32 %v5573, 0.0
      %v5638 = vmax.f32 %v5574, 0.0
      %v5639 = vmax.f32 %v5575, 0.0
      %v5640 = vmax.f32 %v5576, 0.0
      %v5641 = vmax.f32 %v5577, 0.0
      %v5642 = vmax.f32 %v5578, 0.0
      %v5643 = vmax.f32 %v5579, 0.0
      %v5644 = vmax.f32 %v5580, 0.0
      %v5645 = vmax.f32 %v5581, 0.0
      %v5646 = vmax.f32 %v5582, 0.0
      %v5647 = vmax.f32 %v5583, 0.0
      %v5648 = vmax.f32 %v5584, 0.0
      %v5649 = vmax.f32 %v5585, 0.0
      %v5650 = vmax.f32 %v5586, 0.0
      %v5651 = vmax.f32 %v5587, 0.0
      %v5652 = vmax.f32 %v5588, 0.0
      %v5653 = vpack.c.bf16 %v5593, %v5589
      %v5654 = vpack.c.bf16 %v5594, %v5590
      %v5655 = vpack.c.bf16 %v5595, %v5591
      %v5656 = vpack.c.bf16 %v5596, %v5592
      %v5657 = vpack.c.bf16 %v5601, %v5597
      %v5658 = vpack.c.bf16 %v5602, %v5598
      %v5659 = vpack.c.bf16 %v5603, %v5599
      %v5660 = vpack.c.bf16 %v5604, %v5600
      %v5661 = vpack.c.bf16 %v5609, %v5605
      %v5662 = vpack.c.bf16 %v5610, %v5606
      %v5663 = vpack.c.bf16 %v5611, %v5607
      %v5664 = vpack.c.bf16 %v5612, %v5608
      %v5665 = vpack.c.bf16 %v5617, %v5613
      %v5666 = vpack.c.bf16 %v5618, %v5614
      %v5667 = vpack.c.bf16 %v5619, %v5615
      %v5668 = vpack.c.bf16 %v5620, %v5616
      %v5669 = vpack.c.bf16 %v5625, %v5621
      %v5670 = vpack.c.bf16 %v5626, %v5622
      %v5671 = vpack.c.bf16 %v5627, %v5623
      %v5672 = vpack.c.bf16 %v5628, %v5624
      %v5673 = vpack.c.bf16 %v5633, %v5629
      %v5674 = vpack.c.bf16 %v5634, %v5630
      %v5675 = vpack.c.bf16 %v5635, %v5631
      %v5676 = vpack.c.bf16 %v5636, %v5632
      %v5677 = vpack.c.bf16 %v5641, %v5637
      %v5678 = vpack.c.bf16 %v5642, %v5638
      %v5679 = vpack.c.bf16 %v5643, %v5639
      %v5680 = vpack.c.bf16 %v5644, %v5640
      %v5681 = vpack.c.bf16 %v5649, %v5645
      %v5682 = vpack.c.bf16 %v5650, %v5646
      %v5683 = vpack.c.bf16 %v5651, %v5647
      %v5684 = vpack.c.bf16 %v5652, %v5648
      %s5685 = scalar_lea.vmem %s3, 256
      %v5686 = vld [vmem:[%s5685] sm:$0xf]
      %v5687 = vld [vmem:[%s5685 + $0x4] sm:$0xf]
      %v5688 = vld [vmem:[%s5685 + $0x8] sm:$0xf]
      %v5689 = vld [vmem:[%s5685 + $0xc] sm:$0xf]
      %v5690 = vld [vmem:[%s5685 + $0x10] sm:$0xf]
      %v5691 = vld [vmem:[%s5685 + $0x14] sm:$0xf]
      %v5692 = vld [vmem:[%s5685 + $0x18] sm:$0xf]
      %v5693 = vld [vmem:[%s5685 + $0x1c] sm:$0xf]
      %v5694 = vld [vmem:[%s5685 + $0x20] sm:$0xf]
      %v5695 = vld [vmem:[%s5685 + $0x24] sm:$0xf]
      %v5696 = vld [vmem:[%s5685 + $0x28] sm:$0xf]
      %v5697 = vld [vmem:[%s5685 + $0x2c] sm:$0xf]
      %v5698 = vld [vmem:[%s5685 + $0x30] sm:$0xf]
      %v5699 = vld [vmem:[%s5685 + $0x34] sm:$0xf]
      %v5700 = vld [vmem:[%s5685 + $0x38] sm:$0xf]
      %v5701 = vld [vmem:[%s5685 + $0x3c] sm:$0xf]
      %s5702 = scalar_lea.vmem %s4, 512
      %v5703 = vld [vmem:[%s5702] sm:$0xff]
      %v5704 = vld [vmem:[%s5702 + $0x8] sm:$0xff]
      %v5705 = vld [vmem:[%s5702 + $0x10] sm:$0xff]
      %v5706 = vld [vmem:[%s5702 + $0x18] sm:$0xff]
      %v5707 = vld [vmem:[%s5702 + $0x20] sm:$0xff]
      %v5708 = vld [vmem:[%s5702 + $0x28] sm:$0xff]
      %v5709 = vld [vmem:[%s5702 + $0x30] sm:$0xff]
      %v5710 = vld [vmem:[%s5702 + $0x38] sm:$0xff]
      %v5711 = vld [vmem:[%s5702 + $0x40] sm:$0xff]
      %v5712 = vld [vmem:[%s5702 + $0x48] sm:$0xff]
      %v5713 = vld [vmem:[%s5702 + $0x50] sm:$0xff]
      %v5714 = vld [vmem:[%s5702 + $0x58] sm:$0xff]
      %v5715 = vld [vmem:[%s5702 + $0x60] sm:$0xff]
      %v5716 = vld [vmem:[%s5702 + $0x68] sm:$0xff]
      %v5717 = vld [vmem:[%s5702 + $0x70] sm:$0xff]
      %v5718 = vld [vmem:[%s5702 + $0x78] sm:$0xff]
      %5720 = vset.pattern.permute.xlu0 0
      %5721 = vperm.xlu0 %5720, %v5703
      %v5722 = vpop.permute.xlu0 %5721
      %5725 = vset.pattern.permute.xlu0 0
      %5726 = vperm.xlu0 %5725, %v5704
      %v5727 = vpop.permute.xlu0 %5726
      %5730 = vset.pattern.permute.xlu0 0
      %5731 = vperm.xlu0 %5730, %v5705
      %v5732 = vpop.permute.xlu0 %5731
      %5735 = vset.pattern.permute.xlu0 0
      %5736 = vperm.xlu0 %5735, %v5706
      %v5737 = vpop.permute.xlu0 %5736
      %5740 = vset.pattern.permute.xlu0 0
      %5741 = vperm.xlu0 %5740, %v5707
      %v5742 = vpop.permute.xlu0 %5741
      %5745 = vset.pattern.permute.xlu0 0
      %5746 = vperm.xlu0 %5745, %v5708
      %v5747 = vpop.permute.xlu0 %5746
      %5750 = vset.pattern.permute.xlu0 0
      %5751 = vperm.xlu0 %5750, %v5709
      %v5752 = vpop.permute.xlu0 %5751
      %5755 = vset.pattern.permute.xlu0 0
      %5756 = vperm.xlu0 %5755, %v5710
      %v5757 = vpop.permute.xlu0 %5756
      %5760 = vset.pattern.permute.xlu0 0
      %5761 = vperm.xlu0 %5760, %v5711
      %v5762 = vpop.permute.xlu0 %5761
      %5765 = vset.pattern.permute.xlu0 0
      %5766 = vperm.xlu0 %5765, %v5712
      %v5767 = vpop.permute.xlu0 %5766
      %5770 = vset.pattern.permute.xlu0 0
      %5771 = vperm.xlu0 %5770, %v5713
      %v5772 = vpop.permute.xlu0 %5771
      %5775 = vset.pattern.permute.xlu0 0
      %5776 = vperm.xlu0 %5775, %v5714
      %v5777 = vpop.permute.xlu0 %5776
      %5780 = vset.pattern.permute.xlu0 0
      %5781 = vperm.xlu0 %5780, %v5715
      %v5782 = vpop.permute.xlu0 %5781
      %5785 = vset.pattern.permute.xlu0 0
      %5786 = vperm.xlu0 %5785, %v5716
      %v5787 = vpop.permute.xlu0 %5786
      %5790 = vset.pattern.permute.xlu0 0
      %5791 = vperm.xlu0 %5790, %v5717
      %v5792 = vpop.permute.xlu0 %5791
      %5795 = vset.pattern.permute.xlu0 0
      %5796 = vperm.xlu0 %5795, %v5718
      %v5797 = vpop.permute.xlu0 %5796
      %v5815 = vunpack.c.l.b16 %v5686
      %v5816 = vunpack.c.l.b16 %v5687
      %v5817 = vunpack.c.l.b16 %v5688
      %v5818 = vunpack.c.l.b16 %v5689
      %v5819 = vunpack.c.l.b16 %v5690
      %v5820 = vunpack.c.l.b16 %v5691
      %v5821 = vunpack.c.l.b16 %v5692
      %v5822 = vunpack.c.l.b16 %v5693
      %v5823 = vunpack.c.l.b16 %v5694
      %v5824 = vunpack.c.l.b16 %v5695
      %v5825 = vunpack.c.l.b16 %v5696
      %v5826 = vunpack.c.l.b16 %v5697
      %v5827 = vunpack.c.l.b16 %v5698
      %v5828 = vunpack.c.l.b16 %v5699
      %v5829 = vunpack.c.l.b16 %v5700
      %v5830 = vunpack.c.l.b16 %v5701
      %v5831 = vpack.c.b16 %v5816, %v5815
      %v5832 = vpack.c.b16 %v5818, %v5817
      %v5833 = vpack.c.b16 %v5820, %v5819
      %v5834 = vpack.c.b16 %v5822, %v5821
      %v5835 = vpack.c.b16 %v5824, %v5823
      %v5836 = vpack.c.b16 %v5826, %v5825
      %v5837 = vpack.c.b16 %v5828, %v5827
      %v5838 = vpack.c.b16 %v5830, %v5829
      %5847 = vmatprep.subr.bf16.mxu0 %v5654
      %5848 = vmatpush1.bf16.msra.mxu0 %v5653
      %5849 = vmatprep.subr.bf16.mxu0 %v5658
      %5850 = vmatpush1.bf16.msra.mxu0 %v5657
      %5851 = vmatprep.subr.bf16.mxu0 %v5662
      %5852 = vmatpush1.bf16.msra.mxu0 %v5661
      %5853 = vmatprep.subr.bf16.mxu0 %v5666
      %5854 = vmatpush1.bf16.msra.mxu0 %v5665
      %5855 = vmatprep.subr.bf16.mxu0 %v5670
      %5856 = vmatpush1.bf16.msra.mxu0 %v5669
      %5857 = vmatprep.subr.bf16.mxu0 %v5674
      %5858 = vmatpush1.bf16.msra.mxu0 %v5673
      %5859 = vmatprep.subr.bf16.mxu0 %v5678
      %5860 = vmatpush1.bf16.msra.mxu0 %v5677
      %5861 = vmatprep.subr.bf16.mxu0 %v5682
      %5862 = vmatpush1.bf16.msra.mxu0 %v5681
      %5863 = vmatprep.subr.bf16.mxu0 0
      %5864 = vmatpush1.bf16.msra.mxu0 0
      %5865 = vmatprep.subr.bf16.mxu0 0
      %5866 = vmatpush1.bf16.msra.mxu0 0
      %5867 = vmatprep.subr.bf16.mxu0 0
      %5868 = vmatpush1.bf16.msra.mxu0 0
      %5869 = vmatprep.subr.bf16.mxu0 0
      %5870 = vmatpush1.bf16.msra.mxu0 0
      %5871 = vmatprep.subr.bf16.mxu0 0
      %5872 = vmatpush1.bf16.msra.mxu0 0
      %5873 = vmatprep.subr.bf16.mxu0 0
      %5874 = vmatpush1.bf16.msra.mxu0 0
      %5875 = vmatprep.subr.bf16.mxu0 0
      %5876 = vmatpush1.bf16.msra.mxu0 0
      %5877 = vmatprep.subr.bf16.mxu0 0
      %5878 = vmatpush1.bf16.msra.mxu0 0
      %5879 = vmatprep.mubr.bf16.mxu0 0
      %5880 = vmatmul.mubr.bf16.gmra.mrb[0].mxu0 %v5831
      %v5881 = vpop.f32.mrb[0].mxu0
      %v5882 = vadd.f32 %v5722, %v5881
      %v5883 = vpop.f32.mrb[0].mxu0
      %v5884 = vadd.f32 %v5722, %v5883
      %v5885 = vpop.f32.mrb[0].mxu0
      %v5886 = vadd.f32 %v5727, %v5885
      %v5887 = vpop.f32.mrb[0].mxu0
      %v5888 = vadd.f32 %v5727, %v5887
      %5889 = vmatprep.mubr.bf16.mxu0 0
      %5890 = vmatmul.mubr.bf16.gmra.mrb[0].mxu0 %v5832
      %v5891 = vpop.f32.mrb[0].mxu0
      %v5892 = vadd.f32 %v5732, %v5891
      %v5893 = vpop.f32.mrb[0].mxu0
      %v5894 = vadd.f32 %v5732, %v5893
      %v5895 = vpop.f32.mrb[0].mxu0
      %v5896 = vadd.f32 %v5737, %v5895
      %v5897 = vpop.f32.mrb[0].mxu0
      %v5898 = vadd.f32 %v5737, %v5897
      %5899 = vmatprep.mubr.bf16.mxu0 0
      %5900 = vmatmul.mubr.bf16.gmra.mrb[0].mxu0 %v5833
      %v5901 = vpop.f32.mrb[0].mxu0
      %v5902 = vadd.f32 %v5742, %v5901
      %v5903 = vpop.f32.mrb[0].mxu0
      %v5904 = vadd.f32 %v5742, %v5903
      %v5905 = vpop.f32.mrb[0].mxu0
      %v5906 = vadd.f32 %v5747, %v5905
      %v5907 = vpop.f32.mrb[0].mxu0
      %v5908 = vadd.f32 %v5747, %v5907
      %5909 = vmatprep.mubr.bf16.mxu0 0
      %5910 = vmatmul.mubr.bf16.gmra.mrb[0].mxu0 %v5834
      %v5911 = vpop.f32.mrb[0].mxu0
      %v5912 = vadd.f32 %v5752, %v5911
      %v5913 = vpop.f32.mrb[0].mxu0
      %v5914 = vadd.f32 %v5752, %v5913
      %v5915 = vpop.f32.mrb[0].mxu0
      %v5916 = vadd.f32 %v5757, %v5915
      %v5917 = vpop.f32.mrb[0].mxu0
      %v5918 = vadd.f32 %v5757, %v5917
      %5919 = vmatprep.mubr.bf16.mxu0 0
      %5920 = vmatmul.mubr.bf16.gmra.mrb[0].mxu0 %v5835
      %v5921 = vpop.f32.mrb[0].mxu0
      %v5922 = vadd.f32 %v5762, %v5921
      %v5923 = vpop.f32.mrb[0].mxu0
      %v5924 = vadd.f32 %v5762, %v5923
      %v5925 = vpop.f32.mrb[0].mxu0
      %v5926 = vadd.f32 %v5767, %v5925
      %v5927 = vpop.f32.mrb[0].mxu0
      %v5928 = vadd.f32 %v5767, %v5927
      %5929 = vmatprep.mubr.bf16.mxu0 0
      %5930 = vmatmul.mubr.bf16.gmra.mrb[0].mxu0 %v5836
      %v5931 = vpop.f32.mrb[0].mxu0
      %v5932 = vadd.f32 %v5772, %v5931
      %v5933 = vpop.f32.mrb[0].mxu0
      %v5934 = vadd.f32 %v5772, %v5933
      %v5935 = vpop.f32.mrb[0].mxu0
      %v5936 = vadd.f32 %v5777, %v5935
      %v5937 = vpop.f32.mrb[0].mxu0
      %v5938 = vadd.f32 %v5777, %v5937
      %5939 = vmatprep.mubr.bf16.mxu0 0
      %5940 = vmatmul.mubr.bf16.gmra.mrb[0].mxu0 %v5837
      %v5941 = vpop.f32.mrb[0].mxu0
      %v5942 = vadd.f32 %v5782, %v5941
      %v5943 = vpop.f32.mrb[0].mxu0
      %v5944 = vadd.f32 %v5782, %v5943
      %v5945 = vpop.f32.mrb[0].mxu0
      %v5946 = vadd.f32 %v5787, %v5945
      %v5947 = vpop.f32.mrb[0].mxu0
      %v5948 = vadd.f32 %v5787, %v5947
      %5949 = vmatprep.mubr.bf16.mxu0 0
      %5950 = vmatmul.mubr.bf16.gmra.mrb[0].mxu0 %v5838
      %v5951 = vpop.f32.mrb[0].mxu0
      %v5952 = vadd.f32 %v5792, %v5951
      %v5953 = vpop.f32.mrb[0].mxu0
      %v5954 = vadd.f32 %v5792, %v5953
      %v5955 = vpop.f32.mrb[0].mxu0
      %v5956 = vadd.f32 %v5797, %v5955
      %v5957 = vpop.f32.mrb[0].mxu0
      %v5958 = vadd.f32 %v5797, %v5957
      %5959 = vdwg.mxu0
      %5960 = vmatprep.subr.bf16.mxu0 %v5656
      %5961 = vmatpush1.bf16.msra.mxu0 %v5655
      %5962 = vmatprep.subr.bf16.mxu0 %v5660
      %5963 = vmatpush1.bf16.msra.mxu0 %v5659
      %5964 = vmatprep.subr.bf16.mxu0 %v5664
      %5965 = vmatpush1.bf16.msra.mxu0 %v5663
      %5966 = vmatprep.subr.bf16.mxu0 %v5668
      %5967 = vmatpush1.bf16.msra.mxu0 %v5667
      %5968 = vmatprep.subr.bf16.mxu0 %v5672
      %5969 = vmatpush1.bf16.msra.mxu0 %v5671
      %5970 = vmatprep.subr.bf16.mxu0 %v5676
      %5971 = vmatpush1.bf16.msra.mxu0 %v5675
      %5972 = vmatprep.subr.bf16.mxu0 %v5680
      %5973 = vmatpush1.bf16.msra.mxu0 %v5679
      %5974 = vmatprep.subr.bf16.mxu0 %v5684
      %5975 = vmatpush1.bf16.msra.mxu0 %v5683
      %5976 = vmatprep.subr.bf16.mxu0 0
      %5977 = vmatpush1.bf16.msra.mxu0 0
      %5978 = vmatprep.subr.bf16.mxu0 0
      %5979 = vmatpush1.bf16.msra.mxu0 0
      %5980 = vmatprep.subr.bf16.mxu0 0
      %5981 = vmatpush1.bf16.msra.mxu0 0
      %5982 = vmatprep.subr.bf16.mxu0 0
      %5983 = vmatpush1.bf16.msra.mxu0 0
      %5984 = vmatprep.subr.bf16.mxu0 0
      %5985 = vmatpush1.bf16.msra.mxu0 0
      %5986 = vmatprep.subr.bf16.mxu0 0
      %5987 = vmatpush1.bf16.msra.mxu0 0
      %5988 = vmatprep.subr.bf16.mxu0 0
      %5989 = vmatpush1.bf16.msra.mxu0 0
      %5990 = vmatprep.subr.bf16.mxu0 0
      %5991 = vmatpush1.bf16.msra.mxu0 0
      %5992 = vmatprep.mubr.bf16.mxu0 0
      %5993 = vmatmul.mubr.bf16.gmra.mrb[0].mxu0 %v5831
      %v5994 = vpop.f32.mrb[0].mxu0
      %v5995 = vadd.f32 %v5722, %v5994
      %v5996 = vpop.f32.mrb[0].mxu0
      %v5997 = vadd.f32 %v5722, %v5996
      %v5998 = vpop.f32.mrb[0].mxu0
      %v5999 = vadd.f32 %v5727, %v5998
      %v6000 = vpop.f32.mrb[0].mxu0
      %v6001 = vadd.f32 %v5727, %v6000
      %6002 = vmatprep.mubr.bf16.mxu0 0
      %6003 = vmatmul.mubr.bf16.gmra.mrb[0].mxu0 %v5832
      %v6004 = vpop.f32.mrb[0].mxu0
      %v6005 = vadd.f32 %v5732, %v6004
      %v6006 = vpop.f32.mrb[0].mxu0
      %v6007 = vadd.f32 %v5732, %v6006
      %v6008 = vpop.f32.mrb[0].mxu0
      %v6009 = vadd.f32 %v5737, %v6008
      %v6010 = vpop.f32.mrb[0].mxu0
      %v6011 = vadd.f32 %v5737, %v6010
      %6012 = vmatprep.mubr.bf16.mxu0 0
      %6013 = vmatmul.mubr.bf16.gmra.mrb[0].mxu0 %v5833
      %v6014 = vpop.f32.mrb[0].mxu0
      %v6015 = vadd.f32 %v5742, %v6014
      %v6016 = vpop.f32.mrb[0].mxu0
      %v6017 = vadd.f32 %v5742, %v6016
      %v6018 = vpop.f32.mrb[0].mxu0
      %v6019 = vadd.f32 %v5747, %v6018
      %v6020 = vpop.f32.mrb[0].mxu0
      %v6021 = vadd.f32 %v5747, %v6020
      %6022 = vmatprep.mubr.bf16.mxu0 0
      %6023 = vmatmul.mubr.bf16.gmra.mrb[0].mxu0 %v5834
      %v6024 = vpop.f32.mrb[0].mxu0
      %v6025 = vadd.f32 %v5752, %v6024
      %v6026 = vpop.f32.mrb[0].mxu0
      %v6027 = vadd.f32 %v5752, %v6026
      %v6028 = vpop.f32.mrb[0].mxu0
      %v6029 = vadd.f32 %v5757, %v6028
      %v6030 = vpop.f32.mrb[0].mxu0
      %v6031 = vadd.f32 %v5757, %v6030
      %6032 = vmatprep.mubr.bf16.mxu0 0
      %6033 = vmatmul.mubr.bf16.gmra.mrb[0].mxu0 %v5835
      %v6034 = vpop.f32.mrb[0].mxu0
      %v6035 = vadd.f32 %v5762, %v6034
      %v6036 = vpop.f32.mrb[0].mxu0
      %v6037 = vadd.f32 %v5762, %v6036
      %v6038 = vpop.f32.mrb[0].mxu0
      %v6039 = vadd.f32 %v5767, %v6038
      %v6040 = vpop.f32.mrb[0].mxu0
      %v6041 = vadd.f32 %v5767, %v6040
      %6042 = vmatprep.mubr.bf16.mxu0 0
      %6043 = vmatmul.mubr.bf16.gmra.mrb[0].mxu0 %v5836
      %v6044 = vpop.f32.mrb[0].mxu0
      %v6045 = vadd.f32 %v5772, %v6044
      %v6046 = vpop.f32.mrb[0].mxu0
      %v6047 = vadd.f32 %v5772, %v6046
      %v6048 = vpop.f32.mrb[0].mxu0
      %v6049 = vadd.f32 %v5777, %v6048
      %v6050 = vpop.f32.mrb[0].mxu0
      %v6051 = vadd.f32 %v5777, %v6050
      %6052 = vmatprep.mubr.bf16.mxu0 0
      %6053 = vmatmul.mubr.bf16.gmra.mrb[0].mxu0 %v5837
      %v6054 = vpop.f32.mrb[0].mxu0
      %v6055 = vadd.f32 %v5782, %v6054
      %v6056 = vpop.f32.mrb[0].mxu0
      %v6057 = vadd.f32 %v5782, %v6056
      %v6058 = vpop.f32.mrb[0].mxu0
      %v6059 = vadd.f32 %v5787, %v6058
      %v6060 = vpop.f32.mrb[0].mxu0
      %v6061 = vadd.f32 %v5787, %v6060
      %6062 = vmatprep.mubr.bf16.mxu0 0
      %6063 = vmatmul.mubr.bf16.gmra.mrb[0].mxu0 %v5838
      %v6064 = vpop.f32.mrb[0].mxu0
      %v6065 = vadd.f32 %v5792, %v6064
      %v6066 = vpop.f32.mrb[0].mxu0
      %v6067 = vadd.f32 %v5792, %v6066
      %v6068 = vpop.f32.mrb[0].mxu0
      %v6069 = vadd.f32 %v5797, %v6068
      %v6070 = vpop.f32.mrb[0].mxu0
      %v6071 = vadd.f32 %v5797, %v6070
      %6072 = vdwg.mxu0
      %v6073 = vmax.f32 %v5882, 0.0
      %v6074 = vmax.f32 %v5884, 0.0
      %v6075 = vmax.f32 %v5995, 0.0
      %v6076 = vmax.f32 %v5997, 0.0
      %v6077 = vmax.f32 %v5886, 0.0
      %v6078 = vmax.f32 %v5888, 0.0
      %v6079 = vmax.f32 %v5999, 0.0
      %v6080 = vmax.f32 %v6001, 0.0
      %v6081 = vmax.f32 %v5892, 0.0
      %v6082 = vmax.f32 %v5894, 0.0
      %v6083 = vmax.f32 %v6005, 0.0
      %v6084 = vmax.f32 %v6007, 0.0
      %v6085 = vmax.f32 %v5896, 0.0
      %v6086 = vmax.f32 %v5898, 0.0
      %v6087 = vmax.f32 %v6009, 0.0
      %v6088 = vmax.f32 %v6011, 0.0
      %v6089 = vmax.f32 %v5902, 0.0
      %v6090 = vmax.f32 %v5904, 0.0
      %v6091 = vmax.f32 %v6015, 0.0
      %v6092 = vmax.f32 %v6017, 0.0
      %v6093 = vmax.f32 %v5906, 0.0
      %v6094 = vmax.f32 %v5908, 0.0
      %v6095 = vmax.f32 %v6019, 0.0
      %v6096 = vmax.f32 %v6021, 0.0
      %v6097 = vmax.f32 %v5912, 0.0
      %v6098 = vmax.f32 %v5914, 0.0
      %v6099 = vmax.f32 %v6025, 0.0
      %v6100 = vmax.f32 %v6027, 0.0
      %v6101 = vmax.f32 %v5916, 0.0
      %v6102 = vmax.f32 %v5918, 0.0
      %v6103 = vmax.f32 %v6029, 0.0
      %v6104 = vmax.f32 %v6031, 0.0
      %v6105 = vmax.f32 %v5922, 0.0
      %v6106 = vmax.f32 %v5924, 0.0
      %v6107 = vmax.f32 %v6035, 0.0
      %v6108 = vmax.f32 %v6037, 0.0
      %v6109 = vmax.f32 %v5926, 0.0
      %v6110 = vmax.f32 %v5928, 0.0
      %v6111 = vmax.f32 %v6039, 0.0
      %v6112 = vmax.f32 %v6041, 0.0
      %v6113 = vmax.f32 %v5932, 0.0
      %v6114 = vmax.f32 %v5934, 0.0
      %v6115 = vmax.f32 %v6045, 0.0
      %v6116 = vmax.f32 %v6047, 0.0
      %v6117 = vmax.f32 %v5936, 0.0
      %v6118 = vmax.f32 %v5938, 0.0
      %v6119 = vmax.f32 %v6049, 0.0
      %v6120 = vmax.f32 %v6051, 0.0
      %v6121 = vmax.f32 %v5942, 0.0
      %v6122 = vmax.f32 %v5944, 0.0
      %v6123 = vmax.f32 %v6055, 0.0
      %v6124 = vmax.f32 %v6057, 0.0
      %v6125 = vmax.f32 %v5946, 0.0
      %v6126 = vmax.f32 %v5948, 0.0
      %v6127 = vmax.f32 %v6059, 0.0
      %v6128 = vmax.f32 %v6061, 0.0
      %v6129 = vmax.f32 %v5952, 0.0
      %v6130 = vmax.f32 %v5954, 0.0
      %v6131 = vmax.f32 %v6065, 0.0
      %v6132 = vmax.f32 %v6067, 0.0
      %v6133 = vmax.f32 %v5956, 0.0
      %v6134 = vmax.f32 %v5958, 0.0
      %v6135 = vmax.f32 %v6069, 0.0
      %v6136 = vmax.f32 %v6071, 0.0
      %v6137 = vpack.c.bf16 %v6077, %v6073
      %v6138 = vpack.c.bf16 %v6078, %v6074
      %v6139 = vpack.c.bf16 %v6079, %v6075
      %v6140 = vpack.c.bf16 %v6080, %v6076
      %v6141 = vpack.c.bf16 %v6085, %v6081
      %v6142 = vpack.c.bf16 %v6086, %v6082
      %v6143 = vpack.c.bf16 %v6087, %v6083
      %v6144 = vpack.c.bf16 %v6088, %v6084
      %v6145 = vpack.c.bf16 %v6093, %v6089
      %v6146 = vpack.c.bf16 %v6094, %v6090
      %v6147 = vpack.c.bf16 %v6095, %v6091
      %v6148 = vpack.c.bf16 %v6096, %v6092
      %v6149 = vpack.c.bf16 %v6101, %v6097
      %v6150 = vpack.c.bf16 %v6102, %v6098
      %v6151 = vpack.c.bf16 %v6103, %v6099
      %v6152 = vpack.c.bf16 %v6104, %v6100
      %v6153 = vpack.c.bf16 %v6109, %v6105
      %v6154 = vpack.c.bf16 %v6110, %v6106
      %v6155 = vpack.c.bf16 %v6111, %v6107
      %v6156 = vpack.c.bf16 %v6112, %v6108
      %v6157 = vpack.c.bf16 %v6117, %v6113
      %v6158 = vpack.c.bf16 %v6118, %v6114
      %v6159 = vpack.c.bf16 %v6119, %v6115
      %v6160 = vpack.c.bf16 %v6120, %v6116
      %v6161 = vpack.c.bf16 %v6125, %v6121
      %v6162 = vpack.c.bf16 %v6126, %v6122
      %v6163 = vpack.c.bf16 %v6127, %v6123
      %v6164 = vpack.c.bf16 %v6128, %v6124
      %v6165 = vpack.c.bf16 %v6133, %v6129
      %v6166 = vpack.c.bf16 %v6134, %v6130
      %v6167 = vpack.c.bf16 %v6135, %v6131
      %v6168 = vpack.c.bf16 %v6136, %v6132
      %s6169 = scalar_lea.vmem %s5, 256
      %v6170 = vld [vmem:[%s6169] sm:$0xf]
      %v6171 = vld [vmem:[%s6169 + $0x4] sm:$0xf]
      %v6172 = vld [vmem:[%s6169 + $0x8] sm:$0xf]
      %v6173 = vld [vmem:[%s6169 + $0xc] sm:$0xf]
      %v6174 = vld [vmem:[%s6169 + $0x10] sm:$0xf]
      %v6175 = vld [vmem:[%s6169 + $0x14] sm:$0xf]
      %v6176 = vld [vmem:[%s6169 + $0x18] sm:$0xf]
      %v6177 = vld [vmem:[%s6169 + $0x1c] sm:$0xf]
      %v6178 = vld [vmem:[%s6169 + $0x20] sm:$0xf]
      %v6179 = vld [vmem:[%s6169 + $0x24] sm:$0xf]
      %v6180 = vld [vmem:[%s6169 + $0x28] sm:$0xf]
      %v6181 = vld [vmem:[%s6169 + $0x2c] sm:$0xf]
      %v6182 = vld [vmem:[%s6169 + $0x30] sm:$0xf]
      %v6183 = vld [vmem:[%s6169 + $0x34] sm:$0xf]
      %v6184 = vld [vmem:[%s6169 + $0x38] sm:$0xf]
      %v6185 = vld [vmem:[%s6169 + $0x3c] sm:$0xf]
      %v6202 = vunpack.c.l.b16 %v6170
      %v6203 = vunpack.c.l.b16 %v6171
      %v6204 = vunpack.c.l.b16 %v6172
      %v6205 = vunpack.c.l.b16 %v6173
      %v6206 = vunpack.c.l.b16 %v6174
      %v6207 = vunpack.c.l.b16 %v6175
      %v6208 = vunpack.c.l.b16 %v6176
      %v6209 = vunpack.c.l.b16 %v6177
      %v6210 = vunpack.c.l.b16 %v6178
      %v6211 = vunpack.c.l.b16 %v6179
      %v6212 = vunpack.c.l.b16 %v6180
      %v6213 = vunpack.c.l.b16 %v6181
      %v6214 = vunpack.c.l.b16 %v6182
      %v6215 = vunpack.c.l.b16 %v6183
      %v6216 = vunpack.c.l.b16 %v6184
      %v6217 = vunpack.c.l.b16 %v6185
      %v6218 = vpack.c.b16 %v6203, %v6202
      %v6219 = vpack.c.b16 %v6205, %v6204
      %v6220 = vpack.c.b16 %v6207, %v6206
      %v6221 = vpack.c.b16 %v6209, %v6208
      %v6222 = vpack.c.b16 %v6211, %v6210
      %v6223 = vpack.c.b16 %v6213, %v6212
      %v6224 = vpack.c.b16 %v6215, %v6214
      %v6225 = vpack.c.b16 %v6217, %v6216
      %6234 = vmatprep.subr.bf16.mxu0 %v6138
      %6235 = vmatpush1.bf16.msra.mxu0 %v6137
      %6236 = vmatprep.subr.bf16.mxu0 %v6142
      %6237 = vmatpush1.bf16.msra.mxu0 %v6141
      %6238 = vmatprep.subr.bf16.mxu0 %v6146
      %6239 = vmatpush1.bf16.msra.mxu0 %v6145
      %6240 = vmatprep.subr.bf16.mxu0 %v6150
      %6241 = vmatpush1.bf16.msra.mxu0 %v6149
      %6242 = vmatprep.subr.bf16.mxu0 %v6154
      %6243 = vmatpush1.bf16.msra.mxu0 %v6153
      %6244 = vmatprep.subr.bf16.mxu0 %v6158
      %6245 = vmatpush1.bf16.msra.mxu0 %v6157
      %6246 = vmatprep.subr.bf16.mxu0 %v6162
      %6247 = vmatpush1.bf16.msra.mxu0 %v6161
      %6248 = vmatprep.subr.bf16.mxu0 %v6166
      %6249 = vmatpush1.bf16.msra.mxu0 %v6165
      %6250 = vmatprep.subr.bf16.mxu0 0
      %6251 = vmatpush1.bf16.msra.mxu0 0
      %6252 = vmatprep.subr.bf16.mxu0 0
      %6253 = vmatpush1.bf16.msra.mxu0 0
      %6254 = vmatprep.subr.bf16.mxu0 0
      %6255 = vmatpush1.bf16.msra.mxu0 0
      %6256 = vmatprep.subr.bf16.mxu0 0
      %6257 = vmatpush1.bf16.msra.mxu0 0
      %6258 = vmatprep.subr.bf16.mxu0 0
      %6259 = vmatpush1.bf16.msra.mxu0 0
      %6260 = vmatprep.subr.bf16.mxu0 0
      %6261 = vmatpush1.bf16.msra.mxu0 0
      %6262 = vmatprep.subr.bf16.mxu0 0
      %6263 = vmatpush1.bf16.msra.mxu0 0
      %6264 = vmatprep.subr.bf16.mxu0 0
      %6265 = vmatpush1.bf16.msra.mxu0 0
      %6266 = vmatprep.mubr.bf16.mxu0 0
      %6267 = vmatmul.mubr.bf16.gmra.mrb[0].mxu0 %v6218
      %v6268 = vpop.f32.mrb[0].mxu0
      %v6269 = vadd.f32 0.0, %v6268
      %v6270 = vpop.f32.mrb[0].mxu0
      %v6271 = vadd.f32 0.0, %v6270
      %v6272 = vpop.f32.mrb[0].mxu0
      %v6273 = vadd.f32 0.0, %v6272
      %v6274 = vpop.f32.mrb[0].mxu0
      %v6275 = vadd.f32 0.0, %v6274
      %6276 = vmatprep.mubr.bf16.mxu0 0
      %6277 = vmatmul.mubr.bf16.gmra.mrb[0].mxu0 %v6219
      %v6278 = vpop.f32.mrb[0].mxu0
      %v6279 = vadd.f32 0.0, %v6278
      %v6280 = vpop.f32.mrb[0].mxu0
      %v6281 = vadd.f32 0.0, %v6280
      %v6282 = vpop.f32.mrb[0].mxu0
      %v6283 = vadd.f32 0.0, %v6282
      %v6284 = vpop.f32.mrb[0].mxu0
      %v6285 = vadd.f32 0.0, %v6284
      %6286 = vmatprep.mubr.bf16.mxu0 0
      %6287 = vmatmul.mubr.bf16.gmra.mrb[0].mxu0 %v6220
      %v6288 = vpop.f32.mrb[0].mxu0
      %v6289 = vadd.f32 0.0, %v6288
      %v6290 = vpop.f32.mrb[0].mxu0
      %v6291 = vadd.f32 0.0, %v6290
      %v6292 = vpop.f32.mrb[0].mxu0
      %v6293 = vadd.f32 0.0, %v6292
      %v6294 = vpop.f32.mrb[0].mxu0
      %v6295 = vadd.f32 0.0, %v6294
      %6296 = vmatprep.mubr.bf16.mxu0 0
      %6297 = vmatmul.mubr.bf16.gmra.mrb[0].mxu0 %v6221
      %v6298 = vpop.f32.mrb[0].mxu0
      %v6299 = vadd.f32 0.0, %v6298
      %v6300 = vpop.f32.mrb[0].mxu0
      %v6301 = vadd.f32 0.0, %v6300
      %v6302 = vpop.f32.mrb[0].mxu0
      %v6303 = vadd.f32 0.0, %v6302
      %v6304 = vpop.f32.mrb[0].mxu0
      %v6305 = vadd.f32 0.0, %v6304
      %6306 = vmatprep.mubr.bf16.mxu0 0
      %6307 = vmatmul.mubr.bf16.gmra.mrb[0].mxu0 %v6222
      %v6308 = vpop.f32.mrb[0].mxu0
      %v6309 = vadd.f32 0.0, %v6308
      %v6310 = vpop.f32.mrb[0].mxu0
      %v6311 = vadd.f32 0.0, %v6310
      %v6312 = vpop.f32.mrb[0].mxu0
      %v6313 = vadd.f32 0.0, %v6312
      %v6314 = vpop.f32.mrb[0].mxu0
      %v6315 = vadd.f32 0.0, %v6314
      %6316 = vmatprep.mubr.bf16.mxu0 0
      %6317 = vmatmul.mubr.bf16.gmra.mrb[0].mxu0 %v6223
      %v6318 = vpop.f32.mrb[0].mxu0
      %v6319 = vadd.f32 0.0, %v6318
      %v6320 = vpop.f32.mrb[0].mxu0
      %v6321 = vadd.f32 0.0, %v6320
      %v6322 = vpop.f32.mrb[0].mxu0
      %v6323 = vadd.f32 0.0, %v6322
      %v6324 = vpop.f32.mrb[0].mxu0
      %v6325 = vadd.f32 0.0, %v6324
      %6326 = vmatprep.mubr.bf16.mxu0 0
      %6327 = vmatmul.mubr.bf16.gmra.mrb[0].mxu0 %v6224
      %v6328 = vpop.f32.mrb[0].mxu0
      %v6329 = vadd.f32 0.0, %v6328
      %v6330 = vpop.f32.mrb[0].mxu0
      %v6331 = vadd.f32 0.0, %v6330
      %v6332 = vpop.f32.mrb[0].mxu0
      %v6333 = vadd.f32 0.0, %v6332
      %v6334 = vpop.f32.mrb[0].mxu0
      %v6335 = vadd.f32 0.0, %v6334
      %6336 = vmatprep.mubr.bf16.mxu0 0
      %6337 = vmatmul.mubr.bf16.gmra.mrb[0].mxu0 %v6225
      %v6338 = vpop.f32.mrb[0].mxu0
      %v6339 = vadd.f32 0.0, %v6338
      %v6340 = vpop.f32.mrb[0].mxu0
      %v6341 = vadd.f32 0.0, %v6340
      %v6342 = vpop.f32.mrb[0].mxu0
      %v6343 = vadd.f32 0.0, %v6342
      %v6344 = vpop.f32.mrb[0].mxu0
      %v6345 = vadd.f32 0.0, %v6344
      %6346 = vdwg.mxu0
      %6347 = vmatprep.subr.bf16.mxu0 %v6140
      %6348 = vmatpush1.bf16.msra.mxu0 %v6139
      %6349 = vmatprep.subr.bf16.mxu0 %v6144
      %6350 = vmatpush1.bf16.msra.mxu0 %v6143
      %6351 = vmatprep.subr.bf16.mxu0 %v6148
      %6352 = vmatpush1.bf16.msra.mxu0 %v6147
      %6353 = vmatprep.subr.bf16.mxu0 %v6152
      %6354 = vmatpush1.bf16.msra.mxu0 %v6151
      %6355 = vmatprep.subr.bf16.mxu0 %v6156
      %6356 = vmatpush1.bf16.msra.mxu0 %v6155
      %6357 = vmatprep.subr.bf16.mxu0 %v6160
      %6358 = vmatpush1.bf16.msra.mxu0 %v6159
      %6359 = vmatprep.subr.bf16.mxu0 %v6164
      %6360 = vmatpush1.bf16.msra.mxu0 %v6163
      %6361 = vmatprep.subr.bf16.mxu0 %v6168
      %6362 = vmatpush1.bf16.msra.mxu0 %v6167
      %6363 = vmatprep.subr.bf16.mxu0 0
      %6364 = vmatpush1.bf16.msra.mxu0 0
      %6365 = vmatprep.subr.bf16.mxu0 0
      %6366 = vmatpush1.bf16.msra.mxu0 0
      %6367 = vmatprep.subr.bf16.mxu0 0
      %6368 = vmatpush1.bf16.msra.mxu0 0
      %6369 = vmatprep.subr.bf16.mxu0 0
      %6370 = vmatpush1.bf16.msra.mxu0 0
      %6371 = vmatprep.subr.bf16.mxu0 0
      %6372 = vmatpush1.bf16.msra.mxu0 0
      %6373 = vmatprep.subr.bf16.mxu0 0
      %6374 = vmatpush1.bf16.msra.mxu0 0
      %6375 = vmatprep.subr.bf16.mxu0 0
      %6376 = vmatpush1.bf16.msra.mxu0 0
      %6377 = vmatprep.subr.bf16.mxu0 0
      %6378 = vmatpush1.bf16.msra.mxu0 0
      %6379 = vmatprep.mubr.bf16.mxu0 0
      %6380 = vmatmul.mubr.bf16.gmra.mrb[0].mxu0 %v6218
      %v6381 = vpop.f32.mrb[0].mxu0
      %v6382 = vadd.f32 0.0, %v6381
      %v6383 = vpop.f32.mrb[0].mxu0
      %v6384 = vadd.f32 0.0, %v6383
      %v6385 = vpop.f32.mrb[0].mxu0
      %v6386 = vadd.f32 0.0, %v6385
      %v6387 = vpop.f32.mrb[0].mxu0
      %v6388 = vadd.f32 0.0, %v6387
      %6389 = vmatprep.mubr.bf16.mxu0 0
      %6390 = vmatmul.mubr.bf16.gmra.mrb[0].mxu0 %v6219
      %v6391 = vpop.f32.mrb[0].mxu0
      %v6392 = vadd.f32 0.0, %v6391
      %v6393 = vpop.f32.mrb[0].mxu0
      %v6394 = vadd.f32 0.0, %v6393
      %v6395 = vpop.f32.mrb[0].mxu0
      %v6396 = vadd.f32 0.0, %v6395
      %v6397 = vpop.f32.mrb[0].mxu0
      %v6398 = vadd.f32 0.0, %v6397
      %6399 = vmatprep.mubr.bf16.mxu0 0
      %6400 = vmatmul.mubr.bf16.gmra.mrb[0].mxu0 %v6220
      %v6401 = vpop.f32.mrb[0].mxu0
      %v6402 = vadd.f32 0.0, %v6401
      %v6403 = vpop.f32.mrb[0].mxu0
      %v6404 = vadd.f32 0.0, %v6403
      %v6405 = vpop.f32.mrb[0].mxu0
      %v6406 = vadd.f32 0.0, %v6405
      %v6407 = vpop.f32.mrb[0].mxu0
      %v6408 = vadd.f32 0.0, %v6407
      %6409 = vmatprep.mubr.bf16.mxu0 0
      %6410 = vmatmul.mubr.bf16.gmra.mrb[0].mxu0 %v6221
      %v6411 = vpop.f32.mrb[0].mxu0
      %v6412 = vadd.f32 0.0, %v6411
      %v6413 = vpop.f32.mrb[0].mxu0
      %v6414 = vadd.f32 0.0, %v6413
      %v6415 = vpop.f32.mrb[0].mxu0
      %v6416 = vadd.f32 0.0, %v6415
      %v6417 = vpop.f32.mrb[0].mxu0
      %v6418 = vadd.f32 0.0, %v6417
      %6419 = vmatprep.mubr.bf16.mxu0 0
      %6420 = vmatmul.mubr.bf16.gmra.mrb[0].mxu0 %v6222
      %v6421 = vpop.f32.mrb[0].mxu0
      %v6422 = vadd.f32 0.0, %v6421
      %v6423 = vpop.f32.mrb[0].mxu0
      %v6424 = vadd.f32 0.0, %v6423
      %v6425 = vpop.f32.mrb[0].mxu0
      %v6426 = vadd.f32 0.0, %v6425
      %v6427 = vpop.f32.mrb[0].mxu0
      %v6428 = vadd.f32 0.0, %v6427
      %6429 = vmatprep.mubr.bf16.mxu0 0
      %6430 = vmatmul.mubr.bf16.gmra.mrb[0].mxu0 %v6223
      %v6431 = vpop.f32.mrb[0].mxu0
      %v6432 = vadd.f32 0.0, %v6431
      %v6433 = vpop.f32.mrb[0].mxu0
      %v6434 = vadd.f32 0.0, %v6433
      %v6435 = vpop.f32.mrb[0].mxu0
      %v6436 = vadd.f32 0.0, %v6435
      %v6437 = vpop.f32.mrb[0].mxu0
      %v6438 = vadd.f32 0.0, %v6437
      %6439 = vmatprep.mubr.bf16.mxu0 0
      %6440 = vmatmul.mubr.bf16.gmra.mrb[0].mxu0 %v6224
      %v6441 = vpop.f32.mrb[0].mxu0
      %v6442 = vadd.f32 0.0, %v6441
      %v6443 = vpop.f32.mrb[0].mxu0
      %v6444 = vadd.f32 0.0, %v6443
      %v6445 = vpop.f32.mrb[0].mxu0
      %v6446 = vadd.f32 0.0, %v6445
      %v6447 = vpop.f32.mrb[0].mxu0
      %v6448 = vadd.f32 0.0, %v6447
      %6449 = vmatprep.mubr.bf16.mxu0 0
      %6450 = vmatmul.mubr.bf16.gmra.mrb[0].mxu0 %v6225
      %v6451 = vpop.f32.mrb[0].mxu0
      %v6452 = vadd.f32 0.0, %v6451
      %v6453 = vpop.f32.mrb[0].mxu0
      %v6454 = vadd.f32 0.0, %v6453
      %v6455 = vpop.f32.mrb[0].mxu0
      %v6456 = vadd.f32 0.0, %v6455
      %v6457 = vpop.f32.mrb[0].mxu0
      %v6458 = vadd.f32 0.0, %v6457
      %6459 = vdwg.mxu0
      %v6460 = vadd.f32 %v5525, %v6269
      %v6461 = vadd.f32 %v5526, %v6271
      %v6462 = vadd.f32 %v5527, %v6382
      %v6463 = vadd.f32 %v5528, %v6384
      %v6464 = vadd.f32 %v5529, %v6273
      %v6465 = vadd.f32 %v5530, %v6275
      %v6466 = vadd.f32 %v5531, %v6386
      %v6467 = vadd.f32 %v5532, %v6388
      %v6468 = vadd.f32 %v5533, %v6279
      %v6469 = vadd.f32 %v5534, %v6281
      %v6470 = vadd.f32 %v5535, %v6392
      %v6471 = vadd.f32 %v5536, %v6394
      %v6472 = vadd.f32 %v5537, %v6283
      %v6473 = vadd.f32 %v5538, %v6285
      %v6474 = vadd.f32 %v5539, %v6396
      %v6475 = vadd.f32 %v5540, %v6398
      %v6476 = vadd.f32 %v5541, %v6289
      %v6477 = vadd.f32 %v5542, %v6291
      %v6478 = vadd.f32 %v5543, %v6402
      %v6479 = vadd.f32 %v5544, %v6404
      %v6480 = vadd.f32 %v5545, %v6293
      %v6481 = vadd.f32 %v5546, %v6295
      %v6482 = vadd.f32 %v5547, %v6406
      %v6483 = vadd.f32 %v5548, %v6408
      %v6484 = vadd.f32 %v5549, %v6299
      %v6485 = vadd.f32 %v5550, %v6301
      %v6486 = vadd.f32 %v5551, %v6412
      %v6487 = vadd.f32 %v5552, %v6414
      %v6488 = vadd.f32 %v5553, %v6303
      %v6489 = vadd.f32 %v5554, %v6305
      %v6490 = vadd.f32 %v5555, %v6416
      %v6491 = vadd.f32 %v5556, %v6418
      %v6492 = vadd.f32 %v5557, %v6309
      %v6493 = vadd.f32 %v5558, %v6311
      %v6494 = vadd.f32 %v5559, %v6422
      %v6495 = vadd.f32 %v5560, %v6424
      %v6496 = vadd.f32 %v5561, %v6313
      %v6497 = vadd.f32 %v5562, %v6315
      %v6498 = vadd.f32 %v5563, %v6426
      %v6499 = vadd.f32 %v5564, %v6428
      %v6500 = vadd.f32 %v5565, %v6319
      %v6501 = vadd.f32 %v5566, %v6321
      %v6502 = vadd.f32 %v5567, %v6432
      %v6503 = vadd.f32 %v5568, %v6434
      %v6504 = vadd.f32 %v5569, %v6323
      %v6505 = vadd.f32 %v5570, %v6325
      %v6506 = vadd.f32 %v5571, %v6436
      %v6507 = vadd.f32 %v5572, %v6438
      %v6508 = vadd.f32 %v5573, %v6329
      %v6509 = vadd.f32 %v5574, %v6331
      %v6510 = vadd.f32 %v5575, %v6442
      %v6511 = vadd.f32 %v5576, %v6444
      %v6512 = vadd.f32 %v5577, %v6333
      %v6513 = vadd.f32 %v5578, %v6335
      %v6514 = vadd.f32 %v5579, %v6446
      %v6515 = vadd.f32 %v5580, %v6448
      %v6516 = vadd.f32 %v5581, %v6339
      %v6517 = vadd.f32 %v5582, %v6341
      %v6518 = vadd.f32 %v5583, %v6452
      %v6519 = vadd.f32 %v5584, %v6454
      %v6520 = vadd.f32 %v5585, %v6343
      %v6521 = vadd.f32 %v5586, %v6345
      %v6522 = vadd.f32 %v5587, %v6456
      %v6523 = vadd.f32 %v5588, %v6458
      %s6524 = scalar_lea.vmem %s6, 512
      %v6525 = vld [vmem:[%s6524] sm:$0xff]
      %v6526 = vld [vmem:[%s6524 + $0x8] sm:$0xff]
      %v6527 = vld [vmem:[%s6524 + $0x10] sm:$0xff]
      %v6528 = vld [vmem:[%s6524 + $0x18] sm:$0xff]
      %v6529 = vld [vmem:[%s6524 + $0x20] sm:$0xff]
      %v6530 = vld [vmem:[%s6524 + $0x28] sm:$0xff]
      %v6531 = vld [vmem:[%s6524 + $0x30] sm:$0xff]
      %v6532 = vld [vmem:[%s6524 + $0x38] sm:$0xff]
      %v6533 = vld [vmem:[%s6524 + $0x40] sm:$0xff]
      %v6534 = vld [vmem:[%s6524 + $0x48] sm:$0xff]
      %v6535 = vld [vmem:[%s6524 + $0x50] sm:$0xff]
      %v6536 = vld [vmem:[%s6524 + $0x58] sm:$0xff]
      %v6537 = vld [vmem:[%s6524 + $0x60] sm:$0xff]
      %v6538 = vld [vmem:[%s6524 + $0x68] sm:$0xff]
      %v6539 = vld [vmem:[%s6524 + $0x70] sm:$0xff]
      %v6540 = vld [vmem:[%s6524 + $0x78] sm:$0xff]
      %6542 = vset.pattern.permute.xlu0 0
      %6543 = vperm.xlu0 %6542, %v6525
      %v6544 = vpop.permute.xlu0 %6543
      %6547 = vset.pattern.permute.xlu0 0
      %6548 = vperm.xlu0 %6547, %v6526
      %v6549 = vpop.permute.xlu0 %6548
      %6552 = vset.pattern.permute.xlu0 0
      %6553 = vperm.xlu0 %6552, %v6527
      %v6554 = vpop.permute.xlu0 %6553
      %6557 = vset.pattern.permute.xlu0 0
      %6558 = vperm.xlu0 %6557, %v6528
      %v6559 = vpop.permute.xlu0 %6558
      %6562 = vset.pattern.permute.xlu0 0
      %6563 = vperm.xlu0 %6562, %v6529
      %v6564 = vpop.permute.xlu0 %6563
      %6567 = vset.pattern.permute.xlu0 0
      %6568 = vperm.xlu0 %6567, %v6530
      %v6569 = vpop.permute.xlu0 %6568
      %6572 = vset.pattern.permute.xlu0 0
      %6573 = vperm.xlu0 %6572, %v6531
      %v6574 = vpop.permute.xlu0 %6573
      %6577 = vset.pattern.permute.xlu0 0
      %6578 = vperm.xlu0 %6577, %v6532
      %v6579 = vpop.permute.xlu0 %6578
      %6582 = vset.pattern.permute.xlu0 0
      %6583 = vperm.xlu0 %6582, %v6533
      %v6584 = vpop.permute.xlu0 %6583
      %6587 = vset.pattern.permute.xlu0 0
      %6588 = vperm.xlu0 %6587, %v6534
      %v6589 = vpop.permute.xlu0 %6588
      %6592 = vset.pattern.permute.xlu0 0
      %6593 = vperm.xlu0 %6592, %v6535
      %v6594 = vpop.permute.xlu0 %6593
      %6597 = vset.pattern.permute.xlu0 0
      %6598 = vperm.xlu0 %6597, %v6536
      %v6599 = vpop.permute.xlu0 %6598
      %6602 = vset.pattern.permute.xlu0 0
      %6603 = vperm.xlu0 %6602, %v6537
      %v6604 = vpop.permute.xlu0 %6603
      %6607 = vset.pattern.permute.xlu0 0
      %6608 = vperm.xlu0 %6607, %v6538
      %v6609 = vpop.permute.xlu0 %6608
      %6612 = vset.pattern.permute.xlu0 0
      %6613 = vperm.xlu0 %6612, %v6539
      %v6614 = vpop.permute.xlu0 %6613
      %6617 = vset.pattern.permute.xlu0 0
      %6618 = vperm.xlu0 %6617, %v6540
      %v6619 = vpop.permute.xlu0 %6618
      %v6621 = vadd.f32 %v6460, %v6544
      %v6622 = vadd.f32 %v6461, %v6544
      %v6623 = vadd.f32 %v6462, %v6544
      %v6624 = vadd.f32 %v6463, %v6544
      %v6625 = vadd.f32 %v6464, %v6549
      %v6626 = vadd.f32 %v6465, %v6549
      %v6627 = vadd.f32 %v6466, %v6549
      %v6628 = vadd.f32 %v6467, %v6549
      %v6629 = vadd.f32 %v6468, %v6554
      %v6630 = vadd.f32 %v6469, %v6554
      %v6631 = vadd.f32 %v6470, %v6554
      %v6632 = vadd.f32 %v6471, %v6554
      %v6633 = vadd.f32 %v6472, %v6559
      %v6634 = vadd.f32 %v6473, %v6559
      %v6635 = vadd.f32 %v6474, %v6559
      %v6636 = vadd.f32 %v6475, %v6559
      %v6637 = vadd.f32 %v6476, %v6564
      %v6638 = vadd.f32 %v6477, %v6564
      %v6639 = vadd.f32 %v6478, %v6564
      %v6640 = vadd.f32 %v6479, %v6564
      %v6641 = vadd.f32 %v6480, %v6569
      %v6642 = vadd.f32 %v6481, %v6569
      %v6643 = vadd.f32 %v6482, %v6569
      %v6644 = vadd.f32 %v6483, %v6569
      %v6645 = vadd.f32 %v6484, %v6574
      %v6646 = vadd.f32 %v6485, %v6574
      %v6647 = vadd.f32 %v6486, %v6574
      %v6648 = vadd.f32 %v6487, %v6574
      %v6649 = vadd.f32 %v6488, %v6579
      %v6650 = vadd.f32 %v6489, %v6579
      %v6651 = vadd.f32 %v6490, %v6579
      %v6652 = vadd.f32 %v6491, %v6579
      %v6653 = vadd.f32 %v6492, %v6584
      %v6654 = vadd.f32 %v6493, %v6584
      %v6655 = vadd.f32 %v6494, %v6584
      %v6656 = vadd.f32 %v6495, %v6584
      %v6657 = vadd.f32 %v6496, %v6589
      %v6658 = vadd.f32 %v6497, %v6589
      %v6659 = vadd.f32 %v6498, %v6589
      %v6660 = vadd.f32 %v6499, %v6589
      %v6661 = vadd.f32 %v6500, %v6594
      %v6662 = vadd.f32 %v6501, %v6594
      %v6663 = vadd.f32 %v6502, %v6594
      %v6664 = vadd.f32 %v6503, %v6594
      %v6665 = vadd.f32 %v6504, %v6599
      %v6666 = vadd.f32 %v6505, %v6599
      %v6667 = vadd.f32 %v6506, %v6599
      %v6668 = vadd.f32 %v6507, %v6599
      %v6669 = vadd.f32 %v6508, %v6604
      %v6670 = vadd.f32 %v6509, %v6604
      %v6671 = vadd.f32 %v6510, %v6604
      %v6672 = vadd.f32 %v6511, %v6604
      %v6673 = vadd.f32 %v6512, %v6609
      %v6674 = vadd.f32 %v6513, %v6609
      %v6675 = vadd.f32 %v6514, %v6609
      %v6676 = vadd.f32 %v6515, %v6609
      %v6677 = vadd.f32 %v6516, %v6614
      %v6678 = vadd.f32 %v6517, %v6614
      %v6679 = vadd.f32 %v6518, %v6614
      %v6680 = vadd.f32 %v6519, %v6614
      %v6681 = vadd.f32 %v6520, %v6619
      %v6682 = vadd.f32 %v6521, %v6619
      %v6683 = vadd.f32 %v6522, %v6619
      %v6684 = vadd.f32 %v6523, %v6619
      %v6685 = vmax.f32 %v6621, 0.0
      %v6686 = vmax.f32 %v6622, 0.0
      %v6687 = vmax.f32 %v6623, 0.0
      %v6688 = vmax.f32 %v6624, 0.0
      %v6689 = vmax.f32 %v6625, 0.0
      %v6690 = vmax.f32 %v6626, 0.0
      %v6691 = vmax.f32 %v6627, 0.0
      %v6692 = vmax.f32 %v6628, 0.0
      %v6693 = vmax.f32 %v6629, 0.0
      %v6694 = vmax.f32 %v6630, 0.0
      %v6695 = vmax.f32 %v6631, 0.0
      %v6696 = vmax.f32 %v6632, 0.0
      %v6697 = vmax.f32 %v6633, 0.0
      %v6698 = vmax.f32 %v6634, 0.0
      %v6699 = vmax.f32 %v6635, 0.0
      %v6700 = vmax.f32 %v6636, 0.0
      %v6701 = vmax.f32 %v6637, 0.0
      %v6702 = vmax.f32 %v6638, 0.0
      %v6703 = vmax.f32 %v6639, 0.0
      %v6704 = vmax.f32 %v6640, 0.0
      %v6705 = vmax.f32 %v6641, 0.0
      %v6706 = vmax.f32 %v6642, 0.0
      %v6707 = vmax.f32 %v6643, 0.0
      %v6708 = vmax.f32 %v6644, 0.0
      %v6709 = vmax.f32 %v6645, 0.0
      %v6710 = vmax.f32 %v6646, 0.0
      %v6711 = vmax.f32 %v6647, 0.0
      %v6712 = vmax.f32 %v6648, 0.0
      %v6713 = vmax.f32 %v6649, 0.0
      %v6714 = vmax.f32 %v6650, 0.0
      %v6715 = vmax.f32 %v6651, 0.0
      %v6716 = vmax.f32 %v6652, 0.0
      %v6717 = vmax.f32 %v6653, 0.0
      %v6718 = vmax.f32 %v6654, 0.0
      %v6719 = vmax.f32 %v6655, 0.0
      %v6720 = vmax.f32 %v6656, 0.0
      %v6721 = vmax.f32 %v6657, 0.0
      %v6722 = vmax.f32 %v6658, 0.0
      %v6723 = vmax.f32 %v6659, 0.0
      %v6724 = vmax.f32 %v6660, 0.0
      %v6725 = vmax.f32 %v6661, 0.0
      %v6726 = vmax.f32 %v6662, 0.0
      %v6727 = vmax.f32 %v6663, 0.0
      %v6728 = vmax.f32 %v6664, 0.0
      %v6729 = vmax.f32 %v6665, 0.0
      %v6730 = vmax.f32 %v6666, 0.0
      %v6731 = vmax.f32 %v6667, 0.0
      %v6732 = vmax.f32 %v6668, 0.0
      %v6733 = vmax.f32 %v6669, 0.0
      %v6734 = vmax.f32 %v6670, 0.0
      %v6735 = vmax.f32 %v6671, 0.0
      %v6736 = vmax.f32 %v6672, 0.0
      %v6737 = vmax.f32 %v6673, 0.0
      %v6738 = vmax.f32 %v6674, 0.0
      %v6739 = vmax.f32 %v6675, 0.0
      %v6740 = vmax.f32 %v6676, 0.0
      %v6741 = vmax.f32 %v6677, 0.0
      %v6742 = vmax.f32 %v6678, 0.0
      %v6743 = vmax.f32 %v6679, 0.0
      %v6744 = vmax.f32 %v6680, 0.0
      %v6745 = vmax.f32 %v6681, 0.0
      %v6746 = vmax.f32 %v6682, 0.0
      %v6747 = vmax.f32 %v6683, 0.0
      %v6748 = vmax.f32 %v6684, 0.0
      %v6749 = vpack.c.bf16 %v6689, %v6685
      %v6750 = vpack.c.bf16 %v6690, %v6686
      %v6751 = vpack.c.bf16 %v6691, %v6687
      %v6752 = vpack.c.bf16 %v6692, %v6688
      %v6753 = vpack.c.bf16 %v6697, %v6693
      %v6754 = vpack.c.bf16 %v6698, %v6694
      %v6755 = vpack.c.bf16 %v6699, %v6695
      %v6756 = vpack.c.bf16 %v6700, %v6696
      %v6757 = vpack.c.bf16 %v6705, %v6701
      %v6758 = vpack.c.bf16 %v6706, %v6702
      %v6759 = vpack.c.bf16 %v6707, %v6703
      %v6760 = vpack.c.bf16 %v6708, %v6704
      %v6761 = vpack.c.bf16 %v6713, %v6709
      %v6762 = vpack.c.bf16 %v6714, %v6710
      %v6763 = vpack.c.bf16 %v6715, %v6711
      %v6764 = vpack.c.bf16 %v6716, %v6712
      %v6765 = vpack.c.bf16 %v6721, %v6717
      %v6766 = vpack.c.bf16 %v6722, %v6718
      %v6767 = vpack.c.bf16 %v6723, %v6719
      %v6768 = vpack.c.bf16 %v6724, %v6720
      %v6769 = vpack.c.bf16 %v6729, %v6725
      %v6770 = vpack.c.bf16 %v6730, %v6726
      %v6771 = vpack.c.bf16 %v6731, %v6727
      %v6772 = vpack.c.bf16 %v6732, %v6728
      %v6773 = vpack.c.bf16 %v6737, %v6733
      %v6774 = vpack.c.bf16 %v6738, %v6734
      %v6775 = vpack.c.bf16 %v6739, %v6735
      %v6776 = vpack.c.bf16 %v6740, %v6736
      %v6777 = vpack.c.bf16 %v6745, %v6741
      %v6778 = vpack.c.bf16 %v6746, %v6742
      %v6779 = vpack.c.bf16 %v6747, %v6743
      %v6780 = vpack.c.bf16 %v6748, %v6744
      %v6781 = vld [vmem:[%s7] sm:$0x1]
      %v6782 = vld [vmem:[#allocation2] sm:$0x1]
      %6784 = vset.pattern.permute.xlu0 0
      %6785 = vperm.xlu0 %6784, %v6782
      %v6786 = vpop.permute.xlu0 %6785
      %v6788 = vlaneseq
      %v6789 = vshrl.u32 %v6788, 7
      %v6790 = vsub.s32 0, %v6789
      %v6791 = vrot.slane %v6786, %v6790
      %6792 = vmatprep.subr.bf16.mxu0 %v6750
      %6793 = vmatpush1.bf16.msra.mxu0 %v6749
      %6794 = vmatprep.subr.bf16.mxu0 %v6754
      %6795 = vmatpush1.bf16.msra.mxu0 %v6753
      %6796 = vmatprep.subr.bf16.mxu0 %v6758
      %6797 = vmatpush1.bf16.msra.mxu0 %v6757
      %6798 = vmatprep.subr.bf16.mxu0 %v6762
      %6799 = vmatpush1.bf16.msra.mxu0 %v6761
      %6800 = vmatprep.subr.bf16.mxu0 %v6766
      %6801 = vmatpush1.bf16.msra.mxu0 %v6765
      %6802 = vmatprep.subr.bf16.mxu0 %v6770
      %6803 = vmatpush1.bf16.msra.mxu0 %v6769
      %6804 = vmatprep.subr.bf16.mxu0 %v6774
      %6805 = vmatpush1.bf16.msra.mxu0 %v6773
      %6806 = vmatprep.subr.bf16.mxu0 %v6778
      %6807 = vmatpush1.bf16.msra.mxu0 %v6777
      %6808 = vmatprep.subr.bf16.mxu0 0
      %6809 = vmatpush1.bf16.msra.mxu0 0
      %6810 = vmatprep.subr.bf16.mxu0 0
      %6811 = vmatpush1.bf16.msra.mxu0 0
      %6812 = vmatprep.subr.bf16.mxu0 0
      %6813 = vmatpush1.bf16.msra.mxu0 0
      %6814 = vmatprep.subr.bf16.mxu0 0
      %6815 = vmatpush1.bf16.msra.mxu0 0
      %6816 = vmatprep.subr.bf16.mxu0 0
      %6817 = vmatpush1.bf16.msra.mxu0 0
      %6818 = vmatprep.subr.bf16.mxu0 0
      %6819 = vmatpush1.bf16.msra.mxu0 0
      %6820 = vmatprep.subr.bf16.mxu0 0
      %6821 = vmatpush1.bf16.msra.mxu0 0
      %6822 = vmatprep.subr.bf16.mxu0 0
      %6823 = vmatpush1.bf16.msra.mxu0 0
      %6824 = vmatprep.mubr.bf16.mxu0 0
      %6825 = vmatmul.mubr.bf16.gmra.mrb[0].mxu0 %v6781
      %v6826 = vpop.f32.mrb[0].mxu0
      %v6827 = vadd.f32 %v6791, %v6826
      %v6828 = vpop.f32.mrb[0].mxu0
      %v6829 = vadd.f32 %v6791, %v6828
      %v6830 = vpop.f32.mrb[0].mxu0
      %v6831 = vpop.f32.mrb[0].mxu0
      %6832 = vdwg.mxu0
      %6833 = vmatprep.subr.bf16.mxu0 %v6752
      %6834 = vmatpush1.bf16.msra.mxu0 %v6751
      %6835 = vmatprep.subr.bf16.mxu0 %v6756
      %6836 = vmatpush1.bf16.msra.mxu0 %v6755
      %6837 = vmatprep.subr.bf16.mxu0 %v6760
      %6838 = vmatpush1.bf16.msra.mxu0 %v6759
      %6839 = vmatprep.subr.bf16.mxu0 %v6764
      %6840 = vmatpush1.bf16.msra.mxu0 %v6763
      %6841 = vmatprep.subr.bf16.mxu0 %v6768
      %6842 = vmatpush1.bf16.msra.mxu0 %v6767
      %6843 = vmatprep.subr.bf16.mxu0 %v6772
      %6844 = vmatpush1.bf16.msra.mxu0 %v6771
      %6845 = vmatprep.subr.bf16.mxu0 %v6776
      %6846 = vmatpush1.bf16.msra.mxu0 %v6775
      %6847 = vmatprep.subr.bf16.mxu0 %v6780
      %6848 = vmatpush1.bf16.msra.mxu0 %v6779
      %6849 = vmatprep.subr.bf16.mxu0 0
      %6850 = vmatpush1.bf16.msra.mxu0 0
      %6851 = vmatprep.subr.bf16.mxu0 0
      %6852 = vmatpush1.bf16.msra.mxu0 0
      %6853 = vmatprep.subr.bf16.mxu0 0
      %6854 = vmatpush1.bf16.msra.mxu0 0
      %6855 = vmatprep.subr.bf16.mxu0 0
      %6856 = vmatpush1.bf16.msra.mxu0 0
      %6857 = vmatprep.subr.bf16.mxu0 0
      %6858 = vmatpush1.bf16.msra.mxu0 0
      %6859 = vmatprep.subr.bf16.mxu0 0
      %6860 = vmatpush1.bf16.msra.mxu0 0
      %6861 = vmatprep.subr.bf16.mxu0 0
      %6862 = vmatpush1.bf16.msra.mxu0 0
      %6863 = vmatprep.subr.bf16.mxu0 0
      %6864 = vmatpush1.bf16.msra.mxu0 0
      %6865 = vmatprep.mubr.bf16.mxu0 0
      %6866 = vmatmul.mubr.bf16.gmra.mrb[0].mxu0 %v6781
      %v6867 = vpop.f32.mrb[0].mxu0
      %v6868 = vadd.f32 %v6791, %v6867
      %v6869 = vpop.f32.mrb[0].mxu0
      %v6870 = vadd.f32 %v6791, %v6869
      %v6871 = vpop.f32.mrb[0].mxu0
      %v6872 = vpop.f32.mrb[0].mxu0
      %6873 = vdwg.mxu0
      %v6878 = vcombine.low %v6827, %v6829
      %v6879 = vcombine.low %v6868, %v6870
      %v6881 = vunpack.c.l.s4 1966171168
      %v6882 = vunpack.c.0.s8 %v6881
      %v6883 = vlaneseq
      %v6884 = vshrl.u32 %v6883, 7
      %v6885 = vsub.s32 %v6882, %v6884
      %v6886 = vrot.slane %v6878, %v6885
      %v6888 = vunpack.c.l.s4 1966171168
      %v6889 = vunpack.c.0.s8 %v6888
      %v6890 = vlaneseq
      %v6891 = vshrl.u32 %v6890, 7
      %v6892 = vsub.s32 %v6889, %v6891
      %v6893 = vrot.slane %v6879, %v6892
      %v6894 = vcombine.low %v6886, %v6893
      %v6896 = vunpack.c.l.s4 1966171168
      %v6897 = vunpack.c.0.s8 %v6896
      %v6898 = vlaneseq
      %v6899 = vshrl.u32 %v6898, 7
      %v6900 = vsub.s32 %v6897, %v6899
      %v6901 = vrot.slane %v6894, %v6900
      %v6903 = vlaneseq
      %vm6904 = vcmp.ge.s32.totalorder %v6903, 0
      %vm6905 = vcmp.lt.s32.totalorder %v6903, 512
      %vm6906 = vmand %vm6904, %vm6905
      %6907 = vst.msk [vmem:[%s390] sm:$0xf] %vm6906, %v6901
      %s6908 = smul.u32 4, %s27
      %p6909 = scmp.lt.s32.totalorder %s26, 1
      %s6910 = scalar_select %p6909, %s26, 1
      %p6911 = scmp.lt.s32.totalorder %s6908, 7
      %s6912 = scalar_select %p6911, %s6908, 7
      %s6913 = smul.addr %s6910, 8
      %s6914 = sadd.s32 %s6912, %s6913
      %s6915 = scalar_lea.vmem %s9, %s6914
      // Predicated region
      $region57: #{decoder_forward.1} parent=55 // pred_check
        %p6916 = pneg %p255
      $region58: #{decoder_forward.1} parent=55 // pred_check_branch
        %6918 = sbr.rel (%p6916) target = $region60
      $region59: #{decoder_forward.1} parent=55 // pred_region
        %s6919 = smul.u32 4, %s27
      $region60: #{decoder_forward.1} parent=55 // pred_fallthru
        _
    $region56: #{decoder_forward.1} parent=5 // pred_fallthru
      _
    %p6920 = scmp.le.s32.totalorder 2, %s17
    // Predicated region
    $region61: #{decoder_forward.1} parent=5 // pred_check
      %p6921 = pneg %p6920
    $region62: #{decoder_forward.1} parent=5 // pred_check_branch
      %6923 = sbr.rel (%p6921) target = $region64
    $region63: #{decoder_forward.1} parent=5 // pred_region
      %s6924 = ssub.s32 %s17, 2
      // Predicated region
      $region65: #{decoder_forward.1} parent=63 // pred_check
        %p6925 = pneg %p261
      $region66: #{decoder_forward.1} parent=63 // pred_check_branch
        %6927 = sbr.rel (%p6925) target = $region68
      $region67: #{decoder_forward.1} parent=63 // pred_region
        %s6928 = smul.u32 4, %s29
        %p6929 = scmp.lt.s32.totalorder %s28, 1
        %s6930 = scalar_select %p6929, %s28, 1
        %p6931 = scmp.lt.s32.totalorder %s6928, 7
        %s6932 = scalar_select %p6931, %s6928, 7
        %s6933 = smul.addr %s6930, 8
        %s6934 = sadd.s32 %s6932, %s6933
        %s6935 = scalar_lea.vmem %s9, %s6934
      $region68: #{decoder_forward.1} parent=63 // pred_fallthru
        _
    $region64: #{decoder_forward.1} parent=5 // pred_fallthru
      _
  $region6: #{decoder_forward.1} parent=0 // loop_footer
    %s21 = sadd.s32 1, %s17
  $region7: #{decoder_forward.1} parent=0 // loop_footer_branch
    %16 = sbr.rel target = $region3
  $region8: #{decoder_forward.1} parent=0 // loop_exit
    _

</llo_original>
